<compile_context>
chip_gen: v7x
topology: tpu7x:2x2x1
jax: 0.10.0
libtpu: 0.0.40
codegen_flags: <defaults>
</compile_context>

<pallas_src>
import jax
import jax.numpy as jnp
from jax import lax
from jax.experimental import pallas as pl
from jax.experimental.pallas import tpu as pltpu

# f32-parity mode for the self-check below. For production set to
# lax.Precision.DEFAULT and relax the test tolerance.
_PRECISION = lax.Precision.HIGHEST


def interaction_gnn_aggregator(params, sess_self, sess_neighbor, sess_neighbor2,
                               tar_self, tar_neighbor, session_len):
    """Forward of InteractionGNNAggregator with layer == 1 (PyTorch semantics)."""
    # session_len and sess_neighbor2 are unused for layer == 1 (matches PyTorch).
    del session_len, sess_neighbor2
    B, L, D = sess_self.shape
    S = tar_self.shape[1]
    N = sess_neighbor.shape[2]
    Nt = tar_neighbor.shape[2]
    BL, BS = B * L, B * S
    BLN, BSNt = BL * N, BS * Nt
    GS, GE = BL + BS, BLN + BSNt          # self rows / expanded neighbor rows
    SNt = S * Nt
    Dp = D + 8                            # lane pad: col D is the "ones" (denominator) lane
    Bp = ((B + 7) // 8) * 8               # sublane-pad the tiny batch-sized selector matrices
    f32 = jnp.float32

    # ---------------- pack ALL activations into one slab: a single input DMA ----------
    def _flat_pad(x):
        x2 = x.reshape(-1, D).astype(f32)
        rows = x2.shape[0]
        ones = jnp.ones((rows, 1), f32)
        zeros = jnp.zeros((rows, Dp - D - 1), f32)
        return jnp.concatenate([x2, ones, zeros], axis=-1)

    act = jnp.concatenate(
        [_flat_pad(sess_self),            # rows [0, BL)
         _flat_pad(tar_self),             # rows [BL, GS)
         _flat_pad(sess_neighbor),        # rows [GS, GS+BLN)
         _flat_pad(tar_neighbor)],        # rows [GS+BLN, GS+BLN+BSNt)
        axis=0)                           # (GS + GE, Dp)

    # ---------------- pack ALL weights into one slab: a single input DMA --------------
    # nn.Linear stores weight as (out, in); y = x @ W^T, so store W^T row blocks,
    # zero-padded to Dp rows so the activations' ones/zero pad lanes are inert.
    w1_t = params["w1"].T.astype(f32)                       # (D, D)
    w3_t = params["w3"].T.astype(f32)                       # (2D, D)
    w3a_t, w3b_t = w3_t[:D], w3_t[D:]                       # (D, D) each
    w2_row = params["w2"].astype(f32)                       # (1, D)
    w4_row = params["w4"].astype(f32)                       # (1, D)

    def _pad_rows(w, rows):
        return jnp.concatenate([w, jnp.zeros((rows - w.shape[0], D), f32)], axis=0)

    wts = jnp.concatenate(
        [_pad_rows(w1_t, Dp),             # rows [0, Dp)
         _pad_rows(w3a_t, Dp),            # rows [Dp, 2Dp)
         _pad_rows(w3b_t, Dp),            # rows [2Dp, 3Dp)
         _pad_rows(w2_row, 8),            # row 3Dp
         _pad_rows(w4_row, 8)],           # row 3Dp + 8
        axis=0)                           # (3*Dp + 16, D)

    def _kernel(act_ref, w_ref, out_ref):
        hp = _PRECISION

        # -------- packed inputs: static, sublane-aligned slices of the two VMEM slabs --
        selfs = act_ref[0:GS, :]                         # (GS, Dp)   [sess_self ; tar_self]
        sneigh = act_ref[GS:GS + BLN, :]                 # (BLN, Dp)  col D == 1 (den lane)
        tneigh = act_ref[GS + BLN:GS + BLN + BSNt, :]    # (BSNt, Dp)

        w1m = w_ref[0:Dp, :]                             # (Dp, D)   rows >= D are zero
        w3am = w_ref[Dp:2 * Dp, :]                       # (Dp, D)
        w3bpm = w_ref[2 * Dp:3 * Dp, :]                  # (Dp, D)
        w3bm = w_ref[2 * Dp:2 * Dp + D, :]               # (D, D)    unpadded view
        w2v = w_ref[3 * Dp:3 * Dp + 1, :]                # (1, D)
        w4v = w_ref[3 * Dp + 8:3 * Dp + 9, :]            # (1, D)

        # -------- 0/1 matrices generated in-kernel (iota + compare, no integer division)
        r = lax.broadcasted_iota(jnp.int32, (GE, GS), 0)
        c = lax.broadcasted_iota(jnp.int32, (GE, GS), 1)
        sess_hit = (r < BLN) & (c < BL) & (r >= c * N) & (r < c * N + N)
        rt, ct = r - BLN, c - BL
        tar_hit = (r >= BLN) & (c >= BL) & (rt >= ct * Nt) & (rt < ct * Nt + Nt)
        r_all = jnp.where(sess_hit | tar_hit, 1.0, 0.0).astype(f32)       # (GE, GS)

        # one batched expansion matmul replaces the wrapper-side jnp.repeat()s
        rep = jnp.dot(r_all, selfs, preferred_element_type=f32, precision=hp)  # (GE, Dp)
        rep_s = rep[0:BLN, :]
        rep_t = rep[BLN:GE, :]

        # ================= session-neighbor aggregation (all B*L groups at once) ========
        x_s = rep_s * sneigh                                              # (BLN, Dp)
        h = jnp.dot(x_s, w1m, preferred_element_type=f32, precision=hp)   # (BLN, D)
        h = jnp.where(h >= 0, h, 0.2 * h)                                 # leaky_relu(0.2)
        s = jnp.sum(h * w2v, axis=-1, keepdims=True)                      # (BLN, 1)
        # Global shift == per-group shift (softmax is shift-invariant).  NOTE: a true
        # per-group max would be safer for wildly mis-scaled inputs.
        s = s - jnp.max(s, axis=0, keepdims=True)
        e = jnp.exp(s)
        rg = lax.broadcasted_iota(jnp.int32, (BL, BLN), 0)
        cg = lax.broadcasted_iota(jnp.int32, (BL, BLN), 1)
        m_s = jnp.where((cg >= rg * N) & (cg < rg * N + N), 1.0, 0.0).astype(f32)
        # ones lane of sneigh -> column D of this product is the softmax denominator
        numden = jnp.dot(m_s, e * sneigh, preferred_element_type=f32, precision=hp)
        tot = numden[:, 0:D] * pl.reciprocal(numden[:, D:D + 1], approx=True)
        ssq = jnp.sum(tot * tot, axis=-1, keepdims=True)
        sess_norm = tot * lax.rsqrt(jnp.maximum(ssq, 1e-24))              # (BL, D)
        out_ref[0:BL, :] = sess_norm.astype(out_ref.dtype)

        # ================= target-neighbor aggregation (all B*S groups at once) =========
        # sess_last[b] = normalized aggregation row (b, l=0); push it through w3b once per
        # batch and expand to that batch's target rows with tiny 0/1 matmuls.
        rb = lax.broadcasted_iota(jnp.int32, (Bp, BL), 0)
        cb = lax.broadcasted_iota(jnp.int32, (Bp, BL), 1)
        sel_b = jnp.where((rb < B) & (cb == rb * L), 1.0, 0.0).astype(f32)     # (Bp, BL)
        last = jnp.dot(sel_b, sess_norm, preferred_element_type=f32, precision=hp)
        last_w3b = jnp.dot(last, w3bm, preferred_element_type=f32, precision=hp)  # (Bp, D)
        re_ = lax.broadcasted_iota(jnp.int32, (BSNt, Bp), 0)
        ce_ = lax.broadcasted_iota(jnp.int32, (BSNt, Bp), 1)
        e_b = jnp.where((ce_ < B) & (re_ >= ce_ * SNt) & (re_ < ce_ * SNt + SNt),
                        1.0, 0.0).astype(f32)                                   # (BSNt, Bp)
        last_full = jnp.dot(e_b, last_w3b, preferred_element_type=f32, precision=hp)

        x_t = rep_t * tneigh                                                    # (BSNt, Dp)
        # cat([x_t, last + tneigh], -1) @ W3^T == x_t@w3a + tneigh@w3b + last@w3b
        hh = jnp.tanh(
            jnp.dot(x_t, w3am, preferred_element_type=f32, precision=hp)
            + jnp.dot(tneigh, w3bpm, preferred_element_type=f32, precision=hp)
            + last_full)
        sc = jnp.sum(hh * w4v, axis=-1, keepdims=True)                          # (BSNt, 1)
        e2 = jnp.exp(sc)                     # tanh-bounded scores -> no max shift needed
        rg2 = lax.broadcasted_iota(jnp.int32, (BS, BSNt), 0)
        cg2 = lax.broadcasted_iota(jnp.int32, (BS, BSNt), 1)
        m_t = jnp.where((cg2 >= rg2 * Nt) & (cg2 < rg2 * Nt + Nt), 1.0, 0.0).astype(f32)
        numden2 = jnp.dot(m_t, e2 * tneigh, preferred_element_type=f32, precision=hp)
        tot2 = numden2[:, 0:D] * pl.reciprocal(numden2[:, D:D + 1], approx=True)
        outv = (tot2 + selfs[BL:GS, 0:D]) * 0.5
        osq = jnp.sum(outv * outv, axis=-1, keepdims=True)
        out_ref[BL:GS, :] = (outv * lax.rsqrt(jnp.maximum(osq, 1e-24))).astype(out_ref.dtype)

    # Single-step launch: whole (small) slabs live in VMEM, no grid, no per-step
    # pipeline overhead; total VMEM footprint ~70 KB.
    out = pl.pallas_call(
        _kernel,
        out_shape=jax.ShapeDtypeStruct((GS, D), f32),
        in_specs=[pl.BlockSpec(memory_space=pltpu.MemorySpace.VMEM),
                  pl.BlockSpec(memory_space=pltpu.MemorySpace.VMEM)],
        out_specs=pl.BlockSpec(memory_space=pltpu.MemorySpace.VMEM),
    )(act, wts)

    sess_total = out[0:BL].reshape(B, L, D).astype(sess_self.dtype)
    tar_new = out[BL:GS].reshape(B, S, D).astype(tar_self.dtype)

    # ----- module-semantics output expansion -------------------------------------------
    # TODO(synk): these broadcast+stack copies write ~8x more HBM than the kernel reads;
    # downstream consumers that can take the compact (B,L,D)/(B,S,D) results should.
    sess_layer0 = jnp.broadcast_to(sess_self[:, None, :, :], (B, S, L, D))
    sess_layer1 = jnp.broadcast_to(sess_total[:, None, :, :], (B, S, L, D))
    sess_embedding_layer = jnp.stack([sess_layer0, sess_layer1], axis=0)        # (2,B,S,L,D)
    target_embedding_layer = jnp.stack([tar_self, tar_new, tar_self, tar_new],
                                       axis=0)                                  # (4,B,S,D)
    return sess_embedding_layer, target_embedding_layer


# ---------------------------------------------------------------------------
# Pure-JAX reference (mirrors the PyTorch forward with layer=1) for validation.
# ---------------------------------------------------------------------------
def reference_forward(params, sess_self, sess_neighbor, sess_neighbor2,
                      tar_self, tar_neighbor, session_len):
    del session_len, sess_neighbor2
    hp = jax.lax.Precision.HIGHEST
    B, L, D = sess_self.shape
    S = tar_self.shape[1]

    sess_layer0 = jnp.broadcast_to(sess_self[:, None], (B, S, L, D))
    sess_mean = jnp.mean(sess_layer0, axis=1)
    x = sess_mean[:, :, None, :] * sess_neighbor
    h = jnp.einsum("blnd,ed->blne", x, params["w1"], precision=hp)
    h = jnp.where(h >= 0, h, 0.2 * h)
    s = jnp.einsum("blne,oe->blno", h, params["w2"], precision=hp)
    att = jax.nn.softmax(s, axis=-2)
    total = jnp.sum(att * sess_neighbor, axis=-2)
    nrm = jnp.maximum(jnp.linalg.norm(total, axis=-1, keepdims=True), 1e-12)
    sess_norm = total / nrm
    sess_layer1 = jnp.broadcast_to(sess_norm[:, None], (B, S, L, D))
    sess_embedding_layer = jnp.stack([sess_layer0, sess_layer1], 0)

    sess_last = sess_layer1[:, :, 0:1, :]
    x1 = tar_self[:, :, None, :] * tar_neighbor
    x2 = sess_last + tar_neighbor
    cat = jnp.concatenate([x1, x2], -1)
    h = jnp.tanh(jnp.einsum("bsnd,ed->bsne", cat, params["w3"], precision=hp))
    sc = jnp.einsum("bsne,oe->bsno", h, params["w4"], precision=hp)
    att = jax.nn.softmax(sc, axis=-2)
    tot = jnp.sum(att * tar_neighbor, axis=-2)
    out = (tot + tar_self) / 2.0
    nrm = jnp.maximum(jnp.linalg.norm(out, axis=-1, keepdims=True), 1e-12)
    tar_norm = out / nrm
    target_embedding_layer = jnp.stack([tar_self, tar_norm, tar_self, tar_norm], 0)
    return sess_embedding_layer, target_embedding_layer


if __name__ == "__main__":
    # Small shapes consistent with the module. dim=40 (divisible by num_heads=10 as the
    # module's unused MHSA would require); layer=1.
    B, L, N, N2, S, Nt, D = 2, 8, 5, 4, 8, 6, 40

    key = jax.random.PRNGKey(0)
    ks = jax.random.split(key, 6)
    sess_self = jax.random.normal(ks[0], (B, L, D), jnp.float32)
    sess_neighbor = jax.random.normal(ks[1], (B, L, N, D), jnp.float32)
    sess_neighbor2 = jax.random.normal(ks[2], (B, L, N, N2, D), jnp.float32)
    tar_self = jax.random.normal(ks[3], (B, S, D), jnp.float32)
    tar_neighbor = jax.random.normal(ks[4], (B, S, Nt, D), jnp.float32)
    session_len = jnp.full((B,), L, dtype=jnp.int32)

    # Deterministic nn.Linear-style init: uniform(-1/sqrt(fan_in), 1/sqrt(fan_in)).
    wk = jax.random.split(jax.random.PRNGKey(42), 4)

    def lin(k, out_f, in_f):
        bound = 1.0 / (in_f ** 0.5)
        return jax.random.uniform(k, (out_f, in_f), jnp.float32, -bound, bound)

    params = {
        "w1": lin(wk[0], D, D),       # Linear(dim, dim, bias=False)
        "w2": lin(wk[1], 1, D),       # Linear(dim, 1,   bias=False)
        "w3": lin(wk[2], D, 2 * D),   # Linear(2*dim, dim, bias=False)
        "w4": lin(wk[3], 1, D),       # Linear(dim, 1,   bias=False)
    }
    # TODO(synk): MHSA_sess / dropout are constructed in __init__ but never used in this
    # forward path; w_5/w_6/ignn_glu/gate weights are likewise unused. The sess_neighbor2
    # branch only activates for layer > 1 and is not translated.

    fwd = jax.jit(interaction_gnn_aggregator)
    sess_out, tar_out = fwd(params, sess_self, sess_neighbor, sess_neighbor2,
                            tar_self, tar_neighbor, session_len)
    jax.block_until_ready((sess_out, tar_out))

    assert sess_out.shape == (2, B, S, L, D), sess_out.shape
    assert tar_out.shape == (4, B, S, D), tar_out.shape

    sess_ref, tar_ref = reference_forward(params, sess_self, sess_neighbor,
                                          sess_neighbor2, tar_self, tar_neighbor,
                                          session_len)
    # Tolerance accounts for the EUP approx-reciprocal in the production softmax path.
    ok_sess = bool(jnp.allclose(sess_out, sess_ref, atol=2e-3, rtol=2e-3))
    ok_tar = bool(jnp.allclose(tar_out, tar_ref, atol=2e-3, rtol=2e-3))
    if not (ok_sess and ok_tar):
        d1 = float(jnp.max(jnp.abs(sess_out - sess_ref)))
        d2 = float(jnp.max(jnp.abs(tar_out - tar_ref)))
        raise AssertionError(f"mismatch: sess max|diff|={d1:.3e}, tar max|diff|={d2:.3e}")
    print("KERNEL_OK")
</pallas_src>

<mosaic_0001>
module attributes {stable_mosaic.version = 11 : i64} {
  func.func @_kernel(%arg0: memref<208x48xf32, #tpu.memory_space<vmem>>, %arg1: memref<160x40xf32, #tpu.memory_space<vmem>>, %arg2: memref<32x40xf32, #tpu.memory_space<vmem>>) attributes {dimension_semantics = [], scalar_prefetch = 0 : i64, scratch_operands = 0 : i64, tpu.core_type = #tpu.core_type<tc>} {
    %c0 = arith.constant 0 : index
    %c0_0 = arith.constant 0 : index
    %0 = vector.load %arg0[%c0, %c0_0] : memref<208x48xf32, #tpu.memory_space<vmem>>, vector<32x48xf32>
    %c32 = arith.constant 32 : index
    %c0_1 = arith.constant 0 : index
    %1 = vector.load %arg0[%c32, %c0_1] : memref<208x48xf32, #tpu.memory_space<vmem>>, vector<80x48xf32>
    %c112 = arith.constant 112 : index
    %c0_2 = arith.constant 0 : index
    %2 = vector.load %arg0[%c112, %c0_2] : memref<208x48xf32, #tpu.memory_space<vmem>>, vector<96x48xf32>
    %c0_3 = arith.constant 0 : index
    %c0_4 = arith.constant 0 : index
    %3 = vector.load %arg1[%c0_3, %c0_4] : memref<160x40xf32, #tpu.memory_space<vmem>>, vector<48x40xf32>
    %c48 = arith.constant 48 : index
    %c0_5 = arith.constant 0 : index
    %4 = vector.load %arg1[%c48, %c0_5] : memref<160x40xf32, #tpu.memory_space<vmem>>, vector<48x40xf32>
    %c96 = arith.constant 96 : index
    %c0_6 = arith.constant 0 : index
    %5 = vector.load %arg1[%c96, %c0_6] : memref<160x40xf32, #tpu.memory_space<vmem>>, vector<48x40xf32>
    %c96_7 = arith.constant 96 : index
    %c0_8 = arith.constant 0 : index
    %6 = vector.load %arg1[%c96_7, %c0_8] : memref<160x40xf32, #tpu.memory_space<vmem>>, vector<40x40xf32>
    %c144 = arith.constant 144 : index
    %c0_9 = arith.constant 0 : index
    %7 = vector.load %arg1[%c144, %c0_9] : memref<160x40xf32, #tpu.memory_space<vmem>>, vector<1x40xf32>
    %c152 = arith.constant 152 : index
    %c0_10 = arith.constant 0 : index
    %8 = vector.load %arg1[%c152, %c0_10] : memref<160x40xf32, #tpu.memory_space<vmem>>, vector<1x40xf32>
    %9 = tpu.iota {dimensions = array<i32: 0>} : vector<176x32xi32>
    %10 = tpu.iota {dimensions = array<i32: 1>} : vector<176x32xi32>
    %c80_i32 = arith.constant 80 : i32
    %11 = vector.broadcast %c80_i32 : i32 to vector<176x32xi32>
    %12 = arith.cmpi slt, %9, %11 : vector<176x32xi32>
    %c16_i32 = arith.constant 16 : i32
    %13 = vector.broadcast %c16_i32 : i32 to vector<176x32xi32>
    %14 = arith.cmpi slt, %10, %13 : vector<176x32xi32>
    %15 = arith.andi %12, %14 : vector<176x32xi1>
    %c5_i32 = arith.constant 5 : i32
    %16 = vector.broadcast %c5_i32 : i32 to vector<176x32xi32>
    %17 = arith.muli %10, %16 : vector<176x32xi32>
    %18 = arith.cmpi sge, %9, %17 : vector<176x32xi32>
    %19 = arith.andi %15, %18 : vector<176x32xi1>
    %c5_i32_11 = arith.constant 5 : i32
    %20 = vector.broadcast %c5_i32_11 : i32 to vector<176x32xi32>
    %21 = arith.muli %10, %20 : vector<176x32xi32>
    %c5_i32_12 = arith.constant 5 : i32
    %22 = vector.broadcast %c5_i32_12 : i32 to vector<176x32xi32>
    %23 = arith.addi %21, %22 : vector<176x32xi32>
    %24 = arith.cmpi slt, %9, %23 : vector<176x32xi32>
    %25 = arith.andi %19, %24 : vector<176x32xi1>
    %c80_i32_13 = arith.constant 80 : i32
    %26 = vector.broadcast %c80_i32_13 : i32 to vector<176x32xi32>
    %27 = arith.subi %9, %26 : vector<176x32xi32>
    %c16_i32_14 = arith.constant 16 : i32
    %28 = vector.broadcast %c16_i32_14 : i32 to vector<176x32xi32>
    %29 = arith.subi %10, %28 : vector<176x32xi32>
    %c80_i32_15 = arith.constant 80 : i32
    %30 = vector.broadcast %c80_i32_15 : i32 to vector<176x32xi32>
    %31 = arith.cmpi sge, %9, %30 : vector<176x32xi32>
    %c16_i32_16 = arith.constant 16 : i32
    %32 = vector.broadcast %c16_i32_16 : i32 to vector<176x32xi32>
    %33 = arith.cmpi sge, %10, %32 : vector<176x32xi32>
    %34 = arith.andi %31, %33 : vector<176x32xi1>
    %c6_i32 = arith.constant 6 : i32
    %35 = vector.broadcast %c6_i32 : i32 to vector<176x32xi32>
    %36 = arith.muli %29, %35 : vector<176x32xi32>
    %37 = arith.cmpi sge, %27, %36 : vector<176x32xi32>
    %38 = arith.andi %34, %37 : vector<176x32xi1>
    %c6_i32_17 = arith.constant 6 : i32
    %39 = vector.broadcast %c6_i32_17 : i32 to vector<176x32xi32>
    %40 = arith.muli %29, %39 : vector<176x32xi32>
    %c6_i32_18 = arith.constant 6 : i32
    %41 = vector.broadcast %c6_i32_18 : i32 to vector<176x32xi32>
    %42 = arith.addi %40, %41 : vector<176x32xi32>
    %43 = arith.cmpi slt, %27, %42 : vector<176x32xi32>
    %44 = arith.andi %38, %43 : vector<176x32xi1>
    %45 = arith.ori %25, %44 : vector<176x32xi1>
    %cst = arith.constant 1.000000e+00 : f32
    %cst_19 = arith.constant 0.000000e+00 : f32
    %46 = vector.broadcast %cst : f32 to vector<176x32xf32>
    %47 = vector.broadcast %cst_19 : f32 to vector<176x32xf32>
    %48 = arith.select %45, %46, %47 : vector<176x32xi1>, vector<176x32xf32>
    %cst_20 = arith.constant dense<0.000000e+00> : vector<176x48xf32>
    %49 = tpu.matmul %48, %0, %cst_20 {dimension_numbers = #tpu.dot_dimension_numbers<[1], [0], [0], [1], [0, 0, 1, 1], [], []>, precision = #tpu.contract_precision<fp32>} : vector<176x32xf32>, vector<32x48xf32>, vector<176x48xf32> -> vector<176x48xf32>
    %50 = vector.extract_strided_slice %49 {offsets = [0, 0], sizes = [80, 48], strides = [1, 1]} : vector<176x48xf32> to vector<80x48xf32>
    %51 = vector.extract_strided_slice %49 {offsets = [80, 0], sizes = [96, 48], strides = [1, 1]} : vector<176x48xf32> to vector<96x48xf32>
    %52 = arith.mulf %50, %1 : vector<80x48xf32>
    %cst_21 = arith.constant dense<0.000000e+00> : vector<80x40xf32>
    %53 = tpu.matmul %52, %3, %cst_21 {dimension_numbers = #tpu.dot_dimension_numbers<[1], [0], [0], [1], [0, 0, 1, 1], [], []>, precision = #tpu.contract_precision<fp32>} : vector<80x48xf32>, vector<48x40xf32>, vector<80x40xf32> -> vector<80x40xf32>
    %cst_22 = arith.constant 0.000000e+00 : f32
    %54 = vector.broadcast %cst_22 : f32 to vector<80x40xf32>
    %55 = arith.cmpf oge, %53, %54 : vector<80x40xf32>
    %cst_23 = arith.constant 2.000000e-01 : f32
    %56 = vector.broadcast %cst_23 : f32 to vector<80x40xf32>
    %57 = arith.mulf %56, %53 : vector<80x40xf32>
    %58 = arith.select %55, %53, %57 : vector<80x40xi1>, vector<80x40xf32>
    %59 = vector.broadcast %7 : vector<1x40xf32> to vector<80x40xf32>
    %60 = arith.mulf %58, %59 : vector<80x40xf32>
    %cst_24 = arith.constant dense<0.000000e+00> : vector<80xf32>
    %61 = vector.multi_reduction <add>, %60, %cst_24 [1] : vector<80x40xf32> to vector<80xf32>
    %62 = vector.shape_cast %61 : vector<80xf32> to vector<80x1xf32>
    %cst_25 = arith.constant dense<0xFF800000> : vector<1xf32>
    %63 = vector.multi_reduction <maximumf>, %62, %cst_25 [0] : vector<80x1xf32> to vector<1xf32>
    %64 = vector.shape_cast %63 : vector<1xf32> to vector<1x1xf32>
    %65 = vector.broadcast %64 : vector<1x1xf32> to vector<80x1xf32>
    %66 = arith.subf %62, %65 : vector<80x1xf32>
    %67 = math.exp %66 : vector<80x1xf32>
    %68 = tpu.iota {dimensions = array<i32: 0>} : vector<16x80xi32>
    %69 = tpu.iota {dimensions = array<i32: 1>} : vector<16x80xi32>
    %c5_i32_26 = arith.constant 5 : i32
    %70 = vector.broadcast %c5_i32_26 : i32 to vector<16x80xi32>
    %71 = arith.muli %68, %70 : vector<16x80xi32>
    %72 = arith.cmpi sge, %69, %71 : vector<16x80xi32>
    %c5_i32_27 = arith.constant 5 : i32
    %73 = vector.broadcast %c5_i32_27 : i32 to vector<16x80xi32>
    %74 = arith.muli %68, %73 : vector<16x80xi32>
    %c5_i32_28 = arith.constant 5 : i32
    %75 = vector.broadcast %c5_i32_28 : i32 to vector<16x80xi32>
    %76 = arith.addi %74, %75 : vector<16x80xi32>
    %77 = arith.cmpi slt, %69, %76 : vector<16x80xi32>
    %78 = arith.andi %72, %77 : vector<16x80xi1>
    %cst_29 = arith.constant 1.000000e+00 : f32
    %cst_30 = arith.constant 0.000000e+00 : f32
    %79 = vector.broadcast %cst_29 : f32 to vector<16x80xf32>
    %80 = vector.broadcast %cst_30 : f32 to vector<16x80xf32>
    %81 = arith.select %78, %79, %80 : vector<16x80xi1>, vector<16x80xf32>
    %82 = vector.broadcast %67 : vector<80x1xf32> to vector<80x48xf32>
    %83 = arith.mulf %82, %1 : vector<80x48xf32>
    %cst_31 = arith.constant dense<0.000000e+00> : vector<16x48xf32>
    %84 = tpu.matmul %81, %83, %cst_31 {dimension_numbers = #tpu.dot_dimension_numbers<[1], [0], [0], [1], [0, 0, 1, 1], [], []>, precision = #tpu.contract_precision<fp32>} : vector<16x80xf32>, vector<80x48xf32>, vector<16x48xf32> -> vector<16x48xf32>
    %85 = vector.extract_strided_slice %84 {offsets = [0, 0], sizes = [16, 40], strides = [1, 1]} : vector<16x48xf32> to vector<16x40xf32>
    %86 = vector.extract_strided_slice %84 {offsets = [0, 40], sizes = [16, 1], strides = [1, 1]} : vector<16x48xf32> to vector<16x1xf32>
    %87 = tpu.reciprocal %86 {approx = true} : vector<16x1xf32> -> vector<16x1xf32>
    %88 = vector.broadcast %87 : vector<16x1xf32> to vector<16x40xf32>
    %89 = arith.mulf %85, %88 : vector<16x40xf32>
    %90 = arith.mulf %89, %89 : vector<16x40xf32>
    %cst_32 = arith.constant dense<0.000000e+00> : vector<16xf32>
    %91 = vector.multi_reduction <add>, %90, %cst_32 [1] : vector<16x40xf32> to vector<16xf32>
    %92 = vector.shape_cast %91 : vector<16xf32> to vector<16x1xf32>
    %cst_33 = arith.constant 1.000000e-24 : f32
    %93 = vector.broadcast %cst_33 : f32 to vector<16x1xf32>
    %94 = arith.maximumf %92, %93 : vector<16x1xf32>
    %95 = math.rsqrt %94 : vector<16x1xf32>
    %96 = vector.broadcast %95 : vector<16x1xf32> to vector<16x40xf32>
    %97 = arith.mulf %89, %96 : vector<16x40xf32>
    %c0_34 = arith.constant 0 : index
    %c0_35 = arith.constant 0 : index
    %98 = vector.load %arg2[%c0_34, %c0_35] : memref<32x40xf32, #tpu.memory_space<vmem>>, vector<16x40xf32>
    tpu.vector_store %arg2[%c0_34, %c0_35], %97 {strides = array<i32>} : memref<32x40xf32, #tpu.memory_space<vmem>>, vector<16x40xf32>,
    %99 = tpu.iota {dimensions = array<i32: 0>} : vector<8x16xi32>
    %100 = tpu.iota {dimensions = array<i32: 1>} : vector<8x16xi32>
    %c2_i32 = arith.constant 2 : i32
    %101 = vector.broadcast %c2_i32 : i32 to vector<8x16xi32>
    %102 = arith.cmpi slt, %99, %101 : vector<8x16xi32>
    %c8_i32 = arith.constant 8 : i32
    %103 = vector.broadcast %c8_i32 : i32 to vector<8x16xi32>
    %104 = arith.muli %99, %103 : vector<8x16xi32>
    %105 = arith.cmpi eq, %100, %104 : vector<8x16xi32>
    %106 = arith.andi %102, %105 : vector<8x16xi1>
    %cst_36 = arith.constant 1.000000e+00 : f32
    %cst_37 = arith.constant 0.000000e+00 : f32
    %107 = vector.broadcast %cst_36 : f32 to vector<8x16xf32>
    %108 = vector.broadcast %cst_37 : f32 to vector<8x16xf32>
    %109 = arith.select %106, %107, %108 : vector<8x16xi1>, vector<8x16xf32>
    %cst_38 = arith.constant dense<0.000000e+00> : vector<8x40xf32>
    %110 = tpu.matmul %109, %97, %cst_38 {dimension_numbers = #tpu.dot_dimension_numbers<[1], [0], [0], [1], [0, 0, 1, 1], [], []>, precision = #tpu.contract_precision<fp32>} : vector<8x16xf32>, vector<16x40xf32>, vector<8x40xf32> -> vector<8x40xf32>
    %cst_39 = arith.constant dense<0.000000e+00> : vector<8x40xf32>
    %111 = tpu.matmul %110, %6, %cst_39 {dimension_numbers = #tpu.dot_dimension_numbers<[1], [0], [0], [1], [0, 0, 1, 1], [], []>, precision = #tpu.contract_precision<fp32>} : vector<8x40xf32>, vector<40x40xf32>, vector<8x40xf32> -> vector<8x40xf32>
    %112 = tpu.iota {dimensions = array<i32: 0>} : vector<96x8xi32>
    %113 = tpu.iota {dimensions = array<i32: 1>} : vector<96x8xi32>
    %c2_i32_40 = arith.constant 2 : i32
    %114 = vector.broadcast %c2_i32_40 : i32 to vector<96x8xi32>
    %115 = arith.cmpi slt, %113, %114 : vector<96x8xi32>
    %c48_i32 = arith.constant 48 : i32
    %116 = vector.broadcast %c48_i32 : i32 to vector<96x8xi32>
    %117 = arith.muli %113, %116 : vector<96x8xi32>
    %118 = arith.cmpi sge, %112, %117 : vector<96x8xi32>
    %119 = arith.andi %115, %118 : vector<96x8xi1>
    %c48_i32_41 = arith.constant 48 : i32
    %120 = vector.broadcast %c48_i32_41 : i32 to vector<96x8xi32>
    %121 = arith.muli %113, %120 : vector<96x8xi32>
    %c48_i32_42 = arith.constant 48 : i32
    %122 = vector.broadcast %c48_i32_42 : i32 to vector<96x8xi32>
    %123 = arith.addi %121, %122 : vector<96x8xi32>
    %124 = arith.cmpi slt, %112, %123 : vector<96x8xi32>
    %125 = arith.andi %119, %124 : vector<96x8xi1>
    %cst_43 = arith.constant 1.000000e+00 : f32
    %cst_44 = arith.constant 0.000000e+00 : f32
    %126 = vector.broadcast %cst_43 : f32 to vector<96x8xf32>
    %127 = vector.broadcast %cst_44 : f32 to vector<96x8xf32>
    %128 = arith.select %125, %126, %127 : vector<96x8xi1>, vector<96x8xf32>
    %cst_45 = arith.constant dense<0.000000e+00> : vector<96x40xf32>
    %129 = tpu.matmul %128, %111, %cst_45 {dimension_numbers = #tpu.dot_dimension_numbers<[1], [0], [0], [1], [0, 0, 1, 1], [], []>, precision = #tpu.contract_precision<fp32>} : vector<96x8xf32>, vector<8x40xf32>, vector<96x40xf32> -> vector<96x40xf32>
    %130 = arith.mulf %51, %2 : vector<96x48xf32>
    %cst_46 = arith.constant dense<0.000000e+00> : vector<96x40xf32>
    %131 = tpu.matmul %130, %4, %cst_46 {dimension_numbers = #tpu.dot_dimension_numbers<[1], [0], [0], [1], [0, 0, 1, 1], [], []>, precision = #tpu.contract_precision<fp32>} : vector<96x48xf32>, vector<48x40xf32>, vector<96x40xf32> -> vector<96x40xf32>
    %cst_47 = arith.constant dense<0.000000e+00> : vector<96x40xf32>
    %132 = tpu.matmul %2, %5, %cst_47 {dimension_numbers = #tpu.dot_dimension_numbers<[1], [0], [0], [1], [0, 0, 1, 1], [], []>, precision = #tpu.contract_precision<fp32>} : vector<96x48xf32>, vector<48x40xf32>, vector<96x40xf32> -> vector<96x40xf32>
    %133 = arith.addf %131, %132 : vector<96x40xf32>
    %134 = arith.addf %133, %129 : vector<96x40xf32>
    %135 = math.tanh %134 : vector<96x40xf32>
    %136 = vector.broadcast %8 : vector<1x40xf32> to vector<96x40xf32>
    %137 = arith.mulf %135, %136 : vector<96x40xf32>
    %cst_48 = arith.constant dense<0.000000e+00> : vector<96xf32>
    %138 = vector.multi_reduction <add>, %137, %cst_48 [1] : vector<96x40xf32> to vector<96xf32>
    %139 = vector.shape_cast %138 : vector<96xf32> to vector<96x1xf32>
    %140 = math.exp %139 : vector<96x1xf32>
    %141 = tpu.iota {dimensions = array<i32: 0>} : vector<16x96xi32>
    %142 = tpu.iota {dimensions = array<i32: 1>} : vector<16x96xi32>
    %c6_i32_49 = arith.constant 6 : i32
    %143 = vector.broadcast %c6_i32_49 : i32 to vector<16x96xi32>
    %144 = arith.muli %141, %143 : vector<16x96xi32>
    %145 = arith.cmpi sge, %142, %144 : vector<16x96xi32>
    %c6_i32_50 = arith.constant 6 : i32
    %146 = vector.broadcast %c6_i32_50 : i32 to vector<16x96xi32>
    %147 = arith.muli %141, %146 : vector<16x96xi32>
    %c6_i32_51 = arith.constant 6 : i32
    %148 = vector.broadcast %c6_i32_51 : i32 to vector<16x96xi32>
    %149 = arith.addi %147, %148 : vector<16x96xi32>
    %150 = arith.cmpi slt, %142, %149 : vector<16x96xi32>
    %151 = arith.andi %145, %150 : vector<16x96xi1>
    %cst_52 = arith.constant 1.000000e+00 : f32
    %cst_53 = arith.constant 0.000000e+00 : f32
    %152 = vector.broadcast %cst_52 : f32 to vector<16x96xf32>
    %153 = vector.broadcast %cst_53 : f32 to vector<16x96xf32>
    %154 = arith.select %151, %152, %153 : vector<16x96xi1>, vector<16x96xf32>
    %155 = vector.broadcast %140 : vector<96x1xf32> to vector<96x48xf32>
    %156 = arith.mulf %155, %2 : vector<96x48xf32>
    %cst_54 = arith.constant dense<0.000000e+00> : vector<16x48xf32>
    %157 = tpu.matmul %154, %156, %cst_54 {dimension_numbers = #tpu.dot_dimension_numbers<[1], [0], [0], [1], [0, 0, 1, 1], [], []>, precision = #tpu.contract_precision<fp32>} : vector<16x96xf32>, vector<96x48xf32>, vector<16x48xf32> -> vector<16x48xf32>
    %158 = vector.extract_strided_slice %157 {offsets = [0, 0], sizes = [16, 40], strides = [1, 1]} : vector<16x48xf32> to vector<16x40xf32>
    %159 = vector.extract_strided_slice %157 {offsets = [0, 40], sizes = [16, 1], strides = [1, 1]} : vector<16x48xf32> to vector<16x1xf32>
    %160 = tpu.reciprocal %159 {approx = true} : vector<16x1xf32> -> vector<16x1xf32>
    %161 = vector.broadcast %160 : vector<16x1xf32> to vector<16x40xf32>
    %162 = arith.mulf %158, %161 : vector<16x40xf32>
    %163 = vector.extract_strided_slice %0 {offsets = [16, 0], sizes = [16, 40], strides = [1, 1]} : vector<32x48xf32> to vector<16x40xf32>
    %164 = arith.addf %162, %163 : vector<16x40xf32>
    %cst_55 = arith.constant 5.000000e-01 : f32
    %165 = vector.broadcast %cst_55 : f32 to vector<16x40xf32>
    %166 = arith.mulf %164, %165 : vector<16x40xf32>
    %167 = arith.mulf %166, %166 : vector<16x40xf32>
    %cst_56 = arith.constant dense<0.000000e+00> : vector<16xf32>
    %168 = vector.multi_reduction <add>, %167, %cst_56 [1] : vector<16x40xf32> to vector<16xf32>
    %169 = vector.shape_cast %168 : vector<16xf32> to vector<16x1xf32>
    %cst_57 = arith.constant 1.000000e-24 : f32
    %170 = vector.broadcast %cst_57 : f32 to vector<16x1xf32>
    %171 = arith.maximumf %169, %170 : vector<16x1xf32>
    %172 = math.rsqrt %171 : vector<16x1xf32>
    %173 = vector.broadcast %172 : vector<16x1xf32> to vector<16x40xf32>
    %174 = arith.mulf %166, %173 : vector<16x40xf32>
    %c16 = arith.constant 16 : index
    %c0_58 = arith.constant 0 : index
    %175 = vector.load %arg2[%c16, %c0_58] : memref<32x40xf32, #tpu.memory_space<vmem>>, vector<16x40xf32>
    tpu.vector_store %arg2[%c16, %c0_58], %174 {strides = array<i32>} : memref<32x40xf32, #tpu.memory_space<vmem>>, vector<16x40xf32>,
    return
  }
}

</mosaic_0001>

<llo_original>
// kernel: interaction_gnn_aggregator.1
$region0: #{interaction_gnn_aggregator.1}
  #allocation0 [shape = 'u32[]', space=smem, size = 0x4, offset = 0x4, fixed_abs, tag = 'smem constant byte address 0x4 - core index']
  #allocation1 [shape = 'u32[144,128]{1,0:T(1,128)}', space=vmem, size = 0x12000, scoped, tag = 'internal scratch']
  %s0 = inlined_call_operand.vmem [shape: f32[208,48], index: 0, kind: input, shape index: {}]
  %s1 = inlined_call_operand.vmem [shape: f32[160,40], index: 1, kind: input, shape index: {}]
  %s2 = inlined_call_operand.vmem [shape: f32[32,40], index: 2, kind: output, shape index: {}]
  %s3 = sld [smem:[#allocation0]]
  $region18: #{interaction_gnn_aggregator.1} parent=0
    _
  %s5 = ssub.s32 1, %s3
  %s6 = scalar_select 0, %s5, %s3
  // Predicated region
  $region2: #{interaction_gnn_aggregator.1} parent=0 // pred_check
    _
  $region3: #{interaction_gnn_aggregator.1} parent=0 // pred_check_branch
    %8 = sbr.rel (0) target = $region5
  $region4: #{interaction_gnn_aggregator.1} parent=0 // pred_region
    _
  $region5: #{interaction_gnn_aggregator.1} parent=0 // pred_fallthru
    _
  // Predicated region
  $region6: #{interaction_gnn_aggregator.1} parent=0 // pred_check
    _
  $region7: #{interaction_gnn_aggregator.1} parent=0 // pred_check_branch
    %10 = sbr.rel (0) target = $region9
  $region8: #{interaction_gnn_aggregator.1} parent=0 // pred_region
    _
  $region9: #{interaction_gnn_aggregator.1} parent=0 // pred_fallthru
    _
  %v11 = vld [vmem:[%s0] sm:$0xff]
  %v12 = vld [vmem:[%s0 + $0x8] sm:$0xff]
  %v13 = vld [vmem:[%s0 + $0x10] sm:$0xff]
  %v14 = vld [vmem:[%s0 + $0x18] sm:$0xff]
  %v15 = vld [vmem:[%s0 + $0x20] sm:$0xff]
  %v16 = vld [vmem:[%s0 + $0x28] sm:$0xff]
  %v17 = vld [vmem:[%s0 + $0x30] sm:$0xff]
  %v18 = vld [vmem:[%s0 + $0x38] sm:$0xff]
  %v19 = vld [vmem:[%s0 + $0x40] sm:$0xff]
  %v20 = vld [vmem:[%s0 + $0x48] sm:$0xff]
  %v21 = vld [vmem:[%s0 + $0x50] sm:$0xff]
  %v22 = vld [vmem:[%s0 + $0x58] sm:$0xff]
  %v23 = vld [vmem:[%s0 + $0x60] sm:$0xff]
  %v24 = vld [vmem:[%s0 + $0x68] sm:$0xff]
  %v25 = vld [vmem:[%s0 + $0x70] sm:$0xff]
  %v26 = vld [vmem:[%s0 + $0x78] sm:$0xff]
  %v27 = vld [vmem:[%s0 + $0x80] sm:$0xff]
  %v28 = vld [vmem:[%s0 + $0x88] sm:$0xff]
  %v29 = vld [vmem:[%s0 + $0x90] sm:$0xff]
  %v30 = vld [vmem:[%s0 + $0x98] sm:$0xff]
  %v31 = vld [vmem:[%s0 + $0xa0] sm:$0xff]
  %v32 = vld [vmem:[%s0 + $0xa8] sm:$0xff]
  %v33 = vld [vmem:[%s0 + $0xb0] sm:$0xff]
  %v34 = vld [vmem:[%s0 + $0xb8] sm:$0xff]
  %v35 = vld [vmem:[%s0 + $0xc0] sm:$0xff]
  %v36 = vld [vmem:[%s0 + $0xc8] sm:$0xff]
  %v37 = vld [vmem:[%s1] sm:$0xff]
  %v38 = vld [vmem:[%s1 + $0x8] sm:$0xff]
  %v39 = vld [vmem:[%s1 + $0x10] sm:$0xff]
  %v40 = vld [vmem:[%s1 + $0x18] sm:$0xff]
  %v41 = vld [vmem:[%s1 + $0x20] sm:$0xff]
  %v42 = vld [vmem:[%s1 + $0x28] sm:$0xff]
  %v43 = vld [vmem:[%s1 + $0x30] sm:$0xff]
  %v44 = vld [vmem:[%s1 + $0x38] sm:$0xff]
  %v45 = vld [vmem:[%s1 + $0x40] sm:$0xff]
  %v46 = vld [vmem:[%s1 + $0x48] sm:$0xff]
  %v47 = vld [vmem:[%s1 + $0x50] sm:$0xff]
  %v48 = vld [vmem:[%s1 + $0x58] sm:$0xff]
  %v49 = vld [vmem:[%s1 + $0x60] sm:$0xff]
  %v50 = vld [vmem:[%s1 + $0x68] sm:$0xff]
  %v51 = vld [vmem:[%s1 + $0x70] sm:$0xff]
  %v52 = vld [vmem:[%s1 + $0x78] sm:$0xff]
  %v53 = vld [vmem:[%s1 + $0x80] sm:$0xff]
  %v54 = vld [vmem:[%s1 + $0x88] sm:$0xff]
  %v55 = vld [vmem:[%s1 + $0x90] sm:$0x1]
  %v56 = vld [vmem:[%s1 + $0x98] sm:$0x1]
  %v57 = vlaneseq
  %v58 = vshrl.u32 %v57, 7
  %v59 = vadd.s32 %v58, 8
  %v60 = vadd.s32 %v58, 16
  %v61 = vadd.s32 %v58, 24
  %v62 = vadd.s32 %v58, 32
  %v63 = vadd.s32 %v58, 40
  %v64 = vadd.s32 %v58, 48
  %v65 = vadd.s32 %v58, 56
  %v66 = vadd.s32 %v58, 64
  %v67 = vadd.s32 %v58, 72
  %v68 = vadd.s32 %v58, 80
  %v69 = vadd.s32 %v58, 88
  %v70 = vadd.s32 %v58, 96
  %v71 = vadd.s32 %v58, 104
  %v72 = vadd.s32 %v58, 112
  %v73 = vadd.s32 %v58, 120
  %v74 = vadd.s32 %v58, 128
  %v75 = vadd.s32 %v58, 136
  %v76 = vadd.s32 %v58, 144
  %v77 = vadd.s32 %v58, 152
  %v78 = vadd.s32 %v58, 160
  %v79 = vadd.s32 %v58, 168
  %v80 = vlaneseq
  %v81 = vand.u32 %v80, 127
  %vm82 = vcmp.lt.s32.totalorder %v58, 80
  %vm83 = vcmp.lt.s32.totalorder %v59, 80
  %vm84 = vcmp.lt.s32.totalorder %v60, 80
  %vm85 = vcmp.lt.s32.totalorder %v61, 80
  %vm86 = vcmp.lt.s32.totalorder %v62, 80
  %vm87 = vcmp.lt.s32.totalorder %v63, 80
  %vm88 = vcmp.lt.s32.totalorder %v64, 80
  %vm89 = vcmp.lt.s32.totalorder %v65, 80
  %vm90 = vcmp.lt.s32.totalorder %v66, 80
  %vm91 = vcmp.lt.s32.totalorder %v67, 80
  %vm92 = vcmp.lt.s32.totalorder %v68, 80
  %vm93 = vcmp.lt.s32.totalorder %v69, 80
  %vm94 = vcmp.lt.s32.totalorder %v70, 80
  %vm95 = vcmp.lt.s32.totalorder %v71, 80
  %vm96 = vcmp.lt.s32.totalorder %v72, 80
  %vm97 = vcmp.lt.s32.totalorder %v73, 80
  %vm98 = vcmp.lt.s32.totalorder %v74, 80
  %vm99 = vcmp.lt.s32.totalorder %v75, 80
  %vm100 = vcmp.lt.s32.totalorder %v76, 80
  %vm101 = vcmp.lt.s32.totalorder %v77, 80
  %vm102 = vcmp.lt.s32.totalorder %v78, 80
  %vm103 = vcmp.lt.s32.totalorder %v79, 80
  %vm104 = vcmp.lt.s32.totalorder %v81, 16
  %vm105 = vmand %vm82, %vm104
  %vm106 = vmand %vm83, %vm104
  %vm107 = vmand %vm84, %vm104
  %vm108 = vmand %vm85, %vm104
  %vm109 = vmand %vm86, %vm104
  %vm110 = vmand %vm87, %vm104
  %vm111 = vmand %vm88, %vm104
  %vm112 = vmand %vm89, %vm104
  %vm113 = vmand %vm90, %vm104
  %vm114 = vmand %vm91, %vm104
  %vm115 = vmand %vm92, %vm104
  %vm116 = vmand %vm93, %vm104
  %vm117 = vmand %vm94, %vm104
  %vm118 = vmand %vm95, %vm104
  %vm119 = vmand %vm96, %vm104
  %vm120 = vmand %vm97, %vm104
  %vm121 = vmand %vm98, %vm104
  %vm122 = vmand %vm99, %vm104
  %vm123 = vmand %vm100, %vm104
  %vm124 = vmand %vm101, %vm104
  %vm125 = vmand %vm102, %vm104
  %vm126 = vmand %vm103, %vm104
  %v127 = vmul.u32 %v81, 5
  %vm128 = vcmp.ge.s32.totalorder %v58, %v127
  %vm129 = vcmp.ge.s32.totalorder %v59, %v127
  %vm130 = vcmp.ge.s32.totalorder %v60, %v127
  %vm131 = vcmp.ge.s32.totalorder %v61, %v127
  %vm132 = vcmp.ge.s32.totalorder %v62, %v127
  %vm133 = vcmp.ge.s32.totalorder %v63, %v127
  %vm134 = vcmp.ge.s32.totalorder %v64, %v127
  %vm135 = vcmp.ge.s32.totalorder %v65, %v127
  %vm136 = vcmp.ge.s32.totalorder %v66, %v127
  %vm137 = vcmp.ge.s32.totalorder %v67, %v127
  %vm138 = vcmp.ge.s32.totalorder %v68, %v127
  %vm139 = vcmp.ge.s32.totalorder %v69, %v127
  %vm140 = vcmp.ge.s32.totalorder %v70, %v127
  %vm141 = vcmp.ge.s32.totalorder %v71, %v127
  %vm142 = vcmp.ge.s32.totalorder %v72, %v127
  %vm143 = vcmp.ge.s32.totalorder %v73, %v127
  %vm144 = vcmp.ge.s32.totalorder %v74, %v127
  %vm145 = vcmp.ge.s32.totalorder %v75, %v127
  %vm146 = vcmp.ge.s32.totalorder %v76, %v127
  %vm147 = vcmp.ge.s32.totalorder %v77, %v127
  %vm148 = vcmp.ge.s32.totalorder %v78, %v127
  %vm149 = vcmp.ge.s32.totalorder %v79, %v127
  %vm150 = vmand %vm105, %vm128
  %vm151 = vmand %vm106, %vm129
  %vm152 = vmand %vm107, %vm130
  %vm153 = vmand %vm108, %vm131
  %vm154 = vmand %vm109, %vm132
  %vm155 = vmand %vm110, %vm133
  %vm156 = vmand %vm111, %vm134
  %vm157 = vmand %vm112, %vm135
  %vm158 = vmand %vm113, %vm136
  %vm159 = vmand %vm114, %vm137
  %vm160 = vmand %vm115, %vm138
  %vm161 = vmand %vm116, %vm139
  %vm162 = vmand %vm117, %vm140
  %vm163 = vmand %vm118, %vm141
  %vm164 = vmand %vm119, %vm142
  %vm165 = vmand %vm120, %vm143
  %vm166 = vmand %vm121, %vm144
  %vm167 = vmand %vm122, %vm145
  %vm168 = vmand %vm123, %vm146
  %vm169 = vmand %vm124, %vm147
  %vm170 = vmand %vm125, %vm148
  %vm171 = vmand %vm126, %vm149
  %v172 = vadd.s32 %v127, 5
  %vm173 = vcmp.lt.s32.totalorder %v58, %v172
  %vm174 = vcmp.lt.s32.totalorder %v59, %v172
  %vm175 = vcmp.lt.s32.totalorder %v60, %v172
  %vm176 = vcmp.lt.s32.totalorder %v61, %v172
  %vm177 = vcmp.lt.s32.totalorder %v62, %v172
  %vm178 = vcmp.lt.s32.totalorder %v63, %v172
  %vm179 = vcmp.lt.s32.totalorder %v64, %v172
  %vm180 = vcmp.lt.s32.totalorder %v65, %v172
  %vm181 = vcmp.lt.s32.totalorder %v66, %v172
  %vm182 = vcmp.lt.s32.totalorder %v67, %v172
  %vm183 = vcmp.lt.s32.totalorder %v68, %v172
  %vm184 = vcmp.lt.s32.totalorder %v69, %v172
  %vm185 = vcmp.lt.s32.totalorder %v70, %v172
  %vm186 = vcmp.lt.s32.totalorder %v71, %v172
  %vm187 = vcmp.lt.s32.totalorder %v72, %v172
  %vm188 = vcmp.lt.s32.totalorder %v73, %v172
  %vm189 = vcmp.lt.s32.totalorder %v74, %v172
  %vm190 = vcmp.lt.s32.totalorder %v75, %v172
  %vm191 = vcmp.lt.s32.totalorder %v76, %v172
  %vm192 = vcmp.lt.s32.totalorder %v77, %v172
  %vm193 = vcmp.lt.s32.totalorder %v78, %v172
  %vm194 = vcmp.lt.s32.totalorder %v79, %v172
  %vm195 = vmand %vm150, %vm173
  %vm196 = vmand %vm151, %vm174
  %vm197 = vmand %vm152, %vm175
  %vm198 = vmand %vm153, %vm176
  %vm199 = vmand %vm154, %vm177
  %vm200 = vmand %vm155, %vm178
  %vm201 = vmand %vm156, %vm179
  %vm202 = vmand %vm157, %vm180
  %vm203 = vmand %vm158, %vm181
  %vm204 = vmand %vm159, %vm182
  %vm205 = vmand %vm160, %vm183
  %vm206 = vmand %vm161, %vm184
  %vm207 = vmand %vm162, %vm185
  %vm208 = vmand %vm163, %vm186
  %vm209 = vmand %vm164, %vm187
  %vm210 = vmand %vm165, %vm188
  %vm211 = vmand %vm166, %vm189
  %vm212 = vmand %vm167, %vm190
  %vm213 = vmand %vm168, %vm191
  %vm214 = vmand %vm169, %vm192
  %vm215 = vmand %vm170, %vm193
  %vm216 = vmand %vm171, %vm194
  %v217 = vsub.s32 %v58, 80
  %v218 = vsub.s32 %v59, 80
  %v219 = vsub.s32 %v60, 80
  %v220 = vsub.s32 %v61, 80
  %v221 = vsub.s32 %v62, 80
  %v222 = vsub.s32 %v63, 80
  %v223 = vsub.s32 %v64, 80
  %v224 = vsub.s32 %v65, 80
  %v225 = vsub.s32 %v66, 80
  %v226 = vsub.s32 %v67, 80
  %v227 = vsub.s32 %v69, 80
  %v228 = vsub.s32 %v70, 80
  %v229 = vsub.s32 %v71, 80
  %v230 = vsub.s32 %v72, 80
  %v231 = vsub.s32 %v73, 80
  %v232 = vsub.s32 %v74, 80
  %v233 = vsub.s32 %v75, 80
  %v234 = vsub.s32 %v76, 80
  %v235 = vsub.s32 %v77, 80
  %v236 = vsub.s32 %v78, 80
  %v237 = vsub.s32 %v79, 80
  %v238 = vsub.s32 %v81, 16
  %vm239 = vcmp.ge.s32.totalorder %v58, 80
  %vm240 = vcmp.ge.s32.totalorder %v59, 80
  %vm241 = vcmp.ge.s32.totalorder %v60, 80
  %vm242 = vcmp.ge.s32.totalorder %v61, 80
  %vm243 = vcmp.ge.s32.totalorder %v62, 80
  %vm244 = vcmp.ge.s32.totalorder %v63, 80
  %vm245 = vcmp.ge.s32.totalorder %v64, 80
  %vm246 = vcmp.ge.s32.totalorder %v65, 80
  %vm247 = vcmp.ge.s32.totalorder %v66, 80
  %vm248 = vcmp.ge.s32.totalorder %v67, 80
  %vm249 = vcmp.ge.s32.totalorder %v68, 80
  %vm250 = vcmp.ge.s32.totalorder %v69, 80
  %vm251 = vcmp.ge.s32.totalorder %v70, 80
  %vm252 = vcmp.ge.s32.totalorder %v71, 80
  %vm253 = vcmp.ge.s32.totalorder %v72, 80
  %vm254 = vcmp.ge.s32.totalorder %v73, 80
  %vm255 = vcmp.ge.s32.totalorder %v74, 80
  %vm256 = vcmp.ge.s32.totalorder %v75, 80
  %vm257 = vcmp.ge.s32.totalorder %v76, 80
  %vm258 = vcmp.ge.s32.totalorder %v77, 80
  %vm259 = vcmp.ge.s32.totalorder %v78, 80
  %vm260 = vcmp.ge.s32.totalorder %v79, 80
  %vm261 = vcmp.ge.s32.totalorder %v81, 16
  %vm262 = vmand %vm239, %vm261
  %vm263 = vmand %vm240, %vm261
  %vm264 = vmand %vm241, %vm261
  %vm265 = vmand %vm242, %vm261
  %vm266 = vmand %vm243, %vm261
  %vm267 = vmand %vm244, %vm261
  %vm268 = vmand %vm245, %vm261
  %vm269 = vmand %vm246, %vm261
  %vm270 = vmand %vm247, %vm261
  %vm271 = vmand %vm248, %vm261
  %vm272 = vmand %vm249, %vm261
  %vm273 = vmand %vm250, %vm261
  %vm274 = vmand %vm251, %vm261
  %vm275 = vmand %vm252, %vm261
  %vm276 = vmand %vm253, %vm261
  %vm277 = vmand %vm254, %vm261
  %vm278 = vmand %vm255, %vm261
  %vm279 = vmand %vm256, %vm261
  %vm280 = vmand %vm257, %vm261
  %vm281 = vmand %vm258, %vm261
  %vm282 = vmand %vm259, %vm261
  %vm283 = vmand %vm260, %vm261
  %v284 = vmul.u32 %v238, 6
  %vm285 = vcmp.ge.s32.totalorder %v217, %v284
  %vm286 = vcmp.ge.s32.totalorder %v218, %v284
  %vm287 = vcmp.ge.s32.totalorder %v219, %v284
  %vm288 = vcmp.ge.s32.totalorder %v220, %v284
  %vm289 = vcmp.ge.s32.totalorder %v221, %v284
  %vm290 = vcmp.ge.s32.totalorder %v222, %v284
  %vm291 = vcmp.ge.s32.totalorder %v223, %v284
  %vm292 = vcmp.ge.s32.totalorder %v224, %v284
  %vm293 = vcmp.ge.s32.totalorder %v225, %v284
  %vm294 = vcmp.ge.s32.totalorder %v226, %v284
  %vm295 = vcmp.ge.s32.totalorder %v58, %v284
  %vm296 = vcmp.ge.s32.totalorder %v227, %v284
  %vm297 = vcmp.ge.s32.totalorder %v228, %v284
  %vm298 = vcmp.ge.s32.totalorder %v229, %v284
  %vm299 = vcmp.ge.s32.totalorder %v230, %v284
  %vm300 = vcmp.ge.s32.totalorder %v231, %v284
  %vm301 = vcmp.ge.s32.totalorder %v232, %v284
  %vm302 = vcmp.ge.s32.totalorder %v233, %v284
  %vm303 = vcmp.ge.s32.totalorder %v234, %v284
  %vm304 = vcmp.ge.s32.totalorder %v235, %v284
  %vm305 = vcmp.ge.s32.totalorder %v236, %v284
  %vm306 = vcmp.ge.s32.totalorder %v237, %v284
  %vm307 = vmand %vm262, %vm285
  %vm308 = vmand %vm263, %vm286
  %vm309 = vmand %vm264, %vm287
  %vm310 = vmand %vm265, %vm288
  %vm311 = vmand %vm266, %vm289
  %vm312 = vmand %vm267, %vm290
  %vm313 = vmand %vm268, %vm291
  %vm314 = vmand %vm269, %vm292
  %vm315 = vmand %vm270, %vm293
  %vm316 = vmand %vm271, %vm294
  %vm317 = vmand %vm272, %vm295
  %vm318 = vmand %vm273, %vm296
  %vm319 = vmand %vm274, %vm297
  %vm320 = vmand %vm275, %vm298
  %vm321 = vmand %vm276, %vm299
  %vm322 = vmand %vm277, %vm300
  %vm323 = vmand %vm278, %vm301
  %vm324 = vmand %vm279, %vm302
  %vm325 = vmand %vm280, %vm303
  %vm326 = vmand %vm281, %vm304
  %vm327 = vmand %vm282, %vm305
  %vm328 = vmand %vm283, %vm306
  %v329 = vadd.s32 %v284, 6
  %vm330 = vcmp.lt.s32.totalorder %v217, %v329
  %vm331 = vcmp.lt.s32.totalorder %v218, %v329
  %vm332 = vcmp.lt.s32.totalorder %v219, %v329
  %vm333 = vcmp.lt.s32.totalorder %v220, %v329
  %vm334 = vcmp.lt.s32.totalorder %v221, %v329
  %vm335 = vcmp.lt.s32.totalorder %v222, %v329
  %vm336 = vcmp.lt.s32.totalorder %v223, %v329
  %vm337 = vcmp.lt.s32.totalorder %v224, %v329
  %vm338 = vcmp.lt.s32.totalorder %v225, %v329
  %vm339 = vcmp.lt.s32.totalorder %v226, %v329
  %vm340 = vcmp.lt.s32.totalorder %v58, %v329
  %vm341 = vcmp.lt.s32.totalorder %v227, %v329
  %vm342 = vcmp.lt.s32.totalorder %v228, %v329
  %vm343 = vcmp.lt.s32.totalorder %v229, %v329
  %vm344 = vcmp.lt.s32.totalorder %v230, %v329
  %vm345 = vcmp.lt.s32.totalorder %v231, %v329
  %vm346 = vcmp.lt.s32.totalorder %v232, %v329
  %vm347 = vcmp.lt.s32.totalorder %v233, %v329
  %vm348 = vcmp.lt.s32.totalorder %v234, %v329
  %vm349 = vcmp.lt.s32.totalorder %v235, %v329
  %vm350 = vcmp.lt.s32.totalorder %v236, %v329
  %vm351 = vcmp.lt.s32.totalorder %v237, %v329
  %vm352 = vmand %vm307, %vm330
  %vm353 = vmand %vm308, %vm331
  %vm354 = vmand %vm309, %vm332
  %vm355 = vmand %vm310, %vm333
  %vm356 = vmand %vm311, %vm334
  %vm357 = vmand %vm312, %vm335
  %vm358 = vmand %vm313, %vm336
  %vm359 = vmand %vm314, %vm337
  %vm360 = vmand %vm315, %vm338
  %vm361 = vmand %vm316, %vm339
  %vm362 = vmand %vm317, %vm340
  %vm363 = vmand %vm318, %vm341
  %vm364 = vmand %vm319, %vm342
  %vm365 = vmand %vm320, %vm343
  %vm366 = vmand %vm321, %vm344
  %vm367 = vmand %vm322, %vm345
  %vm368 = vmand %vm323, %vm346
  %vm369 = vmand %vm324, %vm347
  %vm370 = vmand %vm325, %vm348
  %vm371 = vmand %vm326, %vm349
  %vm372 = vmand %vm327, %vm350
  %vm373 = vmand %vm328, %vm351
  %vm374 = vmor %vm195, %vm352
  %vm375 = vmor %vm196, %vm353
  %vm376 = vmor %vm197, %vm354
  %vm377 = vmor %vm198, %vm355
  %vm378 = vmor %vm199, %vm356
  %vm379 = vmor %vm200, %vm357
  %vm380 = vmor %vm201, %vm358
  %vm381 = vmor %vm202, %vm359
  %vm382 = vmor %vm203, %vm360
  %vm383 = vmor %vm204, %vm361
  %vm384 = vmor %vm205, %vm362
  %vm385 = vmor %vm206, %vm363
  %vm386 = vmor %vm207, %vm364
  %vm387 = vmor %vm208, %vm365
  %vm388 = vmor %vm209, %vm366
  %vm389 = vmor %vm210, %vm367
  %vm390 = vmor %vm211, %vm368
  %vm391 = vmor %vm212, %vm369
  %vm392 = vmor %vm213, %vm370
  %vm393 = vmor %vm214, %vm371
  %vm394 = vmor %vm215, %vm372
  %vm395 = vmor %vm216, %vm373
  %v396 = vsel %vm374, 1.0, 0.0
  %v397 = vsel %vm375, 1.0, 0.0
  %v398 = vsel %vm376, 1.0, 0.0
  %v399 = vsel %vm377, 1.0, 0.0
  %v400 = vsel %vm378, 1.0, 0.0
  %v401 = vsel %vm379, 1.0, 0.0
  %v402 = vsel %vm380, 1.0, 0.0
  %v403 = vsel %vm381, 1.0, 0.0
  %v404 = vsel %vm382, 1.0, 0.0
  %v405 = vsel %vm383, 1.0, 0.0
  %v406 = vsel %vm384, 1.0, 0.0
  %v407 = vsel %vm385, 1.0, 0.0
  %v408 = vsel %vm386, 1.0, 0.0
  %v409 = vsel %vm387, 1.0, 0.0
  %v410 = vsel %vm388, 1.0, 0.0
  %v411 = vsel %vm389, 1.0, 0.0
  %v412 = vsel %vm390, 1.0, 0.0
  %v413 = vsel %vm391, 1.0, 0.0
  %v414 = vsel %vm392, 1.0, 0.0
  %v415 = vsel %vm393, 1.0, 0.0
  %v416 = vsel %vm394, 1.0, 0.0
  %v417 = vsel %vm395, 1.0, 0.0
  %vm418 = vcmask 261120
  %v420 = vsel %vm418, %v396, 0
  %v423 = vsel %vm418, %v397, 0
  %v426 = vsel %vm418, %v398, 0
  %v429 = vsel %vm418, %v399, 0
  %v432 = vsel %vm418, %v400, 0
  %v435 = vsel %vm418, %v401, 0
  %v438 = vsel %vm418, %v402, 0
  %v441 = vsel %vm418, %v403, 0
  %v444 = vsel %vm418, %v404, 0
  %v447 = vsel %vm418, %v405, 0
  %v450 = vsel %vm418, %v406, 0
  %v453 = vsel %vm418, %v407, 0
  %v456 = vsel %vm418, %v408, 0
  %v459 = vsel %vm418, %v409, 0
  %v462 = vsel %vm418, %v410, 0
  %v465 = vsel %vm418, %v411, 0
  %v468 = vsel %vm418, %v412, 0
  %v471 = vsel %vm418, %v413, 0
  %v474 = vsel %vm418, %v414, 0
  %v477 = vsel %vm418, %v415, 0
  %v480 = vsel %vm418, %v416, 0
  %v483 = vsel %vm418, %v417, 0
  %485 = vmatprep.subr.mxu0 0.0
  %v486 = vand.u32 %v11, 4294901760
  %487 = vmatpush1.msra.mxu0 %v486
  %488 = vmatprep.subr.mxu0 0.0
  %v489 = vand.u32 %v12, 4294901760
  %490 = vmatpush1.msra.mxu0 %v489
  %491 = vmatprep.subr.mxu0 0.0
  %v492 = vand.u32 %v13, 4294901760
  %493 = vmatpush1.msra.mxu0 %v492
  %494 = vmatprep.subr.mxu0 0.0
  %v495 = vand.u32 %v14, 4294901760
  %496 = vmatpush1.msra.mxu0 %v495
  %497 = vmatprep.subr.mxu0 0.0
  %498 = vmatpush1.msra.mxu0 0.0
  %499 = vmatprep.subr.mxu0 0.0
  %500 = vmatpush1.msra.mxu0 0.0
  %501 = vmatprep.subr.mxu0 0.0
  %502 = vmatpush1.msra.mxu0 0.0
  %503 = vmatprep.subr.mxu0 0.0
  %504 = vmatpush1.msra.mxu0 0.0
  %505 = vmatprep.subr.mxu0 0.0
  %506 = vmatpush1.msra.mxu0 0.0
  %507 = vmatprep.subr.mxu0 0.0
  %508 = vmatpush1.msra.mxu0 0.0
  %509 = vmatprep.subr.mxu0 0.0
  %510 = vmatpush1.msra.mxu0 0.0
  %511 = vmatprep.subr.mxu0 0.0
  %512 = vmatpush1.msra.mxu0 0.0
  %513 = vmatprep.subr.mxu0 0.0
  %514 = vmatpush1.msra.mxu0 0.0
  %515 = vmatprep.subr.mxu0 0.0
  %516 = vmatpush1.msra.mxu0 0.0
  %517 = vmatprep.subr.mxu0 0.0
  %518 = vmatpush1.msra.mxu0 0.0
  %519 = vmatprep.subr.mxu0 0.0
  %520 = vmatpush1.msra.mxu0 0.0
  %521 = vmatprep.subr.mxu0 0.0
  %522 = vmatpush1.msra.mxu0 0.0
  %523 = vmatprep.subr.mxu0 0.0
  %524 = vmatpush1.msra.mxu0 0.0
  %525 = vmatprep.subr.mxu0 0.0
  %526 = vmatpush1.msra.mxu0 0.0
  %527 = vmatprep.subr.mxu0 0.0
  %528 = vmatpush1.msra.mxu0 0.0
  %529 = vmatprep.subr.mxu0 0.0
  %530 = vmatpush1.msra.mxu0 0.0
  %531 = vmatprep.subr.mxu0 0.0
  %532 = vmatpush1.msra.mxu0 0.0
  %533 = vmatprep.subr.mxu0 0.0
  %534 = vmatpush1.msra.mxu0 0.0
  %535 = vmatprep.subr.mxu0 0.0
  %536 = vmatpush1.msra.mxu0 0.0
  %537 = vmatprep.subr.mxu0 0.0
  %538 = vmatpush1.msra.mxu0 0.0
  %539 = vmatprep.subr.mxu0 0.0
  %540 = vmatpush1.msra.mxu0 0.0
  %541 = vmatprep.subr.mxu0 0.0
  %542 = vmatpush1.msra.mxu0 0.0
  %543 = vmatprep.subr.mxu0 0.0
  %544 = vmatpush1.msra.mxu0 0.0
  %545 = vmatprep.subr.mxu0 0.0
  %546 = vmatpush1.msra.mxu0 0.0
  %547 = vmatprep.subr.mxu0 0.0
  %548 = vmatpush1.msra.mxu0 0.0
  %549 = vmatprep.subr.mxu0 0.0
  %550 = vmatpush1.msra.mxu0 0.0
  %551 = vmatprep.subr.mxu0 0.0
  %552 = vmatpush1.msra.mxu0 0.0
  %553 = vmatprep.mubr.f32.mxu0 0.0
  %v554 = vand.u32 %v420, 4294901760
  %v555 = vsub.f32 %v420, %v554
  %v556 = vand.u32 %v555, 4294901760
  %v557 = vsub.f32 %v555, %v556
  %v558 = vand.u32 %v557, 4294901760
  %559 = vmatmul.mubr.f32.gmra.mrb[0].mxu0 %v558
  %v560 = vpop.f32.mrb[0].mxu0
  %v561 = vadd.f32 0.0, %v560
  %v562 = vpop.f32.mrb[0].mxu0
  %563 = vmatprep.mubr.f32.mxu0 0.0
  %v564 = vand.u32 %v423, 4294901760
  %v565 = vsub.f32 %v423, %v564
  %v566 = vand.u32 %v565, 4294901760
  %v567 = vsub.f32 %v565, %v566
  %v568 = vand.u32 %v567, 4294901760
  %569 = vmatmul.mubr.f32.gmra.mrb[0].mxu0 %v568
  %v570 = vpop.f32.mrb[0].mxu0
  %v571 = vadd.f32 0.0, %v570
  %v572 = vpop.f32.mrb[0].mxu0
  %573 = vmatprep.mubr.f32.mxu0 0.0
  %v574 = vand.u32 %v426, 4294901760
  %v575 = vsub.f32 %v426, %v574
  %v576 = vand.u32 %v575, 4294901760
  %v577 = vsub.f32 %v575, %v576
  %v578 = vand.u32 %v577, 4294901760
  %579 = vmatmul.mubr.f32.gmra.mrb[0].mxu0 %v578
  %v580 = vpop.f32.mrb[0].mxu0
  %v581 = vadd.f32 0.0, %v580
  %v582 = vpop.f32.mrb[0].mxu0
  %583 = vmatprep.mubr.f32.mxu0 0.0
  %v584 = vand.u32 %v429, 4294901760
  %v585 = vsub.f32 %v429, %v584
  %v586 = vand.u32 %v585, 4294901760
  %v587 = vsub.f32 %v585, %v586
  %v588 = vand.u32 %v587, 4294901760
  %589 = vmatmul.mubr.f32.gmra.mrb[0].mxu0 %v588
  %v590 = vpop.f32.mrb[0].mxu0
  %v591 = vadd.f32 0.0, %v590
  %v592 = vpop.f32.mrb[0].mxu0
  %593 = vmatprep.mubr.f32.mxu0 0.0
  %v594 = vand.u32 %v432, 4294901760
  %v595 = vsub.f32 %v432, %v594
  %v596 = vand.u32 %v595, 4294901760
  %v597 = vsub.f32 %v595, %v596
  %v598 = vand.u32 %v597, 4294901760
  %599 = vmatmul.mubr.f32.gmra.mrb[0].mxu0 %v598
  %v600 = vpop.f32.mrb[0].mxu0
  %v601 = vadd.f32 0.0, %v600
  %v602 = vpop.f32.mrb[0].mxu0
  %603 = vmatprep.mubr.f32.mxu0 0.0
  %v604 = vand.u32 %v435, 4294901760
  %v605 = vsub.f32 %v435, %v604
  %v606 = vand.u32 %v605, 4294901760
  %v607 = vsub.f32 %v605, %v606
  %v608 = vand.u32 %v607, 4294901760
  %609 = vmatmul.mubr.f32.gmra.mrb[0].mxu0 %v608
  %v610 = vpop.f32.mrb[0].mxu0
  %v611 = vadd.f32 0.0, %v610
  %v612 = vpop.f32.mrb[0].mxu0
  %613 = vmatprep.mubr.f32.mxu0 0.0
  %v614 = vand.u32 %v438, 4294901760
  %v615 = vsub.f32 %v438, %v614
  %v616 = vand.u32 %v615, 4294901760
  %v617 = vsub.f32 %v615, %v616
  %v618 = vand.u32 %v617, 4294901760
  %619 = vmatmul.mubr.f32.gmra.mrb[0].mxu0 %v618
  %v620 = vpop.f32.mrb[0].mxu0
  %v621 = vadd.f32 0.0, %v620
  %v622 = vpop.f32.mrb[0].mxu0
  %623 = vmatprep.mubr.f32.mxu0 0.0
  %v624 = vand.u32 %v441, 4294901760
  %v625 = vsub.f32 %v441, %v624
  %v626 = vand.u32 %v625, 4294901760
  %v627 = vsub.f32 %v625, %v626
  %v628 = vand.u32 %v627, 4294901760
  %629 = vmatmul.mubr.f32.gmra.mrb[0].mxu0 %v628
  %v630 = vpop.f32.mrb[0].mxu0
  %v631 = vadd.f32 0.0, %v630
  %v632 = vpop.f32.mrb[0].mxu0
  %633 = vmatprep.mubr.f32.mxu0 0.0
  %v634 = vand.u32 %v444, 4294901760
  %v635 = vsub.f32 %v444, %v634
  %v636 = vand.u32 %v635, 4294901760
  %v637 = vsub.f32 %v635, %v636
  %v638 = vand.u32 %v637, 4294901760
  %639 = vmatmul.mubr.f32.gmra.mrb[0].mxu0 %v638
  %v640 = vpop.f32.mrb[0].mxu0
  %v641 = vadd.f32 0.0, %v640
  %v642 = vpop.f32.mrb[0].mxu0
  %643 = vmatprep.mubr.f32.mxu0 0.0
  %v644 = vand.u32 %v447, 4294901760
  %v645 = vsub.f32 %v447, %v644
  %v646 = vand.u32 %v645, 4294901760
  %v647 = vsub.f32 %v645, %v646
  %v648 = vand.u32 %v647, 4294901760
  %649 = vmatmul.mubr.f32.gmra.mrb[0].mxu0 %v648
  %v650 = vpop.f32.mrb[0].mxu0
  %v651 = vadd.f32 0.0, %v650
  %v652 = vpop.f32.mrb[0].mxu0
  %653 = vmatprep.mubr.f32.mxu0 0.0
  %v654 = vand.u32 %v450, 4294901760
  %v655 = vsub.f32 %v450, %v654
  %v656 = vand.u32 %v655, 4294901760
  %v657 = vsub.f32 %v655, %v656
  %v658 = vand.u32 %v657, 4294901760
  %659 = vmatmul.mubr.f32.gmra.mrb[0].mxu0 %v658
  %v660 = vpop.f32.mrb[0].mxu0
  %v661 = vadd.f32 0.0, %v660
  %v662 = vpop.f32.mrb[0].mxu0
  %663 = vmatprep.mubr.f32.mxu0 0.0
  %v664 = vand.u32 %v453, 4294901760
  %v665 = vsub.f32 %v453, %v664
  %v666 = vand.u32 %v665, 4294901760
  %v667 = vsub.f32 %v665, %v666
  %v668 = vand.u32 %v667, 4294901760
  %669 = vmatmul.mubr.f32.gmra.mrb[0].mxu0 %v668
  %v670 = vpop.f32.mrb[0].mxu0
  %v671 = vadd.f32 0.0, %v670
  %v672 = vpop.f32.mrb[0].mxu0
  %673 = vmatprep.mubr.f32.mxu0 0.0
  %v674 = vand.u32 %v456, 4294901760
  %v675 = vsub.f32 %v456, %v674
  %v676 = vand.u32 %v675, 4294901760
  %v677 = vsub.f32 %v675, %v676
  %v678 = vand.u32 %v677, 4294901760
  %679 = vmatmul.mubr.f32.gmra.mrb[0].mxu0 %v678
  %v680 = vpop.f32.mrb[0].mxu0
  %v681 = vadd.f32 0.0, %v680
  %v682 = vpop.f32.mrb[0].mxu0
  %683 = vmatprep.mubr.f32.mxu0 0.0
  %v684 = vand.u32 %v459, 4294901760
  %v685 = vsub.f32 %v459, %v684
  %v686 = vand.u32 %v685, 4294901760
  %v687 = vsub.f32 %v685, %v686
  %v688 = vand.u32 %v687, 4294901760
  %689 = vmatmul.mubr.f32.gmra.mrb[0].mxu0 %v688
  %v690 = vpop.f32.mrb[0].mxu0
  %v691 = vadd.f32 0.0, %v690
  %v692 = vpop.f32.mrb[0].mxu0
  %693 = vmatprep.mubr.f32.mxu0 0.0
  %v694 = vand.u32 %v462, 4294901760
  %v695 = vsub.f32 %v462, %v694
  %v696 = vand.u32 %v695, 4294901760
  %v697 = vsub.f32 %v695, %v696
  %v698 = vand.u32 %v697, 4294901760
  %699 = vmatmul.mubr.f32.gmra.mrb[0].mxu0 %v698
  %v700 = vpop.f32.mrb[0].mxu0
  %v701 = vadd.f32 0.0, %v700
  %v702 = vpop.f32.mrb[0].mxu0
  %703 = vmatprep.mubr.f32.mxu0 0.0
  %v704 = vand.u32 %v465, 4294901760
  %v705 = vsub.f32 %v465, %v704
  %v706 = vand.u32 %v705, 4294901760
  %v707 = vsub.f32 %v705, %v706
  %v708 = vand.u32 %v707, 4294901760
  %709 = vmatmul.mubr.f32.gmra.mrb[0].mxu0 %v708
  %v710 = vpop.f32.mrb[0].mxu0
  %v711 = vadd.f32 0.0, %v710
  %v712 = vpop.f32.mrb[0].mxu0
  %713 = vmatprep.mubr.f32.mxu0 0.0
  %v714 = vand.u32 %v468, 4294901760
  %v715 = vsub.f32 %v468, %v714
  %v716 = vand.u32 %v715, 4294901760
  %v717 = vsub.f32 %v715, %v716
  %v718 = vand.u32 %v717, 4294901760
  %719 = vmatmul.mubr.f32.gmra.mrb[0].mxu0 %v718
  %v720 = vpop.f32.mrb[0].mxu0
  %v721 = vadd.f32 0.0, %v720
  %v722 = vpop.f32.mrb[0].mxu0
  %723 = vmatprep.mubr.f32.mxu0 0.0
  %v724 = vand.u32 %v471, 4294901760
  %v725 = vsub.f32 %v471, %v724
  %v726 = vand.u32 %v725, 4294901760
  %v727 = vsub.f32 %v725, %v726
  %v728 = vand.u32 %v727, 4294901760
  %729 = vmatmul.mubr.f32.gmra.mrb[0].mxu0 %v728
  %v730 = vpop.f32.mrb[0].mxu0
  %v731 = vadd.f32 0.0, %v730
  %v732 = vpop.f32.mrb[0].mxu0
  %733 = vmatprep.mubr.f32.mxu0 0.0
  %v734 = vand.u32 %v474, 4294901760
  %v735 = vsub.f32 %v474, %v734
  %v736 = vand.u32 %v735, 4294901760
  %v737 = vsub.f32 %v735, %v736
  %v738 = vand.u32 %v737, 4294901760
  %739 = vmatmul.mubr.f32.gmra.mrb[0].mxu0 %v738
  %v740 = vpop.f32.mrb[0].mxu0
  %v741 = vadd.f32 0.0, %v740
  %v742 = vpop.f32.mrb[0].mxu0
  %743 = vmatprep.mubr.f32.mxu0 0.0
  %v744 = vand.u32 %v477, 4294901760
  %v745 = vsub.f32 %v477, %v744
  %v746 = vand.u32 %v745, 4294901760
  %v747 = vsub.f32 %v745, %v746
  %v748 = vand.u32 %v747, 4294901760
  %749 = vmatmul.mubr.f32.gmra.mrb[0].mxu0 %v748
  %v750 = vpop.f32.mrb[0].mxu0
  %v751 = vadd.f32 0.0, %v750
  %v752 = vpop.f32.mrb[0].mxu0
  %753 = vmatprep.mubr.f32.mxu0 0.0
  %v754 = vand.u32 %v480, 4294901760
  %v755 = vsub.f32 %v480, %v754
  %v756 = vand.u32 %v755, 4294901760
  %v757 = vsub.f32 %v755, %v756
  %v758 = vand.u32 %v757, 4294901760
  %759 = vmatmul.mubr.f32.gmra.mrb[0].mxu0 %v758
  %v760 = vpop.f32.mrb[0].mxu0
  %v761 = vadd.f32 0.0, %v760
  %v762 = vpop.f32.mrb[0].mxu0
  %763 = vmatprep.mubr.f32.mxu0 0.0
  %v764 = vand.u32 %v483, 4294901760
  %v765 = vsub.f32 %v483, %v764
  %v766 = vand.u32 %v765, 4294901760
  %v767 = vsub.f32 %v765, %v766
  %v768 = vand.u32 %v767, 4294901760
  %769 = vmatmul.mubr.f32.gmra.mrb[0].mxu0 %v768
  %v770 = vpop.f32.mrb[0].mxu0
  %v771 = vadd.f32 0.0, %v770
  %v772 = vpop.f32.mrb[0].mxu0
  %773 = vdwg.mxu0
  %774 = vmatprep.subr.mxu0 0.0
  %v775 = vand.u32 %v11, 4294901760
  %v776 = vsub.f32 %v11, %v775
  %v777 = vand.u32 %v776, 4294901760
  %v778 = vsub.f32 %v776, %v777
  %v779 = vand.u32 %v778, 4294901760
  %780 = vmatpush1.msra.mxu0 %v779
  %781 = vmatprep.subr.mxu0 0.0
  %v782 = vand.u32 %v12, 4294901760
  %v783 = vsub.f32 %v12, %v782
  %v784 = vand.u32 %v783, 4294901760
  %v785 = vsub.f32 %v783, %v784
  %v786 = vand.u32 %v785, 4294901760
  %787 = vmatpush1.msra.mxu0 %v786
  %788 = vmatprep.subr.mxu0 0.0
  %v789 = vand.u32 %v13, 4294901760
  %v790 = vsub.f32 %v13, %v789
  %v791 = vand.u32 %v790, 4294901760
  %v792 = vsub.f32 %v790, %v791
  %v793 = vand.u32 %v792, 4294901760
  %794 = vmatpush1.msra.mxu0 %v793
  %795 = vmatprep.subr.mxu0 0.0
  %v796 = vand.u32 %v14, 4294901760
  %v797 = vsub.f32 %v14, %v796
  %v798 = vand.u32 %v797, 4294901760
  %v799 = vsub.f32 %v797, %v798
  %v800 = vand.u32 %v799, 4294901760
  %801 = vmatpush1.msra.mxu0 %v800
  %802 = vmatprep.subr.mxu0 0.0
  %803 = vmatpush1.msra.mxu0 0.0
  %804 = vmatprep.subr.mxu0 0.0
  %805 = vmatpush1.msra.mxu0 0.0
  %806 = vmatprep.subr.mxu0 0.0
  %807 = vmatpush1.msra.mxu0 0.0
  %808 = vmatprep.subr.mxu0 0.0
  %809 = vmatpush1.msra.mxu0 0.0
  %810 = vmatprep.subr.mxu0 0.0
  %811 = vmatpush1.msra.mxu0 0.0
  %812 = vmatprep.subr.mxu0 0.0
  %813 = vmatpush1.msra.mxu0 0.0
  %814 = vmatprep.subr.mxu0 0.0
  %815 = vmatpush1.msra.mxu0 0.0
  %816 = vmatprep.subr.mxu0 0.0
  %817 = vmatpush1.msra.mxu0 0.0
  %818 = vmatprep.subr.mxu0 0.0
  %819 = vmatpush1.msra.mxu0 0.0
  %820 = vmatprep.subr.mxu0 0.0
  %821 = vmatpush1.msra.mxu0 0.0
  %822 = vmatprep.subr.mxu0 0.0
  %823 = vmatpush1.msra.mxu0 0.0
  %824 = vmatprep.subr.mxu0 0.0
  %825 = vmatpush1.msra.mxu0 0.0
  %826 = vmatprep.subr.mxu0 0.0
  %827 = vmatpush1.msra.mxu0 0.0
  %828 = vmatprep.subr.mxu0 0.0
  %829 = vmatpush1.msra.mxu0 0.0
  %830 = vmatprep.subr.mxu0 0.0
  %831 = vmatpush1.msra.mxu0 0.0
  %832 = vmatprep.subr.mxu0 0.0
  %833 = vmatpush1.msra.mxu0 0.0
  %834 = vmatprep.subr.mxu0 0.0
  %835 = vmatpush1.msra.mxu0 0.0
  %836 = vmatprep.subr.mxu0 0.0
  %837 = vmatpush1.msra.mxu0 0.0
  %838 = vmatprep.subr.mxu0 0.0
  %839 = vmatpush1.msra.mxu0 0.0
  %840 = vmatprep.subr.mxu0 0.0
  %841 = vmatpush1.msra.mxu0 0.0
  %842 = vmatprep.subr.mxu0 0.0
  %843 = vmatpush1.msra.mxu0 0.0
  %844 = vmatprep.subr.mxu0 0.0
  %845 = vmatpush1.msra.mxu0 0.0
  %846 = vmatprep.subr.mxu0 0.0
  %847 = vmatpush1.msra.mxu0 0.0
  %848 = vmatprep.subr.mxu0 0.0
  %849 = vmatpush1.msra.mxu0 0.0
  %850 = vmatprep.subr.mxu0 0.0
  %851 = vmatpush1.msra.mxu0 0.0
  %852 = vmatprep.subr.mxu0 0.0
  %853 = vmatpush1.msra.mxu0 0.0
  %854 = vmatprep.subr.mxu0 0.0
  %855 = vmatpush1.msra.mxu0 0.0
  %856 = vmatprep.subr.mxu0 0.0
  %857 = vmatpush1.msra.mxu0 0.0
  %858 = vmatprep.mubr.f32.mxu0 0.0
  %v859 = vand.u32 %v420, 4294901760
  %860 = vmatmul.mubr.f32.gmra.mrb[0].mxu0 %v859
  %v861 = vpop.f32.mrb[0].mxu0
  %v862 = vadd.f32 %v561, %v861
  %v863 = vpop.f32.mrb[0].mxu0
  %864 = vmatprep.mubr.f32.mxu0 0.0
  %v865 = vand.u32 %v423, 4294901760
  %866 = vmatmul.mubr.f32.gmra.mrb[0].mxu0 %v865
  %v867 = vpop.f32.mrb[0].mxu0
  %v868 = vadd.f32 %v571, %v867
  %v869 = vpop.f32.mrb[0].mxu0
  %870 = vmatprep.mubr.f32.mxu0 0.0
  %v871 = vand.u32 %v426, 4294901760
  %872 = vmatmul.mubr.f32.gmra.mrb[0].mxu0 %v871
  %v873 = vpop.f32.mrb[0].mxu0
  %v874 = vadd.f32 %v581, %v873
  %v875 = vpop.f32.mrb[0].mxu0
  %876 = vmatprep.mubr.f32.mxu0 0.0
  %v877 = vand.u32 %v429, 4294901760
  %878 = vmatmul.mubr.f32.gmra.mrb[0].mxu0 %v877
  %v879 = vpop.f32.mrb[0].mxu0
  %v880 = vadd.f32 %v591, %v879
  %v881 = vpop.f32.mrb[0].mxu0
  %882 = vmatprep.mubr.f32.mxu0 0.0
  %v883 = vand.u32 %v432, 4294901760
  %884 = vmatmul.mubr.f32.gmra.mrb[0].mxu0 %v883
  %v885 = vpop.f32.mrb[0].mxu0
  %v886 = vadd.f32 %v601, %v885
  %v887 = vpop.f32.mrb[0].mxu0
  %888 = vmatprep.mubr.f32.mxu0 0.0
  %v889 = vand.u32 %v435, 4294901760
  %890 = vmatmul.mubr.f32.gmra.mrb[0].mxu0 %v889
  %v891 = vpop.f32.mrb[0].mxu0
  %v892 = vadd.f32 %v611, %v891
  %v893 = vpop.f32.mrb[0].mxu0
  %894 = vmatprep.mubr.f32.mxu0 0.0
  %v895 = vand.u32 %v438, 4294901760
  %896 = vmatmul.mubr.f32.gmra.mrb[0].mxu0 %v895
  %v897 = vpop.f32.mrb[0].mxu0
  %v898 = vadd.f32 %v621, %v897
  %v899 = vpop.f32.mrb[0].mxu0
  %900 = vmatprep.mubr.f32.mxu0 0.0
  %v901 = vand.u32 %v441, 4294901760
  %902 = vmatmul.mubr.f32.gmra.mrb[0].mxu0 %v901
  %v903 = vpop.f32.mrb[0].mxu0
  %v904 = vadd.f32 %v631, %v903
  %v905 = vpop.f32.mrb[0].mxu0
  %906 = vmatprep.mubr.f32.mxu0 0.0
  %v907 = vand.u32 %v444, 4294901760
  %908 = vmatmul.mubr.f32.gmra.mrb[0].mxu0 %v907
  %v909 = vpop.f32.mrb[0].mxu0
  %v910 = vadd.f32 %v641, %v909
  %v911 = vpop.f32.mrb[0].mxu0
  %912 = vmatprep.mubr.f32.mxu0 0.0
  %v913 = vand.u32 %v447, 4294901760
  %914 = vmatmul.mubr.f32.gmra.mrb[0].mxu0 %v913
  %v915 = vpop.f32.mrb[0].mxu0
  %v916 = vadd.f32 %v651, %v915
  %v917 = vpop.f32.mrb[0].mxu0
  %918 = vmatprep.mubr.f32.mxu0 0.0
  %v919 = vand.u32 %v450, 4294901760
  %920 = vmatmul.mubr.f32.gmra.mrb[0].mxu0 %v919
  %v921 = vpop.f32.mrb[0].mxu0
  %v922 = vadd.f32 %v661, %v921
  %v923 = vpop.f32.mrb[0].mxu0
  %924 = vmatprep.mubr.f32.mxu0 0.0
  %v925 = vand.u32 %v453, 4294901760
  %926 = vmatmul.mubr.f32.gmra.mrb[0].mxu0 %v925
  %v927 = vpop.f32.mrb[0].mxu0
  %v928 = vadd.f32 %v671, %v927
  %v929 = vpop.f32.mrb[0].mxu0
  %930 = vmatprep.mubr.f32.mxu0 0.0
  %v931 = vand.u32 %v456, 4294901760
  %932 = vmatmul.mubr.f32.gmra.mrb[0].mxu0 %v931
  %v933 = vpop.f32.mrb[0].mxu0
  %v934 = vadd.f32 %v681, %v933
  %v935 = vpop.f32.mrb[0].mxu0
  %936 = vmatprep.mubr.f32.mxu0 0.0
  %v937 = vand.u32 %v459, 4294901760
  %938 = vmatmul.mubr.f32.gmra.mrb[0].mxu0 %v937
  %v939 = vpop.f32.mrb[0].mxu0
  %v940 = vadd.f32 %v691, %v939
  %v941 = vpop.f32.mrb[0].mxu0
  %942 = vmatprep.mubr.f32.mxu0 0.0
  %v943 = vand.u32 %v462, 4294901760
  %944 = vmatmul.mubr.f32.gmra.mrb[0].mxu0 %v943
  %v945 = vpop.f32.mrb[0].mxu0
  %v946 = vadd.f32 %v701, %v945
  %v947 = vpop.f32.mrb[0].mxu0
  %948 = vmatprep.mubr.f32.mxu0 0.0
  %v949 = vand.u32 %v465, 4294901760
  %950 = vmatmul.mubr.f32.gmra.mrb[0].mxu0 %v949
  %v951 = vpop.f32.mrb[0].mxu0
  %v952 = vadd.f32 %v711, %v951
  %v953 = vpop.f32.mrb[0].mxu0
  %954 = vmatprep.mubr.f32.mxu0 0.0
  %v955 = vand.u32 %v468, 4294901760
  %956 = vmatmul.mubr.f32.gmra.mrb[0].mxu0 %v955
  %v957 = vpop.f32.mrb[0].mxu0
  %v958 = vadd.f32 %v721, %v957
  %v959 = vpop.f32.mrb[0].mxu0
  %960 = vmatprep.mubr.f32.mxu0 0.0
  %v961 = vand.u32 %v471, 4294901760
  %962 = vmatmul.mubr.f32.gmra.mrb[0].mxu0 %v961
  %v963 = vpop.f32.mrb[0].mxu0
  %v964 = vadd.f32 %v731, %v963
  %v965 = vpop.f32.mrb[0].mxu0
  %966 = vmatprep.mubr.f32.mxu0 0.0
  %v967 = vand.u32 %v474, 4294901760
  %968 = vmatmul.mubr.f32.gmra.mrb[0].mxu0 %v967
  %v969 = vpop.f32.mrb[0].mxu0
  %v970 = vadd.f32 %v741, %v969
  %v971 = vpop.f32.mrb[0].mxu0
  %972 = vmatprep.mubr.f32.mxu0 0.0
  %v973 = vand.u32 %v477, 4294901760
  %974 = vmatmul.mubr.f32.gmra.mrb[0].mxu0 %v973
  %v975 = vpop.f32.mrb[0].mxu0
  %v976 = vadd.f32 %v751, %v975
  %v977 = vpop.f32.mrb[0].mxu0
  %978 = vmatprep.mubr.f32.mxu0 0.0
  %v979 = vand.u32 %v480, 4294901760
  %980 = vmatmul.mubr.f32.gmra.mrb[0].mxu0 %v979
  %v981 = vpop.f32.mrb[0].mxu0
  %v982 = vadd.f32 %v761, %v981
  %v983 = vpop.f32.mrb[0].mxu0
  %984 = vmatprep.mubr.f32.mxu0 0.0
  %v985 = vand.u32 %v483, 4294901760
  %986 = vmatmul.mubr.f32.gmra.mrb[0].mxu0 %v985
  %v987 = vpop.f32.mrb[0].mxu0
  %v988 = vadd.f32 %v771, %v987
  %v989 = vpop.f32.mrb[0].mxu0
  %990 = vdwg.mxu0
  %991 = vmatprep.subr.mxu0 0.0
  %v992 = vand.u32 %v11, 4294901760
  %v993 = vsub.f32 %v11, %v992
  %994 = vmatpush1.msra.mxu0 %v993
  %995 = vmatprep.subr.mxu0 0.0
  %v996 = vand.u32 %v12, 4294901760
  %v997 = vsub.f32 %v12, %v996
  %998 = vmatpush1.msra.mxu0 %v997
  %999 = vmatprep.subr.mxu0 0.0
  %v1000 = vand.u32 %v13, 4294901760
  %v1001 = vsub.f32 %v13, %v1000
  %1002 = vmatpush1.msra.mxu0 %v1001
  %1003 = vmatprep.subr.mxu0 0.0
  %v1004 = vand.u32 %v14, 4294901760
  %v1005 = vsub.f32 %v14, %v1004
  %1006 = vmatpush1.msra.mxu0 %v1005
  %1007 = vmatprep.subr.mxu0 0.0
  %1008 = vmatpush1.msra.mxu0 0.0
  %1009 = vmatprep.subr.mxu0 0.0
  %1010 = vmatpush1.msra.mxu0 0.0
  %1011 = vmatprep.subr.mxu0 0.0
  %1012 = vmatpush1.msra.mxu0 0.0
  %1013 = vmatprep.subr.mxu0 0.0
  %1014 = vmatpush1.msra.mxu0 0.0
  %1015 = vmatprep.subr.mxu0 0.0
  %1016 = vmatpush1.msra.mxu0 0.0
  %1017 = vmatprep.subr.mxu0 0.0
  %1018 = vmatpush1.msra.mxu0 0.0
  %1019 = vmatprep.subr.mxu0 0.0
  %1020 = vmatpush1.msra.mxu0 0.0
  %1021 = vmatprep.subr.mxu0 0.0
  %1022 = vmatpush1.msra.mxu0 0.0
  %1023 = vmatprep.subr.mxu0 0.0
  %1024 = vmatpush1.msra.mxu0 0.0
  %1025 = vmatprep.subr.mxu0 0.0
  %1026 = vmatpush1.msra.mxu0 0.0
  %1027 = vmatprep.subr.mxu0 0.0
  %1028 = vmatpush1.msra.mxu0 0.0
  %1029 = vmatprep.subr.mxu0 0.0
  %1030 = vmatpush1.msra.mxu0 0.0
  %1031 = vmatprep.subr.mxu0 0.0
  %1032 = vmatpush1.msra.mxu0 0.0
  %1033 = vmatprep.subr.mxu0 0.0
  %1034 = vmatpush1.msra.mxu0 0.0
  %1035 = vmatprep.subr.mxu0 0.0
  %1036 = vmatpush1.msra.mxu0 0.0
  %1037 = vmatprep.subr.mxu0 0.0
  %1038 = vmatpush1.msra.mxu0 0.0
  %1039 = vmatprep.subr.mxu0 0.0
  %1040 = vmatpush1.msra.mxu0 0.0
  %1041 = vmatprep.subr.mxu0 0.0
  %1042 = vmatpush1.msra.mxu0 0.0
  %1043 = vmatprep.subr.mxu0 0.0
  %1044 = vmatpush1.msra.mxu0 0.0
  %1045 = vmatprep.subr.mxu0 0.0
  %1046 = vmatpush1.msra.mxu0 0.0
  %1047 = vmatprep.subr.mxu0 0.0
  %1048 = vmatpush1.msra.mxu0 0.0
  %1049 = vmatprep.subr.mxu0 0.0
  %1050 = vmatpush1.msra.mxu0 0.0
  %1051 = vmatprep.subr.mxu0 0.0
  %1052 = vmatpush1.msra.mxu0 0.0
  %1053 = vmatprep.subr.mxu0 0.0
  %1054 = vmatpush1.msra.mxu0 0.0
  %1055 = vmatprep.subr.mxu0 0.0
  %1056 = vmatpush1.msra.mxu0 0.0
  %1057 = vmatprep.subr.mxu0 0.0
  %1058 = vmatpush1.msra.mxu0 0.0
  %1059 = vmatprep.subr.mxu0 0.0
  %1060 = vmatpush1.msra.mxu0 0.0
  %1061 = vmatprep.subr.mxu0 0.0
  %1062 = vmatpush1.msra.mxu0 0.0
  %1063 = vmatprep.mubr.f32.mxu0 0.0
  %v1064 = vand.u32 %v420, 4294901760
  %v1065 = vsub.f32 %v420, %v1064
  %1066 = vmatmul.mubr.f32.gmra.mrb[0].mxu0 %v1065
  %v1067 = vpop.f32.mrb[0].mxu0
  %v1068 = vadd.f32 %v862, %v1067
  %v1069 = vpop.f32.mrb[0].mxu0
  %1070 = vmatprep.mubr.f32.mxu0 0.0
  %v1071 = vand.u32 %v423, 4294901760
  %v1072 = vsub.f32 %v423, %v1071
  %1073 = vmatmul.mubr.f32.gmra.mrb[0].mxu0 %v1072
  %v1074 = vpop.f32.mrb[0].mxu0
  %v1075 = vadd.f32 %v868, %v1074
  %v1076 = vpop.f32.mrb[0].mxu0
  %1077 = vmatprep.mubr.f32.mxu0 0.0
  %v1078 = vand.u32 %v426, 4294901760
  %v1079 = vsub.f32 %v426, %v1078
  %1080 = vmatmul.mubr.f32.gmra.mrb[0].mxu0 %v1079
  %v1081 = vpop.f32.mrb[0].mxu0
  %v1082 = vadd.f32 %v874, %v1081
  %v1083 = vpop.f32.mrb[0].mxu0
  %1084 = vmatprep.mubr.f32.mxu0 0.0
  %v1085 = vand.u32 %v429, 4294901760
  %v1086 = vsub.f32 %v429, %v1085
  %1087 = vmatmul.mubr.f32.gmra.mrb[0].mxu0 %v1086
  %v1088 = vpop.f32.mrb[0].mxu0
  %v1089 = vadd.f32 %v880, %v1088
  %v1090 = vpop.f32.mrb[0].mxu0
  %1091 = vmatprep.mubr.f32.mxu0 0.0
  %v1092 = vand.u32 %v432, 4294901760
  %v1093 = vsub.f32 %v432, %v1092
  %1094 = vmatmul.mubr.f32.gmra.mrb[0].mxu0 %v1093
  %v1095 = vpop.f32.mrb[0].mxu0
  %v1096 = vadd.f32 %v886, %v1095
  %v1097 = vpop.f32.mrb[0].mxu0
  %1098 = vmatprep.mubr.f32.mxu0 0.0
  %v1099 = vand.u32 %v435, 4294901760
  %v1100 = vsub.f32 %v435, %v1099
  %1101 = vmatmul.mubr.f32.gmra.mrb[0].mxu0 %v1100
  %v1102 = vpop.f32.mrb[0].mxu0
  %v1103 = vadd.f32 %v892, %v1102
  %v1104 = vpop.f32.mrb[0].mxu0
  %1105 = vmatprep.mubr.f32.mxu0 0.0
  %v1106 = vand.u32 %v438, 4294901760
  %v1107 = vsub.f32 %v438, %v1106
  %1108 = vmatmul.mubr.f32.gmra.mrb[0].mxu0 %v1107
  %v1109 = vpop.f32.mrb[0].mxu0
  %v1110 = vadd.f32 %v898, %v1109
  %v1111 = vpop.f32.mrb[0].mxu0
  %1112 = vmatprep.mubr.f32.mxu0 0.0
  %v1113 = vand.u32 %v441, 4294901760
  %v1114 = vsub.f32 %v441, %v1113
  %1115 = vmatmul.mubr.f32.gmra.mrb[0].mxu0 %v1114
  %v1116 = vpop.f32.mrb[0].mxu0
  %v1117 = vadd.f32 %v904, %v1116
  %v1118 = vpop.f32.mrb[0].mxu0
  %1119 = vmatprep.mubr.f32.mxu0 0.0
  %v1120 = vand.u32 %v444, 4294901760
  %v1121 = vsub.f32 %v444, %v1120
  %1122 = vmatmul.mubr.f32.gmra.mrb[0].mxu0 %v1121
  %v1123 = vpop.f32.mrb[0].mxu0
  %v1124 = vadd.f32 %v910, %v1123
  %v1125 = vpop.f32.mrb[0].mxu0
  %1126 = vmatprep.mubr.f32.mxu0 0.0
  %v1127 = vand.u32 %v447, 4294901760
  %v1128 = vsub.f32 %v447, %v1127
  %1129 = vmatmul.mubr.f32.gmra.mrb[0].mxu0 %v1128
  %v1130 = vpop.f32.mrb[0].mxu0
  %v1131 = vadd.f32 %v916, %v1130
  %v1132 = vpop.f32.mrb[0].mxu0
  %1133 = vmatprep.mubr.f32.mxu0 0.0
  %v1134 = vand.u32 %v450, 4294901760
  %v1135 = vsub.f32 %v450, %v1134
  %1136 = vmatmul.mubr.f32.gmra.mrb[0].mxu0 %v1135
  %v1137 = vpop.f32.mrb[0].mxu0
  %v1138 = vadd.f32 %v922, %v1137
  %v1139 = vpop.f32.mrb[0].mxu0
  %1140 = vmatprep.mubr.f32.mxu0 0.0
  %v1141 = vand.u32 %v453, 4294901760
  %v1142 = vsub.f32 %v453, %v1141
  %1143 = vmatmul.mubr.f32.gmra.mrb[0].mxu0 %v1142
  %v1144 = vpop.f32.mrb[0].mxu0
  %v1145 = vadd.f32 %v928, %v1144
  %v1146 = vpop.f32.mrb[0].mxu0
  %1147 = vmatprep.mubr.f32.mxu0 0.0
  %v1148 = vand.u32 %v456, 4294901760
  %v1149 = vsub.f32 %v456, %v1148
  %1150 = vmatmul.mubr.f32.gmra.mrb[0].mxu0 %v1149
  %v1151 = vpop.f32.mrb[0].mxu0
  %v1152 = vadd.f32 %v934, %v1151
  %v1153 = vpop.f32.mrb[0].mxu0
  %1154 = vmatprep.mubr.f32.mxu0 0.0
  %v1155 = vand.u32 %v459, 4294901760
  %v1156 = vsub.f32 %v459, %v1155
  %1157 = vmatmul.mubr.f32.gmra.mrb[0].mxu0 %v1156
  %v1158 = vpop.f32.mrb[0].mxu0
  %v1159 = vadd.f32 %v940, %v1158
  %v1160 = vpop.f32.mrb[0].mxu0
  %1161 = vmatprep.mubr.f32.mxu0 0.0
  %v1162 = vand.u32 %v462, 4294901760
  %v1163 = vsub.f32 %v462, %v1162
  %1164 = vmatmul.mubr.f32.gmra.mrb[0].mxu0 %v1163
  %v1165 = vpop.f32.mrb[0].mxu0
  %v1166 = vadd.f32 %v946, %v1165
  %v1167 = vpop.f32.mrb[0].mxu0
  %1168 = vmatprep.mubr.f32.mxu0 0.0
  %v1169 = vand.u32 %v465, 4294901760
  %v1170 = vsub.f32 %v465, %v1169
  %1171 = vmatmul.mubr.f32.gmra.mrb[0].mxu0 %v1170
  %v1172 = vpop.f32.mrb[0].mxu0
  %v1173 = vadd.f32 %v952, %v1172
  %v1174 = vpop.f32.mrb[0].mxu0
  %1175 = vmatprep.mubr.f32.mxu0 0.0
  %v1176 = vand.u32 %v468, 4294901760
  %v1177 = vsub.f32 %v468, %v1176
  %1178 = vmatmul.mubr.f32.gmra.mrb[0].mxu0 %v1177
  %v1179 = vpop.f32.mrb[0].mxu0
  %v1180 = vadd.f32 %v958, %v1179
  %v1181 = vpop.f32.mrb[0].mxu0
  %1182 = vmatprep.mubr.f32.mxu0 0.0
  %v1183 = vand.u32 %v471, 4294901760
  %v1184 = vsub.f32 %v471, %v1183
  %1185 = vmatmul.mubr.f32.gmra.mrb[0].mxu0 %v1184
  %v1186 = vpop.f32.mrb[0].mxu0
  %v1187 = vadd.f32 %v964, %v1186
  %v1188 = vpop.f32.mrb[0].mxu0
  %1189 = vmatprep.mubr.f32.mxu0 0.0
  %v1190 = vand.u32 %v474, 4294901760
  %v1191 = vsub.f32 %v474, %v1190
  %1192 = vmatmul.mubr.f32.gmra.mrb[0].mxu0 %v1191
  %v1193 = vpop.f32.mrb[0].mxu0
  %v1194 = vadd.f32 %v970, %v1193
  %v1195 = vpop.f32.mrb[0].mxu0
  %1196 = vmatprep.mubr.f32.mxu0 0.0
  %v1197 = vand.u32 %v477, 4294901760
  %v1198 = vsub.f32 %v477, %v1197
  %1199 = vmatmul.mubr.f32.gmra.mrb[0].mxu0 %v1198
  %v1200 = vpop.f32.mrb[0].mxu0
  %v1201 = vadd.f32 %v976, %v1200
  %v1202 = vpop.f32.mrb[0].mxu0
  %1203 = vmatprep.mubr.f32.mxu0 0.0
  %v1204 = vand.u32 %v480, 4294901760
  %v1205 = vsub.f32 %v480, %v1204
  %1206 = vmatmul.mubr.f32.gmra.mrb[0].mxu0 %v1205
  %v1207 = vpop.f32.mrb[0].mxu0
  %v1208 = vadd.f32 %v982, %v1207
  %v1209 = vpop.f32.mrb[0].mxu0
  %1210 = vmatprep.mubr.f32.mxu0 0.0
  %v1211 = vand.u32 %v483, 4294901760
  %v1212 = vsub.f32 %v483, %v1211
  %1213 = vmatmul.mubr.f32.gmra.mrb[0].mxu0 %v1212
  %v1214 = vpop.f32.mrb[0].mxu0
  %v1215 = vadd.f32 %v988, %v1214
  %v1216 = vpop.f32.mrb[0].mxu0
  %1217 = vdwg.mxu0
  %1218 = vmatprep.subr.mxu0 0.0
  %v1219 = vand.u32 %v11, 4294901760
  %1220 = vmatpush1.msra.mxu0 %v1219
  %1221 = vmatprep.subr.mxu0 0.0
  %v1222 = vand.u32 %v12, 4294901760
  %1223 = vmatpush1.msra.mxu0 %v1222
  %1224 = vmatprep.subr.mxu0 0.0
  %v1225 = vand.u32 %v13, 4294901760
  %1226 = vmatpush1.msra.mxu0 %v1225
  %1227 = vmatprep.subr.mxu0 0.0
  %v1228 = vand.u32 %v14, 4294901760
  %1229 = vmatpush1.msra.mxu0 %v1228
  %1230 = vmatprep.subr.mxu0 0.0
  %1231 = vmatpush1.msra.mxu0 0.0
  %1232 = vmatprep.subr.mxu0 0.0
  %1233 = vmatpush1.msra.mxu0 0.0
  %1234 = vmatprep.subr.mxu0 0.0
  %1235 = vmatpush1.msra.mxu0 0.0
  %1236 = vmatprep.subr.mxu0 0.0
  %1237 = vmatpush1.msra.mxu0 0.0
  %1238 = vmatprep.subr.mxu0 0.0
  %1239 = vmatpush1.msra.mxu0 0.0
  %1240 = vmatprep.subr.mxu0 0.0
  %1241 = vmatpush1.msra.mxu0 0.0
  %1242 = vmatprep.subr.mxu0 0.0
  %1243 = vmatpush1.msra.mxu0 0.0
  %1244 = vmatprep.subr.mxu0 0.0
  %1245 = vmatpush1.msra.mxu0 0.0
  %1246 = vmatprep.subr.mxu0 0.0
  %1247 = vmatpush1.msra.mxu0 0.0
  %1248 = vmatprep.subr.mxu0 0.0
  %1249 = vmatpush1.msra.mxu0 0.0
  %1250 = vmatprep.subr.mxu0 0.0
  %1251 = vmatpush1.msra.mxu0 0.0
  %1252 = vmatprep.subr.mxu0 0.0
  %1253 = vmatpush1.msra.mxu0 0.0
  %1254 = vmatprep.subr.mxu0 0.0
  %1255 = vmatpush1.msra.mxu0 0.0
  %1256 = vmatprep.subr.mxu0 0.0
  %1257 = vmatpush1.msra.mxu0 0.0
  %1258 = vmatprep.subr.mxu0 0.0
  %1259 = vmatpush1.msra.mxu0 0.0
  %1260 = vmatprep.subr.mxu0 0.0
  %1261 = vmatpush1.msra.mxu0 0.0
  %1262 = vmatprep.subr.mxu0 0.0
  %1263 = vmatpush1.msra.mxu0 0.0
  %1264 = vmatprep.subr.mxu0 0.0
  %1265 = vmatpush1.msra.mxu0 0.0
  %1266 = vmatprep.subr.mxu0 0.0
  %1267 = vmatpush1.msra.mxu0 0.0
  %1268 = vmatprep.subr.mxu0 0.0
  %1269 = vmatpush1.msra.mxu0 0.0
  %1270 = vmatprep.subr.mxu0 0.0
  %1271 = vmatpush1.msra.mxu0 0.0
  %1272 = vmatprep.subr.mxu0 0.0
  %1273 = vmatpush1.msra.mxu0 0.0
  %1274 = vmatprep.subr.mxu0 0.0
  %1275 = vmatpush1.msra.mxu0 0.0
  %1276 = vmatprep.subr.mxu0 0.0
  %1277 = vmatpush1.msra.mxu0 0.0
  %1278 = vmatprep.subr.mxu0 0.0
  %1279 = vmatpush1.msra.mxu0 0.0
  %1280 = vmatprep.subr.mxu0 0.0
  %1281 = vmatpush1.msra.mxu0 0.0
  %1282 = vmatprep.subr.mxu0 0.0
  %1283 = vmatpush1.msra.mxu0 0.0
  %1284 = vmatprep.subr.mxu0 0.0
  %1285 = vmatpush1.msra.mxu0 0.0
  %1286 = vmatprep.mubr.f32.mxu0 0.0
  %v1287 = vand.u32 %v420, 4294901760
  %v1288 = vsub.f32 %v420, %v1287
  %v1289 = vand.u32 %v1288, 4294901760
  %1290 = vmatmul.mubr.f32.gmra.mrb[0].mxu0 %v1289
  %v1291 = vpop.f32.mrb[0].mxu0
  %v1292 = vadd.f32 %v1068, %v1291
  %v1293 = vpop.f32.mrb[0].mxu0
  %1294 = vmatprep.mubr.f32.mxu0 0.0
  %v1295 = vand.u32 %v423, 4294901760
  %v1296 = vsub.f32 %v423, %v1295
  %v1297 = vand.u32 %v1296, 4294901760
  %1298 = vmatmul.mubr.f32.gmra.mrb[0].mxu0 %v1297
  %v1299 = vpop.f32.mrb[0].mxu0
  %v1300 = vadd.f32 %v1075, %v1299
  %v1301 = vpop.f32.mrb[0].mxu0
  %1302 = vmatprep.mubr.f32.mxu0 0.0
  %v1303 = vand.u32 %v426, 4294901760
  %v1304 = vsub.f32 %v426, %v1303
  %v1305 = vand.u32 %v1304, 4294901760
  %1306 = vmatmul.mubr.f32.gmra.mrb[0].mxu0 %v1305
  %v1307 = vpop.f32.mrb[0].mxu0
  %v1308 = vadd.f32 %v1082, %v1307
  %v1309 = vpop.f32.mrb[0].mxu0
  %1310 = vmatprep.mubr.f32.mxu0 0.0
  %v1311 = vand.u32 %v429, 4294901760
  %v1312 = vsub.f32 %v429, %v1311
  %v1313 = vand.u32 %v1312, 4294901760
  %1314 = vmatmul.mubr.f32.gmra.mrb[0].mxu0 %v1313
  %v1315 = vpop.f32.mrb[0].mxu0
  %v1316 = vadd.f32 %v1089, %v1315
  %v1317 = vpop.f32.mrb[0].mxu0
  %1318 = vmatprep.mubr.f32.mxu0 0.0
  %v1319 = vand.u32 %v432, 4294901760
  %v1320 = vsub.f32 %v432, %v1319
  %v1321 = vand.u32 %v1320, 4294901760
  %1322 = vmatmul.mubr.f32.gmra.mrb[0].mxu0 %v1321
  %v1323 = vpop.f32.mrb[0].mxu0
  %v1324 = vadd.f32 %v1096, %v1323
  %v1325 = vpop.f32.mrb[0].mxu0
  %1326 = vmatprep.mubr.f32.mxu0 0.0
  %v1327 = vand.u32 %v435, 4294901760
  %v1328 = vsub.f32 %v435, %v1327
  %v1329 = vand.u32 %v1328, 4294901760
  %1330 = vmatmul.mubr.f32.gmra.mrb[0].mxu0 %v1329
  %v1331 = vpop.f32.mrb[0].mxu0
  %v1332 = vadd.f32 %v1103, %v1331
  %v1333 = vpop.f32.mrb[0].mxu0
  %1334 = vmatprep.mubr.f32.mxu0 0.0
  %v1335 = vand.u32 %v438, 4294901760
  %v1336 = vsub.f32 %v438, %v1335
  %v1337 = vand.u32 %v1336, 4294901760
  %1338 = vmatmul.mubr.f32.gmra.mrb[0].mxu0 %v1337
  %v1339 = vpop.f32.mrb[0].mxu0
  %v1340 = vadd.f32 %v1110, %v1339
  %v1341 = vpop.f32.mrb[0].mxu0
  %1342 = vmatprep.mubr.f32.mxu0 0.0
  %v1343 = vand.u32 %v441, 4294901760
  %v1344 = vsub.f32 %v441, %v1343
  %v1345 = vand.u32 %v1344, 4294901760
  %1346 = vmatmul.mubr.f32.gmra.mrb[0].mxu0 %v1345
  %v1347 = vpop.f32.mrb[0].mxu0
  %v1348 = vadd.f32 %v1117, %v1347
  %v1349 = vpop.f32.mrb[0].mxu0
  %1350 = vmatprep.mubr.f32.mxu0 0.0
  %v1351 = vand.u32 %v444, 4294901760
  %v1352 = vsub.f32 %v444, %v1351
  %v1353 = vand.u32 %v1352, 4294901760
  %1354 = vmatmul.mubr.f32.gmra.mrb[0].mxu0 %v1353
  %v1355 = vpop.f32.mrb[0].mxu0
  %v1356 = vadd.f32 %v1124, %v1355
  %v1357 = vpop.f32.mrb[0].mxu0
  %1358 = vmatprep.mubr.f32.mxu0 0.0
  %v1359 = vand.u32 %v447, 4294901760
  %v1360 = vsub.f32 %v447, %v1359
  %v1361 = vand.u32 %v1360, 4294901760
  %1362 = vmatmul.mubr.f32.gmra.mrb[0].mxu0 %v1361
  %v1363 = vpop.f32.mrb[0].mxu0
  %v1364 = vadd.f32 %v1131, %v1363
  %v1365 = vpop.f32.mrb[0].mxu0
  %1366 = vmatprep.mubr.f32.mxu0 0.0
  %v1367 = vand.u32 %v450, 4294901760
  %v1368 = vsub.f32 %v450, %v1367
  %v1369 = vand.u32 %v1368, 4294901760
  %1370 = vmatmul.mubr.f32.gmra.mrb[0].mxu0 %v1369
  %v1371 = vpop.f32.mrb[0].mxu0
  %v1372 = vadd.f32 %v1138, %v1371
  %v1373 = vpop.f32.mrb[0].mxu0
  %1374 = vmatprep.mubr.f32.mxu0 0.0
  %v1375 = vand.u32 %v453, 4294901760
  %v1376 = vsub.f32 %v453, %v1375
  %v1377 = vand.u32 %v1376, 4294901760
  %1378 = vmatmul.mubr.f32.gmra.mrb[0].mxu0 %v1377
  %v1379 = vpop.f32.mrb[0].mxu0
  %v1380 = vadd.f32 %v1145, %v1379
  %v1381 = vpop.f32.mrb[0].mxu0
  %1382 = vmatprep.mubr.f32.mxu0 0.0
  %v1383 = vand.u32 %v456, 4294901760
  %v1384 = vsub.f32 %v456, %v1383
  %v1385 = vand.u32 %v1384, 4294901760
  %1386 = vmatmul.mubr.f32.gmra.mrb[0].mxu0 %v1385
  %v1387 = vpop.f32.mrb[0].mxu0
  %v1388 = vadd.f32 %v1152, %v1387
  %v1389 = vpop.f32.mrb[0].mxu0
  %1390 = vmatprep.mubr.f32.mxu0 0.0
  %v1391 = vand.u32 %v459, 4294901760
  %v1392 = vsub.f32 %v459, %v1391
  %v1393 = vand.u32 %v1392, 4294901760
  %1394 = vmatmul.mubr.f32.gmra.mrb[0].mxu0 %v1393
  %v1395 = vpop.f32.mrb[0].mxu0
  %v1396 = vadd.f32 %v1159, %v1395
  %v1397 = vpop.f32.mrb[0].mxu0
  %1398 = vmatprep.mubr.f32.mxu0 0.0
  %v1399 = vand.u32 %v462, 4294901760
  %v1400 = vsub.f32 %v462, %v1399
  %v1401 = vand.u32 %v1400, 4294901760
  %1402 = vmatmul.mubr.f32.gmra.mrb[0].mxu0 %v1401
  %v1403 = vpop.f32.mrb[0].mxu0
  %v1404 = vadd.f32 %v1166, %v1403
  %v1405 = vpop.f32.mrb[0].mxu0
  %1406 = vmatprep.mubr.f32.mxu0 0.0
  %v1407 = vand.u32 %v465, 4294901760
  %v1408 = vsub.f32 %v465, %v1407
  %v1409 = vand.u32 %v1408, 4294901760
  %1410 = vmatmul.mubr.f32.gmra.mrb[0].mxu0 %v1409
  %v1411 = vpop.f32.mrb[0].mxu0
  %v1412 = vadd.f32 %v1173, %v1411
  %v1413 = vpop.f32.mrb[0].mxu0
  %1414 = vmatprep.mubr.f32.mxu0 0.0
  %v1415 = vand.u32 %v468, 4294901760
  %v1416 = vsub.f32 %v468, %v1415
  %v1417 = vand.u32 %v1416, 4294901760
  %1418 = vmatmul.mubr.f32.gmra.mrb[0].mxu0 %v1417
  %v1419 = vpop.f32.mrb[0].mxu0
  %v1420 = vadd.f32 %v1180, %v1419
  %v1421 = vpop.f32.mrb[0].mxu0
  %1422 = vmatprep.mubr.f32.mxu0 0.0
  %v1423 = vand.u32 %v471, 4294901760
  %v1424 = vsub.f32 %v471, %v1423
  %v1425 = vand.u32 %v1424, 4294901760
  %1426 = vmatmul.mubr.f32.gmra.mrb[0].mxu0 %v1425
  %v1427 = vpop.f32.mrb[0].mxu0
  %v1428 = vadd.f32 %v1187, %v1427
  %v1429 = vpop.f32.mrb[0].mxu0
  %1430 = vmatprep.mubr.f32.mxu0 0.0
  %v1431 = vand.u32 %v474, 4294901760
  %v1432 = vsub.f32 %v474, %v1431
  %v1433 = vand.u32 %v1432, 4294901760
  %1434 = vmatmul.mubr.f32.gmra.mrb[0].mxu0 %v1433
  %v1435 = vpop.f32.mrb[0].mxu0
  %v1436 = vadd.f32 %v1194, %v1435
  %v1437 = vpop.f32.mrb[0].mxu0
  %1438 = vmatprep.mubr.f32.mxu0 0.0
  %v1439 = vand.u32 %v477, 4294901760
  %v1440 = vsub.f32 %v477, %v1439
  %v1441 = vand.u32 %v1440, 4294901760
  %1442 = vmatmul.mubr.f32.gmra.mrb[0].mxu0 %v1441
  %v1443 = vpop.f32.mrb[0].mxu0
  %v1444 = vadd.f32 %v1201, %v1443
  %v1445 = vpop.f32.mrb[0].mxu0
  %1446 = vmatprep.mubr.f32.mxu0 0.0
  %v1447 = vand.u32 %v480, 4294901760
  %v1448 = vsub.f32 %v480, %v1447
  %v1449 = vand.u32 %v1448, 4294901760
  %1450 = vmatmul.mubr.f32.gmra.mrb[0].mxu0 %v1449
  %v1451 = vpop.f32.mrb[0].mxu0
  %v1452 = vadd.f32 %v1208, %v1451
  %v1453 = vpop.f32.mrb[0].mxu0
  %1454 = vmatprep.mubr.f32.mxu0 0.0
  %v1455 = vand.u32 %v483, 4294901760
  %v1456 = vsub.f32 %v483, %v1455
  %v1457 = vand.u32 %v1456, 4294901760
  %1458 = vmatmul.mubr.f32.gmra.mrb[0].mxu0 %v1457
  %v1459 = vpop.f32.mrb[0].mxu0
  %v1460 = vadd.f32 %v1215, %v1459
  %v1461 = vpop.f32.mrb[0].mxu0
  %1462 = vdwg.mxu0
  %1463 = vmatprep.subr.mxu0 0.0
  %v1464 = vand.u32 %v11, 4294901760
  %v1465 = vsub.f32 %v11, %v1464
  %v1466 = vand.u32 %v1465, 4294901760
  %1467 = vmatpush1.msra.mxu0 %v1466
  %1468 = vmatprep.subr.mxu0 0.0
  %v1469 = vand.u32 %v12, 4294901760
  %v1470 = vsub.f32 %v12, %v1469
  %v1471 = vand.u32 %v1470, 4294901760
  %1472 = vmatpush1.msra.mxu0 %v1471
  %1473 = vmatprep.subr.mxu0 0.0
  %v1474 = vand.u32 %v13, 4294901760
  %v1475 = vsub.f32 %v13, %v1474
  %v1476 = vand.u32 %v1475, 4294901760
  %1477 = vmatpush1.msra.mxu0 %v1476
  %1478 = vmatprep.subr.mxu0 0.0
  %v1479 = vand.u32 %v14, 4294901760
  %v1480 = vsub.f32 %v14, %v1479
  %v1481 = vand.u32 %v1480, 4294901760
  %1482 = vmatpush1.msra.mxu0 %v1481
  %1483 = vmatprep.subr.mxu0 0.0
  %1484 = vmatpush1.msra.mxu0 0.0
  %1485 = vmatprep.subr.mxu0 0.0
  %1486 = vmatpush1.msra.mxu0 0.0
  %1487 = vmatprep.subr.mxu0 0.0
  %1488 = vmatpush1.msra.mxu0 0.0
  %1489 = vmatprep.subr.mxu0 0.0
  %1490 = vmatpush1.msra.mxu0 0.0
  %1491 = vmatprep.subr.mxu0 0.0
  %1492 = vmatpush1.msra.mxu0 0.0
  %1493 = vmatprep.subr.mxu0 0.0
  %1494 = vmatpush1.msra.mxu0 0.0
  %1495 = vmatprep.subr.mxu0 0.0
  %1496 = vmatpush1.msra.mxu0 0.0
  %1497 = vmatprep.subr.mxu0 0.0
  %1498 = vmatpush1.msra.mxu0 0.0
  %1499 = vmatprep.subr.mxu0 0.0
  %1500 = vmatpush1.msra.mxu0 0.0
  %1501 = vmatprep.subr.mxu0 0.0
  %1502 = vmatpush1.msra.mxu0 0.0
  %1503 = vmatprep.subr.mxu0 0.0
  %1504 = vmatpush1.msra.mxu0 0.0
  %1505 = vmatprep.subr.mxu0 0.0
  %1506 = vmatpush1.msra.mxu0 0.0
  %1507 = vmatprep.subr.mxu0 0.0
  %1508 = vmatpush1.msra.mxu0 0.0
  %1509 = vmatprep.subr.mxu0 0.0
  %1510 = vmatpush1.msra.mxu0 0.0
  %1511 = vmatprep.subr.mxu0 0.0
  %1512 = vmatpush1.msra.mxu0 0.0
  %1513 = vmatprep.subr.mxu0 0.0
  %1514 = vmatpush1.msra.mxu0 0.0
  %1515 = vmatprep.subr.mxu0 0.0
  %1516 = vmatpush1.msra.mxu0 0.0
  %1517 = vmatprep.subr.mxu0 0.0
  %1518 = vmatpush1.msra.mxu0 0.0
  %1519 = vmatprep.subr.mxu0 0.0
  %1520 = vmatpush1.msra.mxu0 0.0
  %1521 = vmatprep.subr.mxu0 0.0
  %1522 = vmatpush1.msra.mxu0 0.0
  %1523 = vmatprep.subr.mxu0 0.0
  %1524 = vmatpush1.msra.mxu0 0.0
  %1525 = vmatprep.subr.mxu0 0.0
  %1526 = vmatpush1.msra.mxu0 0.0
  %1527 = vmatprep.subr.mxu0 0.0
  %1528 = vmatpush1.msra.mxu0 0.0
  %1529 = vmatprep.subr.mxu0 0.0
  %1530 = vmatpush1.msra.mxu0 0.0
  %1531 = vmatprep.subr.mxu0 0.0
  %1532 = vmatpush1.msra.mxu0 0.0
  %1533 = vmatprep.subr.mxu0 0.0
  %1534 = vmatpush1.msra.mxu0 0.0
  %1535 = vmatprep.subr.mxu0 0.0
  %1536 = vmatpush1.msra.mxu0 0.0
  %1537 = vmatprep.subr.mxu0 0.0
  %1538 = vmatpush1.msra.mxu0 0.0
  %1539 = vmatprep.mubr.f32.mxu0 0.0
  %v1540 = vand.u32 %v420, 4294901760
  %1541 = vmatmul.mubr.f32.gmra.mrb[0].mxu0 %v1540
  %v1542 = vpop.f32.mrb[0].mxu0
  %v1543 = vadd.f32 %v1292, %v1542
  %v1544 = vpop.f32.mrb[0].mxu0
  %1545 = vmatprep.mubr.f32.mxu0 0.0
  %v1546 = vand.u32 %v423, 4294901760
  %1547 = vmatmul.mubr.f32.gmra.mrb[0].mxu0 %v1546
  %v1548 = vpop.f32.mrb[0].mxu0
  %v1549 = vadd.f32 %v1300, %v1548
  %v1550 = vpop.f32.mrb[0].mxu0
  %1551 = vmatprep.mubr.f32.mxu0 0.0
  %v1552 = vand.u32 %v426, 4294901760
  %1553 = vmatmul.mubr.f32.gmra.mrb[0].mxu0 %v1552
  %v1554 = vpop.f32.mrb[0].mxu0
  %v1555 = vadd.f32 %v1308, %v1554
  %v1556 = vpop.f32.mrb[0].mxu0
  %1557 = vmatprep.mubr.f32.mxu0 0.0
  %v1558 = vand.u32 %v429, 4294901760
  %1559 = vmatmul.mubr.f32.gmra.mrb[0].mxu0 %v1558
  %v1560 = vpop.f32.mrb[0].mxu0
  %v1561 = vadd.f32 %v1316, %v1560
  %v1562 = vpop.f32.mrb[0].mxu0
  %1563 = vmatprep.mubr.f32.mxu0 0.0
  %v1564 = vand.u32 %v432, 4294901760
  %1565 = vmatmul.mubr.f32.gmra.mrb[0].mxu0 %v1564
  %v1566 = vpop.f32.mrb[0].mxu0
  %v1567 = vadd.f32 %v1324, %v1566
  %v1568 = vpop.f32.mrb[0].mxu0
  %1569 = vmatprep.mubr.f32.mxu0 0.0
  %v1570 = vand.u32 %v435, 4294901760
  %1571 = vmatmul.mubr.f32.gmra.mrb[0].mxu0 %v1570
  %v1572 = vpop.f32.mrb[0].mxu0
  %v1573 = vadd.f32 %v1332, %v1572
  %v1574 = vpop.f32.mrb[0].mxu0
  %1575 = vmatprep.mubr.f32.mxu0 0.0
  %v1576 = vand.u32 %v438, 4294901760
  %1577 = vmatmul.mubr.f32.gmra.mrb[0].mxu0 %v1576
  %v1578 = vpop.f32.mrb[0].mxu0
  %v1579 = vadd.f32 %v1340, %v1578
  %v1580 = vpop.f32.mrb[0].mxu0
  %1581 = vmatprep.mubr.f32.mxu0 0.0
  %v1582 = vand.u32 %v441, 4294901760
  %1583 = vmatmul.mubr.f32.gmra.mrb[0].mxu0 %v1582
  %v1584 = vpop.f32.mrb[0].mxu0
  %v1585 = vadd.f32 %v1348, %v1584
  %v1586 = vpop.f32.mrb[0].mxu0
  %1587 = vmatprep.mubr.f32.mxu0 0.0
  %v1588 = vand.u32 %v444, 4294901760
  %1589 = vmatmul.mubr.f32.gmra.mrb[0].mxu0 %v1588
  %v1590 = vpop.f32.mrb[0].mxu0
  %v1591 = vadd.f32 %v1356, %v1590
  %v1592 = vpop.f32.mrb[0].mxu0
  %1593 = vmatprep.mubr.f32.mxu0 0.0
  %v1594 = vand.u32 %v447, 4294901760
  %1595 = vmatmul.mubr.f32.gmra.mrb[0].mxu0 %v1594
  %v1596 = vpop.f32.mrb[0].mxu0
  %v1597 = vadd.f32 %v1364, %v1596
  %v1598 = vpop.f32.mrb[0].mxu0
  %1599 = vmatprep.mubr.f32.mxu0 0.0
  %v1600 = vand.u32 %v450, 4294901760
  %1601 = vmatmul.mubr.f32.gmra.mrb[0].mxu0 %v1600
  %v1602 = vpop.f32.mrb[0].mxu0
  %v1603 = vadd.f32 %v1372, %v1602
  %v1604 = vpop.f32.mrb[0].mxu0
  %1605 = vmatprep.mubr.f32.mxu0 0.0
  %v1606 = vand.u32 %v453, 4294901760
  %1607 = vmatmul.mubr.f32.gmra.mrb[0].mxu0 %v1606
  %v1608 = vpop.f32.mrb[0].mxu0
  %v1609 = vadd.f32 %v1380, %v1608
  %v1610 = vpop.f32.mrb[0].mxu0
  %1611 = vmatprep.mubr.f32.mxu0 0.0
  %v1612 = vand.u32 %v456, 4294901760
  %1613 = vmatmul.mubr.f32.gmra.mrb[0].mxu0 %v1612
  %v1614 = vpop.f32.mrb[0].mxu0
  %v1615 = vadd.f32 %v1388, %v1614
  %v1616 = vpop.f32.mrb[0].mxu0
  %1617 = vmatprep.mubr.f32.mxu0 0.0
  %v1618 = vand.u32 %v459, 4294901760
  %1619 = vmatmul.mubr.f32.gmra.mrb[0].mxu0 %v1618
  %v1620 = vpop.f32.mrb[0].mxu0
  %v1621 = vadd.f32 %v1396, %v1620
  %v1622 = vpop.f32.mrb[0].mxu0
  %1623 = vmatprep.mubr.f32.mxu0 0.0
  %v1624 = vand.u32 %v462, 4294901760
  %1625 = vmatmul.mubr.f32.gmra.mrb[0].mxu0 %v1624
  %v1626 = vpop.f32.mrb[0].mxu0
  %v1627 = vadd.f32 %v1404, %v1626
  %v1628 = vpop.f32.mrb[0].mxu0
  %1629 = vmatprep.mubr.f32.mxu0 0.0
  %v1630 = vand.u32 %v465, 4294901760
  %1631 = vmatmul.mubr.f32.gmra.mrb[0].mxu0 %v1630
  %v1632 = vpop.f32.mrb[0].mxu0
  %v1633 = vadd.f32 %v1412, %v1632
  %v1634 = vpop.f32.mrb[0].mxu0
  %1635 = vmatprep.mubr.f32.mxu0 0.0
  %v1636 = vand.u32 %v468, 4294901760
  %1637 = vmatmul.mubr.f32.gmra.mrb[0].mxu0 %v1636
  %v1638 = vpop.f32.mrb[0].mxu0
  %v1639 = vadd.f32 %v1420, %v1638
  %v1640 = vpop.f32.mrb[0].mxu0
  %1641 = vmatprep.mubr.f32.mxu0 0.0
  %v1642 = vand.u32 %v471, 4294901760
  %1643 = vmatmul.mubr.f32.gmra.mrb[0].mxu0 %v1642
  %v1644 = vpop.f32.mrb[0].mxu0
  %v1645 = vadd.f32 %v1428, %v1644
  %v1646 = vpop.f32.mrb[0].mxu0
  %1647 = vmatprep.mubr.f32.mxu0 0.0
  %v1648 = vand.u32 %v474, 4294901760
  %1649 = vmatmul.mubr.f32.gmra.mrb[0].mxu0 %v1648
  %v1650 = vpop.f32.mrb[0].mxu0
  %v1651 = vadd.f32 %v1436, %v1650
  %v1652 = vpop.f32.mrb[0].mxu0
  %1653 = vmatprep.mubr.f32.mxu0 0.0
  %v1654 = vand.u32 %v477, 4294901760
  %1655 = vmatmul.mubr.f32.gmra.mrb[0].mxu0 %v1654
  %v1656 = vpop.f32.mrb[0].mxu0
  %v1657 = vadd.f32 %v1444, %v1656
  %v1658 = vpop.f32.mrb[0].mxu0
  %1659 = vmatprep.mubr.f32.mxu0 0.0
  %v1660 = vand.u32 %v480, 4294901760
  %1661 = vmatmul.mubr.f32.gmra.mrb[0].mxu0 %v1660
  %v1662 = vpop.f32.mrb[0].mxu0
  %v1663 = vadd.f32 %v1452, %v1662
  %v1664 = vpop.f32.mrb[0].mxu0
  %1665 = vmatprep.mubr.f32.mxu0 0.0
  %v1666 = vand.u32 %v483, 4294901760
  %1667 = vmatmul.mubr.f32.gmra.mrb[0].mxu0 %v1666
  %v1668 = vpop.f32.mrb[0].mxu0
  %v1669 = vadd.f32 %v1460, %v1668
  %v1670 = vpop.f32.mrb[0].mxu0
  %1671 = vdwg.mxu0
  %1672 = vmatprep.subr.mxu0 0.0
  %v1673 = vand.u32 %v11, 4294901760
  %1674 = vmatpush1.msra.mxu0 %v1673
  %1675 = vmatprep.subr.mxu0 0.0
  %v1676 = vand.u32 %v12, 4294901760
  %1677 = vmatpush1.msra.mxu0 %v1676
  %1678 = vmatprep.subr.mxu0 0.0
  %v1679 = vand.u32 %v13, 4294901760
  %1680 = vmatpush1.msra.mxu0 %v1679
  %1681 = vmatprep.subr.mxu0 0.0
  %v1682 = vand.u32 %v14, 4294901760
  %1683 = vmatpush1.msra.mxu0 %v1682
  %1684 = vmatprep.subr.mxu0 0.0
  %1685 = vmatpush1.msra.mxu0 0.0
  %1686 = vmatprep.subr.mxu0 0.0
  %1687 = vmatpush1.msra.mxu0 0.0
  %1688 = vmatprep.subr.mxu0 0.0
  %1689 = vmatpush1.msra.mxu0 0.0
  %1690 = vmatprep.subr.mxu0 0.0
  %1691 = vmatpush1.msra.mxu0 0.0
  %1692 = vmatprep.subr.mxu0 0.0
  %1693 = vmatpush1.msra.mxu0 0.0
  %1694 = vmatprep.subr.mxu0 0.0
  %1695 = vmatpush1.msra.mxu0 0.0
  %1696 = vmatprep.subr.mxu0 0.0
  %1697 = vmatpush1.msra.mxu0 0.0
  %1698 = vmatprep.subr.mxu0 0.0
  %1699 = vmatpush1.msra.mxu0 0.0
  %1700 = vmatprep.subr.mxu0 0.0
  %1701 = vmatpush1.msra.mxu0 0.0
  %1702 = vmatprep.subr.mxu0 0.0
  %1703 = vmatpush1.msra.mxu0 0.0
  %1704 = vmatprep.subr.mxu0 0.0
  %1705 = vmatpush1.msra.mxu0 0.0
  %1706 = vmatprep.subr.mxu0 0.0
  %1707 = vmatpush1.msra.mxu0 0.0
  %1708 = vmatprep.subr.mxu0 0.0
  %1709 = vmatpush1.msra.mxu0 0.0
  %1710 = vmatprep.subr.mxu0 0.0
  %1711 = vmatpush1.msra.mxu0 0.0
  %1712 = vmatprep.subr.mxu0 0.0
  %1713 = vmatpush1.msra.mxu0 0.0
  %1714 = vmatprep.subr.mxu0 0.0
  %1715 = vmatpush1.msra.mxu0 0.0
  %1716 = vmatprep.subr.mxu0 0.0
  %1717 = vmatpush1.msra.mxu0 0.0
  %1718 = vmatprep.subr.mxu0 0.0
  %1719 = vmatpush1.msra.mxu0 0.0
  %1720 = vmatprep.subr.mxu0 0.0
  %1721 = vmatpush1.msra.mxu0 0.0
  %1722 = vmatprep.subr.mxu0 0.0
  %1723 = vmatpush1.msra.mxu0 0.0
  %1724 = vmatprep.subr.mxu0 0.0
  %1725 = vmatpush1.msra.mxu0 0.0
  %1726 = vmatprep.subr.mxu0 0.0
  %1727 = vmatpush1.msra.mxu0 0.0
  %1728 = vmatprep.subr.mxu0 0.0
  %1729 = vmatpush1.msra.mxu0 0.0
  %1730 = vmatprep.subr.mxu0 0.0
  %1731 = vmatpush1.msra.mxu0 0.0
  %1732 = vmatprep.subr.mxu0 0.0
  %1733 = vmatpush1.msra.mxu0 0.0
  %1734 = vmatprep.subr.mxu0 0.0
  %1735 = vmatpush1.msra.mxu0 0.0
  %1736 = vmatprep.subr.mxu0 0.0
  %1737 = vmatpush1.msra.mxu0 0.0
  %1738 = vmatprep.subr.mxu0 0.0
  %1739 = vmatpush1.msra.mxu0 0.0
  %1740 = vmatprep.mubr.f32.mxu0 0.0
  %v1741 = vand.u32 %v420, 4294901760
  %1742 = vmatmul.mubr.f32.gmra.mrb[0].mxu0 %v1741
  %v1743 = vpop.f32.mrb[0].mxu0
  %v1744 = vadd.f32 %v1543, %v1743
  %v1745 = vpop.f32.mrb[0].mxu0
  %1746 = vmatprep.mubr.f32.mxu0 0.0
  %v1747 = vand.u32 %v423, 4294901760
  %1748 = vmatmul.mubr.f32.gmra.mrb[0].mxu0 %v1747
  %v1749 = vpop.f32.mrb[0].mxu0
  %v1750 = vadd.f32 %v1549, %v1749
  %v1751 = vpop.f32.mrb[0].mxu0
  %1752 = vmatprep.mubr.f32.mxu0 0.0
  %v1753 = vand.u32 %v426, 4294901760
  %1754 = vmatmul.mubr.f32.gmra.mrb[0].mxu0 %v1753
  %v1755 = vpop.f32.mrb[0].mxu0
  %v1756 = vadd.f32 %v1555, %v1755
  %v1757 = vpop.f32.mrb[0].mxu0
  %1758 = vmatprep.mubr.f32.mxu0 0.0
  %v1759 = vand.u32 %v429, 4294901760
  %1760 = vmatmul.mubr.f32.gmra.mrb[0].mxu0 %v1759
  %v1761 = vpop.f32.mrb[0].mxu0
  %v1762 = vadd.f32 %v1561, %v1761
  %v1763 = vpop.f32.mrb[0].mxu0
  %1764 = vmatprep.mubr.f32.mxu0 0.0
  %v1765 = vand.u32 %v432, 4294901760
  %1766 = vmatmul.mubr.f32.gmra.mrb[0].mxu0 %v1765
  %v1767 = vpop.f32.mrb[0].mxu0
  %v1768 = vadd.f32 %v1567, %v1767
  %v1769 = vpop.f32.mrb[0].mxu0
  %1770 = vmatprep.mubr.f32.mxu0 0.0
  %v1771 = vand.u32 %v435, 4294901760
  %1772 = vmatmul.mubr.f32.gmra.mrb[0].mxu0 %v1771
  %v1773 = vpop.f32.mrb[0].mxu0
  %v1774 = vadd.f32 %v1573, %v1773
  %v1775 = vpop.f32.mrb[0].mxu0
  %1776 = vmatprep.mubr.f32.mxu0 0.0
  %v1777 = vand.u32 %v438, 4294901760
  %1778 = vmatmul.mubr.f32.gmra.mrb[0].mxu0 %v1777
  %v1779 = vpop.f32.mrb[0].mxu0
  %v1780 = vadd.f32 %v1579, %v1779
  %v1781 = vpop.f32.mrb[0].mxu0
  %1782 = vmatprep.mubr.f32.mxu0 0.0
  %v1783 = vand.u32 %v441, 4294901760
  %1784 = vmatmul.mubr.f32.gmra.mrb[0].mxu0 %v1783
  %v1785 = vpop.f32.mrb[0].mxu0
  %v1786 = vadd.f32 %v1585, %v1785
  %v1787 = vpop.f32.mrb[0].mxu0
  %1788 = vmatprep.mubr.f32.mxu0 0.0
  %v1789 = vand.u32 %v444, 4294901760
  %1790 = vmatmul.mubr.f32.gmra.mrb[0].mxu0 %v1789
  %v1791 = vpop.f32.mrb[0].mxu0
  %v1792 = vadd.f32 %v1591, %v1791
  %v1793 = vpop.f32.mrb[0].mxu0
  %1794 = vmatprep.mubr.f32.mxu0 0.0
  %v1795 = vand.u32 %v447, 4294901760
  %1796 = vmatmul.mubr.f32.gmra.mrb[0].mxu0 %v1795
  %v1797 = vpop.f32.mrb[0].mxu0
  %v1798 = vadd.f32 %v1597, %v1797
  %v1799 = vpop.f32.mrb[0].mxu0
  %1800 = vmatprep.mubr.f32.mxu0 0.0
  %v1801 = vand.u32 %v450, 4294901760
  %1802 = vmatmul.mubr.f32.gmra.mrb[0].mxu0 %v1801
  %v1803 = vpop.f32.mrb[0].mxu0
  %v1804 = vadd.f32 %v1603, %v1803
  %v1805 = vpop.f32.mrb[0].mxu0
  %1806 = vmatprep.mubr.f32.mxu0 0.0
  %v1807 = vand.u32 %v453, 4294901760
  %1808 = vmatmul.mubr.f32.gmra.mrb[0].mxu0 %v1807
  %v1809 = vpop.f32.mrb[0].mxu0
  %v1810 = vadd.f32 %v1609, %v1809
  %v1811 = vpop.f32.mrb[0].mxu0
  %1812 = vmatprep.mubr.f32.mxu0 0.0
  %v1813 = vand.u32 %v456, 4294901760
  %1814 = vmatmul.mubr.f32.gmra.mrb[0].mxu0 %v1813
  %v1815 = vpop.f32.mrb[0].mxu0
  %v1816 = vadd.f32 %v1615, %v1815
  %v1817 = vpop.f32.mrb[0].mxu0
  %1818 = vmatprep.mubr.f32.mxu0 0.0
  %v1819 = vand.u32 %v459, 4294901760
  %1820 = vmatmul.mubr.f32.gmra.mrb[0].mxu0 %v1819
  %v1821 = vpop.f32.mrb[0].mxu0
  %v1822 = vadd.f32 %v1621, %v1821
  %v1823 = vpop.f32.mrb[0].mxu0
  %1824 = vmatprep.mubr.f32.mxu0 0.0
  %v1825 = vand.u32 %v462, 4294901760
  %1826 = vmatmul.mubr.f32.gmra.mrb[0].mxu0 %v1825
  %v1827 = vpop.f32.mrb[0].mxu0
  %v1828 = vadd.f32 %v1627, %v1827
  %v1829 = vpop.f32.mrb[0].mxu0
  %1830 = vmatprep.mubr.f32.mxu0 0.0
  %v1831 = vand.u32 %v465, 4294901760
  %1832 = vmatmul.mubr.f32.gmra.mrb[0].mxu0 %v1831
  %v1833 = vpop.f32.mrb[0].mxu0
  %v1834 = vadd.f32 %v1633, %v1833
  %v1835 = vpop.f32.mrb[0].mxu0
  %1836 = vmatprep.mubr.f32.mxu0 0.0
  %v1837 = vand.u32 %v468, 4294901760
  %1838 = vmatmul.mubr.f32.gmra.mrb[0].mxu0 %v1837
  %v1839 = vpop.f32.mrb[0].mxu0
  %v1840 = vadd.f32 %v1639, %v1839
  %v1841 = vpop.f32.mrb[0].mxu0
  %1842 = vmatprep.mubr.f32.mxu0 0.0
  %v1843 = vand.u32 %v471, 4294901760
  %1844 = vmatmul.mubr.f32.gmra.mrb[0].mxu0 %v1843
  %v1845 = vpop.f32.mrb[0].mxu0
  %v1846 = vadd.f32 %v1645, %v1845
  %v1847 = vpop.f32.mrb[0].mxu0
  %1848 = vmatprep.mubr.f32.mxu0 0.0
  %v1849 = vand.u32 %v474, 4294901760
  %1850 = vmatmul.mubr.f32.gmra.mrb[0].mxu0 %v1849
  %v1851 = vpop.f32.mrb[0].mxu0
  %v1852 = vadd.f32 %v1651, %v1851
  %v1853 = vpop.f32.mrb[0].mxu0
  %1854 = vmatprep.mubr.f32.mxu0 0.0
  %v1855 = vand.u32 %v477, 4294901760
  %1856 = vmatmul.mubr.f32.gmra.mrb[0].mxu0 %v1855
  %v1857 = vpop.f32.mrb[0].mxu0
  %v1858 = vadd.f32 %v1657, %v1857
  %v1859 = vpop.f32.mrb[0].mxu0
  %1860 = vmatprep.mubr.f32.mxu0 0.0
  %v1861 = vand.u32 %v480, 4294901760
  %1862 = vmatmul.mubr.f32.gmra.mrb[0].mxu0 %v1861
  %v1863 = vpop.f32.mrb[0].mxu0
  %v1864 = vadd.f32 %v1663, %v1863
  %v1865 = vpop.f32.mrb[0].mxu0
  %1866 = vmatprep.mubr.f32.mxu0 0.0
  %v1867 = vand.u32 %v483, 4294901760
  %1868 = vmatmul.mubr.f32.gmra.mrb[0].mxu0 %v1867
  %v1869 = vpop.f32.mrb[0].mxu0
  %v1870 = vadd.f32 %v1669, %v1869
  %v1871 = vpop.f32.mrb[0].mxu0
  %1872 = vdwg.mxu0
  %v1873 = vmul.f32 %v1744, %v15
  %v1874 = vmul.f32 %v1750, %v16
  %v1875 = vmul.f32 %v1756, %v17
  %v1876 = vmul.f32 %v1762, %v18
  %v1877 = vmul.f32 %v1768, %v19
  %v1878 = vmul.f32 %v1774, %v20
  %v1879 = vmul.f32 %v1780, %v21
  %v1880 = vmul.f32 %v1786, %v22
  %v1881 = vmul.f32 %v1792, %v23
  %v1882 = vmul.f32 %v1798, %v24
  %vm1883 = vcmask 392192
  %v1885 = vsel %vm1883, %v1873, 0
  %v1888 = vsel %vm1883, %v1874, 0
  %v1891 = vsel %vm1883, %v1875, 0
  %v1894 = vsel %vm1883, %v1876, 0
  %v1897 = vsel %vm1883, %v1877, 0
  %v1900 = vsel %vm1883, %v1878, 0
  %v1903 = vsel %vm1883, %v1879, 0
  %v1906 = vsel %vm1883, %v1880, 0
  %v1909 = vsel %vm1883, %v1881, 0
  %v1912 = vsel %vm1883, %v1882, 0
  %1914 = vmatprep.subr.mxu0 0.0
  %v1915 = vand.u32 %v37, 4294901760
  %1916 = vmatpush1.msra.mxu0 %v1915
  %1917 = vmatprep.subr.mxu0 0.0
  %v1918 = vand.u32 %v38, 4294901760
  %1919 = vmatpush1.msra.mxu0 %v1918
  %1920 = vmatprep.subr.mxu0 0.0
  %v1921 = vand.u32 %v39, 4294901760
  %1922 = vmatpush1.msra.mxu0 %v1921
  %1923 = vmatprep.subr.mxu0 0.0
  %v1924 = vand.u32 %v40, 4294901760
  %1925 = vmatpush1.msra.mxu0 %v1924
  %1926 = vmatprep.subr.mxu0 0.0
  %v1927 = vand.u32 %v41, 4294901760
  %1928 = vmatpush1.msra.mxu0 %v1927
  %1929 = vmatprep.subr.mxu0 0.0
  %v1930 = vand.u32 %v42, 4294901760
  %1931 = vmatpush1.msra.mxu0 %v1930
  %1932 = vmatprep.subr.mxu0 0.0
  %1933 = vmatpush1.msra.mxu0 0.0
  %1934 = vmatprep.subr.mxu0 0.0
  %1935 = vmatpush1.msra.mxu0 0.0
  %1936 = vmatprep.subr.mxu0 0.0
  %1937 = vmatpush1.msra.mxu0 0.0
  %1938 = vmatprep.subr.mxu0 0.0
  %1939 = vmatpush1.msra.mxu0 0.0
  %1940 = vmatprep.subr.mxu0 0.0
  %1941 = vmatpush1.msra.mxu0 0.0
  %1942 = vmatprep.subr.mxu0 0.0
  %1943 = vmatpush1.msra.mxu0 0.0
  %1944 = vmatprep.subr.mxu0 0.0
  %1945 = vmatpush1.msra.mxu0 0.0
  %1946 = vmatprep.subr.mxu0 0.0
  %1947 = vmatpush1.msra.mxu0 0.0
  %1948 = vmatprep.subr.mxu0 0.0
  %1949 = vmatpush1.msra.mxu0 0.0
  %1950 = vmatprep.subr.mxu0 0.0
  %1951 = vmatpush1.msra.mxu0 0.0
  %1952 = vmatprep.subr.mxu0 0.0
  %1953 = vmatpush1.msra.mxu0 0.0
  %1954 = vmatprep.subr.mxu0 0.0
  %1955 = vmatpush1.msra.mxu0 0.0
  %1956 = vmatprep.subr.mxu0 0.0
  %1957 = vmatpush1.msra.mxu0 0.0
  %1958 = vmatprep.subr.mxu0 0.0
  %1959 = vmatpush1.msra.mxu0 0.0
  %1960 = vmatprep.subr.mxu0 0.0
  %1961 = vmatpush1.msra.mxu0 0.0
  %1962 = vmatprep.subr.mxu0 0.0
  %1963 = vmatpush1.msra.mxu0 0.0
  %1964 = vmatprep.subr.mxu0 0.0
  %1965 = vmatpush1.msra.mxu0 0.0
  %1966 = vmatprep.subr.mxu0 0.0
  %1967 = vmatpush1.msra.mxu0 0.0
  %1968 = vmatprep.subr.mxu0 0.0
  %1969 = vmatpush1.msra.mxu0 0.0
  %1970 = vmatprep.subr.mxu0 0.0
  %1971 = vmatpush1.msra.mxu0 0.0
  %1972 = vmatprep.subr.mxu0 0.0
  %1973 = vmatpush1.msra.mxu0 0.0
  %1974 = vmatprep.subr.mxu0 0.0
  %1975 = vmatpush1.msra.mxu0 0.0
  %1976 = vmatprep.subr.mxu0 0.0
  %1977 = vmatpush1.msra.mxu0 0.0
  %1978 = vmatprep.subr.mxu0 0.0
  %1979 = vmatpush1.msra.mxu0 0.0
  %1980 = vmatprep.subr.mxu0 0.0
  %1981 = vmatpush1.msra.mxu0 0.0
  %1982 = vmatprep.subr.mxu0 0.0
  %1983 = vmatpush1.msra.mxu0 0.0
  %1984 = vmatprep.mubr.f32.mxu0 0.0
  %v1985 = vand.u32 %v1885, 4294901760
  %v1986 = vsub.f32 %v1885, %v1985
  %v1987 = vand.u32 %v1986, 4294901760
  %v1988 = vsub.f32 %v1986, %v1987
  %v1989 = vand.u32 %v1988, 4294901760
  %1990 = vmatmul.mubr.f32.gmra.mrb[0].mxu0 %v1989
  %v1991 = vpop.f32.mrb[0].mxu0
  %v1992 = vadd.f32 0.0, %v1991
  %v1993 = vpop.f32.mrb[0].mxu0
  %1994 = vmatprep.mubr.f32.mxu0 0.0
  %v1995 = vand.u32 %v1888, 4294901760
  %v1996 = vsub.f32 %v1888, %v1995
  %v1997 = vand.u32 %v1996, 4294901760
  %v1998 = vsub.f32 %v1996, %v1997
  %v1999 = vand.u32 %v1998, 4294901760
  %2000 = vmatmul.mubr.f32.gmra.mrb[0].mxu0 %v1999
  %v2001 = vpop.f32.mrb[0].mxu0
  %v2002 = vadd.f32 0.0, %v2001
  %v2003 = vpop.f32.mrb[0].mxu0
  %2004 = vmatprep.mubr.f32.mxu0 0.0
  %v2005 = vand.u32 %v1891, 4294901760
  %v2006 = vsub.f32 %v1891, %v2005
  %v2007 = vand.u32 %v2006, 4294901760
  %v2008 = vsub.f32 %v2006, %v2007
  %v2009 = vand.u32 %v2008, 4294901760
  %2010 = vmatmul.mubr.f32.gmra.mrb[0].mxu0 %v2009
  %v2011 = vpop.f32.mrb[0].mxu0
  %v2012 = vadd.f32 0.0, %v2011
  %v2013 = vpop.f32.mrb[0].mxu0
  %2014 = vmatprep.mubr.f32.mxu0 0.0
  %v2015 = vand.u32 %v1894, 4294901760
  %v2016 = vsub.f32 %v1894, %v2015
  %v2017 = vand.u32 %v2016, 4294901760
  %v2018 = vsub.f32 %v2016, %v2017
  %v2019 = vand.u32 %v2018, 4294901760
  %2020 = vmatmul.mubr.f32.gmra.mrb[0].mxu0 %v2019
  %v2021 = vpop.f32.mrb[0].mxu0
  %v2022 = vadd.f32 0.0, %v2021
  %v2023 = vpop.f32.mrb[0].mxu0
  %2024 = vmatprep.mubr.f32.mxu0 0.0
  %v2025 = vand.u32 %v1897, 4294901760
  %v2026 = vsub.f32 %v1897, %v2025
  %v2027 = vand.u32 %v2026, 4294901760
  %v2028 = vsub.f32 %v2026, %v2027
  %v2029 = vand.u32 %v2028, 4294901760
  %2030 = vmatmul.mubr.f32.gmra.mrb[0].mxu0 %v2029
  %v2031 = vpop.f32.mrb[0].mxu0
  %v2032 = vadd.f32 0.0, %v2031
  %v2033 = vpop.f32.mrb[0].mxu0
  %2034 = vmatprep.mubr.f32.mxu0 0.0
  %v2035 = vand.u32 %v1900, 4294901760
  %v2036 = vsub.f32 %v1900, %v2035
  %v2037 = vand.u32 %v2036, 4294901760
  %v2038 = vsub.f32 %v2036, %v2037
  %v2039 = vand.u32 %v2038, 4294901760
  %2040 = vmatmul.mubr.f32.gmra.mrb[0].mxu0 %v2039
  %v2041 = vpop.f32.mrb[0].mxu0
  %v2042 = vadd.f32 0.0, %v2041
  %v2043 = vpop.f32.mrb[0].mxu0
  %2044 = vmatprep.mubr.f32.mxu0 0.0
  %v2045 = vand.u32 %v1903, 4294901760
  %v2046 = vsub.f32 %v1903, %v2045
  %v2047 = vand.u32 %v2046, 4294901760
  %v2048 = vsub.f32 %v2046, %v2047
  %v2049 = vand.u32 %v2048, 4294901760
  %2050 = vmatmul.mubr.f32.gmra.mrb[0].mxu0 %v2049
  %v2051 = vpop.f32.mrb[0].mxu0
  %v2052 = vadd.f32 0.0, %v2051
  %v2053 = vpop.f32.mrb[0].mxu0
  %2054 = vmatprep.mubr.f32.mxu0 0.0
  %v2055 = vand.u32 %v1906, 4294901760
  %v2056 = vsub.f32 %v1906, %v2055
  %v2057 = vand.u32 %v2056, 4294901760
  %v2058 = vsub.f32 %v2056, %v2057
  %v2059 = vand.u32 %v2058, 4294901760
  %2060 = vmatmul.mubr.f32.gmra.mrb[0].mxu0 %v2059
  %v2061 = vpop.f32.mrb[0].mxu0
  %v2062 = vadd.f32 0.0, %v2061
  %v2063 = vpop.f32.mrb[0].mxu0
  %2064 = vmatprep.mubr.f32.mxu0 0.0
  %v2065 = vand.u32 %v1909, 4294901760
  %v2066 = vsub.f32 %v1909, %v2065
  %v2067 = vand.u32 %v2066, 4294901760
  %v2068 = vsub.f32 %v2066, %v2067
  %v2069 = vand.u32 %v2068, 4294901760
  %2070 = vmatmul.mubr.f32.gmra.mrb[0].mxu0 %v2069
  %v2071 = vpop.f32.mrb[0].mxu0
  %v2072 = vadd.f32 0.0, %v2071
  %v2073 = vpop.f32.mrb[0].mxu0
  %2074 = vmatprep.mubr.f32.mxu0 0.0
  %v2075 = vand.u32 %v1912, 4294901760
  %v2076 = vsub.f32 %v1912, %v2075
  %v2077 = vand.u32 %v2076, 4294901760
  %v2078 = vsub.f32 %v2076, %v2077
  %v2079 = vand.u32 %v2078, 4294901760
  %2080 = vmatmul.mubr.f32.gmra.mrb[0].mxu0 %v2079
  %v2081 = vpop.f32.mrb[0].mxu0
  %v2082 = vadd.f32 0.0, %v2081
  %v2083 = vpop.f32.mrb[0].mxu0
  %2084 = vdwg.mxu0
  %2085 = vmatprep.subr.mxu0 0.0
  %v2086 = vand.u32 %v37, 4294901760
  %v2087 = vsub.f32 %v37, %v2086
  %v2088 = vand.u32 %v2087, 4294901760
  %v2089 = vsub.f32 %v2087, %v2088
  %v2090 = vand.u32 %v2089, 4294901760
  %2091 = vmatpush1.msra.mxu0 %v2090
  %2092 = vmatprep.subr.mxu0 0.0
  %v2093 = vand.u32 %v38, 4294901760
  %v2094 = vsub.f32 %v38, %v2093
  %v2095 = vand.u32 %v2094, 4294901760
  %v2096 = vsub.f32 %v2094, %v2095
  %v2097 = vand.u32 %v2096, 4294901760
  %2098 = vmatpush1.msra.mxu0 %v2097
  %2099 = vmatprep.subr.mxu0 0.0
  %v2100 = vand.u32 %v39, 4294901760
  %v2101 = vsub.f32 %v39, %v2100
  %v2102 = vand.u32 %v2101, 4294901760
  %v2103 = vsub.f32 %v2101, %v2102
  %v2104 = vand.u32 %v2103, 4294901760
  %2105 = vmatpush1.msra.mxu0 %v2104
  %2106 = vmatprep.subr.mxu0 0.0
  %v2107 = vand.u32 %v40, 4294901760
  %v2108 = vsub.f32 %v40, %v2107
  %v2109 = vand.u32 %v2108, 4294901760
  %v2110 = vsub.f32 %v2108, %v2109
  %v2111 = vand.u32 %v2110, 4294901760
  %2112 = vmatpush1.msra.mxu0 %v2111
  %2113 = vmatprep.subr.mxu0 0.0
  %v2114 = vand.u32 %v41, 4294901760
  %v2115 = vsub.f32 %v41, %v2114
  %v2116 = vand.u32 %v2115, 4294901760
  %v2117 = vsub.f32 %v2115, %v2116
  %v2118 = vand.u32 %v2117, 4294901760
  %2119 = vmatpush1.msra.mxu0 %v2118
  %2120 = vmatprep.subr.mxu0 0.0
  %v2121 = vand.u32 %v42, 4294901760
  %v2122 = vsub.f32 %v42, %v2121
  %v2123 = vand.u32 %v2122, 4294901760
  %v2124 = vsub.f32 %v2122, %v2123
  %v2125 = vand.u32 %v2124, 4294901760
  %2126 = vmatpush1.msra.mxu0 %v2125
  %2127 = vmatprep.subr.mxu0 0.0
  %2128 = vmatpush1.msra.mxu0 0.0
  %2129 = vmatprep.subr.mxu0 0.0
  %2130 = vmatpush1.msra.mxu0 0.0
  %2131 = vmatprep.subr.mxu0 0.0
  %2132 = vmatpush1.msra.mxu0 0.0
  %2133 = vmatprep.subr.mxu0 0.0
  %2134 = vmatpush1.msra.mxu0 0.0
  %2135 = vmatprep.subr.mxu0 0.0
  %2136 = vmatpush1.msra.mxu0 0.0
  %2137 = vmatprep.subr.mxu0 0.0
  %2138 = vmatpush1.msra.mxu0 0.0
  %2139 = vmatprep.subr.mxu0 0.0
  %2140 = vmatpush1.msra.mxu0 0.0
  %2141 = vmatprep.subr.mxu0 0.0
  %2142 = vmatpush1.msra.mxu0 0.0
  %2143 = vmatprep.subr.mxu0 0.0
  %2144 = vmatpush1.msra.mxu0 0.0
  %2145 = vmatprep.subr.mxu0 0.0
  %2146 = vmatpush1.msra.mxu0 0.0
  %2147 = vmatprep.subr.mxu0 0.0
  %2148 = vmatpush1.msra.mxu0 0.0
  %2149 = vmatprep.subr.mxu0 0.0
  %2150 = vmatpush1.msra.mxu0 0.0
  %2151 = vmatprep.subr.mxu0 0.0
  %2152 = vmatpush1.msra.mxu0 0.0
  %2153 = vmatprep.subr.mxu0 0.0
  %2154 = vmatpush1.msra.mxu0 0.0
  %2155 = vmatprep.subr.mxu0 0.0
  %2156 = vmatpush1.msra.mxu0 0.0
  %2157 = vmatprep.subr.mxu0 0.0
  %2158 = vmatpush1.msra.mxu0 0.0
  %2159 = vmatprep.subr.mxu0 0.0
  %2160 = vmatpush1.msra.mxu0 0.0
  %2161 = vmatprep.subr.mxu0 0.0
  %2162 = vmatpush1.msra.mxu0 0.0
  %2163 = vmatprep.subr.mxu0 0.0
  %2164 = vmatpush1.msra.mxu0 0.0
  %2165 = vmatprep.subr.mxu0 0.0
  %2166 = vmatpush1.msra.mxu0 0.0
  %2167 = vmatprep.subr.mxu0 0.0
  %2168 = vmatpush1.msra.mxu0 0.0
  %2169 = vmatprep.subr.mxu0 0.0
  %2170 = vmatpush1.msra.mxu0 0.0
  %2171 = vmatprep.subr.mxu0 0.0
  %2172 = vmatpush1.msra.mxu0 0.0
  %2173 = vmatprep.subr.mxu0 0.0
  %2174 = vmatpush1.msra.mxu0 0.0
  %2175 = vmatprep.subr.mxu0 0.0
  %2176 = vmatpush1.msra.mxu0 0.0
  %2177 = vmatprep.subr.mxu0 0.0
  %2178 = vmatpush1.msra.mxu0 0.0
  %2179 = vmatprep.mubr.f32.mxu0 0.0
  %v2180 = vand.u32 %v1885, 4294901760
  %2181 = vmatmul.mubr.f32.gmra.mrb[0].mxu0 %v2180
  %v2182 = vpop.f32.mrb[0].mxu0
  %v2183 = vadd.f32 %v1992, %v2182
  %v2184 = vpop.f32.mrb[0].mxu0
  %2185 = vmatprep.mubr.f32.mxu0 0.0
  %v2186 = vand.u32 %v1888, 4294901760
  %2187 = vmatmul.mubr.f32.gmra.mrb[0].mxu0 %v2186
  %v2188 = vpop.f32.mrb[0].mxu0
  %v2189 = vadd.f32 %v2002, %v2188
  %v2190 = vpop.f32.mrb[0].mxu0
  %2191 = vmatprep.mubr.f32.mxu0 0.0
  %v2192 = vand.u32 %v1891, 4294901760
  %2193 = vmatmul.mubr.f32.gmra.mrb[0].mxu0 %v2192
  %v2194 = vpop.f32.mrb[0].mxu0
  %v2195 = vadd.f32 %v2012, %v2194
  %v2196 = vpop.f32.mrb[0].mxu0
  %2197 = vmatprep.mubr.f32.mxu0 0.0
  %v2198 = vand.u32 %v1894, 4294901760
  %2199 = vmatmul.mubr.f32.gmra.mrb[0].mxu0 %v2198
  %v2200 = vpop.f32.mrb[0].mxu0
  %v2201 = vadd.f32 %v2022, %v2200
  %v2202 = vpop.f32.mrb[0].mxu0
  %2203 = vmatprep.mubr.f32.mxu0 0.0
  %v2204 = vand.u32 %v1897, 4294901760
  %2205 = vmatmul.mubr.f32.gmra.mrb[0].mxu0 %v2204
  %v2206 = vpop.f32.mrb[0].mxu0
  %v2207 = vadd.f32 %v2032, %v2206
  %v2208 = vpop.f32.mrb[0].mxu0
  %2209 = vmatprep.mubr.f32.mxu0 0.0
  %v2210 = vand.u32 %v1900, 4294901760
  %2211 = vmatmul.mubr.f32.gmra.mrb[0].mxu0 %v2210
  %v2212 = vpop.f32.mrb[0].mxu0
  %v2213 = vadd.f32 %v2042, %v2212
  %v2214 = vpop.f32.mrb[0].mxu0
  %2215 = vmatprep.mubr.f32.mxu0 0.0
  %v2216 = vand.u32 %v1903, 4294901760
  %2217 = vmatmul.mubr.f32.gmra.mrb[0].mxu0 %v2216
  %v2218 = vpop.f32.mrb[0].mxu0
  %v2219 = vadd.f32 %v2052, %v2218
  %v2220 = vpop.f32.mrb[0].mxu0
  %2221 = vmatprep.mubr.f32.mxu0 0.0
  %v2222 = vand.u32 %v1906, 4294901760
  %2223 = vmatmul.mubr.f32.gmra.mrb[0].mxu0 %v2222
  %v2224 = vpop.f32.mrb[0].mxu0
  %v2225 = vadd.f32 %v2062, %v2224
  %v2226 = vpop.f32.mrb[0].mxu0
  %2227 = vmatprep.mubr.f32.mxu0 0.0
  %v2228 = vand.u32 %v1909, 4294901760
  %2229 = vmatmul.mubr.f32.gmra.mrb[0].mxu0 %v2228
  %v2230 = vpop.f32.mrb[0].mxu0
  %v2231 = vadd.f32 %v2072, %v2230
  %v2232 = vpop.f32.mrb[0].mxu0
  %2233 = vmatprep.mubr.f32.mxu0 0.0
  %v2234 = vand.u32 %v1912, 4294901760
  %2235 = vmatmul.mubr.f32.gmra.mrb[0].mxu0 %v2234
  %v2236 = vpop.f32.mrb[0].mxu0
  %v2237 = vadd.f32 %v2082, %v2236
  %v2238 = vpop.f32.mrb[0].mxu0
  %2239 = vdwg.mxu0
  %2240 = vmatprep.subr.mxu0 0.0
  %v2241 = vand.u32 %v37, 4294901760
  %v2242 = vsub.f32 %v37, %v2241
  %2243 = vmatpush1.msra.mxu0 %v2242
  %2244 = vmatprep.subr.mxu0 0.0
  %v2245 = vand.u32 %v38, 4294901760
  %v2246 = vsub.f32 %v38, %v2245
  %2247 = vmatpush1.msra.mxu0 %v2246
  %2248 = vmatprep.subr.mxu0 0.0
  %v2249 = vand.u32 %v39, 4294901760
  %v2250 = vsub.f32 %v39, %v2249
  %2251 = vmatpush1.msra.mxu0 %v2250
  %2252 = vmatprep.subr.mxu0 0.0
  %v2253 = vand.u32 %v40, 4294901760
  %v2254 = vsub.f32 %v40, %v2253
  %2255 = vmatpush1.msra.mxu0 %v2254
  %2256 = vmatprep.subr.mxu0 0.0
  %v2257 = vand.u32 %v41, 4294901760
  %v2258 = vsub.f32 %v41, %v2257
  %2259 = vmatpush1.msra.mxu0 %v2258
  %2260 = vmatprep.subr.mxu0 0.0
  %v2261 = vand.u32 %v42, 4294901760
  %v2262 = vsub.f32 %v42, %v2261
  %2263 = vmatpush1.msra.mxu0 %v2262
  %2264 = vmatprep.subr.mxu0 0.0
  %2265 = vmatpush1.msra.mxu0 0.0
  %2266 = vmatprep.subr.mxu0 0.0
  %2267 = vmatpush1.msra.mxu0 0.0
  %2268 = vmatprep.subr.mxu0 0.0
  %2269 = vmatpush1.msra.mxu0 0.0
  %2270 = vmatprep.subr.mxu0 0.0
  %2271 = vmatpush1.msra.mxu0 0.0
  %2272 = vmatprep.subr.mxu0 0.0
  %2273 = vmatpush1.msra.mxu0 0.0
  %2274 = vmatprep.subr.mxu0 0.0
  %2275 = vmatpush1.msra.mxu0 0.0
  %2276 = vmatprep.subr.mxu0 0.0
  %2277 = vmatpush1.msra.mxu0 0.0
  %2278 = vmatprep.subr.mxu0 0.0
  %2279 = vmatpush1.msra.mxu0 0.0
  %2280 = vmatprep.subr.mxu0 0.0
  %2281 = vmatpush1.msra.mxu0 0.0
  %2282 = vmatprep.subr.mxu0 0.0
  %2283 = vmatpush1.msra.mxu0 0.0
  %2284 = vmatprep.subr.mxu0 0.0
  %2285 = vmatpush1.msra.mxu0 0.0
  %2286 = vmatprep.subr.mxu0 0.0
  %2287 = vmatpush1.msra.mxu0 0.0
  %2288 = vmatprep.subr.mxu0 0.0
  %2289 = vmatpush1.msra.mxu0 0.0
  %2290 = vmatprep.subr.mxu0 0.0
  %2291 = vmatpush1.msra.mxu0 0.0
  %2292 = vmatprep.subr.mxu0 0.0
  %2293 = vmatpush1.msra.mxu0 0.0
  %2294 = vmatprep.subr.mxu0 0.0
  %2295 = vmatpush1.msra.mxu0 0.0
  %2296 = vmatprep.subr.mxu0 0.0
  %2297 = vmatpush1.msra.mxu0 0.0
  %2298 = vmatprep.subr.mxu0 0.0
  %2299 = vmatpush1.msra.mxu0 0.0
  %2300 = vmatprep.subr.mxu0 0.0
  %2301 = vmatpush1.msra.mxu0 0.0
  %2302 = vmatprep.subr.mxu0 0.0
  %2303 = vmatpush1.msra.mxu0 0.0
  %2304 = vmatprep.subr.mxu0 0.0
  %2305 = vmatpush1.msra.mxu0 0.0
  %2306 = vmatprep.subr.mxu0 0.0
  %2307 = vmatpush1.msra.mxu0 0.0
  %2308 = vmatprep.subr.mxu0 0.0
  %2309 = vmatpush1.msra.mxu0 0.0
  %2310 = vmatprep.subr.mxu0 0.0
  %2311 = vmatpush1.msra.mxu0 0.0
  %2312 = vmatprep.subr.mxu0 0.0
  %2313 = vmatpush1.msra.mxu0 0.0
  %2314 = vmatprep.subr.mxu0 0.0
  %2315 = vmatpush1.msra.mxu0 0.0
  %2316 = vmatprep.mubr.f32.mxu0 0.0
  %v2317 = vand.u32 %v1885, 4294901760
  %v2318 = vsub.f32 %v1885, %v2317
  %2319 = vmatmul.mubr.f32.gmra.mrb[0].mxu0 %v2318
  %v2320 = vpop.f32.mrb[0].mxu0
  %v2321 = vadd.f32 %v2183, %v2320
  %v2322 = vpop.f32.mrb[0].mxu0
  %2323 = vmatprep.mubr.f32.mxu0 0.0
  %v2324 = vand.u32 %v1888, 4294901760
  %v2325 = vsub.f32 %v1888, %v2324
  %2326 = vmatmul.mubr.f32.gmra.mrb[0].mxu0 %v2325
  %v2327 = vpop.f32.mrb[0].mxu0
  %v2328 = vadd.f32 %v2189, %v2327
  %v2329 = vpop.f32.mrb[0].mxu0
  %2330 = vmatprep.mubr.f32.mxu0 0.0
  %v2331 = vand.u32 %v1891, 4294901760
  %v2332 = vsub.f32 %v1891, %v2331
  %2333 = vmatmul.mubr.f32.gmra.mrb[0].mxu0 %v2332
  %v2334 = vpop.f32.mrb[0].mxu0
  %v2335 = vadd.f32 %v2195, %v2334
  %v2336 = vpop.f32.mrb[0].mxu0
  %2337 = vmatprep.mubr.f32.mxu0 0.0
  %v2338 = vand.u32 %v1894, 4294901760
  %v2339 = vsub.f32 %v1894, %v2338
  %2340 = vmatmul.mubr.f32.gmra.mrb[0].mxu0 %v2339
  %v2341 = vpop.f32.mrb[0].mxu0
  %v2342 = vadd.f32 %v2201, %v2341
  %v2343 = vpop.f32.mrb[0].mxu0
  %2344 = vmatprep.mubr.f32.mxu0 0.0
  %v2345 = vand.u32 %v1897, 4294901760
  %v2346 = vsub.f32 %v1897, %v2345
  %2347 = vmatmul.mubr.f32.gmra.mrb[0].mxu0 %v2346
  %v2348 = vpop.f32.mrb[0].mxu0
  %v2349 = vadd.f32 %v2207, %v2348
  %v2350 = vpop.f32.mrb[0].mxu0
  %2351 = vmatprep.mubr.f32.mxu0 0.0
  %v2352 = vand.u32 %v1900, 4294901760
  %v2353 = vsub.f32 %v1900, %v2352
  %2354 = vmatmul.mubr.f32.gmra.mrb[0].mxu0 %v2353
  %v2355 = vpop.f32.mrb[0].mxu0
  %v2356 = vadd.f32 %v2213, %v2355
  %v2357 = vpop.f32.mrb[0].mxu0
  %2358 = vmatprep.mubr.f32.mxu0 0.0
  %v2359 = vand.u32 %v1903, 4294901760
  %v2360 = vsub.f32 %v1903, %v2359
  %2361 = vmatmul.mubr.f32.gmra.mrb[0].mxu0 %v2360
  %v2362 = vpop.f32.mrb[0].mxu0
  %v2363 = vadd.f32 %v2219, %v2362
  %v2364 = vpop.f32.mrb[0].mxu0
  %2365 = vmatprep.mubr.f32.mxu0 0.0
  %v2366 = vand.u32 %v1906, 4294901760
  %v2367 = vsub.f32 %v1906, %v2366
  %2368 = vmatmul.mubr.f32.gmra.mrb[0].mxu0 %v2367
  %v2369 = vpop.f32.mrb[0].mxu0
  %v2370 = vadd.f32 %v2225, %v2369
  %v2371 = vpop.f32.mrb[0].mxu0
  %2372 = vmatprep.mubr.f32.mxu0 0.0
  %v2373 = vand.u32 %v1909, 4294901760
  %v2374 = vsub.f32 %v1909, %v2373
  %2375 = vmatmul.mubr.f32.gmra.mrb[0].mxu0 %v2374
  %v2376 = vpop.f32.mrb[0].mxu0
  %v2377 = vadd.f32 %v2231, %v2376
  %v2378 = vpop.f32.mrb[0].mxu0
  %2379 = vmatprep.mubr.f32.mxu0 0.0
  %v2380 = vand.u32 %v1912, 4294901760
  %v2381 = vsub.f32 %v1912, %v2380
  %2382 = vmatmul.mubr.f32.gmra.mrb[0].mxu0 %v2381
  %v2383 = vpop.f32.mrb[0].mxu0
  %v2384 = vadd.f32 %v2237, %v2383
  %v2385 = vpop.f32.mrb[0].mxu0
  %2386 = vdwg.mxu0
  %2387 = vmatprep.subr.mxu0 0.0
  %v2388 = vand.u32 %v37, 4294901760
  %2389 = vmatpush1.msra.mxu0 %v2388
  %2390 = vmatprep.subr.mxu0 0.0
  %v2391 = vand.u32 %v38, 4294901760
  %2392 = vmatpush1.msra.mxu0 %v2391
  %2393 = vmatprep.subr.mxu0 0.0
  %v2394 = vand.u32 %v39, 4294901760
  %2395 = vmatpush1.msra.mxu0 %v2394
  %2396 = vmatprep.subr.mxu0 0.0
  %v2397 = vand.u32 %v40, 4294901760
  %2398 = vmatpush1.msra.mxu0 %v2397
  %2399 = vmatprep.subr.mxu0 0.0
  %v2400 = vand.u32 %v41, 4294901760
  %2401 = vmatpush1.msra.mxu0 %v2400
  %2402 = vmatprep.subr.mxu0 0.0
  %v2403 = vand.u32 %v42, 4294901760
  %2404 = vmatpush1.msra.mxu0 %v2403
  %2405 = vmatprep.subr.mxu0 0.0
  %2406 = vmatpush1.msra.mxu0 0.0
  %2407 = vmatprep.subr.mxu0 0.0
  %2408 = vmatpush1.msra.mxu0 0.0
  %2409 = vmatprep.subr.mxu0 0.0
  %2410 = vmatpush1.msra.mxu0 0.0
  %2411 = vmatprep.subr.mxu0 0.0
  %2412 = vmatpush1.msra.mxu0 0.0
  %2413 = vmatprep.subr.mxu0 0.0
  %2414 = vmatpush1.msra.mxu0 0.0
  %2415 = vmatprep.subr.mxu0 0.0
  %2416 = vmatpush1.msra.mxu0 0.0
  %2417 = vmatprep.subr.mxu0 0.0
  %2418 = vmatpush1.msra.mxu0 0.0
  %2419 = vmatprep.subr.mxu0 0.0
  %2420 = vmatpush1.msra.mxu0 0.0
  %2421 = vmatprep.subr.mxu0 0.0
  %2422 = vmatpush1.msra.mxu0 0.0
  %2423 = vmatprep.subr.mxu0 0.0
  %2424 = vmatpush1.msra.mxu0 0.0
  %2425 = vmatprep.subr.mxu0 0.0
  %2426 = vmatpush1.msra.mxu0 0.0
  %2427 = vmatprep.subr.mxu0 0.0
  %2428 = vmatpush1.msra.mxu0 0.0
  %2429 = vmatprep.subr.mxu0 0.0
  %2430 = vmatpush1.msra.mxu0 0.0
  %2431 = vmatprep.subr.mxu0 0.0
  %2432 = vmatpush1.msra.mxu0 0.0
  %2433 = vmatprep.subr.mxu0 0.0
  %2434 = vmatpush1.msra.mxu0 0.0
  %2435 = vmatprep.subr.mxu0 0.0
  %2436 = vmatpush1.msra.mxu0 0.0
  %2437 = vmatprep.subr.mxu0 0.0
  %2438 = vmatpush1.msra.mxu0 0.0
  %2439 = vmatprep.subr.mxu0 0.0
  %2440 = vmatpush1.msra.mxu0 0.0
  %2441 = vmatprep.subr.mxu0 0.0
  %2442 = vmatpush1.msra.mxu0 0.0
  %2443 = vmatprep.subr.mxu0 0.0
  %2444 = vmatpush1.msra.mxu0 0.0
  %2445 = vmatprep.subr.mxu0 0.0
  %2446 = vmatpush1.msra.mxu0 0.0
  %2447 = vmatprep.subr.mxu0 0.0
  %2448 = vmatpush1.msra.mxu0 0.0
  %2449 = vmatprep.subr.mxu0 0.0
  %2450 = vmatpush1.msra.mxu0 0.0
  %2451 = vmatprep.subr.mxu0 0.0
  %2452 = vmatpush1.msra.mxu0 0.0
  %2453 = vmatprep.subr.mxu0 0.0
  %2454 = vmatpush1.msra.mxu0 0.0
  %2455 = vmatprep.subr.mxu0 0.0
  %2456 = vmatpush1.msra.mxu0 0.0
  %2457 = vmatprep.mubr.f32.mxu0 0.0
  %v2458 = vand.u32 %v1885, 4294901760
  %v2459 = vsub.f32 %v1885, %v2458
  %v2460 = vand.u32 %v2459, 4294901760
  %2461 = vmatmul.mubr.f32.gmra.mrb[0].mxu0 %v2460
  %v2462 = vpop.f32.mrb[0].mxu0
  %v2463 = vadd.f32 %v2321, %v2462
  %v2464 = vpop.f32.mrb[0].mxu0
  %2465 = vmatprep.mubr.f32.mxu0 0.0
  %v2466 = vand.u32 %v1888, 4294901760
  %v2467 = vsub.f32 %v1888, %v2466
  %v2468 = vand.u32 %v2467, 4294901760
  %2469 = vmatmul.mubr.f32.gmra.mrb[0].mxu0 %v2468
  %v2470 = vpop.f32.mrb[0].mxu0
  %v2471 = vadd.f32 %v2328, %v2470
  %v2472 = vpop.f32.mrb[0].mxu0
  %2473 = vmatprep.mubr.f32.mxu0 0.0
  %v2474 = vand.u32 %v1891, 4294901760
  %v2475 = vsub.f32 %v1891, %v2474
  %v2476 = vand.u32 %v2475, 4294901760
  %2477 = vmatmul.mubr.f32.gmra.mrb[0].mxu0 %v2476
  %v2478 = vpop.f32.mrb[0].mxu0
  %v2479 = vadd.f32 %v2335, %v2478
  %v2480 = vpop.f32.mrb[0].mxu0
  %2481 = vmatprep.mubr.f32.mxu0 0.0
  %v2482 = vand.u32 %v1894, 4294901760
  %v2483 = vsub.f32 %v1894, %v2482
  %v2484 = vand.u32 %v2483, 4294901760
  %2485 = vmatmul.mubr.f32.gmra.mrb[0].mxu0 %v2484
  %v2486 = vpop.f32.mrb[0].mxu0
  %v2487 = vadd.f32 %v2342, %v2486
  %v2488 = vpop.f32.mrb[0].mxu0
  %2489 = vmatprep.mubr.f32.mxu0 0.0
  %v2490 = vand.u32 %v1897, 4294901760
  %v2491 = vsub.f32 %v1897, %v2490
  %v2492 = vand.u32 %v2491, 4294901760
  %2493 = vmatmul.mubr.f32.gmra.mrb[0].mxu0 %v2492
  %v2494 = vpop.f32.mrb[0].mxu0
  %v2495 = vadd.f32 %v2349, %v2494
  %v2496 = vpop.f32.mrb[0].mxu0
  %2497 = vmatprep.mubr.f32.mxu0 0.0
  %v2498 = vand.u32 %v1900, 4294901760
  %v2499 = vsub.f32 %v1900, %v2498
  %v2500 = vand.u32 %v2499, 4294901760
  %2501 = vmatmul.mubr.f32.gmra.mrb[0].mxu0 %v2500
  %v2502 = vpop.f32.mrb[0].mxu0
  %v2503 = vadd.f32 %v2356, %v2502
  %v2504 = vpop.f32.mrb[0].mxu0
  %2505 = vmatprep.mubr.f32.mxu0 0.0
  %v2506 = vand.u32 %v1903, 4294901760
  %v2507 = vsub.f32 %v1903, %v2506
  %v2508 = vand.u32 %v2507, 4294901760
  %2509 = vmatmul.mubr.f32.gmra.mrb[0].mxu0 %v2508
  %v2510 = vpop.f32.mrb[0].mxu0
  %v2511 = vadd.f32 %v2363, %v2510
  %v2512 = vpop.f32.mrb[0].mxu0
  %2513 = vmatprep.mubr.f32.mxu0 0.0
  %v2514 = vand.u32 %v1906, 4294901760
  %v2515 = vsub.f32 %v1906, %v2514
  %v2516 = vand.u32 %v2515, 4294901760
  %2517 = vmatmul.mubr.f32.gmra.mrb[0].mxu0 %v2516
  %v2518 = vpop.f32.mrb[0].mxu0
  %v2519 = vadd.f32 %v2370, %v2518
  %v2520 = vpop.f32.mrb[0].mxu0
  %2521 = vmatprep.mubr.f32.mxu0 0.0
  %v2522 = vand.u32 %v1909, 4294901760
  %v2523 = vsub.f32 %v1909, %v2522
  %v2524 = vand.u32 %v2523, 4294901760
  %2525 = vmatmul.mubr.f32.gmra.mrb[0].mxu0 %v2524
  %v2526 = vpop.f32.mrb[0].mxu0
  %v2527 = vadd.f32 %v2377, %v2526
  %v2528 = vpop.f32.mrb[0].mxu0
  %2529 = vmatprep.mubr.f32.mxu0 0.0
  %v2530 = vand.u32 %v1912, 4294901760
  %v2531 = vsub.f32 %v1912, %v2530
  %v2532 = vand.u32 %v2531, 4294901760
  %2533 = vmatmul.mubr.f32.gmra.mrb[0].mxu0 %v2532
  %v2534 = vpop.f32.mrb[0].mxu0
  %v2535 = vadd.f32 %v2384, %v2534
  %v2536 = vpop.f32.mrb[0].mxu0
  %2537 = vdwg.mxu0
  %2538 = vmatprep.subr.mxu0 0.0
  %v2539 = vand.u32 %v37, 4294901760
  %v2540 = vsub.f32 %v37, %v2539
  %v2541 = vand.u32 %v2540, 4294901760
  %2542 = vmatpush1.msra.mxu0 %v2541
  %2543 = vmatprep.subr.mxu0 0.0
  %v2544 = vand.u32 %v38, 4294901760
  %v2545 = vsub.f32 %v38, %v2544
  %v2546 = vand.u32 %v2545, 4294901760
  %2547 = vmatpush1.msra.mxu0 %v2546
  %2548 = vmatprep.subr.mxu0 0.0
  %v2549 = vand.u32 %v39, 4294901760
  %v2550 = vsub.f32 %v39, %v2549
  %v2551 = vand.u32 %v2550, 4294901760
  %2552 = vmatpush1.msra.mxu0 %v2551
  %2553 = vmatprep.subr.mxu0 0.0
  %v2554 = vand.u32 %v40, 4294901760
  %v2555 = vsub.f32 %v40, %v2554
  %v2556 = vand.u32 %v2555, 4294901760
  %2557 = vmatpush1.msra.mxu0 %v2556
  %2558 = vmatprep.subr.mxu0 0.0
  %v2559 = vand.u32 %v41, 4294901760
  %v2560 = vsub.f32 %v41, %v2559
  %v2561 = vand.u32 %v2560, 4294901760
  %2562 = vmatpush1.msra.mxu0 %v2561
  %2563 = vmatprep.subr.mxu0 0.0
  %v2564 = vand.u32 %v42, 4294901760
  %v2565 = vsub.f32 %v42, %v2564
  %v2566 = vand.u32 %v2565, 4294901760
  %2567 = vmatpush1.msra.mxu0 %v2566
  %2568 = vmatprep.subr.mxu0 0.0
  %2569 = vmatpush1.msra.mxu0 0.0
  %2570 = vmatprep.subr.mxu0 0.0
  %2571 = vmatpush1.msra.mxu0 0.0
  %2572 = vmatprep.subr.mxu0 0.0
  %2573 = vmatpush1.msra.mxu0 0.0
  %2574 = vmatprep.subr.mxu0 0.0
  %2575 = vmatpush1.msra.mxu0 0.0
  %2576 = vmatprep.subr.mxu0 0.0
  %2577 = vmatpush1.msra.mxu0 0.0
  %2578 = vmatprep.subr.mxu0 0.0
  %2579 = vmatpush1.msra.mxu0 0.0
  %2580 = vmatprep.subr.mxu0 0.0
  %2581 = vmatpush1.msra.mxu0 0.0
  %2582 = vmatprep.subr.mxu0 0.0
  %2583 = vmatpush1.msra.mxu0 0.0
  %2584 = vmatprep.subr.mxu0 0.0
  %2585 = vmatpush1.msra.mxu0 0.0
  %2586 = vmatprep.subr.mxu0 0.0
  %2587 = vmatpush1.msra.mxu0 0.0
  %2588 = vmatprep.subr.mxu0 0.0
  %2589 = vmatpush1.msra.mxu0 0.0
  %2590 = vmatprep.subr.mxu0 0.0
  %2591 = vmatpush1.msra.mxu0 0.0
  %2592 = vmatprep.subr.mxu0 0.0
  %2593 = vmatpush1.msra.mxu0 0.0
  %2594 = vmatprep.subr.mxu0 0.0
  %2595 = vmatpush1.msra.mxu0 0.0
  %2596 = vmatprep.subr.mxu0 0.0
  %2597 = vmatpush1.msra.mxu0 0.0
  %2598 = vmatprep.subr.mxu0 0.0
  %2599 = vmatpush1.msra.mxu0 0.0
  %2600 = vmatprep.subr.mxu0 0.0
  %2601 = vmatpush1.msra.mxu0 0.0
  %2602 = vmatprep.subr.mxu0 0.0
  %2603 = vmatpush1.msra.mxu0 0.0
  %2604 = vmatprep.subr.mxu0 0.0
  %2605 = vmatpush1.msra.mxu0 0.0
  %2606 = vmatprep.subr.mxu0 0.0
  %2607 = vmatpush1.msra.mxu0 0.0
  %2608 = vmatprep.subr.mxu0 0.0
  %2609 = vmatpush1.msra.mxu0 0.0
  %2610 = vmatprep.subr.mxu0 0.0
  %2611 = vmatpush1.msra.mxu0 0.0
  %2612 = vmatprep.subr.mxu0 0.0
  %2613 = vmatpush1.msra.mxu0 0.0
  %2614 = vmatprep.subr.mxu0 0.0
  %2615 = vmatpush1.msra.mxu0 0.0
  %2616 = vmatprep.subr.mxu0 0.0
  %2617 = vmatpush1.msra.mxu0 0.0
  %2618 = vmatprep.subr.mxu0 0.0
  %2619 = vmatpush1.msra.mxu0 0.0
  %2620 = vmatprep.mubr.f32.mxu0 0.0
  %v2621 = vand.u32 %v1885, 4294901760
  %2622 = vmatmul.mubr.f32.gmra.mrb[0].mxu0 %v2621
  %v2623 = vpop.f32.mrb[0].mxu0
  %v2624 = vadd.f32 %v2463, %v2623
  %v2625 = vpop.f32.mrb[0].mxu0
  %2626 = vmatprep.mubr.f32.mxu0 0.0
  %v2627 = vand.u32 %v1888, 4294901760
  %2628 = vmatmul.mubr.f32.gmra.mrb[0].mxu0 %v2627
  %v2629 = vpop.f32.mrb[0].mxu0
  %v2630 = vadd.f32 %v2471, %v2629
  %v2631 = vpop.f32.mrb[0].mxu0
  %2632 = vmatprep.mubr.f32.mxu0 0.0
  %v2633 = vand.u32 %v1891, 4294901760
  %2634 = vmatmul.mubr.f32.gmra.mrb[0].mxu0 %v2633
  %v2635 = vpop.f32.mrb[0].mxu0
  %v2636 = vadd.f32 %v2479, %v2635
  %v2637 = vpop.f32.mrb[0].mxu0
  %2638 = vmatprep.mubr.f32.mxu0 0.0
  %v2639 = vand.u32 %v1894, 4294901760
  %2640 = vmatmul.mubr.f32.gmra.mrb[0].mxu0 %v2639
  %v2641 = vpop.f32.mrb[0].mxu0
  %v2642 = vadd.f32 %v2487, %v2641
  %v2643 = vpop.f32.mrb[0].mxu0
  %2644 = vmatprep.mubr.f32.mxu0 0.0
  %v2645 = vand.u32 %v1897, 4294901760
  %2646 = vmatmul.mubr.f32.gmra.mrb[0].mxu0 %v2645
  %v2647 = vpop.f32.mrb[0].mxu0
  %v2648 = vadd.f32 %v2495, %v2647
  %v2649 = vpop.f32.mrb[0].mxu0
  %2650 = vmatprep.mubr.f32.mxu0 0.0
  %v2651 = vand.u32 %v1900, 4294901760
  %2652 = vmatmul.mubr.f32.gmra.mrb[0].mxu0 %v2651
  %v2653 = vpop.f32.mrb[0].mxu0
  %v2654 = vadd.f32 %v2503, %v2653
  %v2655 = vpop.f32.mrb[0].mxu0
  %2656 = vmatprep.mubr.f32.mxu0 0.0
  %v2657 = vand.u32 %v1903, 4294901760
  %2658 = vmatmul.mubr.f32.gmra.mrb[0].mxu0 %v2657
  %v2659 = vpop.f32.mrb[0].mxu0
  %v2660 = vadd.f32 %v2511, %v2659
  %v2661 = vpop.f32.mrb[0].mxu0
  %2662 = vmatprep.mubr.f32.mxu0 0.0
  %v2663 = vand.u32 %v1906, 4294901760
  %2664 = vmatmul.mubr.f32.gmra.mrb[0].mxu0 %v2663
  %v2665 = vpop.f32.mrb[0].mxu0
  %v2666 = vadd.f32 %v2519, %v2665
  %v2667 = vpop.f32.mrb[0].mxu0
  %2668 = vmatprep.mubr.f32.mxu0 0.0
  %v2669 = vand.u32 %v1909, 4294901760
  %2670 = vmatmul.mubr.f32.gmra.mrb[0].mxu0 %v2669
  %v2671 = vpop.f32.mrb[0].mxu0
  %v2672 = vadd.f32 %v2527, %v2671
  %v2673 = vpop.f32.mrb[0].mxu0
  %2674 = vmatprep.mubr.f32.mxu0 0.0
  %v2675 = vand.u32 %v1912, 4294901760
  %2676 = vmatmul.mubr.f32.gmra.mrb[0].mxu0 %v2675
  %v2677 = vpop.f32.mrb[0].mxu0
  %v2678 = vadd.f32 %v2535, %v2677
  %v2679 = vpop.f32.mrb[0].mxu0
  %2680 = vdwg.mxu0
  %2681 = vmatprep.subr.mxu0 0.0
  %v2682 = vand.u32 %v37, 4294901760
  %2683 = vmatpush1.msra.mxu0 %v2682
  %2684 = vmatprep.subr.mxu0 0.0
  %v2685 = vand.u32 %v38, 4294901760
  %2686 = vmatpush1.msra.mxu0 %v2685
  %2687 = vmatprep.subr.mxu0 0.0
  %v2688 = vand.u32 %v39, 4294901760
  %2689 = vmatpush1.msra.mxu0 %v2688
  %2690 = vmatprep.subr.mxu0 0.0
  %v2691 = vand.u32 %v40, 4294901760
  %2692 = vmatpush1.msra.mxu0 %v2691
  %2693 = vmatprep.subr.mxu0 0.0
  %v2694 = vand.u32 %v41, 4294901760
  %2695 = vmatpush1.msra.mxu0 %v2694
  %2696 = vmatprep.subr.mxu0 0.0
  %v2697 = vand.u32 %v42, 4294901760
  %2698 = vmatpush1.msra.mxu0 %v2697
  %2699 = vmatprep.subr.mxu0 0.0
  %2700 = vmatpush1.msra.mxu0 0.0
  %2701 = vmatprep.subr.mxu0 0.0
  %2702 = vmatpush1.msra.mxu0 0.0
  %2703 = vmatprep.subr.mxu0 0.0
  %2704 = vmatpush1.msra.mxu0 0.0
  %2705 = vmatprep.subr.mxu0 0.0
  %2706 = vmatpush1.msra.mxu0 0.0
  %2707 = vmatprep.subr.mxu0 0.0
  %2708 = vmatpush1.msra.mxu0 0.0
  %2709 = vmatprep.subr.mxu0 0.0
  %2710 = vmatpush1.msra.mxu0 0.0
  %2711 = vmatprep.subr.mxu0 0.0
  %2712 = vmatpush1.msra.mxu0 0.0
  %2713 = vmatprep.subr.mxu0 0.0
  %2714 = vmatpush1.msra.mxu0 0.0
  %2715 = vmatprep.subr.mxu0 0.0
  %2716 = vmatpush1.msra.mxu0 0.0
  %2717 = vmatprep.subr.mxu0 0.0
  %2718 = vmatpush1.msra.mxu0 0.0
  %2719 = vmatprep.subr.mxu0 0.0
  %2720 = vmatpush1.msra.mxu0 0.0
  %2721 = vmatprep.subr.mxu0 0.0
  %2722 = vmatpush1.msra.mxu0 0.0
  %2723 = vmatprep.subr.mxu0 0.0
  %2724 = vmatpush1.msra.mxu0 0.0
  %2725 = vmatprep.subr.mxu0 0.0
  %2726 = vmatpush1.msra.mxu0 0.0
  %2727 = vmatprep.subr.mxu0 0.0
  %2728 = vmatpush1.msra.mxu0 0.0
  %2729 = vmatprep.subr.mxu0 0.0
  %2730 = vmatpush1.msra.mxu0 0.0
  %2731 = vmatprep.subr.mxu0 0.0
  %2732 = vmatpush1.msra.mxu0 0.0
  %2733 = vmatprep.subr.mxu0 0.0
  %2734 = vmatpush1.msra.mxu0 0.0
  %2735 = vmatprep.subr.mxu0 0.0
  %2736 = vmatpush1.msra.mxu0 0.0
  %2737 = vmatprep.subr.mxu0 0.0
  %2738 = vmatpush1.msra.mxu0 0.0
  %2739 = vmatprep.subr.mxu0 0.0
  %2740 = vmatpush1.msra.mxu0 0.0
  %2741 = vmatprep.subr.mxu0 0.0
  %2742 = vmatpush1.msra.mxu0 0.0
  %2743 = vmatprep.subr.mxu0 0.0
  %2744 = vmatpush1.msra.mxu0 0.0
  %2745 = vmatprep.subr.mxu0 0.0
  %2746 = vmatpush1.msra.mxu0 0.0
  %2747 = vmatprep.subr.mxu0 0.0
  %2748 = vmatpush1.msra.mxu0 0.0
  %2749 = vmatprep.subr.mxu0 0.0
  %2750 = vmatpush1.msra.mxu0 0.0
  %2751 = vmatprep.mubr.f32.mxu0 0.0
  %v2752 = vand.u32 %v1885, 4294901760
  %2753 = vmatmul.mubr.f32.gmra.mrb[0].mxu0 %v2752
  %v2754 = vpop.f32.mrb[0].mxu0
  %v2755 = vadd.f32 %v2624, %v2754
  %v2756 = vpop.f32.mrb[0].mxu0
  %2757 = vmatprep.mubr.f32.mxu0 0.0
  %v2758 = vand.u32 %v1888, 4294901760
  %2759 = vmatmul.mubr.f32.gmra.mrb[0].mxu0 %v2758
  %v2760 = vpop.f32.mrb[0].mxu0
  %v2761 = vadd.f32 %v2630, %v2760
  %v2762 = vpop.f32.mrb[0].mxu0
  %2763 = vmatprep.mubr.f32.mxu0 0.0
  %v2764 = vand.u32 %v1891, 4294901760
  %2765 = vmatmul.mubr.f32.gmra.mrb[0].mxu0 %v2764
  %v2766 = vpop.f32.mrb[0].mxu0
  %v2767 = vadd.f32 %v2636, %v2766
  %v2768 = vpop.f32.mrb[0].mxu0
  %2769 = vmatprep.mubr.f32.mxu0 0.0
  %v2770 = vand.u32 %v1894, 4294901760
  %2771 = vmatmul.mubr.f32.gmra.mrb[0].mxu0 %v2770
  %v2772 = vpop.f32.mrb[0].mxu0
  %v2773 = vadd.f32 %v2642, %v2772
  %v2774 = vpop.f32.mrb[0].mxu0
  %2775 = vmatprep.mubr.f32.mxu0 0.0
  %v2776 = vand.u32 %v1897, 4294901760
  %2777 = vmatmul.mubr.f32.gmra.mrb[0].mxu0 %v2776
  %v2778 = vpop.f32.mrb[0].mxu0
  %v2779 = vadd.f32 %v2648, %v2778
  %v2780 = vpop.f32.mrb[0].mxu0
  %2781 = vmatprep.mubr.f32.mxu0 0.0
  %v2782 = vand.u32 %v1900, 4294901760
  %2783 = vmatmul.mubr.f32.gmra.mrb[0].mxu0 %v2782
  %v2784 = vpop.f32.mrb[0].mxu0
  %v2785 = vadd.f32 %v2654, %v2784
  %v2786 = vpop.f32.mrb[0].mxu0
  %2787 = vmatprep.mubr.f32.mxu0 0.0
  %v2788 = vand.u32 %v1903, 4294901760
  %2789 = vmatmul.mubr.f32.gmra.mrb[0].mxu0 %v2788
  %v2790 = vpop.f32.mrb[0].mxu0
  %v2791 = vadd.f32 %v2660, %v2790
  %v2792 = vpop.f32.mrb[0].mxu0
  %2793 = vmatprep.mubr.f32.mxu0 0.0
  %v2794 = vand.u32 %v1906, 4294901760
  %2795 = vmatmul.mubr.f32.gmra.mrb[0].mxu0 %v2794
  %v2796 = vpop.f32.mrb[0].mxu0
  %v2797 = vadd.f32 %v2666, %v2796
  %v2798 = vpop.f32.mrb[0].mxu0
  %2799 = vmatprep.mubr.f32.mxu0 0.0
  %v2800 = vand.u32 %v1909, 4294901760
  %2801 = vmatmul.mubr.f32.gmra.mrb[0].mxu0 %v2800
  %v2802 = vpop.f32.mrb[0].mxu0
  %v2803 = vadd.f32 %v2672, %v2802
  %v2804 = vpop.f32.mrb[0].mxu0
  %2805 = vmatprep.mubr.f32.mxu0 0.0
  %v2806 = vand.u32 %v1912, 4294901760
  %2807 = vmatmul.mubr.f32.gmra.mrb[0].mxu0 %v2806
  %v2808 = vpop.f32.mrb[0].mxu0
  %v2809 = vadd.f32 %v2678, %v2808
  %v2810 = vpop.f32.mrb[0].mxu0
  %2811 = vdwg.mxu0
  %vm2812 = vcmp.ge.f32.partialorder %v2755, 0.0
  %vm2813 = vcmp.ge.f32.partialorder %v2761, 0.0
  %vm2814 = vcmp.ge.f32.partialorder %v2767, 0.0
  %vm2815 = vcmp.ge.f32.partialorder %v2773, 0.0
  %vm2816 = vcmp.ge.f32.partialorder %v2779, 0.0
  %vm2817 = vcmp.ge.f32.partialorder %v2785, 0.0
  %vm2818 = vcmp.ge.f32.partialorder %v2791, 0.0
  %vm2819 = vcmp.ge.f32.partialorder %v2797, 0.0
  %vm2820 = vcmp.ge.f32.partialorder %v2803, 0.0
  %vm2821 = vcmp.ge.f32.partialorder %v2809, 0.0
  %v2822 = vmul.f32 %v2755, 0.2
  %v2823 = vmul.f32 %v2761, 0.2
  %v2824 = vmul.f32 %v2767, 0.2
  %v2825 = vmul.f32 %v2773, 0.2
  %v2826 = vmul.f32 %v2779, 0.2
  %v2827 = vmul.f32 %v2785, 0.2
  %v2828 = vmul.f32 %v2791, 0.2
  %v2829 = vmul.f32 %v2797, 0.2
  %v2830 = vmul.f32 %v2803, 0.2
  %v2831 = vmul.f32 %v2809, 0.2
  %v2832 = vsel %vm2812, %v2755, %v2822
  %v2833 = vsel %vm2813, %v2761, %v2823
  %v2834 = vsel %vm2814, %v2767, %v2824
  %v2835 = vsel %vm2815, %v2773, %v2825
  %v2836 = vsel %vm2816, %v2779, %v2826
  %v2837 = vsel %vm2817, %v2785, %v2827
  %v2838 = vsel %vm2818, %v2791, %v2828
  %v2839 = vsel %vm2819, %v2797, %v2829
  %v2840 = vsel %vm2820, %v2803, %v2830
  %v2841 = vsel %vm2821, %v2809, %v2831
  %v2842 = vlaneseq
  %v2843 = vshrl.u32 %v2842, 7
  %v2844 = vsub.s32 0, %v2843
  %v2845 = vrot.slane %v55, %v2844
  %v2846 = vmul.f32 %v2832, %v2845
  %v2847 = vmul.f32 %v2833, %v2845
  %v2848 = vmul.f32 %v2834, %v2845
  %v2849 = vmul.f32 %v2835, %v2845
  %v2850 = vmul.f32 %v2836, %v2845
  %v2851 = vmul.f32 %v2837, %v2845
  %v2852 = vmul.f32 %v2838, %v2845
  %v2853 = vmul.f32 %v2839, %v2845
  %v2854 = vmul.f32 %v2840, %v2845
  %v2855 = vmul.f32 %v2841, %v2845
  %vm2856 = vcmask 326656
  %v2857 = vsel %vm2856, %v2846, 0.0
  %2858 = vadd.xlane.f32.xlu0 %v2857
  %v2859 = vpop.xlane.xlu0 %2858
  %v2860 = vsel %vm2856, %v2847, 0.0
  %2861 = vadd.xlane.f32.xlu0 %v2860
  %v2862 = vpop.xlane.xlu0 %2861
  %v2863 = vsel %vm2856, %v2848, 0.0
  %2864 = vadd.xlane.f32.xlu0 %v2863
  %v2865 = vpop.xlane.xlu0 %2864
  %v2866 = vsel %vm2856, %v2849, 0.0
  %2867 = vadd.xlane.f32.xlu0 %v2866
  %v2868 = vpop.xlane.xlu0 %2867
  %v2869 = vsel %vm2856, %v2850, 0.0
  %2870 = vadd.xlane.f32.xlu0 %v2869
  %v2871 = vpop.xlane.xlu0 %2870
  %v2872 = vsel %vm2856, %v2851, 0.0
  %2873 = vadd.xlane.f32.xlu0 %v2872
  %v2874 = vpop.xlane.xlu0 %2873
  %v2875 = vsel %vm2856, %v2852, 0.0
  %2876 = vadd.xlane.f32.xlu0 %v2875
  %v2877 = vpop.xlane.xlu0 %2876
  %v2878 = vsel %vm2856, %v2853, 0.0
  %2879 = vadd.xlane.f32.xlu0 %v2878
  %v2880 = vpop.xlane.xlu0 %2879
  %v2881 = vsel %vm2856, %v2854, 0.0
  %2882 = vadd.xlane.f32.xlu0 %v2881
  %v2883 = vpop.xlane.xlu0 %2882
  %v2884 = vsel %vm2856, %v2855, 0.0
  %2885 = vadd.xlane.f32.xlu0 %v2884
  %v2886 = vpop.xlane.xlu0 %2885
  %v2887 = vmax.f32 %v2859, %v2871
  %v2888 = vmax.f32 %v2862, %v2874
  %v2889 = vmax.f32 %v2865, %v2877
  %v2890 = vmax.f32 %v2868, %v2880
  %v2891 = vmax.f32 %v2887, %v2883
  %v2892 = vmax.f32 %v2888, %v2886
  %v2893 = vmax.f32 %v2891, %v2892
  %v2894 = vmax.f32 %v2889, %v2890
  %v2895 = vmax.f32 %v2893, %v2894
  %v2896 = vrot.slane %v2895, 4
  %v2897 = vmax.f32 %v2895, %v2896
  %v2898 = vrot.slane %v2897, 2
  %v2899 = vmax.f32 %v2897, %v2898
  %v2900 = vrot.slane %v2899, 1
  %v2901 = vmax.f32 %v2899, %v2900
  %v2902 = vsub.f32 %v2859, %v2901
  %v2903 = vsub.f32 %v2862, %v2901
  %v2904 = vsub.f32 %v2865, %v2901
  %v2905 = vsub.f32 %v2868, %v2901
  %v2906 = vsub.f32 %v2871, %v2901
  %v2907 = vsub.f32 %v2874, %v2901
  %v2908 = vsub.f32 %v2877, %v2901
  %v2909 = vsub.f32 %v2880, %v2901
  %v2910 = vsub.f32 %v2883, %v2901
  %v2911 = vsub.f32 %v2886, %v2901
  %v2912 = vmul.f32 %v2902, 1.442695
  %v2913 = vpow.pop %v2912
  %v2914 = vmul.f32 %v2903, 1.442695
  %v2915 = vpow.pop %v2914
  %v2916 = vmul.f32 %v2904, 1.442695
  %v2917 = vpow.pop %v2916
  %v2918 = vmul.f32 %v2905, 1.442695
  %v2919 = vpow.pop %v2918
  %v2920 = vmul.f32 %v2906, 1.442695
  %v2921 = vpow.pop %v2920
  %v2922 = vmul.f32 %v2907, 1.442695
  %v2923 = vpow.pop %v2922
  %v2924 = vmul.f32 %v2908, 1.442695
  %v2925 = vpow.pop %v2924
  %v2926 = vmul.f32 %v2909, 1.442695
  %v2927 = vpow.pop %v2926
  %v2928 = vmul.f32 %v2910, 1.442695
  %v2929 = vpow.pop %v2928
  %v2930 = vmul.f32 %v2911, 1.442695
  %v2931 = vpow.pop %v2930
  %v2932 = vmul.u32 %v58, 5
  %v2933 = vmul.u32 %v59, 5
  %vm2934 = vcmp.ge.s32.totalorder %v81, %v2932
  %vm2935 = vcmp.ge.s32.totalorder %v81, %v2933
  %v2936 = vadd.s32 %v2932, 5
  %v2937 = vadd.s32 %v2933, 5
  %vm2938 = vcmp.lt.s32.totalorder %v81, %v2936
  %vm2939 = vcmp.lt.s32.totalorder %v81, %v2937
  %vm2940 = vmand %vm2934, %vm2938
  %vm2941 = vmand %vm2935, %vm2939
  %v2942 = vsel %vm2940, 1.0, 0.0
  %v2943 = vsel %vm2941, 1.0, 0.0
  %v2944 = vmul.f32 %v2913, %v15
  %v2945 = vmul.f32 %v2915, %v16
  %v2946 = vmul.f32 %v2917, %v17
  %v2947 = vmul.f32 %v2919, %v18
  %v2948 = vmul.f32 %v2921, %v19
  %v2949 = vmul.f32 %v2923, %v20
  %v2950 = vmul.f32 %v2925, %v21
  %v2951 = vmul.f32 %v2927, %v22
  %v2952 = vmul.f32 %v2929, %v23
  %v2953 = vmul.f32 %v2931, %v24
  %vm2954 = vcmask 654336
  %v2956 = vsel %vm2954, %v2942, 0
  %v2959 = vsel %vm2954, %v2943, 0
  %2961 = vmatprep.subr.mxu0 0.0
  %v2962 = vand.u32 %v2944, 4294901760
  %2963 = vmatpush1.msra.mxu0 %v2962
  %2964 = vmatprep.subr.mxu0 0.0
  %v2965 = vand.u32 %v2945, 4294901760
  %2966 = vmatpush1.msra.mxu0 %v2965
  %2967 = vmatprep.subr.mxu0 0.0
  %v2968 = vand.u32 %v2946, 4294901760
  %2969 = vmatpush1.msra.mxu0 %v2968
  %2970 = vmatprep.subr.mxu0 0.0
  %v2971 = vand.u32 %v2947, 4294901760
  %2972 = vmatpush1.msra.mxu0 %v2971
  %2973 = vmatprep.subr.mxu0 0.0
  %v2974 = vand.u32 %v2948, 4294901760
  %2975 = vmatpush1.msra.mxu0 %v2974
  %2976 = vmatprep.subr.mxu0 0.0
  %v2977 = vand.u32 %v2949, 4294901760
  %2978 = vmatpush1.msra.mxu0 %v2977
  %2979 = vmatprep.subr.mxu0 0.0
  %v2980 = vand.u32 %v2950, 4294901760
  %2981 = vmatpush1.msra.mxu0 %v2980
  %2982 = vmatprep.subr.mxu0 0.0
  %v2983 = vand.u32 %v2951, 4294901760
  %2984 = vmatpush1.msra.mxu0 %v2983
  %2985 = vmatprep.subr.mxu0 0.0
  %v2986 = vand.u32 %v2952, 4294901760
  %2987 = vmatpush1.msra.mxu0 %v2986
  %2988 = vmatprep.subr.mxu0 0.0
  %v2989 = vand.u32 %v2953, 4294901760
  %2990 = vmatpush1.msra.mxu0 %v2989
  %2991 = vmatprep.subr.mxu0 0.0
  %2992 = vmatpush1.msra.mxu0 0.0
  %2993 = vmatprep.subr.mxu0 0.0
  %2994 = vmatpush1.msra.mxu0 0.0
  %2995 = vmatprep.subr.mxu0 0.0
  %2996 = vmatpush1.msra.mxu0 0.0
  %2997 = vmatprep.subr.mxu0 0.0
  %2998 = vmatpush1.msra.mxu0 0.0
  %2999 = vmatprep.subr.mxu0 0.0
  %3000 = vmatpush1.msra.mxu0 0.0
  %3001 = vmatprep.subr.mxu0 0.0
  %3002 = vmatpush1.msra.mxu0 0.0
  %3003 = vmatprep.subr.mxu0 0.0
  %3004 = vmatpush1.msra.mxu0 0.0
  %3005 = vmatprep.subr.mxu0 0.0
  %3006 = vmatpush1.msra.mxu0 0.0
  %3007 = vmatprep.subr.mxu0 0.0
  %3008 = vmatpush1.msra.mxu0 0.0
  %3009 = vmatprep.subr.mxu0 0.0
  %3010 = vmatpush1.msra.mxu0 0.0
  %3011 = vmatprep.subr.mxu0 0.0
  %3012 = vmatpush1.msra.mxu0 0.0
  %3013 = vmatprep.subr.mxu0 0.0
  %3014 = vmatpush1.msra.mxu0 0.0
  %3015 = vmatprep.subr.mxu0 0.0
  %3016 = vmatpush1.msra.mxu0 0.0
  %3017 = vmatprep.subr.mxu0 0.0
  %3018 = vmatpush1.msra.mxu0 0.0
  %3019 = vmatprep.subr.mxu0 0.0
  %3020 = vmatpush1.msra.mxu0 0.0
  %3021 = vmatprep.subr.mxu0 0.0
  %3022 = vmatpush1.msra.mxu0 0.0
  %3023 = vmatprep.subr.mxu0 0.0
  %3024 = vmatpush1.msra.mxu0 0.0
  %3025 = vmatprep.subr.mxu0 0.0
  %3026 = vmatpush1.msra.mxu0 0.0
  %3027 = vmatprep.subr.mxu0 0.0
  %3028 = vmatpush1.msra.mxu0 0.0
  %3029 = vmatprep.subr.mxu0 0.0
  %3030 = vmatpush1.msra.mxu0 0.0
  %3031 = vmatprep.subr.mxu0 0.0
  %3032 = vmatpush1.msra.mxu0 0.0
  %3033 = vmatprep.subr.mxu0 0.0
  %3034 = vmatpush1.msra.mxu0 0.0
  %3035 = vmatprep.mubr.f32.mxu0 0.0
  %v3036 = vand.u32 %v2956, 4294901760
  %v3037 = vsub.f32 %v2956, %v3036
  %v3038 = vand.u32 %v3037, 4294901760
  %v3039 = vsub.f32 %v3037, %v3038
  %v3040 = vand.u32 %v3039, 4294901760
  %3041 = vmatmul.mubr.f32.gmra.mrb[0].mxu0 %v3040
  %v3042 = vpop.f32.mrb[0].mxu0
  %v3043 = vadd.f32 0.0, %v3042
  %v3044 = vpop.f32.mrb[0].mxu0
  %3045 = vmatprep.mubr.f32.mxu0 0.0
  %v3046 = vand.u32 %v2959, 4294901760
  %v3047 = vsub.f32 %v2959, %v3046
  %v3048 = vand.u32 %v3047, 4294901760
  %v3049 = vsub.f32 %v3047, %v3048
  %v3050 = vand.u32 %v3049, 4294901760
  %3051 = vmatmul.mubr.f32.gmra.mrb[0].mxu0 %v3050
  %v3052 = vpop.f32.mrb[0].mxu0
  %v3053 = vadd.f32 0.0, %v3052
  %v3054 = vpop.f32.mrb[0].mxu0
  %3055 = vdwg.mxu0
  %3056 = vmatprep.subr.mxu0 0.0
  %v3057 = vand.u32 %v2944, 4294901760
  %v3058 = vsub.f32 %v2944, %v3057
  %v3059 = vand.u32 %v3058, 4294901760
  %v3060 = vsub.f32 %v3058, %v3059
  %v3061 = vand.u32 %v3060, 4294901760
  %3062 = vmatpush1.msra.mxu0 %v3061
  %3063 = vmatprep.subr.mxu0 0.0
  %v3064 = vand.u32 %v2945, 4294901760
  %v3065 = vsub.f32 %v2945, %v3064
  %v3066 = vand.u32 %v3065, 4294901760
  %v3067 = vsub.f32 %v3065, %v3066
  %v3068 = vand.u32 %v3067, 4294901760
  %3069 = vmatpush1.msra.mxu0 %v3068
  %3070 = vmatprep.subr.mxu0 0.0
  %v3071 = vand.u32 %v2946, 4294901760
  %v3072 = vsub.f32 %v2946, %v3071
  %v3073 = vand.u32 %v3072, 4294901760
  %v3074 = vsub.f32 %v3072, %v3073
  %v3075 = vand.u32 %v3074, 4294901760
  %3076 = vmatpush1.msra.mxu0 %v3075
  %3077 = vmatprep.subr.mxu0 0.0
  %v3078 = vand.u32 %v2947, 4294901760
  %v3079 = vsub.f32 %v2947, %v3078
  %v3080 = vand.u32 %v3079, 4294901760
  %v3081 = vsub.f32 %v3079, %v3080
  %v3082 = vand.u32 %v3081, 4294901760
  %3083 = vmatpush1.msra.mxu0 %v3082
  %3084 = vmatprep.subr.mxu0 0.0
  %v3085 = vand.u32 %v2948, 4294901760
  %v3086 = vsub.f32 %v2948, %v3085
  %v3087 = vand.u32 %v3086, 4294901760
  %v3088 = vsub.f32 %v3086, %v3087
  %v3089 = vand.u32 %v3088, 4294901760
  %3090 = vmatpush1.msra.mxu0 %v3089
  %3091 = vmatprep.subr.mxu0 0.0
  %v3092 = vand.u32 %v2949, 4294901760
  %v3093 = vsub.f32 %v2949, %v3092
  %v3094 = vand.u32 %v3093, 4294901760
  %v3095 = vsub.f32 %v3093, %v3094
  %v3096 = vand.u32 %v3095, 4294901760
  %3097 = vmatpush1.msra.mxu0 %v3096
  %3098 = vmatprep.subr.mxu0 0.0
  %v3099 = vand.u32 %v2950, 4294901760
  %v3100 = vsub.f32 %v2950, %v3099
  %v3101 = vand.u32 %v3100, 4294901760
  %v3102 = vsub.f32 %v3100, %v3101
  %v3103 = vand.u32 %v3102, 4294901760
  %3104 = vmatpush1.msra.mxu0 %v3103
  %3105 = vmatprep.subr.mxu0 0.0
  %v3106 = vand.u32 %v2951, 4294901760
  %v3107 = vsub.f32 %v2951, %v3106
  %v3108 = vand.u32 %v3107, 4294901760
  %v3109 = vsub.f32 %v3107, %v3108
  %v3110 = vand.u32 %v3109, 4294901760
  %3111 = vmatpush1.msra.mxu0 %v3110
  %3112 = vmatprep.subr.mxu0 0.0
  %v3113 = vand.u32 %v2952, 4294901760
  %v3114 = vsub.f32 %v2952, %v3113
  %v3115 = vand.u32 %v3114, 4294901760
  %v3116 = vsub.f32 %v3114, %v3115
  %v3117 = vand.u32 %v3116, 4294901760
  %3118 = vmatpush1.msra.mxu0 %v3117
  %3119 = vmatprep.subr.mxu0 0.0
  %v3120 = vand.u32 %v2953, 4294901760
  %v3121 = vsub.f32 %v2953, %v3120
  %v3122 = vand.u32 %v3121, 4294901760
  %v3123 = vsub.f32 %v3121, %v3122
  %v3124 = vand.u32 %v3123, 4294901760
  %3125 = vmatpush1.msra.mxu0 %v3124
  %3126 = vmatprep.subr.mxu0 0.0
  %3127 = vmatpush1.msra.mxu0 0.0
  %3128 = vmatprep.subr.mxu0 0.0
  %3129 = vmatpush1.msra.mxu0 0.0
  %3130 = vmatprep.subr.mxu0 0.0
  %3131 = vmatpush1.msra.mxu0 0.0
  %3132 = vmatprep.subr.mxu0 0.0
  %3133 = vmatpush1.msra.mxu0 0.0
  %3134 = vmatprep.subr.mxu0 0.0
  %3135 = vmatpush1.msra.mxu0 0.0
  %3136 = vmatprep.subr.mxu0 0.0
  %3137 = vmatpush1.msra.mxu0 0.0
  %3138 = vmatprep.subr.mxu0 0.0
  %3139 = vmatpush1.msra.mxu0 0.0
  %3140 = vmatprep.subr.mxu0 0.0
  %3141 = vmatpush1.msra.mxu0 0.0
  %3142 = vmatprep.subr.mxu0 0.0
  %3143 = vmatpush1.msra.mxu0 0.0
  %3144 = vmatprep.subr.mxu0 0.0
  %3145 = vmatpush1.msra.mxu0 0.0
  %3146 = vmatprep.subr.mxu0 0.0
  %3147 = vmatpush1.msra.mxu0 0.0
  %3148 = vmatprep.subr.mxu0 0.0
  %3149 = vmatpush1.msra.mxu0 0.0
  %3150 = vmatprep.subr.mxu0 0.0
  %3151 = vmatpush1.msra.mxu0 0.0
  %3152 = vmatprep.subr.mxu0 0.0
  %3153 = vmatpush1.msra.mxu0 0.0
  %3154 = vmatprep.subr.mxu0 0.0
  %3155 = vmatpush1.msra.mxu0 0.0
  %3156 = vmatprep.subr.mxu0 0.0
  %3157 = vmatpush1.msra.mxu0 0.0
  %3158 = vmatprep.subr.mxu0 0.0
  %3159 = vmatpush1.msra.mxu0 0.0
  %3160 = vmatprep.subr.mxu0 0.0
  %3161 = vmatpush1.msra.mxu0 0.0
  %3162 = vmatprep.subr.mxu0 0.0
  %3163 = vmatpush1.msra.mxu0 0.0
  %3164 = vmatprep.subr.mxu0 0.0
  %3165 = vmatpush1.msra.mxu0 0.0
  %3166 = vmatprep.subr.mxu0 0.0
  %3167 = vmatpush1.msra.mxu0 0.0
  %3168 = vmatprep.subr.mxu0 0.0
  %3169 = vmatpush1.msra.mxu0 0.0
  %3170 = vmatprep.mubr.f32.mxu0 0.0
  %v3171 = vand.u32 %v2956, 4294901760
  %3172 = vmatmul.mubr.f32.gmra.mrb[0].mxu0 %v3171
  %v3173 = vpop.f32.mrb[0].mxu0
  %v3174 = vadd.f32 %v3043, %v3173
  %v3175 = vpop.f32.mrb[0].mxu0
  %3176 = vmatprep.mubr.f32.mxu0 0.0
  %v3177 = vand.u32 %v2959, 4294901760
  %3178 = vmatmul.mubr.f32.gmra.mrb[0].mxu0 %v3177
  %v3179 = vpop.f32.mrb[0].mxu0
  %v3180 = vadd.f32 %v3053, %v3179
  %v3181 = vpop.f32.mrb[0].mxu0
  %3182 = vdwg.mxu0
  %3183 = vmatprep.subr.mxu0 0.0
  %v3184 = vand.u32 %v2944, 4294901760
  %v3185 = vsub.f32 %v2944, %v3184
  %3186 = vmatpush1.msra.mxu0 %v3185
  %3187 = vmatprep.subr.mxu0 0.0
  %v3188 = vand.u32 %v2945, 4294901760
  %v3189 = vsub.f32 %v2945, %v3188
  %3190 = vmatpush1.msra.mxu0 %v3189
  %3191 = vmatprep.subr.mxu0 0.0
  %v3192 = vand.u32 %v2946, 4294901760
  %v3193 = vsub.f32 %v2946, %v3192
  %3194 = vmatpush1.msra.mxu0 %v3193
  %3195 = vmatprep.subr.mxu0 0.0
  %v3196 = vand.u32 %v2947, 4294901760
  %v3197 = vsub.f32 %v2947, %v3196
  %3198 = vmatpush1.msra.mxu0 %v3197
  %3199 = vmatprep.subr.mxu0 0.0
  %v3200 = vand.u32 %v2948, 4294901760
  %v3201 = vsub.f32 %v2948, %v3200
  %3202 = vmatpush1.msra.mxu0 %v3201
  %3203 = vmatprep.subr.mxu0 0.0
  %v3204 = vand.u32 %v2949, 4294901760
  %v3205 = vsub.f32 %v2949, %v3204
  %3206 = vmatpush1.msra.mxu0 %v3205
  %3207 = vmatprep.subr.mxu0 0.0
  %v3208 = vand.u32 %v2950, 4294901760
  %v3209 = vsub.f32 %v2950, %v3208
  %3210 = vmatpush1.msra.mxu0 %v3209
  %3211 = vmatprep.subr.mxu0 0.0
  %v3212 = vand.u32 %v2951, 4294901760
  %v3213 = vsub.f32 %v2951, %v3212
  %3214 = vmatpush1.msra.mxu0 %v3213
  %3215 = vmatprep.subr.mxu0 0.0
  %v3216 = vand.u32 %v2952, 4294901760
  %v3217 = vsub.f32 %v2952, %v3216
  %3218 = vmatpush1.msra.mxu0 %v3217
  %3219 = vmatprep.subr.mxu0 0.0
  %v3220 = vand.u32 %v2953, 4294901760
  %v3221 = vsub.f32 %v2953, %v3220
  %3222 = vmatpush1.msra.mxu0 %v3221
  %3223 = vmatprep.subr.mxu0 0.0
  %3224 = vmatpush1.msra.mxu0 0.0
  %3225 = vmatprep.subr.mxu0 0.0
  %3226 = vmatpush1.msra.mxu0 0.0
  %3227 = vmatprep.subr.mxu0 0.0
  %3228 = vmatpush1.msra.mxu0 0.0
  %3229 = vmatprep.subr.mxu0 0.0
  %3230 = vmatpush1.msra.mxu0 0.0
  %3231 = vmatprep.subr.mxu0 0.0
  %3232 = vmatpush1.msra.mxu0 0.0
  %3233 = vmatprep.subr.mxu0 0.0
  %3234 = vmatpush1.msra.mxu0 0.0
  %3235 = vmatprep.subr.mxu0 0.0
  %3236 = vmatpush1.msra.mxu0 0.0
  %3237 = vmatprep.subr.mxu0 0.0
  %3238 = vmatpush1.msra.mxu0 0.0
  %3239 = vmatprep.subr.mxu0 0.0
  %3240 = vmatpush1.msra.mxu0 0.0
  %3241 = vmatprep.subr.mxu0 0.0
  %3242 = vmatpush1.msra.mxu0 0.0
  %3243 = vmatprep.subr.mxu0 0.0
  %3244 = vmatpush1.msra.mxu0 0.0
  %3245 = vmatprep.subr.mxu0 0.0
  %3246 = vmatpush1.msra.mxu0 0.0
  %3247 = vmatprep.subr.mxu0 0.0
  %3248 = vmatpush1.msra.mxu0 0.0
  %3249 = vmatprep.subr.mxu0 0.0
  %3250 = vmatpush1.msra.mxu0 0.0
  %3251 = vmatprep.subr.mxu0 0.0
  %3252 = vmatpush1.msra.mxu0 0.0
  %3253 = vmatprep.subr.mxu0 0.0
  %3254 = vmatpush1.msra.mxu0 0.0
  %3255 = vmatprep.subr.mxu0 0.0
  %3256 = vmatpush1.msra.mxu0 0.0
  %3257 = vmatprep.subr.mxu0 0.0
  %3258 = vmatpush1.msra.mxu0 0.0
  %3259 = vmatprep.subr.mxu0 0.0
  %3260 = vmatpush1.msra.mxu0 0.0
  %3261 = vmatprep.subr.mxu0 0.0
  %3262 = vmatpush1.msra.mxu0 0.0
  %3263 = vmatprep.subr.mxu0 0.0
  %3264 = vmatpush1.msra.mxu0 0.0
  %3265 = vmatprep.subr.mxu0 0.0
  %3266 = vmatpush1.msra.mxu0 0.0
  %3267 = vmatprep.mubr.f32.mxu0 0.0
  %v3268 = vand.u32 %v2956, 4294901760
  %v3269 = vsub.f32 %v2956, %v3268
  %3270 = vmatmul.mubr.f32.gmra.mrb[0].mxu0 %v3269
  %v3271 = vpop.f32.mrb[0].mxu0
  %v3272 = vadd.f32 %v3174, %v3271
  %v3273 = vpop.f32.mrb[0].mxu0
  %3274 = vmatprep.mubr.f32.mxu0 0.0
  %v3275 = vand.u32 %v2959, 4294901760
  %v3276 = vsub.f32 %v2959, %v3275
  %3277 = vmatmul.mubr.f32.gmra.mrb[0].mxu0 %v3276
  %v3278 = vpop.f32.mrb[0].mxu0
  %v3279 = vadd.f32 %v3180, %v3278
  %v3280 = vpop.f32.mrb[0].mxu0
  %3281 = vdwg.mxu0
  %3282 = vmatprep.subr.mxu0 0.0
  %v3283 = vand.u32 %v2944, 4294901760
  %3284 = vmatpush1.msra.mxu0 %v3283
  %3285 = vmatprep.subr.mxu0 0.0
  %v3286 = vand.u32 %v2945, 4294901760
  %3287 = vmatpush1.msra.mxu0 %v3286
  %3288 = vmatprep.subr.mxu0 0.0
  %v3289 = vand.u32 %v2946, 4294901760
  %3290 = vmatpush1.msra.mxu0 %v3289
  %3291 = vmatprep.subr.mxu0 0.0
  %v3292 = vand.u32 %v2947, 4294901760
  %3293 = vmatpush1.msra.mxu0 %v3292
  %3294 = vmatprep.subr.mxu0 0.0
  %v3295 = vand.u32 %v2948, 4294901760
  %3296 = vmatpush1.msra.mxu0 %v3295
  %3297 = vmatprep.subr.mxu0 0.0
  %v3298 = vand.u32 %v2949, 4294901760
  %3299 = vmatpush1.msra.mxu0 %v3298
  %3300 = vmatprep.subr.mxu0 0.0
  %v3301 = vand.u32 %v2950, 4294901760
  %3302 = vmatpush1.msra.mxu0 %v3301
  %3303 = vmatprep.subr.mxu0 0.0
  %v3304 = vand.u32 %v2951, 4294901760
  %3305 = vmatpush1.msra.mxu0 %v3304
  %3306 = vmatprep.subr.mxu0 0.0
  %v3307 = vand.u32 %v2952, 4294901760
  %3308 = vmatpush1.msra.mxu0 %v3307
  %3309 = vmatprep.subr.mxu0 0.0
  %v3310 = vand.u32 %v2953, 4294901760
  %3311 = vmatpush1.msra.mxu0 %v3310
  %3312 = vmatprep.subr.mxu0 0.0
  %3313 = vmatpush1.msra.mxu0 0.0
  %3314 = vmatprep.subr.mxu0 0.0
  %3315 = vmatpush1.msra.mxu0 0.0
  %3316 = vmatprep.subr.mxu0 0.0
  %3317 = vmatpush1.msra.mxu0 0.0
  %3318 = vmatprep.subr.mxu0 0.0
  %3319 = vmatpush1.msra.mxu0 0.0
  %3320 = vmatprep.subr.mxu0 0.0
  %3321 = vmatpush1.msra.mxu0 0.0
  %3322 = vmatprep.subr.mxu0 0.0
  %3323 = vmatpush1.msra.mxu0 0.0
  %3324 = vmatprep.subr.mxu0 0.0
  %3325 = vmatpush1.msra.mxu0 0.0
  %3326 = vmatprep.subr.mxu0 0.0
  %3327 = vmatpush1.msra.mxu0 0.0
  %3328 = vmatprep.subr.mxu0 0.0
  %3329 = vmatpush1.msra.mxu0 0.0
  %3330 = vmatprep.subr.mxu0 0.0
  %3331 = vmatpush1.msra.mxu0 0.0
  %3332 = vmatprep.subr.mxu0 0.0
  %3333 = vmatpush1.msra.mxu0 0.0
  %3334 = vmatprep.subr.mxu0 0.0
  %3335 = vmatpush1.msra.mxu0 0.0
  %3336 = vmatprep.subr.mxu0 0.0
  %3337 = vmatpush1.msra.mxu0 0.0
  %3338 = vmatprep.subr.mxu0 0.0
  %3339 = vmatpush1.msra.mxu0 0.0
  %3340 = vmatprep.subr.mxu0 0.0
  %3341 = vmatpush1.msra.mxu0 0.0
  %3342 = vmatprep.subr.mxu0 0.0
  %3343 = vmatpush1.msra.mxu0 0.0
  %3344 = vmatprep.subr.mxu0 0.0
  %3345 = vmatpush1.msra.mxu0 0.0
  %3346 = vmatprep.subr.mxu0 0.0
  %3347 = vmatpush1.msra.mxu0 0.0
  %3348 = vmatprep.subr.mxu0 0.0
  %3349 = vmatpush1.msra.mxu0 0.0
  %3350 = vmatprep.subr.mxu0 0.0
  %3351 = vmatpush1.msra.mxu0 0.0
  %3352 = vmatprep.subr.mxu0 0.0
  %3353 = vmatpush1.msra.mxu0 0.0
  %3354 = vmatprep.subr.mxu0 0.0
  %3355 = vmatpush1.msra.mxu0 0.0
  %3356 = vmatprep.mubr.f32.mxu0 0.0
  %v3357 = vand.u32 %v2956, 4294901760
  %v3358 = vsub.f32 %v2956, %v3357
  %v3359 = vand.u32 %v3358, 4294901760
  %3360 = vmatmul.mubr.f32.gmra.mrb[0].mxu0 %v3359
  %v3361 = vpop.f32.mrb[0].mxu0
  %v3362 = vadd.f32 %v3272, %v3361
  %v3363 = vpop.f32.mrb[0].mxu0
  %3364 = vmatprep.mubr.f32.mxu0 0.0
  %v3365 = vand.u32 %v2959, 4294901760
  %v3366 = vsub.f32 %v2959, %v3365
  %v3367 = vand.u32 %v3366, 4294901760
  %3368 = vmatmul.mubr.f32.gmra.mrb[0].mxu0 %v3367
  %v3369 = vpop.f32.mrb[0].mxu0
  %v3370 = vadd.f32 %v3279, %v3369
  %v3371 = vpop.f32.mrb[0].mxu0
  %3372 = vdwg.mxu0
  %3373 = vmatprep.subr.mxu0 0.0
  %v3374 = vand.u32 %v2944, 4294901760
  %v3375 = vsub.f32 %v2944, %v3374
  %v3376 = vand.u32 %v3375, 4294901760
  %3377 = vmatpush1.msra.mxu0 %v3376
  %3378 = vmatprep.subr.mxu0 0.0
  %v3379 = vand.u32 %v2945, 4294901760
  %v3380 = vsub.f32 %v2945, %v3379
  %v3381 = vand.u32 %v3380, 4294901760
  %3382 = vmatpush1.msra.mxu0 %v3381
  %3383 = vmatprep.subr.mxu0 0.0
  %v3384 = vand.u32 %v2946, 4294901760
  %v3385 = vsub.f32 %v2946, %v3384
  %v3386 = vand.u32 %v3385, 4294901760
  %3387 = vmatpush1.msra.mxu0 %v3386
  %3388 = vmatprep.subr.mxu0 0.0
  %v3389 = vand.u32 %v2947, 4294901760
  %v3390 = vsub.f32 %v2947, %v3389
  %v3391 = vand.u32 %v3390, 4294901760
  %3392 = vmatpush1.msra.mxu0 %v3391
  %3393 = vmatprep.subr.mxu0 0.0
  %v3394 = vand.u32 %v2948, 4294901760
  %v3395 = vsub.f32 %v2948, %v3394
  %v3396 = vand.u32 %v3395, 4294901760
  %3397 = vmatpush1.msra.mxu0 %v3396
  %3398 = vmatprep.subr.mxu0 0.0
  %v3399 = vand.u32 %v2949, 4294901760
  %v3400 = vsub.f32 %v2949, %v3399
  %v3401 = vand.u32 %v3400, 4294901760
  %3402 = vmatpush1.msra.mxu0 %v3401
  %3403 = vmatprep.subr.mxu0 0.0
  %v3404 = vand.u32 %v2950, 4294901760
  %v3405 = vsub.f32 %v2950, %v3404
  %v3406 = vand.u32 %v3405, 4294901760
  %3407 = vmatpush1.msra.mxu0 %v3406
  %3408 = vmatprep.subr.mxu0 0.0
  %v3409 = vand.u32 %v2951, 4294901760
  %v3410 = vsub.f32 %v2951, %v3409
  %v3411 = vand.u32 %v3410, 4294901760
  %3412 = vmatpush1.msra.mxu0 %v3411
  %3413 = vmatprep.subr.mxu0 0.0
  %v3414 = vand.u32 %v2952, 4294901760
  %v3415 = vsub.f32 %v2952, %v3414
  %v3416 = vand.u32 %v3415, 4294901760
  %3417 = vmatpush1.msra.mxu0 %v3416
  %3418 = vmatprep.subr.mxu0 0.0
  %v3419 = vand.u32 %v2953, 4294901760
  %v3420 = vsub.f32 %v2953, %v3419
  %v3421 = vand.u32 %v3420, 4294901760
  %3422 = vmatpush1.msra.mxu0 %v3421
  %3423 = vmatprep.subr.mxu0 0.0
  %3424 = vmatpush1.msra.mxu0 0.0
  %3425 = vmatprep.subr.mxu0 0.0
  %3426 = vmatpush1.msra.mxu0 0.0
  %3427 = vmatprep.subr.mxu0 0.0
  %3428 = vmatpush1.msra.mxu0 0.0
  %3429 = vmatprep.subr.mxu0 0.0
  %3430 = vmatpush1.msra.mxu0 0.0
  %3431 = vmatprep.subr.mxu0 0.0
  %3432 = vmatpush1.msra.mxu0 0.0
  %3433 = vmatprep.subr.mxu0 0.0
  %3434 = vmatpush1.msra.mxu0 0.0
  %3435 = vmatprep.subr.mxu0 0.0
  %3436 = vmatpush1.msra.mxu0 0.0
  %3437 = vmatprep.subr.mxu0 0.0
  %3438 = vmatpush1.msra.mxu0 0.0
  %3439 = vmatprep.subr.mxu0 0.0
  %3440 = vmatpush1.msra.mxu0 0.0
  %3441 = vmatprep.subr.mxu0 0.0
  %3442 = vmatpush1.msra.mxu0 0.0
  %3443 = vmatprep.subr.mxu0 0.0
  %3444 = vmatpush1.msra.mxu0 0.0
  %3445 = vmatprep.subr.mxu0 0.0
  %3446 = vmatpush1.msra.mxu0 0.0
  %3447 = vmatprep.subr.mxu0 0.0
  %3448 = vmatpush1.msra.mxu0 0.0
  %3449 = vmatprep.subr.mxu0 0.0
  %3450 = vmatpush1.msra.mxu0 0.0
  %3451 = vmatprep.subr.mxu0 0.0
  %3452 = vmatpush1.msra.mxu0 0.0
  %3453 = vmatprep.subr.mxu0 0.0
  %3454 = vmatpush1.msra.mxu0 0.0
  %3455 = vmatprep.subr.mxu0 0.0
  %3456 = vmatpush1.msra.mxu0 0.0
  %3457 = vmatprep.subr.mxu0 0.0
  %3458 = vmatpush1.msra.mxu0 0.0
  %3459 = vmatprep.subr.mxu0 0.0
  %3460 = vmatpush1.msra.mxu0 0.0
  %3461 = vmatprep.subr.mxu0 0.0
  %3462 = vmatpush1.msra.mxu0 0.0
  %3463 = vmatprep.subr.mxu0 0.0
  %3464 = vmatpush1.msra.mxu0 0.0
  %3465 = vmatprep.subr.mxu0 0.0
  %3466 = vmatpush1.msra.mxu0 0.0
  %3467 = vmatprep.mubr.f32.mxu0 0.0
  %v3468 = vand.u32 %v2956, 4294901760
  %3469 = vmatmul.mubr.f32.gmra.mrb[0].mxu0 %v3468
  %v3470 = vpop.f32.mrb[0].mxu0
  %v3471 = vadd.f32 %v3362, %v3470
  %v3472 = vpop.f32.mrb[0].mxu0
  %3473 = vmatprep.mubr.f32.mxu0 0.0
  %v3474 = vand.u32 %v2959, 4294901760
  %3475 = vmatmul.mubr.f32.gmra.mrb[0].mxu0 %v3474
  %v3476 = vpop.f32.mrb[0].mxu0
  %v3477 = vadd.f32 %v3370, %v3476
  %v3478 = vpop.f32.mrb[0].mxu0
  %3479 = vdwg.mxu0
  %3480 = vmatprep.subr.mxu0 0.0
  %v3481 = vand.u32 %v2944, 4294901760
  %3482 = vmatpush1.msra.mxu0 %v3481
  %3483 = vmatprep.subr.mxu0 0.0
  %v3484 = vand.u32 %v2945, 4294901760
  %3485 = vmatpush1.msra.mxu0 %v3484
  %3486 = vmatprep.subr.mxu0 0.0
  %v3487 = vand.u32 %v2946, 4294901760
  %3488 = vmatpush1.msra.mxu0 %v3487
  %3489 = vmatprep.subr.mxu0 0.0
  %v3490 = vand.u32 %v2947, 4294901760
  %3491 = vmatpush1.msra.mxu0 %v3490
  %3492 = vmatprep.subr.mxu0 0.0
  %v3493 = vand.u32 %v2948, 4294901760
  %3494 = vmatpush1.msra.mxu0 %v3493
  %3495 = vmatprep.subr.mxu0 0.0
  %v3496 = vand.u32 %v2949, 4294901760
  %3497 = vmatpush1.msra.mxu0 %v3496
  %3498 = vmatprep.subr.mxu0 0.0
  %v3499 = vand.u32 %v2950, 4294901760
  %3500 = vmatpush1.msra.mxu0 %v3499
  %3501 = vmatprep.subr.mxu0 0.0
  %v3502 = vand.u32 %v2951, 4294901760
  %3503 = vmatpush1.msra.mxu0 %v3502
  %3504 = vmatprep.subr.mxu0 0.0
  %v3505 = vand.u32 %v2952, 4294901760
  %3506 = vmatpush1.msra.mxu0 %v3505
  %3507 = vmatprep.subr.mxu0 0.0
  %v3508 = vand.u32 %v2953, 4294901760
  %3509 = vmatpush1.msra.mxu0 %v3508
  %3510 = vmatprep.subr.mxu0 0.0
  %3511 = vmatpush1.msra.mxu0 0.0
  %3512 = vmatprep.subr.mxu0 0.0
  %3513 = vmatpush1.msra.mxu0 0.0
  %3514 = vmatprep.subr.mxu0 0.0
  %3515 = vmatpush1.msra.mxu0 0.0
  %3516 = vmatprep.subr.mxu0 0.0
  %3517 = vmatpush1.msra.mxu0 0.0
  %3518 = vmatprep.subr.mxu0 0.0
  %3519 = vmatpush1.msra.mxu0 0.0
  %3520 = vmatprep.subr.mxu0 0.0
  %3521 = vmatpush1.msra.mxu0 0.0
  %3522 = vmatprep.subr.mxu0 0.0
  %3523 = vmatpush1.msra.mxu0 0.0
  %3524 = vmatprep.subr.mxu0 0.0
  %3525 = vmatpush1.msra.mxu0 0.0
  %3526 = vmatprep.subr.mxu0 0.0
  %3527 = vmatpush1.msra.mxu0 0.0
  %3528 = vmatprep.subr.mxu0 0.0
  %3529 = vmatpush1.msra.mxu0 0.0
  %3530 = vmatprep.subr.mxu0 0.0
  %3531 = vmatpush1.msra.mxu0 0.0
  %3532 = vmatprep.subr.mxu0 0.0
  %3533 = vmatpush1.msra.mxu0 0.0
  %3534 = vmatprep.subr.mxu0 0.0
  %3535 = vmatpush1.msra.mxu0 0.0
  %3536 = vmatprep.subr.mxu0 0.0
  %3537 = vmatpush1.msra.mxu0 0.0
  %3538 = vmatprep.subr.mxu0 0.0
  %3539 = vmatpush1.msra.mxu0 0.0
  %3540 = vmatprep.subr.mxu0 0.0
  %3541 = vmatpush1.msra.mxu0 0.0
  %3542 = vmatprep.subr.mxu0 0.0
  %3543 = vmatpush1.msra.mxu0 0.0
  %3544 = vmatprep.subr.mxu0 0.0
  %3545 = vmatpush1.msra.mxu0 0.0
  %3546 = vmatprep.subr.mxu0 0.0
  %3547 = vmatpush1.msra.mxu0 0.0
  %3548 = vmatprep.subr.mxu0 0.0
  %3549 = vmatpush1.msra.mxu0 0.0
  %3550 = vmatprep.subr.mxu0 0.0
  %3551 = vmatpush1.msra.mxu0 0.0
  %3552 = vmatprep.subr.mxu0 0.0
  %3553 = vmatpush1.msra.mxu0 0.0
  %3554 = vmatprep.mubr.f32.mxu0 0.0
  %v3555 = vand.u32 %v2956, 4294901760
  %3556 = vmatmul.mubr.f32.gmra.mrb[0].mxu0 %v3555
  %v3557 = vpop.f32.mrb[0].mxu0
  %v3558 = vadd.f32 %v3471, %v3557
  %v3559 = vpop.f32.mrb[0].mxu0
  %3560 = vmatprep.mubr.f32.mxu0 0.0
  %v3561 = vand.u32 %v2959, 4294901760
  %3562 = vmatmul.mubr.f32.gmra.mrb[0].mxu0 %v3561
  %v3563 = vpop.f32.mrb[0].mxu0
  %v3564 = vadd.f32 %v3477, %v3563
  %v3565 = vpop.f32.mrb[0].mxu0
  %3566 = vdwg.mxu0
  %v3567 = vrcp.pop %v3558
  %v3568 = vrcp.pop %v3564
  %3570 = vset.pattern.permute.xlu0 40
  %3571 = vperm.xlu0 %3570, %v3567
  %v3572 = vpop.permute.xlu0 %3571
  %3575 = vset.pattern.permute.xlu0 40
  %3576 = vperm.xlu0 %3575, %v3568
  %v3577 = vpop.permute.xlu0 %3576
  %v3579 = vmul.f32 %v3558, %v3572
  %v3580 = vmul.f32 %v3564, %v3577
  %v3581 = vmul.f32 %v3579, %v3579
  %v3582 = vmul.f32 %v3580, %v3580
  %v3583 = vsel %vm2856, %v3581, 0.0
  %3584 = vadd.xlane.f32.xlu0 %v3583
  %v3585 = vpop.xlane.xlu0 %3584
  %v3586 = vsel %vm2856, %v3582, 0.0
  %3587 = vadd.xlane.f32.xlu0 %v3586
  %v3588 = vpop.xlane.xlu0 %3587
  %v3589 = vmax.f32 %v3585, 1e-24
  %v3590 = vmax.f32 %v3588, 1e-24
  %v3591 = vrsqrt.pop %v3589
  %v3592 = vrsqrt.pop %v3590
  %v3593 = vmul.f32 %v3579, %v3591
  %v3594 = vmul.f32 %v3580, %v3592
  %3595 = vst.msk [vmem:[%s2] sm:$0xff] %vm2856, %v3593
  %3596 = vst.msk [vmem:[%s2 + $0x8] sm:$0xff] %vm2856, %v3594
  %vm3597 = vcmp.lt.s32.totalorder %v58, 2
  %v3598 = vmul.u32 %v58, 8
  %vm3599 = vcmp.eq.s32.totalorder %v81, %v3598
  %vm3600 = vmand %vm3597, %vm3599
  %v3601 = vsel %vm3600, 1.0, 0.0
  %vm3602 = vcmask 130048
  %v3604 = vsel %vm3602, %v3601, 0
  %3606 = vmatprep.subr.mxu0 0.0
  %v3607 = vand.u32 %v3593, 4294901760
  %3608 = vmatpush1.msra.mxu0 %v3607
  %3609 = vmatprep.subr.mxu0 0.0
  %v3610 = vand.u32 %v3594, 4294901760
  %3611 = vmatpush1.msra.mxu0 %v3610
  %3612 = vmatprep.subr.mxu0 0.0
  %3613 = vmatpush1.msra.mxu0 0.0
  %3614 = vmatprep.subr.mxu0 0.0
  %3615 = vmatpush1.msra.mxu0 0.0
  %3616 = vmatprep.subr.mxu0 0.0
  %3617 = vmatpush1.msra.mxu0 0.0
  %3618 = vmatprep.subr.mxu0 0.0
  %3619 = vmatpush1.msra.mxu0 0.0
  %3620 = vmatprep.subr.mxu0 0.0
  %3621 = vmatpush1.msra.mxu0 0.0
  %3622 = vmatprep.subr.mxu0 0.0
  %3623 = vmatpush1.msra.mxu0 0.0
  %3624 = vmatprep.subr.mxu0 0.0
  %3625 = vmatpush1.msra.mxu0 0.0
  %3626 = vmatprep.subr.mxu0 0.0
  %3627 = vmatpush1.msra.mxu0 0.0
  %3628 = vmatprep.subr.mxu0 0.0
  %3629 = vmatpush1.msra.mxu0 0.0
  %3630 = vmatprep.subr.mxu0 0.0
  %3631 = vmatpush1.msra.mxu0 0.0
  %3632 = vmatprep.subr.mxu0 0.0
  %3633 = vmatpush1.msra.mxu0 0.0
  %3634 = vmatprep.subr.mxu0 0.0
  %3635 = vmatpush1.msra.mxu0 0.0
  %3636 = vmatprep.subr.mxu0 0.0
  %3637 = vmatpush1.msra.mxu0 0.0
  %3638 = vmatprep.subr.mxu0 0.0
  %3639 = vmatpush1.msra.mxu0 0.0
  %3640 = vmatprep.subr.mxu0 0.0
  %3641 = vmatpush1.msra.mxu0 0.0
  %3642 = vmatprep.subr.mxu0 0.0
  %3643 = vmatpush1.msra.mxu0 0.0
  %3644 = vmatprep.subr.mxu0 0.0
  %3645 = vmatpush1.msra.mxu0 0.0
  %3646 = vmatprep.subr.mxu0 0.0
  %3647 = vmatpush1.msra.mxu0 0.0
  %3648 = vmatprep.subr.mxu0 0.0
  %3649 = vmatpush1.msra.mxu0 0.0
  %3650 = vmatprep.subr.mxu0 0.0
  %3651 = vmatpush1.msra.mxu0 0.0
  %3652 = vmatprep.subr.mxu0 0.0
  %3653 = vmatpush1.msra.mxu0 0.0
  %3654 = vmatprep.subr.mxu0 0.0
  %3655 = vmatpush1.msra.mxu0 0.0
  %3656 = vmatprep.subr.mxu0 0.0
  %3657 = vmatpush1.msra.mxu0 0.0
  %3658 = vmatprep.subr.mxu0 0.0
  %3659 = vmatpush1.msra.mxu0 0.0
  %3660 = vmatprep.subr.mxu0 0.0
  %3661 = vmatpush1.msra.mxu0 0.0
  %3662 = vmatprep.subr.mxu0 0.0
  %3663 = vmatpush1.msra.mxu0 0.0
  %3664 = vmatprep.subr.mxu0 0.0
  %3665 = vmatpush1.msra.mxu0 0.0
  %3666 = vmatprep.subr.mxu0 0.0
  %3667 = vmatpush1.msra.mxu0 0.0
  %3668 = vmatprep.subr.mxu0 0.0
  %3669 = vmatpush1.msra.mxu0 0.0
  %3670 = vmatprep.subr.mxu0 0.0
  %3671 = vmatpush1.msra.mxu0 0.0
  %3672 = vmatprep.mubr.f32.mxu0 0.0
  %v3673 = vand.u32 %v3604, 4294901760
  %v3674 = vsub.f32 %v3604, %v3673
  %v3675 = vand.u32 %v3674, 4294901760
  %v3676 = vsub.f32 %v3674, %v3675
  %v3677 = vand.u32 %v3676, 4294901760
  %3678 = vmatmul.mubr.f32.gmra.mrb[0].mxu0 %v3677
  %v3679 = vpop.f32.mrb[0].mxu0
  %v3680 = vadd.f32 0.0, %v3679
  %v3681 = vpop.f32.mrb[0].mxu0
  %3682 = vdwg.mxu0
  %3683 = vmatprep.subr.mxu0 0.0
  %v3684 = vand.u32 %v3593, 4294901760
  %v3685 = vsub.f32 %v3593, %v3684
  %v3686 = vand.u32 %v3685, 4294901760
  %v3687 = vsub.f32 %v3685, %v3686
  %v3688 = vand.u32 %v3687, 4294901760
  %3689 = vmatpush1.msra.mxu0 %v3688
  %3690 = vmatprep.subr.mxu0 0.0
  %v3691 = vand.u32 %v3594, 4294901760
  %v3692 = vsub.f32 %v3594, %v3691
  %v3693 = vand.u32 %v3692, 4294901760
  %v3694 = vsub.f32 %v3692, %v3693
  %v3695 = vand.u32 %v3694, 4294901760
  %3696 = vmatpush1.msra.mxu0 %v3695
  %3697 = vmatprep.subr.mxu0 0.0
  %3698 = vmatpush1.msra.mxu0 0.0
  %3699 = vmatprep.subr.mxu0 0.0
  %3700 = vmatpush1.msra.mxu0 0.0
  %3701 = vmatprep.subr.mxu0 0.0
  %3702 = vmatpush1.msra.mxu0 0.0
  %3703 = vmatprep.subr.mxu0 0.0
  %3704 = vmatpush1.msra.mxu0 0.0
  %3705 = vmatprep.subr.mxu0 0.0
  %3706 = vmatpush1.msra.mxu0 0.0
  %3707 = vmatprep.subr.mxu0 0.0
  %3708 = vmatpush1.msra.mxu0 0.0
  %3709 = vmatprep.subr.mxu0 0.0
  %3710 = vmatpush1.msra.mxu0 0.0
  %3711 = vmatprep.subr.mxu0 0.0
  %3712 = vmatpush1.msra.mxu0 0.0
  %3713 = vmatprep.subr.mxu0 0.0
  %3714 = vmatpush1.msra.mxu0 0.0
  %3715 = vmatprep.subr.mxu0 0.0
  %3716 = vmatpush1.msra.mxu0 0.0
  %3717 = vmatprep.subr.mxu0 0.0
  %3718 = vmatpush1.msra.mxu0 0.0
  %3719 = vmatprep.subr.mxu0 0.0
  %3720 = vmatpush1.msra.mxu0 0.0
  %3721 = vmatprep.subr.mxu0 0.0
  %3722 = vmatpush1.msra.mxu0 0.0
  %3723 = vmatprep.subr.mxu0 0.0
  %3724 = vmatpush1.msra.mxu0 0.0
  %3725 = vmatprep.subr.mxu0 0.0
  %3726 = vmatpush1.msra.mxu0 0.0
  %3727 = vmatprep.subr.mxu0 0.0
  %3728 = vmatpush1.msra.mxu0 0.0
  %3729 = vmatprep.subr.mxu0 0.0
  %3730 = vmatpush1.msra.mxu0 0.0
  %3731 = vmatprep.subr.mxu0 0.0
  %3732 = vmatpush1.msra.mxu0 0.0
  %3733 = vmatprep.subr.mxu0 0.0
  %3734 = vmatpush1.msra.mxu0 0.0
  %3735 = vmatprep.subr.mxu0 0.0
  %3736 = vmatpush1.msra.mxu0 0.0
  %3737 = vmatprep.subr.mxu0 0.0
  %3738 = vmatpush1.msra.mxu0 0.0
  %3739 = vmatprep.subr.mxu0 0.0
  %3740 = vmatpush1.msra.mxu0 0.0
  %3741 = vmatprep.subr.mxu0 0.0
  %3742 = vmatpush1.msra.mxu0 0.0
  %3743 = vmatprep.subr.mxu0 0.0
  %3744 = vmatpush1.msra.mxu0 0.0
  %3745 = vmatprep.subr.mxu0 0.0
  %3746 = vmatpush1.msra.mxu0 0.0
  %3747 = vmatprep.subr.mxu0 0.0
  %3748 = vmatpush1.msra.mxu0 0.0
  %3749 = vmatprep.subr.mxu0 0.0
  %3750 = vmatpush1.msra.mxu0 0.0
  %3751 = vmatprep.subr.mxu0 0.0
  %3752 = vmatpush1.msra.mxu0 0.0
  %3753 = vmatprep.subr.mxu0 0.0
  %3754 = vmatpush1.msra.mxu0 0.0
  %3755 = vmatprep.subr.mxu0 0.0
  %3756 = vmatpush1.msra.mxu0 0.0
  %3757 = vmatprep.mubr.f32.mxu0 0.0
  %v3758 = vand.u32 %v3604, 4294901760
  %3759 = vmatmul.mubr.f32.gmra.mrb[0].mxu0 %v3758
  %v3760 = vpop.f32.mrb[0].mxu0
  %v3761 = vadd.f32 %v3680, %v3760
  %v3762 = vpop.f32.mrb[0].mxu0
  %3763 = vdwg.mxu0
  %3764 = vmatprep.subr.mxu0 0.0
  %v3765 = vand.u32 %v3593, 4294901760
  %v3766 = vsub.f32 %v3593, %v3765
  %3767 = vmatpush1.msra.mxu0 %v3766
  %3768 = vmatprep.subr.mxu0 0.0
  %v3769 = vand.u32 %v3594, 4294901760
  %v3770 = vsub.f32 %v3594, %v3769
  %3771 = vmatpush1.msra.mxu0 %v3770
  %3772 = vmatprep.subr.mxu0 0.0
  %3773 = vmatpush1.msra.mxu0 0.0
  %3774 = vmatprep.subr.mxu0 0.0
  %3775 = vmatpush1.msra.mxu0 0.0
  %3776 = vmatprep.subr.mxu0 0.0
  %3777 = vmatpush1.msra.mxu0 0.0
  %3778 = vmatprep.subr.mxu0 0.0
  %3779 = vmatpush1.msra.mxu0 0.0
  %3780 = vmatprep.subr.mxu0 0.0
  %3781 = vmatpush1.msra.mxu0 0.0
  %3782 = vmatprep.subr.mxu0 0.0
  %3783 = vmatpush1.msra.mxu0 0.0
  %3784 = vmatprep.subr.mxu0 0.0
  %3785 = vmatpush1.msra.mxu0 0.0
  %3786 = vmatprep.subr.mxu0 0.0
  %3787 = vmatpush1.msra.mxu0 0.0
  %3788 = vmatprep.subr.mxu0 0.0
  %3789 = vmatpush1.msra.mxu0 0.0
  %3790 = vmatprep.subr.mxu0 0.0
  %3791 = vmatpush1.msra.mxu0 0.0
  %3792 = vmatprep.subr.mxu0 0.0
  %3793 = vmatpush1.msra.mxu0 0.0
  %3794 = vmatprep.subr.mxu0 0.0
  %3795 = vmatpush1.msra.mxu0 0.0
  %3796 = vmatprep.subr.mxu0 0.0
  %3797 = vmatpush1.msra.mxu0 0.0
  %3798 = vmatprep.subr.mxu0 0.0
  %3799 = vmatpush1.msra.mxu0 0.0
  %3800 = vmatprep.subr.mxu0 0.0
  %3801 = vmatpush1.msra.mxu0 0.0
  %3802 = vmatprep.subr.mxu0 0.0
  %3803 = vmatpush1.msra.mxu0 0.0
  %3804 = vmatprep.subr.mxu0 0.0
  %3805 = vmatpush1.msra.mxu0 0.0
  %3806 = vmatprep.subr.mxu0 0.0
  %3807 = vmatpush1.msra.mxu0 0.0
  %3808 = vmatprep.subr.mxu0 0.0
  %3809 = vmatpush1.msra.mxu0 0.0
  %3810 = vmatprep.subr.mxu0 0.0
  %3811 = vmatpush1.msra.mxu0 0.0
  %3812 = vmatprep.subr.mxu0 0.0
  %3813 = vmatpush1.msra.mxu0 0.0
  %3814 = vmatprep.subr.mxu0 0.0
  %3815 = vmatpush1.msra.mxu0 0.0
  %3816 = vmatprep.subr.mxu0 0.0
  %3817 = vmatpush1.msra.mxu0 0.0
  %3818 = vmatprep.subr.mxu0 0.0
  %3819 = vmatpush1.msra.mxu0 0.0
  %3820 = vmatprep.subr.mxu0 0.0
  %3821 = vmatpush1.msra.mxu0 0.0
  %3822 = vmatprep.subr.mxu0 0.0
  %3823 = vmatpush1.msra.mxu0 0.0
  %3824 = vmatprep.subr.mxu0 0.0
  %3825 = vmatpush1.msra.mxu0 0.0
  %3826 = vmatprep.subr.mxu0 0.0
  %3827 = vmatpush1.msra.mxu0 0.0
  %3828 = vmatprep.subr.mxu0 0.0
  %3829 = vmatpush1.msra.mxu0 0.0
  %3830 = vmatprep.subr.mxu0 0.0
  %3831 = vmatpush1.msra.mxu0 0.0
  %3832 = vmatprep.mubr.f32.mxu0 0.0
  %v3833 = vand.u32 %v3604, 4294901760
  %v3834 = vsub.f32 %v3604, %v3833
  %3835 = vmatmul.mubr.f32.gmra.mrb[0].mxu0 %v3834
  %v3836 = vpop.f32.mrb[0].mxu0
  %v3837 = vadd.f32 %v3761, %v3836
  %v3838 = vpop.f32.mrb[0].mxu0
  %3839 = vdwg.mxu0
  %3840 = vmatprep.subr.mxu0 0.0
  %v3841 = vand.u32 %v3593, 4294901760
  %3842 = vmatpush1.msra.mxu0 %v3841
  %3843 = vmatprep.subr.mxu0 0.0
  %v3844 = vand.u32 %v3594, 4294901760
  %3845 = vmatpush1.msra.mxu0 %v3844
  %3846 = vmatprep.subr.mxu0 0.0
  %3847 = vmatpush1.msra.mxu0 0.0
  %3848 = vmatprep.subr.mxu0 0.0
  %3849 = vmatpush1.msra.mxu0 0.0
  %3850 = vmatprep.subr.mxu0 0.0
  %3851 = vmatpush1.msra.mxu0 0.0
  %3852 = vmatprep.subr.mxu0 0.0
  %3853 = vmatpush1.msra.mxu0 0.0
  %3854 = vmatprep.subr.mxu0 0.0
  %3855 = vmatpush1.msra.mxu0 0.0
  %3856 = vmatprep.subr.mxu0 0.0
  %3857 = vmatpush1.msra.mxu0 0.0
  %3858 = vmatprep.subr.mxu0 0.0
  %3859 = vmatpush1.msra.mxu0 0.0
  %3860 = vmatprep.subr.mxu0 0.0
  %3861 = vmatpush1.msra.mxu0 0.0
  %3862 = vmatprep.subr.mxu0 0.0
  %3863 = vmatpush1.msra.mxu0 0.0
  %3864 = vmatprep.subr.mxu0 0.0
  %3865 = vmatpush1.msra.mxu0 0.0
  %3866 = vmatprep.subr.mxu0 0.0
  %3867 = vmatpush1.msra.mxu0 0.0
  %3868 = vmatprep.subr.mxu0 0.0
  %3869 = vmatpush1.msra.mxu0 0.0
  %3870 = vmatprep.subr.mxu0 0.0
  %3871 = vmatpush1.msra.mxu0 0.0
  %3872 = vmatprep.subr.mxu0 0.0
  %3873 = vmatpush1.msra.mxu0 0.0
  %3874 = vmatprep.subr.mxu0 0.0
  %3875 = vmatpush1.msra.mxu0 0.0
  %3876 = vmatprep.subr.mxu0 0.0
  %3877 = vmatpush1.msra.mxu0 0.0
  %3878 = vmatprep.subr.mxu0 0.0
  %3879 = vmatpush1.msra.mxu0 0.0
  %3880 = vmatprep.subr.mxu0 0.0
  %3881 = vmatpush1.msra.mxu0 0.0
  %3882 = vmatprep.subr.mxu0 0.0
  %3883 = vmatpush1.msra.mxu0 0.0
  %3884 = vmatprep.subr.mxu0 0.0
  %3885 = vmatpush1.msra.mxu0 0.0
  %3886 = vmatprep.subr.mxu0 0.0
  %3887 = vmatpush1.msra.mxu0 0.0
  %3888 = vmatprep.subr.mxu0 0.0
  %3889 = vmatpush1.msra.mxu0 0.0
  %3890 = vmatprep.subr.mxu0 0.0
  %3891 = vmatpush1.msra.mxu0 0.0
  %3892 = vmatprep.subr.mxu0 0.0
  %3893 = vmatpush1.msra.mxu0 0.0
  %3894 = vmatprep.subr.mxu0 0.0
  %3895 = vmatpush1.msra.mxu0 0.0
  %3896 = vmatprep.subr.mxu0 0.0
  %3897 = vmatpush1.msra.mxu0 0.0
  %3898 = vmatprep.subr.mxu0 0.0
  %3899 = vmatpush1.msra.mxu0 0.0
  %3900 = vmatprep.subr.mxu0 0.0
  %3901 = vmatpush1.msra.mxu0 0.0
  %3902 = vmatprep.subr.mxu0 0.0
  %3903 = vmatpush1.msra.mxu0 0.0
  %3904 = vmatprep.subr.mxu0 0.0
  %3905 = vmatpush1.msra.mxu0 0.0
  %3906 = vmatprep.mubr.f32.mxu0 0.0
  %v3907 = vand.u32 %v3604, 4294901760
  %v3908 = vsub.f32 %v3604, %v3907
  %v3909 = vand.u32 %v3908, 4294901760
  %3910 = vmatmul.mubr.f32.gmra.mrb[0].mxu0 %v3909
  %v3911 = vpop.f32.mrb[0].mxu0
  %v3912 = vadd.f32 %v3837, %v3911
  %v3913 = vpop.f32.mrb[0].mxu0
  %3914 = vdwg.mxu0
  %3915 = vmatprep.subr.mxu0 0.0
  %v3916 = vand.u32 %v3593, 4294901760
  %v3917 = vsub.f32 %v3593, %v3916
  %v3918 = vand.u32 %v3917, 4294901760
  %3919 = vmatpush1.msra.mxu0 %v3918
  %3920 = vmatprep.subr.mxu0 0.0
  %v3921 = vand.u32 %v3594, 4294901760
  %v3922 = vsub.f32 %v3594, %v3921
  %v3923 = vand.u32 %v3922, 4294901760
  %3924 = vmatpush1.msra.mxu0 %v3923
  %3925 = vmatprep.subr.mxu0 0.0
  %3926 = vmatpush1.msra.mxu0 0.0
  %3927 = vmatprep.subr.mxu0 0.0
  %3928 = vmatpush1.msra.mxu0 0.0
  %3929 = vmatprep.subr.mxu0 0.0
  %3930 = vmatpush1.msra.mxu0 0.0
  %3931 = vmatprep.subr.mxu0 0.0
  %3932 = vmatpush1.msra.mxu0 0.0
  %3933 = vmatprep.subr.mxu0 0.0
  %3934 = vmatpush1.msra.mxu0 0.0
  %3935 = vmatprep.subr.mxu0 0.0
  %3936 = vmatpush1.msra.mxu0 0.0
  %3937 = vmatprep.subr.mxu0 0.0
  %3938 = vmatpush1.msra.mxu0 0.0
  %3939 = vmatprep.subr.mxu0 0.0
  %3940 = vmatpush1.msra.mxu0 0.0
  %3941 = vmatprep.subr.mxu0 0.0
  %3942 = vmatpush1.msra.mxu0 0.0
  %3943 = vmatprep.subr.mxu0 0.0
  %3944 = vmatpush1.msra.mxu0 0.0
  %3945 = vmatprep.subr.mxu0 0.0
  %3946 = vmatpush1.msra.mxu0 0.0
  %3947 = vmatprep.subr.mxu0 0.0
  %3948 = vmatpush1.msra.mxu0 0.0
  %3949 = vmatprep.subr.mxu0 0.0
  %3950 = vmatpush1.msra.mxu0 0.0
  %3951 = vmatprep.subr.mxu0 0.0
  %3952 = vmatpush1.msra.mxu0 0.0
  %3953 = vmatprep.subr.mxu0 0.0
  %3954 = vmatpush1.msra.mxu0 0.0
  %3955 = vmatprep.subr.mxu0 0.0
  %3956 = vmatpush1.msra.mxu0 0.0
  %3957 = vmatprep.subr.mxu0 0.0
  %3958 = vmatpush1.msra.mxu0 0.0
  %3959 = vmatprep.subr.mxu0 0.0
  %3960 = vmatpush1.msra.mxu0 0.0
  %3961 = vmatprep.subr.mxu0 0.0
  %3962 = vmatpush1.msra.mxu0 0.0
  %3963 = vmatprep.subr.mxu0 0.0
  %3964 = vmatpush1.msra.mxu0 0.0
  %3965 = vmatprep.subr.mxu0 0.0
  %3966 = vmatpush1.msra.mxu0 0.0
  %3967 = vmatprep.subr.mxu0 0.0
  %3968 = vmatpush1.msra.mxu0 0.0
  %3969 = vmatprep.subr.mxu0 0.0
  %3970 = vmatpush1.msra.mxu0 0.0
  %3971 = vmatprep.subr.mxu0 0.0
  %3972 = vmatpush1.msra.mxu0 0.0
  %3973 = vmatprep.subr.mxu0 0.0
  %3974 = vmatpush1.msra.mxu0 0.0
  %3975 = vmatprep.subr.mxu0 0.0
  %3976 = vmatpush1.msra.mxu0 0.0
  %3977 = vmatprep.subr.mxu0 0.0
  %3978 = vmatpush1.msra.mxu0 0.0
  %3979 = vmatprep.subr.mxu0 0.0
  %3980 = vmatpush1.msra.mxu0 0.0
  %3981 = vmatprep.subr.mxu0 0.0
  %3982 = vmatpush1.msra.mxu0 0.0
  %3983 = vmatprep.subr.mxu0 0.0
  %3984 = vmatpush1.msra.mxu0 0.0
  %3985 = vmatprep.mubr.f32.mxu0 0.0
  %v3986 = vand.u32 %v3604, 4294901760
  %3987 = vmatmul.mubr.f32.gmra.mrb[0].mxu0 %v3986
  %v3988 = vpop.f32.mrb[0].mxu0
  %v3989 = vadd.f32 %v3912, %v3988
  %v3990 = vpop.f32.mrb[0].mxu0
  %3991 = vdwg.mxu0
  %3992 = vmatprep.subr.mxu0 0.0
  %v3993 = vand.u32 %v3593, 4294901760
  %3994 = vmatpush1.msra.mxu0 %v3993
  %3995 = vmatprep.subr.mxu0 0.0
  %v3996 = vand.u32 %v3594, 4294901760
  %3997 = vmatpush1.msra.mxu0 %v3996
  %3998 = vmatprep.subr.mxu0 0.0
  %3999 = vmatpush1.msra.mxu0 0.0
  %4000 = vmatprep.subr.mxu0 0.0
  %4001 = vmatpush1.msra.mxu0 0.0
  %4002 = vmatprep.subr.mxu0 0.0
  %4003 = vmatpush1.msra.mxu0 0.0
  %4004 = vmatprep.subr.mxu0 0.0
  %4005 = vmatpush1.msra.mxu0 0.0
  %4006 = vmatprep.subr.mxu0 0.0
  %4007 = vmatpush1.msra.mxu0 0.0
  %4008 = vmatprep.subr.mxu0 0.0
  %4009 = vmatpush1.msra.mxu0 0.0
  %4010 = vmatprep.subr.mxu0 0.0
  %4011 = vmatpush1.msra.mxu0 0.0
  %4012 = vmatprep.subr.mxu0 0.0
  %4013 = vmatpush1.msra.mxu0 0.0
  %4014 = vmatprep.subr.mxu0 0.0
  %4015 = vmatpush1.msra.mxu0 0.0
  %4016 = vmatprep.subr.mxu0 0.0
  %4017 = vmatpush1.msra.mxu0 0.0
  %4018 = vmatprep.subr.mxu0 0.0
  %4019 = vmatpush1.msra.mxu0 0.0
  %4020 = vmatprep.subr.mxu0 0.0
  %4021 = vmatpush1.msra.mxu0 0.0
  %4022 = vmatprep.subr.mxu0 0.0
  %4023 = vmatpush1.msra.mxu0 0.0
  %4024 = vmatprep.subr.mxu0 0.0
  %4025 = vmatpush1.msra.mxu0 0.0
  %4026 = vmatprep.subr.mxu0 0.0
  %4027 = vmatpush1.msra.mxu0 0.0
  %4028 = vmatprep.subr.mxu0 0.0
  %4029 = vmatpush1.msra.mxu0 0.0
  %4030 = vmatprep.subr.mxu0 0.0
  %4031 = vmatpush1.msra.mxu0 0.0
  %4032 = vmatprep.subr.mxu0 0.0
  %4033 = vmatpush1.msra.mxu0 0.0
  %4034 = vmatprep.subr.mxu0 0.0
  %4035 = vmatpush1.msra.mxu0 0.0
  %4036 = vmatprep.subr.mxu0 0.0
  %4037 = vmatpush1.msra.mxu0 0.0
  %4038 = vmatprep.subr.mxu0 0.0
  %4039 = vmatpush1.msra.mxu0 0.0
  %4040 = vmatprep.subr.mxu0 0.0
  %4041 = vmatpush1.msra.mxu0 0.0
  %4042 = vmatprep.subr.mxu0 0.0
  %4043 = vmatpush1.msra.mxu0 0.0
  %4044 = vmatprep.subr.mxu0 0.0
  %4045 = vmatpush1.msra.mxu0 0.0
  %4046 = vmatprep.subr.mxu0 0.0
  %4047 = vmatpush1.msra.mxu0 0.0
  %4048 = vmatprep.subr.mxu0 0.0
  %4049 = vmatpush1.msra.mxu0 0.0
  %4050 = vmatprep.subr.mxu0 0.0
  %4051 = vmatpush1.msra.mxu0 0.0
  %4052 = vmatprep.subr.mxu0 0.0
  %4053 = vmatpush1.msra.mxu0 0.0
  %4054 = vmatprep.subr.mxu0 0.0
  %4055 = vmatpush1.msra.mxu0 0.0
  %4056 = vmatprep.subr.mxu0 0.0
  %4057 = vmatpush1.msra.mxu0 0.0
  %4058 = vmatprep.mubr.f32.mxu0 0.0
  %v4059 = vand.u32 %v3604, 4294901760
  %4060 = vmatmul.mubr.f32.gmra.mrb[0].mxu0 %v4059
  %v4061 = vpop.f32.mrb[0].mxu0
  %v4062 = vadd.f32 %v3989, %v4061
  %v4063 = vpop.f32.mrb[0].mxu0
  %4064 = vdwg.mxu0
  %v4066 = vsel %vm2856, %v4062, 0
  %4068 = vmatprep.subr.mxu0 0.0
  %v4069 = vand.u32 %v49, 4294901760
  %4070 = vmatpush1.msra.mxu0 %v4069
  %4071 = vmatprep.subr.mxu0 0.0
  %v4072 = vand.u32 %v50, 4294901760
  %4073 = vmatpush1.msra.mxu0 %v4072
  %4074 = vmatprep.subr.mxu0 0.0
  %v4075 = vand.u32 %v51, 4294901760
  %4076 = vmatpush1.msra.mxu0 %v4075
  %4077 = vmatprep.subr.mxu0 0.0
  %v4078 = vand.u32 %v52, 4294901760
  %4079 = vmatpush1.msra.mxu0 %v4078
  %4080 = vmatprep.subr.mxu0 0.0
  %v4081 = vand.u32 %v53, 4294901760
  %4082 = vmatpush1.msra.mxu0 %v4081
  %4083 = vmatprep.subr.mxu0 0.0
  %4084 = vmatpush1.msra.mxu0 0.0
  %4085 = vmatprep.subr.mxu0 0.0
  %4086 = vmatpush1.msra.mxu0 0.0
  %4087 = vmatprep.subr.mxu0 0.0
  %4088 = vmatpush1.msra.mxu0 0.0
  %4089 = vmatprep.subr.mxu0 0.0
  %4090 = vmatpush1.msra.mxu0 0.0
  %4091 = vmatprep.subr.mxu0 0.0
  %4092 = vmatpush1.msra.mxu0 0.0
  %4093 = vmatprep.subr.mxu0 0.0
  %4094 = vmatpush1.msra.mxu0 0.0
  %4095 = vmatprep.subr.mxu0 0.0
  %4096 = vmatpush1.msra.mxu0 0.0
  %4097 = vmatprep.subr.mxu0 0.0
  %4098 = vmatpush1.msra.mxu0 0.0
  %4099 = vmatprep.subr.mxu0 0.0
  %4100 = vmatpush1.msra.mxu0 0.0
  %4101 = vmatprep.subr.mxu0 0.0
  %4102 = vmatpush1.msra.mxu0 0.0
  %4103 = vmatprep.subr.mxu0 0.0
  %4104 = vmatpush1.msra.mxu0 0.0
  %4105 = vmatprep.subr.mxu0 0.0
  %4106 = vmatpush1.msra.mxu0 0.0
  %4107 = vmatprep.subr.mxu0 0.0
  %4108 = vmatpush1.msra.mxu0 0.0
  %4109 = vmatprep.subr.mxu0 0.0
  %4110 = vmatpush1.msra.mxu0 0.0
  %4111 = vmatprep.subr.mxu0 0.0
  %4112 = vmatpush1.msra.mxu0 0.0
  %4113 = vmatprep.subr.mxu0 0.0
  %4114 = vmatpush1.msra.mxu0 0.0
  %4115 = vmatprep.subr.mxu0 0.0
  %4116 = vmatpush1.msra.mxu0 0.0
  %4117 = vmatprep.subr.mxu0 0.0
  %4118 = vmatpush1.msra.mxu0 0.0
  %4119 = vmatprep.subr.mxu0 0.0
  %4120 = vmatpush1.msra.mxu0 0.0
  %4121 = vmatprep.subr.mxu0 0.0
  %4122 = vmatpush1.msra.mxu0 0.0
  %4123 = vmatprep.subr.mxu0 0.0
  %4124 = vmatpush1.msra.mxu0 0.0
  %4125 = vmatprep.subr.mxu0 0.0
  %4126 = vmatpush1.msra.mxu0 0.0
  %4127 = vmatprep.subr.mxu0 0.0
  %4128 = vmatpush1.msra.mxu0 0.0
  %4129 = vmatprep.subr.mxu0 0.0
  %4130 = vmatpush1.msra.mxu0 0.0
  %4131 = vmatprep.subr.mxu0 0.0
  %4132 = vmatpush1.msra.mxu0 0.0
  %4133 = vmatprep.subr.mxu0 0.0
  %4134 = vmatpush1.msra.mxu0 0.0
  %4135 = vmatprep.subr.mxu0 0.0
  %4136 = vmatpush1.msra.mxu0 0.0
  %4137 = vmatprep.mubr.f32.mxu0 0.0
  %v4138 = vand.u32 %v4066, 4294901760
  %v4139 = vsub.f32 %v4066, %v4138
  %v4140 = vand.u32 %v4139, 4294901760
  %v4141 = vsub.f32 %v4139, %v4140
  %v4142 = vand.u32 %v4141, 4294901760
  %4143 = vmatmul.mubr.f32.gmra.mrb[0].mxu0 %v4142
  %v4144 = vpop.f32.mrb[0].mxu0
  %v4145 = vadd.f32 0.0, %v4144
  %v4146 = vpop.f32.mrb[0].mxu0
  %4147 = vdwg.mxu0
  %4148 = vmatprep.subr.mxu0 0.0
  %v4149 = vand.u32 %v49, 4294901760
  %v4150 = vsub.f32 %v49, %v4149
  %v4151 = vand.u32 %v4150, 4294901760
  %v4152 = vsub.f32 %v4150, %v4151
  %v4153 = vand.u32 %v4152, 4294901760
  %4154 = vmatpush1.msra.mxu0 %v4153
  %4155 = vmatprep.subr.mxu0 0.0
  %v4156 = vand.u32 %v50, 4294901760
  %v4157 = vsub.f32 %v50, %v4156
  %v4158 = vand.u32 %v4157, 4294901760
  %v4159 = vsub.f32 %v4157, %v4158
  %v4160 = vand.u32 %v4159, 4294901760
  %4161 = vmatpush1.msra.mxu0 %v4160
  %4162 = vmatprep.subr.mxu0 0.0
  %v4163 = vand.u32 %v51, 4294901760
  %v4164 = vsub.f32 %v51, %v4163
  %v4165 = vand.u32 %v4164, 4294901760
  %v4166 = vsub.f32 %v4164, %v4165
  %v4167 = vand.u32 %v4166, 4294901760
  %4168 = vmatpush1.msra.mxu0 %v4167
  %4169 = vmatprep.subr.mxu0 0.0
  %v4170 = vand.u32 %v52, 4294901760
  %v4171 = vsub.f32 %v52, %v4170
  %v4172 = vand.u32 %v4171, 4294901760
  %v4173 = vsub.f32 %v4171, %v4172
  %v4174 = vand.u32 %v4173, 4294901760
  %4175 = vmatpush1.msra.mxu0 %v4174
  %4176 = vmatprep.subr.mxu0 0.0
  %v4177 = vand.u32 %v53, 4294901760
  %v4178 = vsub.f32 %v53, %v4177
  %v4179 = vand.u32 %v4178, 4294901760
  %v4180 = vsub.f32 %v4178, %v4179
  %v4181 = vand.u32 %v4180, 4294901760
  %4182 = vmatpush1.msra.mxu0 %v4181
  %4183 = vmatprep.subr.mxu0 0.0
  %4184 = vmatpush1.msra.mxu0 0.0
  %4185 = vmatprep.subr.mxu0 0.0
  %4186 = vmatpush1.msra.mxu0 0.0
  %4187 = vmatprep.subr.mxu0 0.0
  %4188 = vmatpush1.msra.mxu0 0.0
  %4189 = vmatprep.subr.mxu0 0.0
  %4190 = vmatpush1.msra.mxu0 0.0
  %4191 = vmatprep.subr.mxu0 0.0
  %4192 = vmatpush1.msra.mxu0 0.0
  %4193 = vmatprep.subr.mxu0 0.0
  %4194 = vmatpush1.msra.mxu0 0.0
  %4195 = vmatprep.subr.mxu0 0.0
  %4196 = vmatpush1.msra.mxu0 0.0
  %4197 = vmatprep.subr.mxu0 0.0
  %4198 = vmatpush1.msra.mxu0 0.0
  %4199 = vmatprep.subr.mxu0 0.0
  %4200 = vmatpush1.msra.mxu0 0.0
  %4201 = vmatprep.subr.mxu0 0.0
  %4202 = vmatpush1.msra.mxu0 0.0
  %4203 = vmatprep.subr.mxu0 0.0
  %4204 = vmatpush1.msra.mxu0 0.0
  %4205 = vmatprep.subr.mxu0 0.0
  %4206 = vmatpush1.msra.mxu0 0.0
  %4207 = vmatprep.subr.mxu0 0.0
  %4208 = vmatpush1.msra.mxu0 0.0
  %4209 = vmatprep.subr.mxu0 0.0
  %4210 = vmatpush1.msra.mxu0 0.0
  %4211 = vmatprep.subr.mxu0 0.0
  %4212 = vmatpush1.msra.mxu0 0.0
  %4213 = vmatprep.subr.mxu0 0.0
  %4214 = vmatpush1.msra.mxu0 0.0
  %4215 = vmatprep.subr.mxu0 0.0
  %4216 = vmatpush1.msra.mxu0 0.0
  %4217 = vmatprep.subr.mxu0 0.0
  %4218 = vmatpush1.msra.mxu0 0.0
  %4219 = vmatprep.subr.mxu0 0.0
  %4220 = vmatpush1.msra.mxu0 0.0
  %4221 = vmatprep.subr.mxu0 0.0
  %4222 = vmatpush1.msra.mxu0 0.0
  %4223 = vmatprep.subr.mxu0 0.0
  %4224 = vmatpush1.msra.mxu0 0.0
  %4225 = vmatprep.subr.mxu0 0.0
  %4226 = vmatpush1.msra.mxu0 0.0
  %4227 = vmatprep.subr.mxu0 0.0
  %4228 = vmatpush1.msra.mxu0 0.0
  %4229 = vmatprep.subr.mxu0 0.0
  %4230 = vmatpush1.msra.mxu0 0.0
  %4231 = vmatprep.subr.mxu0 0.0
  %4232 = vmatpush1.msra.mxu0 0.0
  %4233 = vmatprep.subr.mxu0 0.0
  %4234 = vmatpush1.msra.mxu0 0.0
  %4235 = vmatprep.subr.mxu0 0.0
  %4236 = vmatpush1.msra.mxu0 0.0
  %4237 = vmatprep.mubr.f32.mxu0 0.0
  %v4238 = vand.u32 %v4066, 4294901760
  %4239 = vmatmul.mubr.f32.gmra.mrb[0].mxu0 %v4238
  %v4240 = vpop.f32.mrb[0].mxu0
  %v4241 = vadd.f32 %v4145, %v4240
  %v4242 = vpop.f32.mrb[0].mxu0
  %4243 = vdwg.mxu0
  %4244 = vmatprep.subr.mxu0 0.0
  %v4245 = vand.u32 %v49, 4294901760
  %v4246 = vsub.f32 %v49, %v4245
  %4247 = vmatpush1.msra.mxu0 %v4246
  %4248 = vmatprep.subr.mxu0 0.0
  %v4249 = vand.u32 %v50, 4294901760
  %v4250 = vsub.f32 %v50, %v4249
  %4251 = vmatpush1.msra.mxu0 %v4250
  %4252 = vmatprep.subr.mxu0 0.0
  %v4253 = vand.u32 %v51, 4294901760
  %v4254 = vsub.f32 %v51, %v4253
  %4255 = vmatpush1.msra.mxu0 %v4254
  %4256 = vmatprep.subr.mxu0 0.0
  %v4257 = vand.u32 %v52, 4294901760
  %v4258 = vsub.f32 %v52, %v4257
  %4259 = vmatpush1.msra.mxu0 %v4258
  %4260 = vmatprep.subr.mxu0 0.0
  %v4261 = vand.u32 %v53, 4294901760
  %v4262 = vsub.f32 %v53, %v4261
  %4263 = vmatpush1.msra.mxu0 %v4262
  %4264 = vmatprep.subr.mxu0 0.0
  %4265 = vmatpush1.msra.mxu0 0.0
  %4266 = vmatprep.subr.mxu0 0.0
  %4267 = vmatpush1.msra.mxu0 0.0
  %4268 = vmatprep.subr.mxu0 0.0
  %4269 = vmatpush1.msra.mxu0 0.0
  %4270 = vmatprep.subr.mxu0 0.0
  %4271 = vmatpush1.msra.mxu0 0.0
  %4272 = vmatprep.subr.mxu0 0.0
  %4273 = vmatpush1.msra.mxu0 0.0
  %4274 = vmatprep.subr.mxu0 0.0
  %4275 = vmatpush1.msra.mxu0 0.0
  %4276 = vmatprep.subr.mxu0 0.0
  %4277 = vmatpush1.msra.mxu0 0.0
  %4278 = vmatprep.subr.mxu0 0.0
  %4279 = vmatpush1.msra.mxu0 0.0
  %4280 = vmatprep.subr.mxu0 0.0
  %4281 = vmatpush1.msra.mxu0 0.0
  %4282 = vmatprep.subr.mxu0 0.0
  %4283 = vmatpush1.msra.mxu0 0.0
  %4284 = vmatprep.subr.mxu0 0.0
  %4285 = vmatpush1.msra.mxu0 0.0
  %4286 = vmatprep.subr.mxu0 0.0
  %4287 = vmatpush1.msra.mxu0 0.0
  %4288 = vmatprep.subr.mxu0 0.0
  %4289 = vmatpush1.msra.mxu0 0.0
  %4290 = vmatprep.subr.mxu0 0.0
  %4291 = vmatpush1.msra.mxu0 0.0
  %4292 = vmatprep.subr.mxu0 0.0
  %4293 = vmatpush1.msra.mxu0 0.0
  %4294 = vmatprep.subr.mxu0 0.0
  %4295 = vmatpush1.msra.mxu0 0.0
  %4296 = vmatprep.subr.mxu0 0.0
  %4297 = vmatpush1.msra.mxu0 0.0
  %4298 = vmatprep.subr.mxu0 0.0
  %4299 = vmatpush1.msra.mxu0 0.0
  %4300 = vmatprep.subr.mxu0 0.0
  %4301 = vmatpush1.msra.mxu0 0.0
  %4302 = vmatprep.subr.mxu0 0.0
  %4303 = vmatpush1.msra.mxu0 0.0
  %4304 = vmatprep.subr.mxu0 0.0
  %4305 = vmatpush1.msra.mxu0 0.0
  %4306 = vmatprep.subr.mxu0 0.0
  %4307 = vmatpush1.msra.mxu0 0.0
  %4308 = vmatprep.subr.mxu0 0.0
  %4309 = vmatpush1.msra.mxu0 0.0
  %4310 = vmatprep.subr.mxu0 0.0
  %4311 = vmatpush1.msra.mxu0 0.0
  %4312 = vmatprep.subr.mxu0 0.0
  %4313 = vmatpush1.msra.mxu0 0.0
  %4314 = vmatprep.subr.mxu0 0.0
  %4315 = vmatpush1.msra.mxu0 0.0
  %4316 = vmatprep.subr.mxu0 0.0
  %4317 = vmatpush1.msra.mxu0 0.0
  %4318 = vmatprep.mubr.f32.mxu0 0.0
  %v4319 = vand.u32 %v4066, 4294901760
  %v4320 = vsub.f32 %v4066, %v4319
  %4321 = vmatmul.mubr.f32.gmra.mrb[0].mxu0 %v4320
  %v4322 = vpop.f32.mrb[0].mxu0
  %v4323 = vadd.f32 %v4241, %v4322
  %v4324 = vpop.f32.mrb[0].mxu0
  %4325 = vdwg.mxu0
  %4326 = vmatprep.subr.mxu0 0.0
  %v4327 = vand.u32 %v49, 4294901760
  %4328 = vmatpush1.msra.mxu0 %v4327
  %4329 = vmatprep.subr.mxu0 0.0
  %v4330 = vand.u32 %v50, 4294901760
  %4331 = vmatpush1.msra.mxu0 %v4330
  %4332 = vmatprep.subr.mxu0 0.0
  %v4333 = vand.u32 %v51, 4294901760
  %4334 = vmatpush1.msra.mxu0 %v4333
  %4335 = vmatprep.subr.mxu0 0.0
  %v4336 = vand.u32 %v52, 4294901760
  %4337 = vmatpush1.msra.mxu0 %v4336
  %4338 = vmatprep.subr.mxu0 0.0
  %v4339 = vand.u32 %v53, 4294901760
  %4340 = vmatpush1.msra.mxu0 %v4339
  %4341 = vmatprep.subr.mxu0 0.0
  %4342 = vmatpush1.msra.mxu0 0.0
  %4343 = vmatprep.subr.mxu0 0.0
  %4344 = vmatpush1.msra.mxu0 0.0
  %4345 = vmatprep.subr.mxu0 0.0
  %4346 = vmatpush1.msra.mxu0 0.0
  %4347 = vmatprep.subr.mxu0 0.0
  %4348 = vmatpush1.msra.mxu0 0.0
  %4349 = vmatprep.subr.mxu0 0.0
  %4350 = vmatpush1.msra.mxu0 0.0
  %4351 = vmatprep.subr.mxu0 0.0
  %4352 = vmatpush1.msra.mxu0 0.0
  %4353 = vmatprep.subr.mxu0 0.0
  %4354 = vmatpush1.msra.mxu0 0.0
  %4355 = vmatprep.subr.mxu0 0.0
  %4356 = vmatpush1.msra.mxu0 0.0
  %4357 = vmatprep.subr.mxu0 0.0
  %4358 = vmatpush1.msra.mxu0 0.0
  %4359 = vmatprep.subr.mxu0 0.0
  %4360 = vmatpush1.msra.mxu0 0.0
  %4361 = vmatprep.subr.mxu0 0.0
  %4362 = vmatpush1.msra.mxu0 0.0
  %4363 = vmatprep.subr.mxu0 0.0
  %4364 = vmatpush1.msra.mxu0 0.0
  %4365 = vmatprep.subr.mxu0 0.0
  %4366 = vmatpush1.msra.mxu0 0.0
  %4367 = vmatprep.subr.mxu0 0.0
  %4368 = vmatpush1.msra.mxu0 0.0
  %4369 = vmatprep.subr.mxu0 0.0
  %4370 = vmatpush1.msra.mxu0 0.0
  %4371 = vmatprep.subr.mxu0 0.0
  %4372 = vmatpush1.msra.mxu0 0.0
  %4373 = vmatprep.subr.mxu0 0.0
  %4374 = vmatpush1.msra.mxu0 0.0
  %4375 = vmatprep.subr.mxu0 0.0
  %4376 = vmatpush1.msra.mxu0 0.0
  %4377 = vmatprep.subr.mxu0 0.0
  %4378 = vmatpush1.msra.mxu0 0.0
  %4379 = vmatprep.subr.mxu0 0.0
  %4380 = vmatpush1.msra.mxu0 0.0
  %4381 = vmatprep.subr.mxu0 0.0
  %4382 = vmatpush1.msra.mxu0 0.0
  %4383 = vmatprep.subr.mxu0 0.0
  %4384 = vmatpush1.msra.mxu0 0.0
  %4385 = vmatprep.subr.mxu0 0.0
  %4386 = vmatpush1.msra.mxu0 0.0
  %4387 = vmatprep.subr.mxu0 0.0
  %4388 = vmatpush1.msra.mxu0 0.0
  %4389 = vmatprep.subr.mxu0 0.0
  %4390 = vmatpush1.msra.mxu0 0.0
  %4391 = vmatprep.subr.mxu0 0.0
  %4392 = vmatpush1.msra.mxu0 0.0
  %4393 = vmatprep.subr.mxu0 0.0
  %4394 = vmatpush1.msra.mxu0 0.0
  %4395 = vmatprep.mubr.f32.mxu0 0.0
  %v4396 = vand.u32 %v4066, 4294901760
  %v4397 = vsub.f32 %v4066, %v4396
  %v4398 = vand.u32 %v4397, 4294901760
  %4399 = vmatmul.mubr.f32.gmra.mrb[0].mxu0 %v4398
  %v4400 = vpop.f32.mrb[0].mxu0
  %v4401 = vadd.f32 %v4323, %v4400
  %v4402 = vpop.f32.mrb[0].mxu0
  %4403 = vdwg.mxu0
  %4404 = vmatprep.subr.mxu0 0.0
  %v4405 = vand.u32 %v49, 4294901760
  %v4406 = vsub.f32 %v49, %v4405
  %v4407 = vand.u32 %v4406, 4294901760
  %4408 = vmatpush1.msra.mxu0 %v4407
  %4409 = vmatprep.subr.mxu0 0.0
  %v4410 = vand.u32 %v50, 4294901760
  %v4411 = vsub.f32 %v50, %v4410
  %v4412 = vand.u32 %v4411, 4294901760
  %4413 = vmatpush1.msra.mxu0 %v4412
  %4414 = vmatprep.subr.mxu0 0.0
  %v4415 = vand.u32 %v51, 4294901760
  %v4416 = vsub.f32 %v51, %v4415
  %v4417 = vand.u32 %v4416, 4294901760
  %4418 = vmatpush1.msra.mxu0 %v4417
  %4419 = vmatprep.subr.mxu0 0.0
  %v4420 = vand.u32 %v52, 4294901760
  %v4421 = vsub.f32 %v52, %v4420
  %v4422 = vand.u32 %v4421, 4294901760
  %4423 = vmatpush1.msra.mxu0 %v4422
  %4424 = vmatprep.subr.mxu0 0.0
  %v4425 = vand.u32 %v53, 4294901760
  %v4426 = vsub.f32 %v53, %v4425
  %v4427 = vand.u32 %v4426, 4294901760
  %4428 = vmatpush1.msra.mxu0 %v4427
  %4429 = vmatprep.subr.mxu0 0.0
  %4430 = vmatpush1.msra.mxu0 0.0
  %4431 = vmatprep.subr.mxu0 0.0
  %4432 = vmatpush1.msra.mxu0 0.0
  %4433 = vmatprep.subr.mxu0 0.0
  %4434 = vmatpush1.msra.mxu0 0.0
  %4435 = vmatprep.subr.mxu0 0.0
  %4436 = vmatpush1.msra.mxu0 0.0
  %4437 = vmatprep.subr.mxu0 0.0
  %4438 = vmatpush1.msra.mxu0 0.0
  %4439 = vmatprep.subr.mxu0 0.0
  %4440 = vmatpush1.msra.mxu0 0.0
  %4441 = vmatprep.subr.mxu0 0.0
  %4442 = vmatpush1.msra.mxu0 0.0
  %4443 = vmatprep.subr.mxu0 0.0
  %4444 = vmatpush1.msra.mxu0 0.0
  %4445 = vmatprep.subr.mxu0 0.0
  %4446 = vmatpush1.msra.mxu0 0.0
  %4447 = vmatprep.subr.mxu0 0.0
  %4448 = vmatpush1.msra.mxu0 0.0
  %4449 = vmatprep.subr.mxu0 0.0
  %4450 = vmatpush1.msra.mxu0 0.0
  %4451 = vmatprep.subr.mxu0 0.0
  %4452 = vmatpush1.msra.mxu0 0.0
  %4453 = vmatprep.subr.mxu0 0.0
  %4454 = vmatpush1.msra.mxu0 0.0
  %4455 = vmatprep.subr.mxu0 0.0
  %4456 = vmatpush1.msra.mxu0 0.0
  %4457 = vmatprep.subr.mxu0 0.0
  %4458 = vmatpush1.msra.mxu0 0.0
  %4459 = vmatprep.subr.mxu0 0.0
  %4460 = vmatpush1.msra.mxu0 0.0
  %4461 = vmatprep.subr.mxu0 0.0
  %4462 = vmatpush1.msra.mxu0 0.0
  %4463 = vmatprep.subr.mxu0 0.0
  %4464 = vmatpush1.msra.mxu0 0.0
  %4465 = vmatprep.subr.mxu0 0.0
  %4466 = vmatpush1.msra.mxu0 0.0
  %4467 = vmatprep.subr.mxu0 0.0
  %4468 = vmatpush1.msra.mxu0 0.0
  %4469 = vmatprep.subr.mxu0 0.0
  %4470 = vmatpush1.msra.mxu0 0.0
  %4471 = vmatprep.subr.mxu0 0.0
  %4472 = vmatpush1.msra.mxu0 0.0
  %4473 = vmatprep.subr.mxu0 0.0
  %4474 = vmatpush1.msra.mxu0 0.0
  %4475 = vmatprep.subr.mxu0 0.0
  %4476 = vmatpush1.msra.mxu0 0.0
  %4477 = vmatprep.subr.mxu0 0.0
  %4478 = vmatpush1.msra.mxu0 0.0
  %4479 = vmatprep.subr.mxu0 0.0
  %4480 = vmatpush1.msra.mxu0 0.0
  %4481 = vmatprep.subr.mxu0 0.0
  %4482 = vmatpush1.msra.mxu0 0.0
  %4483 = vmatprep.mubr.f32.mxu0 0.0
  %v4484 = vand.u32 %v4066, 4294901760
  %4485 = vmatmul.mubr.f32.gmra.mrb[0].mxu0 %v4484
  %v4486 = vpop.f32.mrb[0].mxu0
  %v4487 = vadd.f32 %v4401, %v4486
  %v4488 = vpop.f32.mrb[0].mxu0
  %4489 = vdwg.mxu0
  %4490 = vmatprep.subr.mxu0 0.0
  %v4491 = vand.u32 %v49, 4294901760
  %4492 = vmatpush1.msra.mxu0 %v4491
  %4493 = vmatprep.subr.mxu0 0.0
  %v4494 = vand.u32 %v50, 4294901760
  %4495 = vmatpush1.msra.mxu0 %v4494
  %4496 = vmatprep.subr.mxu0 0.0
  %v4497 = vand.u32 %v51, 4294901760
  %4498 = vmatpush1.msra.mxu0 %v4497
  %4499 = vmatprep.subr.mxu0 0.0
  %v4500 = vand.u32 %v52, 4294901760
  %4501 = vmatpush1.msra.mxu0 %v4500
  %4502 = vmatprep.subr.mxu0 0.0
  %v4503 = vand.u32 %v53, 4294901760
  %4504 = vmatpush1.msra.mxu0 %v4503
  %4505 = vmatprep.subr.mxu0 0.0
  %4506 = vmatpush1.msra.mxu0 0.0
  %4507 = vmatprep.subr.mxu0 0.0
  %4508 = vmatpush1.msra.mxu0 0.0
  %4509 = vmatprep.subr.mxu0 0.0
  %4510 = vmatpush1.msra.mxu0 0.0
  %4511 = vmatprep.subr.mxu0 0.0
  %4512 = vmatpush1.msra.mxu0 0.0
  %4513 = vmatprep.subr.mxu0 0.0
  %4514 = vmatpush1.msra.mxu0 0.0
  %4515 = vmatprep.subr.mxu0 0.0
  %4516 = vmatpush1.msra.mxu0 0.0
  %4517 = vmatprep.subr.mxu0 0.0
  %4518 = vmatpush1.msra.mxu0 0.0
  %4519 = vmatprep.subr.mxu0 0.0
  %4520 = vmatpush1.msra.mxu0 0.0
  %4521 = vmatprep.subr.mxu0 0.0
  %4522 = vmatpush1.msra.mxu0 0.0
  %4523 = vmatprep.subr.mxu0 0.0
  %4524 = vmatpush1.msra.mxu0 0.0
  %4525 = vmatprep.subr.mxu0 0.0
  %4526 = vmatpush1.msra.mxu0 0.0
  %4527 = vmatprep.subr.mxu0 0.0
  %4528 = vmatpush1.msra.mxu0 0.0
  %4529 = vmatprep.subr.mxu0 0.0
  %4530 = vmatpush1.msra.mxu0 0.0
  %4531 = vmatprep.subr.mxu0 0.0
  %4532 = vmatpush1.msra.mxu0 0.0
  %4533 = vmatprep.subr.mxu0 0.0
  %4534 = vmatpush1.msra.mxu0 0.0
  %4535 = vmatprep.subr.mxu0 0.0
  %4536 = vmatpush1.msra.mxu0 0.0
  %4537 = vmatprep.subr.mxu0 0.0
  %4538 = vmatpush1.msra.mxu0 0.0
  %4539 = vmatprep.subr.mxu0 0.0
  %4540 = vmatpush1.msra.mxu0 0.0
  %4541 = vmatprep.subr.mxu0 0.0
  %4542 = vmatpush1.msra.mxu0 0.0
  %4543 = vmatprep.subr.mxu0 0.0
  %4544 = vmatpush1.msra.mxu0 0.0
  %4545 = vmatprep.subr.mxu0 0.0
  %4546 = vmatpush1.msra.mxu0 0.0
  %4547 = vmatprep.subr.mxu0 0.0
  %4548 = vmatpush1.msra.mxu0 0.0
  %4549 = vmatprep.subr.mxu0 0.0
  %4550 = vmatpush1.msra.mxu0 0.0
  %4551 = vmatprep.subr.mxu0 0.0
  %4552 = vmatpush1.msra.mxu0 0.0
  %4553 = vmatprep.subr.mxu0 0.0
  %4554 = vmatpush1.msra.mxu0 0.0
  %4555 = vmatprep.subr.mxu0 0.0
  %4556 = vmatpush1.msra.mxu0 0.0
  %4557 = vmatprep.subr.mxu0 0.0
  %4558 = vmatpush1.msra.mxu0 0.0
  %4559 = vmatprep.mubr.f32.mxu0 0.0
  %v4560 = vand.u32 %v4066, 4294901760
  %4561 = vmatmul.mubr.f32.gmra.mrb[0].mxu0 %v4560
  %v4562 = vpop.f32.mrb[0].mxu0
  %v4563 = vadd.f32 %v4487, %v4562
  %v4564 = vpop.f32.mrb[0].mxu0
  %4565 = vdwg.mxu0
  %vm4566 = vcmp.lt.s32.totalorder %v81, 2
  %v4567 = vmul.u32 %v81, 48
  %vm4568 = vcmp.ge.s32.totalorder %v58, %v4567
  %vm4569 = vcmp.ge.s32.totalorder %v59, %v4567
  %vm4570 = vcmp.ge.s32.totalorder %v60, %v4567
  %vm4571 = vcmp.ge.s32.totalorder %v61, %v4567
  %vm4572 = vcmp.ge.s32.totalorder %v62, %v4567
  %vm4573 = vcmp.ge.s32.totalorder %v63, %v4567
  %vm4574 = vcmp.ge.s32.totalorder %v64, %v4567
  %vm4575 = vcmp.ge.s32.totalorder %v65, %v4567
  %vm4576 = vcmp.ge.s32.totalorder %v66, %v4567
  %vm4577 = vcmp.ge.s32.totalorder %v67, %v4567
  %vm4578 = vcmp.ge.s32.totalorder %v68, %v4567
  %vm4579 = vcmp.ge.s32.totalorder %v69, %v4567
  %vm4580 = vmand %vm4566, %vm4568
  %vm4581 = vmand %vm4566, %vm4569
  %vm4582 = vmand %vm4566, %vm4570
  %vm4583 = vmand %vm4566, %vm4571
  %vm4584 = vmand %vm4566, %vm4572
  %vm4585 = vmand %vm4566, %vm4573
  %vm4586 = vmand %vm4566, %vm4574
  %vm4587 = vmand %vm4566, %vm4575
  %vm4588 = vmand %vm4566, %vm4576
  %vm4589 = vmand %vm4566, %vm4577
  %vm4590 = vmand %vm4566, %vm4578
  %vm4591 = vmand %vm4566, %vm4579
  %v4592 = vadd.s32 %v4567, 48
  %vm4593 = vcmp.lt.s32.totalorder %v58, %v4592
  %vm4594 = vcmp.lt.s32.totalorder %v59, %v4592
  %vm4595 = vcmp.lt.s32.totalorder %v60, %v4592
  %vm4596 = vcmp.lt.s32.totalorder %v61, %v4592
  %vm4597 = vcmp.lt.s32.totalorder %v62, %v4592
  %vm4598 = vcmp.lt.s32.totalorder %v63, %v4592
  %vm4599 = vcmp.lt.s32.totalorder %v64, %v4592
  %vm4600 = vcmp.lt.s32.totalorder %v65, %v4592
  %vm4601 = vcmp.lt.s32.totalorder %v66, %v4592
  %vm4602 = vcmp.lt.s32.totalorder %v67, %v4592
  %vm4603 = vcmp.lt.s32.totalorder %v68, %v4592
  %vm4604 = vcmp.lt.s32.totalorder %v69, %v4592
  %vm4605 = vmand %vm4580, %vm4593
  %vm4606 = vmand %vm4581, %vm4594
  %vm4607 = vmand %vm4582, %vm4595
  %vm4608 = vmand %vm4583, %vm4596
  %vm4609 = vmand %vm4584, %vm4597
  %vm4610 = vmand %vm4585, %vm4598
  %vm4611 = vmand %vm4586, %vm4599
  %vm4612 = vmand %vm4587, %vm4600
  %vm4613 = vmand %vm4588, %vm4601
  %vm4614 = vmand %vm4589, %vm4602
  %vm4615 = vmand %vm4590, %vm4603
  %vm4616 = vmand %vm4591, %vm4604
  %v4617 = vsel %vm4605, 1.0, 0.0
  %v4618 = vsel %vm4606, 1.0, 0.0
  %v4619 = vsel %vm4607, 1.0, 0.0
  %v4620 = vsel %vm4608, 1.0, 0.0
  %v4621 = vsel %vm4609, 1.0, 0.0
  %v4622 = vsel %vm4610, 1.0, 0.0
  %v4623 = vsel %vm4611, 1.0, 0.0
  %v4624 = vsel %vm4612, 1.0, 0.0
  %v4625 = vsel %vm4613, 1.0, 0.0
  %v4626 = vsel %vm4614, 1.0, 0.0
  %v4627 = vsel %vm4615, 1.0, 0.0
  %v4628 = vsel %vm4616, 1.0, 0.0
  %vm4629 = vcmask 64512
  %v4631 = vsel %vm4629, %v4617, 0
  %v4634 = vsel %vm4629, %v4618, 0
  %v4637 = vsel %vm4629, %v4619, 0
  %v4640 = vsel %vm4629, %v4620, 0
  %v4643 = vsel %vm4629, %v4621, 0
  %v4646 = vsel %vm4629, %v4622, 0
  %v4649 = vsel %vm4629, %v4623, 0
  %v4652 = vsel %vm4629, %v4624, 0
  %v4655 = vsel %vm4629, %v4625, 0
  %v4658 = vsel %vm4629, %v4626, 0
  %v4661 = vsel %vm4629, %v4627, 0
  %v4664 = vsel %vm4629, %v4628, 0
  %4666 = vmatprep.subr.mxu0 0.0
  %v4667 = vand.u32 %v4563, 4294901760
  %4668 = vmatpush1.msra.mxu0 %v4667
  %4669 = vmatprep.subr.mxu0 0.0
  %4670 = vmatpush1.msra.mxu0 0.0
  %4671 = vmatprep.subr.mxu0 0.0
  %4672 = vmatpush1.msra.mxu0 0.0
  %4673 = vmatprep.subr.mxu0 0.0
  %4674 = vmatpush1.msra.mxu0 0.0
  %4675 = vmatprep.subr.mxu0 0.0
  %4676 = vmatpush1.msra.mxu0 0.0
  %4677 = vmatprep.subr.mxu0 0.0
  %4678 = vmatpush1.msra.mxu0 0.0
  %4679 = vmatprep.subr.mxu0 0.0
  %4680 = vmatpush1.msra.mxu0 0.0
  %4681 = vmatprep.subr.mxu0 0.0
  %4682 = vmatpush1.msra.mxu0 0.0
  %4683 = vmatprep.subr.mxu0 0.0
  %4684 = vmatpush1.msra.mxu0 0.0
  %4685 = vmatprep.subr.mxu0 0.0
  %4686 = vmatpush1.msra.mxu0 0.0
  %4687 = vmatprep.subr.mxu0 0.0
  %4688 = vmatpush1.msra.mxu0 0.0
  %4689 = vmatprep.subr.mxu0 0.0
  %4690 = vmatpush1.msra.mxu0 0.0
  %4691 = vmatprep.subr.mxu0 0.0
  %4692 = vmatpush1.msra.mxu0 0.0
  %4693 = vmatprep.subr.mxu0 0.0
  %4694 = vmatpush1.msra.mxu0 0.0
  %4695 = vmatprep.subr.mxu0 0.0
  %4696 = vmatpush1.msra.mxu0 0.0
  %4697 = vmatprep.subr.mxu0 0.0
  %4698 = vmatpush1.msra.mxu0 0.0
  %4699 = vmatprep.subr.mxu0 0.0
  %4700 = vmatpush1.msra.mxu0 0.0
  %4701 = vmatprep.subr.mxu0 0.0
  %4702 = vmatpush1.msra.mxu0 0.0
  %4703 = vmatprep.subr.mxu0 0.0
  %4704 = vmatpush1.msra.mxu0 0.0
  %4705 = vmatprep.subr.mxu0 0.0
  %4706 = vmatpush1.msra.mxu0 0.0
  %4707 = vmatprep.subr.mxu0 0.0
  %4708 = vmatpush1.msra.mxu0 0.0
  %4709 = vmatprep.subr.mxu0 0.0
  %4710 = vmatpush1.msra.mxu0 0.0
  %4711 = vmatprep.subr.mxu0 0.0
  %4712 = vmatpush1.msra.mxu0 0.0
  %4713 = vmatprep.subr.mxu0 0.0
  %4714 = vmatpush1.msra.mxu0 0.0
  %4715 = vmatprep.subr.mxu0 0.0
  %4716 = vmatpush1.msra.mxu0 0.0
  %4717 = vmatprep.subr.mxu0 0.0
  %4718 = vmatpush1.msra.mxu0 0.0
  %4719 = vmatprep.subr.mxu0 0.0
  %4720 = vmatpush1.msra.mxu0 0.0
  %4721 = vmatprep.subr.mxu0 0.0
  %4722 = vmatpush1.msra.mxu0 0.0
  %4723 = vmatprep.subr.mxu0 0.0
  %4724 = vmatpush1.msra.mxu0 0.0
  %4725 = vmatprep.subr.mxu0 0.0
  %4726 = vmatpush1.msra.mxu0 0.0
  %4727 = vmatprep.subr.mxu0 0.0
  %4728 = vmatpush1.msra.mxu0 0.0
  %4729 = vmatprep.subr.mxu0 0.0
  %4730 = vmatpush1.msra.mxu0 0.0
  %4731 = vmatprep.mubr.f32.mxu0 0.0
  %v4732 = vand.u32 %v4631, 4294901760
  %v4733 = vsub.f32 %v4631, %v4732
  %v4734 = vand.u32 %v4733, 4294901760
  %v4735 = vsub.f32 %v4733, %v4734
  %v4736 = vand.u32 %v4735, 4294901760
  %4737 = vmatmul.mubr.f32.gmra.mrb[0].mxu0 %v4736
  %v4738 = vpop.f32.mrb[0].mxu0
  %v4739 = vadd.f32 0.0, %v4738
  %v4740 = vpop.f32.mrb[0].mxu0
  %4741 = vmatprep.mubr.f32.mxu0 0.0
  %v4742 = vand.u32 %v4634, 4294901760
  %v4743 = vsub.f32 %v4634, %v4742
  %v4744 = vand.u32 %v4743, 4294901760
  %v4745 = vsub.f32 %v4743, %v4744
  %v4746 = vand.u32 %v4745, 4294901760
  %4747 = vmatmul.mubr.f32.gmra.mrb[0].mxu0 %v4746
  %v4748 = vpop.f32.mrb[0].mxu0
  %v4749 = vadd.f32 0.0, %v4748
  %v4750 = vpop.f32.mrb[0].mxu0
  %4751 = vmatprep.mubr.f32.mxu0 0.0
  %v4752 = vand.u32 %v4637, 4294901760
  %v4753 = vsub.f32 %v4637, %v4752
  %v4754 = vand.u32 %v4753, 4294901760
  %v4755 = vsub.f32 %v4753, %v4754
  %v4756 = vand.u32 %v4755, 4294901760
  %4757 = vmatmul.mubr.f32.gmra.mrb[0].mxu0 %v4756
  %v4758 = vpop.f32.mrb[0].mxu0
  %v4759 = vadd.f32 0.0, %v4758
  %v4760 = vpop.f32.mrb[0].mxu0
  %4761 = vmatprep.mubr.f32.mxu0 0.0
  %v4762 = vand.u32 %v4640, 4294901760
  %v4763 = vsub.f32 %v4640, %v4762
  %v4764 = vand.u32 %v4763, 4294901760
  %v4765 = vsub.f32 %v4763, %v4764
  %v4766 = vand.u32 %v4765, 4294901760
  %4767 = vmatmul.mubr.f32.gmra.mrb[0].mxu0 %v4766
  %v4768 = vpop.f32.mrb[0].mxu0
  %v4769 = vadd.f32 0.0, %v4768
  %v4770 = vpop.f32.mrb[0].mxu0
  %4771 = vmatprep.mubr.f32.mxu0 0.0
  %v4772 = vand.u32 %v4643, 4294901760
  %v4773 = vsub.f32 %v4643, %v4772
  %v4774 = vand.u32 %v4773, 4294901760
  %v4775 = vsub.f32 %v4773, %v4774
  %v4776 = vand.u32 %v4775, 4294901760
  %4777 = vmatmul.mubr.f32.gmra.mrb[0].mxu0 %v4776
  %v4778 = vpop.f32.mrb[0].mxu0
  %v4779 = vadd.f32 0.0, %v4778
  %v4780 = vpop.f32.mrb[0].mxu0
  %4781 = vmatprep.mubr.f32.mxu0 0.0
  %v4782 = vand.u32 %v4646, 4294901760
  %v4783 = vsub.f32 %v4646, %v4782
  %v4784 = vand.u32 %v4783, 4294901760
  %v4785 = vsub.f32 %v4783, %v4784
  %v4786 = vand.u32 %v4785, 4294901760
  %4787 = vmatmul.mubr.f32.gmra.mrb[0].mxu0 %v4786
  %v4788 = vpop.f32.mrb[0].mxu0
  %v4789 = vadd.f32 0.0, %v4788
  %v4790 = vpop.f32.mrb[0].mxu0
  %4791 = vmatprep.mubr.f32.mxu0 0.0
  %v4792 = vand.u32 %v4649, 4294901760
  %v4793 = vsub.f32 %v4649, %v4792
  %v4794 = vand.u32 %v4793, 4294901760
  %v4795 = vsub.f32 %v4793, %v4794
  %v4796 = vand.u32 %v4795, 4294901760
  %4797 = vmatmul.mubr.f32.gmra.mrb[0].mxu0 %v4796
  %v4798 = vpop.f32.mrb[0].mxu0
  %v4799 = vadd.f32 0.0, %v4798
  %v4800 = vpop.f32.mrb[0].mxu0
  %4801 = vmatprep.mubr.f32.mxu0 0.0
  %v4802 = vand.u32 %v4652, 4294901760
  %v4803 = vsub.f32 %v4652, %v4802
  %v4804 = vand.u32 %v4803, 4294901760
  %v4805 = vsub.f32 %v4803, %v4804
  %v4806 = vand.u32 %v4805, 4294901760
  %4807 = vmatmul.mubr.f32.gmra.mrb[0].mxu0 %v4806
  %v4808 = vpop.f32.mrb[0].mxu0
  %v4809 = vadd.f32 0.0, %v4808
  %v4810 = vpop.f32.mrb[0].mxu0
  %4811 = vmatprep.mubr.f32.mxu0 0.0
  %v4812 = vand.u32 %v4655, 4294901760
  %v4813 = vsub.f32 %v4655, %v4812
  %v4814 = vand.u32 %v4813, 4294901760
  %v4815 = vsub.f32 %v4813, %v4814
  %v4816 = vand.u32 %v4815, 4294901760
  %4817 = vmatmul.mubr.f32.gmra.mrb[0].mxu0 %v4816
  %v4818 = vpop.f32.mrb[0].mxu0
  %v4819 = vadd.f32 0.0, %v4818
  %v4820 = vpop.f32.mrb[0].mxu0
  %4821 = vmatprep.mubr.f32.mxu0 0.0
  %v4822 = vand.u32 %v4658, 4294901760
  %v4823 = vsub.f32 %v4658, %v4822
  %v4824 = vand.u32 %v4823, 4294901760
  %v4825 = vsub.f32 %v4823, %v4824
  %v4826 = vand.u32 %v4825, 4294901760
  %4827 = vmatmul.mubr.f32.gmra.mrb[0].mxu0 %v4826
  %v4828 = vpop.f32.mrb[0].mxu0
  %v4829 = vadd.f32 0.0, %v4828
  %v4830 = vpop.f32.mrb[0].mxu0
  %4831 = vmatprep.mubr.f32.mxu0 0.0
  %v4832 = vand.u32 %v4661, 4294901760
  %v4833 = vsub.f32 %v4661, %v4832
  %v4834 = vand.u32 %v4833, 4294901760
  %v4835 = vsub.f32 %v4833, %v4834
  %v4836 = vand.u32 %v4835, 4294901760
  %4837 = vmatmul.mubr.f32.gmra.mrb[0].mxu0 %v4836
  %v4838 = vpop.f32.mrb[0].mxu0
  %v4839 = vadd.f32 0.0, %v4838
  %v4840 = vpop.f32.mrb[0].mxu0
  %4841 = vmatprep.mubr.f32.mxu0 0.0
  %v4842 = vand.u32 %v4664, 4294901760
  %v4843 = vsub.f32 %v4664, %v4842
  %v4844 = vand.u32 %v4843, 4294901760
  %v4845 = vsub.f32 %v4843, %v4844
  %v4846 = vand.u32 %v4845, 4294901760
  %4847 = vmatmul.mubr.f32.gmra.mrb[0].mxu0 %v4846
  %v4848 = vpop.f32.mrb[0].mxu0
  %v4849 = vadd.f32 0.0, %v4848
  %v4850 = vpop.f32.mrb[0].mxu0
  %4851 = vdwg.mxu0
  %4852 = vmatprep.subr.mxu0 0.0
  %v4853 = vand.u32 %v4563, 4294901760
  %v4854 = vsub.f32 %v4563, %v4853
  %v4855 = vand.u32 %v4854, 4294901760
  %v4856 = vsub.f32 %v4854, %v4855
  %v4857 = vand.u32 %v4856, 4294901760
  %4858 = vmatpush1.msra.mxu0 %v4857
  %4859 = vmatprep.subr.mxu0 0.0
  %4860 = vmatpush1.msra.mxu0 0.0
  %4861 = vmatprep.subr.mxu0 0.0
  %4862 = vmatpush1.msra.mxu0 0.0
  %4863 = vmatprep.subr.mxu0 0.0
  %4864 = vmatpush1.msra.mxu0 0.0
  %4865 = vmatprep.subr.mxu0 0.0
  %4866 = vmatpush1.msra.mxu0 0.0
  %4867 = vmatprep.subr.mxu0 0.0
  %4868 = vmatpush1.msra.mxu0 0.0
  %4869 = vmatprep.subr.mxu0 0.0
  %4870 = vmatpush1.msra.mxu0 0.0
  %4871 = vmatprep.subr.mxu0 0.0
  %4872 = vmatpush1.msra.mxu0 0.0
  %4873 = vmatprep.subr.mxu0 0.0
  %4874 = vmatpush1.msra.mxu0 0.0
  %4875 = vmatprep.subr.mxu0 0.0
  %4876 = vmatpush1.msra.mxu0 0.0
  %4877 = vmatprep.subr.mxu0 0.0
  %4878 = vmatpush1.msra.mxu0 0.0
  %4879 = vmatprep.subr.mxu0 0.0
  %4880 = vmatpush1.msra.mxu0 0.0
  %4881 = vmatprep.subr.mxu0 0.0
  %4882 = vmatpush1.msra.mxu0 0.0
  %4883 = vmatprep.subr.mxu0 0.0
  %4884 = vmatpush1.msra.mxu0 0.0
  %4885 = vmatprep.subr.mxu0 0.0
  %4886 = vmatpush1.msra.mxu0 0.0
  %4887 = vmatprep.subr.mxu0 0.0
  %4888 = vmatpush1.msra.mxu0 0.0
  %4889 = vmatprep.subr.mxu0 0.0
  %4890 = vmatpush1.msra.mxu0 0.0
  %4891 = vmatprep.subr.mxu0 0.0
  %4892 = vmatpush1.msra.mxu0 0.0
  %4893 = vmatprep.subr.mxu0 0.0
  %4894 = vmatpush1.msra.mxu0 0.0
  %4895 = vmatprep.subr.mxu0 0.0
  %4896 = vmatpush1.msra.mxu0 0.0
  %4897 = vmatprep.subr.mxu0 0.0
  %4898 = vmatpush1.msra.mxu0 0.0
  %4899 = vmatprep.subr.mxu0 0.0
  %4900 = vmatpush1.msra.mxu0 0.0
  %4901 = vmatprep.subr.mxu0 0.0
  %4902 = vmatpush1.msra.mxu0 0.0
  %4903 = vmatprep.subr.mxu0 0.0
  %4904 = vmatpush1.msra.mxu0 0.0
  %4905 = vmatprep.subr.mxu0 0.0
  %4906 = vmatpush1.msra.mxu0 0.0
  %4907 = vmatprep.subr.mxu0 0.0
  %4908 = vmatpush1.msra.mxu0 0.0
  %4909 = vmatprep.subr.mxu0 0.0
  %4910 = vmatpush1.msra.mxu0 0.0
  %4911 = vmatprep.subr.mxu0 0.0
  %4912 = vmatpush1.msra.mxu0 0.0
  %4913 = vmatprep.subr.mxu0 0.0
  %4914 = vmatpush1.msra.mxu0 0.0
  %4915 = vmatprep.subr.mxu0 0.0
  %4916 = vmatpush1.msra.mxu0 0.0
  %4917 = vmatprep.subr.mxu0 0.0
  %4918 = vmatpush1.msra.mxu0 0.0
  %4919 = vmatprep.subr.mxu0 0.0
  %4920 = vmatpush1.msra.mxu0 0.0
  %4921 = vmatprep.mubr.f32.mxu0 0.0
  %v4922 = vand.u32 %v4631, 4294901760
  %4923 = vmatmul.mubr.f32.gmra.mrb[0].mxu0 %v4922
  %v4924 = vpop.f32.mrb[0].mxu0
  %v4925 = vadd.f32 %v4739, %v4924
  %v4926 = vpop.f32.mrb[0].mxu0
  %4927 = vmatprep.mubr.f32.mxu0 0.0
  %v4928 = vand.u32 %v4634, 4294901760
  %4929 = vmatmul.mubr.f32.gmra.mrb[0].mxu0 %v4928
  %v4930 = vpop.f32.mrb[0].mxu0
  %v4931 = vadd.f32 %v4749, %v4930
  %v4932 = vpop.f32.mrb[0].mxu0
  %4933 = vmatprep.mubr.f32.mxu0 0.0
  %v4934 = vand.u32 %v4637, 4294901760
  %4935 = vmatmul.mubr.f32.gmra.mrb[0].mxu0 %v4934
  %v4936 = vpop.f32.mrb[0].mxu0
  %v4937 = vadd.f32 %v4759, %v4936
  %v4938 = vpop.f32.mrb[0].mxu0
  %4939 = vmatprep.mubr.f32.mxu0 0.0
  %v4940 = vand.u32 %v4640, 4294901760
  %4941 = vmatmul.mubr.f32.gmra.mrb[0].mxu0 %v4940
  %v4942 = vpop.f32.mrb[0].mxu0
  %v4943 = vadd.f32 %v4769, %v4942
  %v4944 = vpop.f32.mrb[0].mxu0
  %4945 = vmatprep.mubr.f32.mxu0 0.0
  %v4946 = vand.u32 %v4643, 4294901760
  %4947 = vmatmul.mubr.f32.gmra.mrb[0].mxu0 %v4946
  %v4948 = vpop.f32.mrb[0].mxu0
  %v4949 = vadd.f32 %v4779, %v4948
  %v4950 = vpop.f32.mrb[0].mxu0
  %4951 = vmatprep.mubr.f32.mxu0 0.0
  %v4952 = vand.u32 %v4646, 4294901760
  %4953 = vmatmul.mubr.f32.gmra.mrb[0].mxu0 %v4952
  %v4954 = vpop.f32.mrb[0].mxu0
  %v4955 = vadd.f32 %v4789, %v4954
  %v4956 = vpop.f32.mrb[0].mxu0
  %4957 = vmatprep.mubr.f32.mxu0 0.0
  %v4958 = vand.u32 %v4649, 4294901760
  %4959 = vmatmul.mubr.f32.gmra.mrb[0].mxu0 %v4958
  %v4960 = vpop.f32.mrb[0].mxu0
  %v4961 = vadd.f32 %v4799, %v4960
  %v4962 = vpop.f32.mrb[0].mxu0
  %4963 = vmatprep.mubr.f32.mxu0 0.0
  %v4964 = vand.u32 %v4652, 4294901760
  %4965 = vmatmul.mubr.f32.gmra.mrb[0].mxu0 %v4964
  %v4966 = vpop.f32.mrb[0].mxu0
  %v4967 = vadd.f32 %v4809, %v4966
  %v4968 = vpop.f32.mrb[0].mxu0
  %4969 = vmatprep.mubr.f32.mxu0 0.0
  %v4970 = vand.u32 %v4655, 4294901760
  %4971 = vmatmul.mubr.f32.gmra.mrb[0].mxu0 %v4970
  %v4972 = vpop.f32.mrb[0].mxu0
  %v4973 = vadd.f32 %v4819, %v4972
  %v4974 = vpop.f32.mrb[0].mxu0
  %4975 = vmatprep.mubr.f32.mxu0 0.0
  %v4976 = vand.u32 %v4658, 4294901760
  %4977 = vmatmul.mubr.f32.gmra.mrb[0].mxu0 %v4976
  %v4978 = vpop.f32.mrb[0].mxu0
  %v4979 = vadd.f32 %v4829, %v4978
  %v4980 = vpop.f32.mrb[0].mxu0
  %4981 = vmatprep.mubr.f32.mxu0 0.0
  %v4982 = vand.u32 %v4661, 4294901760
  %4983 = vmatmul.mubr.f32.gmra.mrb[0].mxu0 %v4982
  %v4984 = vpop.f32.mrb[0].mxu0
  %v4985 = vadd.f32 %v4839, %v4984
  %v4986 = vpop.f32.mrb[0].mxu0
  %4987 = vmatprep.mubr.f32.mxu0 0.0
  %v4988 = vand.u32 %v4664, 4294901760
  %4989 = vmatmul.mubr.f32.gmra.mrb[0].mxu0 %v4988
  %v4990 = vpop.f32.mrb[0].mxu0
  %v4991 = vadd.f32 %v4849, %v4990
  %v4992 = vpop.f32.mrb[0].mxu0
  %4993 = vdwg.mxu0
  %4994 = vmatprep.subr.mxu0 0.0
  %v4995 = vand.u32 %v4563, 4294901760
  %v4996 = vsub.f32 %v4563, %v4995
  %4997 = vmatpush1.msra.mxu0 %v4996
  %4998 = vmatprep.subr.mxu0 0.0
  %4999 = vmatpush1.msra.mxu0 0.0
  %5000 = vmatprep.subr.mxu0 0.0
  %5001 = vmatpush1.msra.mxu0 0.0
  %5002 = vmatprep.subr.mxu0 0.0
  %5003 = vmatpush1.msra.mxu0 0.0
  %5004 = vmatprep.subr.mxu0 0.0
  %5005 = vmatpush1.msra.mxu0 0.0
  %5006 = vmatprep.subr.mxu0 0.0
  %5007 = vmatpush1.msra.mxu0 0.0
  %5008 = vmatprep.subr.mxu0 0.0
  %5009 = vmatpush1.msra.mxu0 0.0
  %5010 = vmatprep.subr.mxu0 0.0
  %5011 = vmatpush1.msra.mxu0 0.0
  %5012 = vmatprep.subr.mxu0 0.0
  %5013 = vmatpush1.msra.mxu0 0.0
  %5014 = vmatprep.subr.mxu0 0.0
  %5015 = vmatpush1.msra.mxu0 0.0
  %5016 = vmatprep.subr.mxu0 0.0
  %5017 = vmatpush1.msra.mxu0 0.0
  %5018 = vmatprep.subr.mxu0 0.0
  %5019 = vmatpush1.msra.mxu0 0.0
  %5020 = vmatprep.subr.mxu0 0.0
  %5021 = vmatpush1.msra.mxu0 0.0
  %5022 = vmatprep.subr.mxu0 0.0
  %5023 = vmatpush1.msra.mxu0 0.0
  %5024 = vmatprep.subr.mxu0 0.0
  %5025 = vmatpush1.msra.mxu0 0.0
  %5026 = vmatprep.subr.mxu0 0.0
  %5027 = vmatpush1.msra.mxu0 0.0
  %5028 = vmatprep.subr.mxu0 0.0
  %5029 = vmatpush1.msra.mxu0 0.0
  %5030 = vmatprep.subr.mxu0 0.0
  %5031 = vmatpush1.msra.mxu0 0.0
  %5032 = vmatprep.subr.mxu0 0.0
  %5033 = vmatpush1.msra.mxu0 0.0
  %5034 = vmatprep.subr.mxu0 0.0
  %5035 = vmatpush1.msra.mxu0 0.0
  %5036 = vmatprep.subr.mxu0 0.0
  %5037 = vmatpush1.msra.mxu0 0.0
  %5038 = vmatprep.subr.mxu0 0.0
  %5039 = vmatpush1.msra.mxu0 0.0
  %5040 = vmatprep.subr.mxu0 0.0
  %5041 = vmatpush1.msra.mxu0 0.0
  %5042 = vmatprep.subr.mxu0 0.0
  %5043 = vmatpush1.msra.mxu0 0.0
  %5044 = vmatprep.subr.mxu0 0.0
  %5045 = vmatpush1.msra.mxu0 0.0
  %5046 = vmatprep.subr.mxu0 0.0
  %5047 = vmatpush1.msra.mxu0 0.0
  %5048 = vmatprep.subr.mxu0 0.0
  %5049 = vmatpush1.msra.mxu0 0.0
  %5050 = vmatprep.subr.mxu0 0.0
  %5051 = vmatpush1.msra.mxu0 0.0
  %5052 = vmatprep.subr.mxu0 0.0
  %5053 = vmatpush1.msra.mxu0 0.0
  %5054 = vmatprep.subr.mxu0 0.0
  %5055 = vmatpush1.msra.mxu0 0.0
  %5056 = vmatprep.subr.mxu0 0.0
  %5057 = vmatpush1.msra.mxu0 0.0
  %5058 = vmatprep.subr.mxu0 0.0
  %5059 = vmatpush1.msra.mxu0 0.0
  %5060 = vmatprep.mubr.f32.mxu0 0.0
  %v5061 = vand.u32 %v4631, 4294901760
  %v5062 = vsub.f32 %v4631, %v5061
  %5063 = vmatmul.mubr.f32.gmra.mrb[0].mxu0 %v5062
  %v5064 = vpop.f32.mrb[0].mxu0
  %v5065 = vadd.f32 %v4925, %v5064
  %v5066 = vpop.f32.mrb[0].mxu0
  %5067 = vmatprep.mubr.f32.mxu0 0.0
  %v5068 = vand.u32 %v4634, 4294901760
  %v5069 = vsub.f32 %v4634, %v5068
  %5070 = vmatmul.mubr.f32.gmra.mrb[0].mxu0 %v5069
  %v5071 = vpop.f32.mrb[0].mxu0
  %v5072 = vadd.f32 %v4931, %v5071
  %v5073 = vpop.f32.mrb[0].mxu0
  %5074 = vmatprep.mubr.f32.mxu0 0.0
  %v5075 = vand.u32 %v4637, 4294901760
  %v5076 = vsub.f32 %v4637, %v5075
  %5077 = vmatmul.mubr.f32.gmra.mrb[0].mxu0 %v5076
  %v5078 = vpop.f32.mrb[0].mxu0
  %v5079 = vadd.f32 %v4937, %v5078
  %v5080 = vpop.f32.mrb[0].mxu0
  %5081 = vmatprep.mubr.f32.mxu0 0.0
  %v5082 = vand.u32 %v4640, 4294901760
  %v5083 = vsub.f32 %v4640, %v5082
  %5084 = vmatmul.mubr.f32.gmra.mrb[0].mxu0 %v5083
  %v5085 = vpop.f32.mrb[0].mxu0
  %v5086 = vadd.f32 %v4943, %v5085
  %v5087 = vpop.f32.mrb[0].mxu0
  %5088 = vmatprep.mubr.f32.mxu0 0.0
  %v5089 = vand.u32 %v4643, 4294901760
  %v5090 = vsub.f32 %v4643, %v5089
  %5091 = vmatmul.mubr.f32.gmra.mrb[0].mxu0 %v5090
  %v5092 = vpop.f32.mrb[0].mxu0
  %v5093 = vadd.f32 %v4949, %v5092
  %v5094 = vpop.f32.mrb[0].mxu0
  %5095 = vmatprep.mubr.f32.mxu0 0.0
  %v5096 = vand.u32 %v4646, 4294901760
  %v5097 = vsub.f32 %v4646, %v5096
  %5098 = vmatmul.mubr.f32.gmra.mrb[0].mxu0 %v5097
  %v5099 = vpop.f32.mrb[0].mxu0
  %v5100 = vadd.f32 %v4955, %v5099
  %v5101 = vpop.f32.mrb[0].mxu0
  %5102 = vmatprep.mubr.f32.mxu0 0.0
  %v5103 = vand.u32 %v4649, 4294901760
  %v5104 = vsub.f32 %v4649, %v5103
  %5105 = vmatmul.mubr.f32.gmra.mrb[0].mxu0 %v5104
  %v5106 = vpop.f32.mrb[0].mxu0
  %v5107 = vadd.f32 %v4961, %v5106
  %v5108 = vpop.f32.mrb[0].mxu0
  %5109 = vmatprep.mubr.f32.mxu0 0.0
  %v5110 = vand.u32 %v4652, 4294901760
  %v5111 = vsub.f32 %v4652, %v5110
  %5112 = vmatmul.mubr.f32.gmra.mrb[0].mxu0 %v5111
  %v5113 = vpop.f32.mrb[0].mxu0
  %v5114 = vadd.f32 %v4967, %v5113
  %v5115 = vpop.f32.mrb[0].mxu0
  %5116 = vmatprep.mubr.f32.mxu0 0.0
  %v5117 = vand.u32 %v4655, 4294901760
  %v5118 = vsub.f32 %v4655, %v5117
  %5119 = vmatmul.mubr.f32.gmra.mrb[0].mxu0 %v5118
  %v5120 = vpop.f32.mrb[0].mxu0
  %v5121 = vadd.f32 %v4973, %v5120
  %v5122 = vpop.f32.mrb[0].mxu0
  %5123 = vmatprep.mubr.f32.mxu0 0.0
  %v5124 = vand.u32 %v4658, 4294901760
  %v5125 = vsub.f32 %v4658, %v5124
  %5126 = vmatmul.mubr.f32.gmra.mrb[0].mxu0 %v5125
  %v5127 = vpop.f32.mrb[0].mxu0
  %v5128 = vadd.f32 %v4979, %v5127
  %v5129 = vpop.f32.mrb[0].mxu0
  %5130 = vmatprep.mubr.f32.mxu0 0.0
  %v5131 = vand.u32 %v4661, 4294901760
  %v5132 = vsub.f32 %v4661, %v5131
  %5133 = vmatmul.mubr.f32.gmra.mrb[0].mxu0 %v5132
  %v5134 = vpop.f32.mrb[0].mxu0
  %v5135 = vadd.f32 %v4985, %v5134
  %v5136 = vpop.f32.mrb[0].mxu0
  %5137 = vmatprep.mubr.f32.mxu0 0.0
  %v5138 = vand.u32 %v4664, 4294901760
  %v5139 = vsub.f32 %v4664, %v5138
  %5140 = vmatmul.mubr.f32.gmra.mrb[0].mxu0 %v5139
  %v5141 = vpop.f32.mrb[0].mxu0
  %v5142 = vadd.f32 %v4991, %v5141
  %v5143 = vpop.f32.mrb[0].mxu0
  %5144 = vdwg.mxu0
  %5145 = vmatprep.subr.mxu0 0.0
  %v5146 = vand.u32 %v4563, 4294901760
  %5147 = vmatpush1.msra.mxu0 %v5146
  %5148 = vmatprep.subr.mxu0 0.0
  %5149 = vmatpush1.msra.mxu0 0.0
  %5150 = vmatprep.subr.mxu0 0.0
  %5151 = vmatpush1.msra.mxu0 0.0
  %5152 = vmatprep.subr.mxu0 0.0
  %5153 = vmatpush1.msra.mxu0 0.0
  %5154 = vmatprep.subr.mxu0 0.0
  %5155 = vmatpush1.msra.mxu0 0.0
  %5156 = vmatprep.subr.mxu0 0.0
  %5157 = vmatpush1.msra.mxu0 0.0
  %5158 = vmatprep.subr.mxu0 0.0
  %5159 = vmatpush1.msra.mxu0 0.0
  %5160 = vmatprep.subr.mxu0 0.0
  %5161 = vmatpush1.msra.mxu0 0.0
  %5162 = vmatprep.subr.mxu0 0.0
  %5163 = vmatpush1.msra.mxu0 0.0
  %5164 = vmatprep.subr.mxu0 0.0
  %5165 = vmatpush1.msra.mxu0 0.0
  %5166 = vmatprep.subr.mxu0 0.0
  %5167 = vmatpush1.msra.mxu0 0.0
  %5168 = vmatprep.subr.mxu0 0.0
  %5169 = vmatpush1.msra.mxu0 0.0
  %5170 = vmatprep.subr.mxu0 0.0
  %5171 = vmatpush1.msra.mxu0 0.0
  %5172 = vmatprep.subr.mxu0 0.0
  %5173 = vmatpush1.msra.mxu0 0.0
  %5174 = vmatprep.subr.mxu0 0.0
  %5175 = vmatpush1.msra.mxu0 0.0
  %5176 = vmatprep.subr.mxu0 0.0
  %5177 = vmatpush1.msra.mxu0 0.0
  %5178 = vmatprep.subr.mxu0 0.0
  %5179 = vmatpush1.msra.mxu0 0.0
  %5180 = vmatprep.subr.mxu0 0.0
  %5181 = vmatpush1.msra.mxu0 0.0
  %5182 = vmatprep.subr.mxu0 0.0
  %5183 = vmatpush1.msra.mxu0 0.0
  %5184 = vmatprep.subr.mxu0 0.0
  %5185 = vmatpush1.msra.mxu0 0.0
  %5186 = vmatprep.subr.mxu0 0.0
  %5187 = vmatpush1.msra.mxu0 0.0
  %5188 = vmatprep.subr.mxu0 0.0
  %5189 = vmatpush1.msra.mxu0 0.0
  %5190 = vmatprep.subr.mxu0 0.0
  %5191 = vmatpush1.msra.mxu0 0.0
  %5192 = vmatprep.subr.mxu0 0.0
  %5193 = vmatpush1.msra.mxu0 0.0
  %5194 = vmatprep.subr.mxu0 0.0
  %5195 = vmatpush1.msra.mxu0 0.0
  %5196 = vmatprep.subr.mxu0 0.0
  %5197 = vmatpush1.msra.mxu0 0.0
  %5198 = vmatprep.subr.mxu0 0.0
  %5199 = vmatpush1.msra.mxu0 0.0
  %5200 = vmatprep.subr.mxu0 0.0
  %5201 = vmatpush1.msra.mxu0 0.0
  %5202 = vmatprep.subr.mxu0 0.0
  %5203 = vmatpush1.msra.mxu0 0.0
  %5204 = vmatprep.subr.mxu0 0.0
  %5205 = vmatpush1.msra.mxu0 0.0
  %5206 = vmatprep.subr.mxu0 0.0
  %5207 = vmatpush1.msra.mxu0 0.0
  %5208 = vmatprep.subr.mxu0 0.0
  %5209 = vmatpush1.msra.mxu0 0.0
  %5210 = vmatprep.mubr.f32.mxu0 0.0
  %v5211 = vand.u32 %v4631, 4294901760
  %v5212 = vsub.f32 %v4631, %v5211
  %v5213 = vand.u32 %v5212, 4294901760
  %5214 = vmatmul.mubr.f32.gmra.mrb[0].mxu0 %v5213
  %v5215 = vpop.f32.mrb[0].mxu0
  %v5216 = vadd.f32 %v5065, %v5215
  %v5217 = vpop.f32.mrb[0].mxu0
  %5218 = vmatprep.mubr.f32.mxu0 0.0
  %v5219 = vand.u32 %v4634, 4294901760
  %v5220 = vsub.f32 %v4634, %v5219
  %v5221 = vand.u32 %v5220, 4294901760
  %5222 = vmatmul.mubr.f32.gmra.mrb[0].mxu0 %v5221
  %v5223 = vpop.f32.mrb[0].mxu0
  %v5224 = vadd.f32 %v5072, %v5223
  %v5225 = vpop.f32.mrb[0].mxu0
  %5226 = vmatprep.mubr.f32.mxu0 0.0
  %v5227 = vand.u32 %v4637, 4294901760
  %v5228 = vsub.f32 %v4637, %v5227
  %v5229 = vand.u32 %v5228, 4294901760
  %5230 = vmatmul.mubr.f32.gmra.mrb[0].mxu0 %v5229
  %v5231 = vpop.f32.mrb[0].mxu0
  %v5232 = vadd.f32 %v5079, %v5231
  %v5233 = vpop.f32.mrb[0].mxu0
  %5234 = vmatprep.mubr.f32.mxu0 0.0
  %v5235 = vand.u32 %v4640, 4294901760
  %v5236 = vsub.f32 %v4640, %v5235
  %v5237 = vand.u32 %v5236, 4294901760
  %5238 = vmatmul.mubr.f32.gmra.mrb[0].mxu0 %v5237
  %v5239 = vpop.f32.mrb[0].mxu0
  %v5240 = vadd.f32 %v5086, %v5239
  %v5241 = vpop.f32.mrb[0].mxu0
  %5242 = vmatprep.mubr.f32.mxu0 0.0
  %v5243 = vand.u32 %v4643, 4294901760
  %v5244 = vsub.f32 %v4643, %v5243
  %v5245 = vand.u32 %v5244, 4294901760
  %5246 = vmatmul.mubr.f32.gmra.mrb[0].mxu0 %v5245
  %v5247 = vpop.f32.mrb[0].mxu0
  %v5248 = vadd.f32 %v5093, %v5247
  %v5249 = vpop.f32.mrb[0].mxu0
  %5250 = vmatprep.mubr.f32.mxu0 0.0
  %v5251 = vand.u32 %v4646, 4294901760
  %v5252 = vsub.f32 %v4646, %v5251
  %v5253 = vand.u32 %v5252, 4294901760
  %5254 = vmatmul.mubr.f32.gmra.mrb[0].mxu0 %v5253
  %v5255 = vpop.f32.mrb[0].mxu0
  %v5256 = vadd.f32 %v5100, %v5255
  %v5257 = vpop.f32.mrb[0].mxu0
  %5258 = vmatprep.mubr.f32.mxu0 0.0
  %v5259 = vand.u32 %v4649, 4294901760
  %v5260 = vsub.f32 %v4649, %v5259
  %v5261 = vand.u32 %v5260, 4294901760
  %5262 = vmatmul.mubr.f32.gmra.mrb[0].mxu0 %v5261
  %v5263 = vpop.f32.mrb[0].mxu0
  %v5264 = vadd.f32 %v5107, %v5263
  %v5265 = vpop.f32.mrb[0].mxu0
  %5266 = vmatprep.mubr.f32.mxu0 0.0
  %v5267 = vand.u32 %v4652, 4294901760
  %v5268 = vsub.f32 %v4652, %v5267
  %v5269 = vand.u32 %v5268, 4294901760
  %5270 = vmatmul.mubr.f32.gmra.mrb[0].mxu0 %v5269
  %v5271 = vpop.f32.mrb[0].mxu0
  %v5272 = vadd.f32 %v5114, %v5271
  %v5273 = vpop.f32.mrb[0].mxu0
  %5274 = vmatprep.mubr.f32.mxu0 0.0
  %v5275 = vand.u32 %v4655, 4294901760
  %v5276 = vsub.f32 %v4655, %v5275
  %v5277 = vand.u32 %v5276, 4294901760
  %5278 = vmatmul.mubr.f32.gmra.mrb[0].mxu0 %v5277
  %v5279 = vpop.f32.mrb[0].mxu0
  %v5280 = vadd.f32 %v5121, %v5279
  %v5281 = vpop.f32.mrb[0].mxu0
  %5282 = vmatprep.mubr.f32.mxu0 0.0
  %v5283 = vand.u32 %v4658, 4294901760
  %v5284 = vsub.f32 %v4658, %v5283
  %v5285 = vand.u32 %v5284, 4294901760
  %5286 = vmatmul.mubr.f32.gmra.mrb[0].mxu0 %v5285
  %v5287 = vpop.f32.mrb[0].mxu0
  %v5288 = vadd.f32 %v5128, %v5287
  %v5289 = vpop.f32.mrb[0].mxu0
  %5290 = vmatprep.mubr.f32.mxu0 0.0
  %v5291 = vand.u32 %v4661, 4294901760
  %v5292 = vsub.f32 %v4661, %v5291
  %v5293 = vand.u32 %v5292, 4294901760
  %5294 = vmatmul.mubr.f32.gmra.mrb[0].mxu0 %v5293
  %v5295 = vpop.f32.mrb[0].mxu0
  %v5296 = vadd.f32 %v5135, %v5295
  %v5297 = vpop.f32.mrb[0].mxu0
  %5298 = vmatprep.mubr.f32.mxu0 0.0
  %v5299 = vand.u32 %v4664, 4294901760
  %v5300 = vsub.f32 %v4664, %v5299
  %v5301 = vand.u32 %v5300, 4294901760
  %5302 = vmatmul.mubr.f32.gmra.mrb[0].mxu0 %v5301
  %v5303 = vpop.f32.mrb[0].mxu0
  %v5304 = vadd.f32 %v5142, %v5303
  %v5305 = vpop.f32.mrb[0].mxu0
  %5306 = vdwg.mxu0
  %5307 = vmatprep.subr.mxu0 0.0
  %v5308 = vand.u32 %v4563, 4294901760
  %v5309 = vsub.f32 %v4563, %v5308
  %v5310 = vand.u32 %v5309, 4294901760
  %5311 = vmatpush1.msra.mxu0 %v5310
  %5312 = vmatprep.subr.mxu0 0.0
  %5313 = vmatpush1.msra.mxu0 0.0
  %5314 = vmatprep.subr.mxu0 0.0
  %5315 = vmatpush1.msra.mxu0 0.0
  %5316 = vmatprep.subr.mxu0 0.0
  %5317 = vmatpush1.msra.mxu0 0.0
  %5318 = vmatprep.subr.mxu0 0.0
  %5319 = vmatpush1.msra.mxu0 0.0
  %5320 = vmatprep.subr.mxu0 0.0
  %5321 = vmatpush1.msra.mxu0 0.0
  %5322 = vmatprep.subr.mxu0 0.0
  %5323 = vmatpush1.msra.mxu0 0.0
  %5324 = vmatprep.subr.mxu0 0.0
  %5325 = vmatpush1.msra.mxu0 0.0
  %5326 = vmatprep.subr.mxu0 0.0
  %5327 = vmatpush1.msra.mxu0 0.0
  %5328 = vmatprep.subr.mxu0 0.0
  %5329 = vmatpush1.msra.mxu0 0.0
  %5330 = vmatprep.subr.mxu0 0.0
  %5331 = vmatpush1.msra.mxu0 0.0
  %5332 = vmatprep.subr.mxu0 0.0
  %5333 = vmatpush1.msra.mxu0 0.0
  %5334 = vmatprep.subr.mxu0 0.0
  %5335 = vmatpush1.msra.mxu0 0.0
  %5336 = vmatprep.subr.mxu0 0.0
  %5337 = vmatpush1.msra.mxu0 0.0
  %5338 = vmatprep.subr.mxu0 0.0
  %5339 = vmatpush1.msra.mxu0 0.0
  %5340 = vmatprep.subr.mxu0 0.0
  %5341 = vmatpush1.msra.mxu0 0.0
  %5342 = vmatprep.subr.mxu0 0.0
  %5343 = vmatpush1.msra.mxu0 0.0
  %5344 = vmatprep.subr.mxu0 0.0
  %5345 = vmatpush1.msra.mxu0 0.0
  %5346 = vmatprep.subr.mxu0 0.0
  %5347 = vmatpush1.msra.mxu0 0.0
  %5348 = vmatprep.subr.mxu0 0.0
  %5349 = vmatpush1.msra.mxu0 0.0
  %5350 = vmatprep.subr.mxu0 0.0
  %5351 = vmatpush1.msra.mxu0 0.0
  %5352 = vmatprep.subr.mxu0 0.0
  %5353 = vmatpush1.msra.mxu0 0.0
  %5354 = vmatprep.subr.mxu0 0.0
  %5355 = vmatpush1.msra.mxu0 0.0
  %5356 = vmatprep.subr.mxu0 0.0
  %5357 = vmatpush1.msra.mxu0 0.0
  %5358 = vmatprep.subr.mxu0 0.0
  %5359 = vmatpush1.msra.mxu0 0.0
  %5360 = vmatprep.subr.mxu0 0.0
  %5361 = vmatpush1.msra.mxu0 0.0
  %5362 = vmatprep.subr.mxu0 0.0
  %5363 = vmatpush1.msra.mxu0 0.0
  %5364 = vmatprep.subr.mxu0 0.0
  %5365 = vmatpush1.msra.mxu0 0.0
  %5366 = vmatprep.subr.mxu0 0.0
  %5367 = vmatpush1.msra.mxu0 0.0
  %5368 = vmatprep.subr.mxu0 0.0
  %5369 = vmatpush1.msra.mxu0 0.0
  %5370 = vmatprep.subr.mxu0 0.0
  %5371 = vmatpush1.msra.mxu0 0.0
  %5372 = vmatprep.subr.mxu0 0.0
  %5373 = vmatpush1.msra.mxu0 0.0
  %5374 = vmatprep.mubr.f32.mxu0 0.0
  %v5375 = vand.u32 %v4631, 4294901760
  %5376 = vmatmul.mubr.f32.gmra.mrb[0].mxu0 %v5375
  %v5377 = vpop.f32.mrb[0].mxu0
  %v5378 = vadd.f32 %v5216, %v5377
  %v5379 = vpop.f32.mrb[0].mxu0
  %5380 = vmatprep.mubr.f32.mxu0 0.0
  %v5381 = vand.u32 %v4634, 4294901760
  %5382 = vmatmul.mubr.f32.gmra.mrb[0].mxu0 %v5381
  %v5383 = vpop.f32.mrb[0].mxu0
  %v5384 = vadd.f32 %v5224, %v5383
  %v5385 = vpop.f32.mrb[0].mxu0
  %5386 = vmatprep.mubr.f32.mxu0 0.0
  %v5387 = vand.u32 %v4637, 4294901760
  %5388 = vmatmul.mubr.f32.gmra.mrb[0].mxu0 %v5387
  %v5389 = vpop.f32.mrb[0].mxu0
  %v5390 = vadd.f32 %v5232, %v5389
  %v5391 = vpop.f32.mrb[0].mxu0
  %5392 = vmatprep.mubr.f32.mxu0 0.0
  %v5393 = vand.u32 %v4640, 4294901760
  %5394 = vmatmul.mubr.f32.gmra.mrb[0].mxu0 %v5393
  %v5395 = vpop.f32.mrb[0].mxu0
  %v5396 = vadd.f32 %v5240, %v5395
  %v5397 = vpop.f32.mrb[0].mxu0
  %5398 = vmatprep.mubr.f32.mxu0 0.0
  %v5399 = vand.u32 %v4643, 4294901760
  %5400 = vmatmul.mubr.f32.gmra.mrb[0].mxu0 %v5399
  %v5401 = vpop.f32.mrb[0].mxu0
  %v5402 = vadd.f32 %v5248, %v5401
  %v5403 = vpop.f32.mrb[0].mxu0
  %5404 = vmatprep.mubr.f32.mxu0 0.0
  %v5405 = vand.u32 %v4646, 4294901760
  %5406 = vmatmul.mubr.f32.gmra.mrb[0].mxu0 %v5405
  %v5407 = vpop.f32.mrb[0].mxu0
  %v5408 = vadd.f32 %v5256, %v5407
  %v5409 = vpop.f32.mrb[0].mxu0
  %5410 = vmatprep.mubr.f32.mxu0 0.0
  %v5411 = vand.u32 %v4649, 4294901760
  %5412 = vmatmul.mubr.f32.gmra.mrb[0].mxu0 %v5411
  %v5413 = vpop.f32.mrb[0].mxu0
  %v5414 = vadd.f32 %v5264, %v5413
  %v5415 = vpop.f32.mrb[0].mxu0
  %5416 = vmatprep.mubr.f32.mxu0 0.0
  %v5417 = vand.u32 %v4652, 4294901760
  %5418 = vmatmul.mubr.f32.gmra.mrb[0].mxu0 %v5417
  %v5419 = vpop.f32.mrb[0].mxu0
  %v5420 = vadd.f32 %v5272, %v5419
  %v5421 = vpop.f32.mrb[0].mxu0
  %5422 = vmatprep.mubr.f32.mxu0 0.0
  %v5423 = vand.u32 %v4655, 4294901760
  %5424 = vmatmul.mubr.f32.gmra.mrb[0].mxu0 %v5423
  %v5425 = vpop.f32.mrb[0].mxu0
  %v5426 = vadd.f32 %v5280, %v5425
  %v5427 = vpop.f32.mrb[0].mxu0
  %5428 = vmatprep.mubr.f32.mxu0 0.0
  %v5429 = vand.u32 %v4658, 4294901760
  %5430 = vmatmul.mubr.f32.gmra.mrb[0].mxu0 %v5429
  %v5431 = vpop.f32.mrb[0].mxu0
  %v5432 = vadd.f32 %v5288, %v5431
  %v5433 = vpop.f32.mrb[0].mxu0
  %5434 = vmatprep.mubr.f32.mxu0 0.0
  %v5435 = vand.u32 %v4661, 4294901760
  %5436 = vmatmul.mubr.f32.gmra.mrb[0].mxu0 %v5435
  %v5437 = vpop.f32.mrb[0].mxu0
  %v5438 = vadd.f32 %v5296, %v5437
  %v5439 = vpop.f32.mrb[0].mxu0
  %5440 = vmatprep.mubr.f32.mxu0 0.0
  %v5441 = vand.u32 %v4664, 4294901760
  %5442 = vmatmul.mubr.f32.gmra.mrb[0].mxu0 %v5441
  %v5443 = vpop.f32.mrb[0].mxu0
  %v5444 = vadd.f32 %v5304, %v5443
  %v5445 = vpop.f32.mrb[0].mxu0
  %5446 = vdwg.mxu0
  %5447 = vmatprep.subr.mxu0 0.0
  %v5448 = vand.u32 %v4563, 4294901760
  %5449 = vmatpush1.msra.mxu0 %v5448
  %5450 = vmatprep.subr.mxu0 0.0
  %5451 = vmatpush1.msra.mxu0 0.0
  %5452 = vmatprep.subr.mxu0 0.0
  %5453 = vmatpush1.msra.mxu0 0.0
  %5454 = vmatprep.subr.mxu0 0.0
  %5455 = vmatpush1.msra.mxu0 0.0
  %5456 = vmatprep.subr.mxu0 0.0
  %5457 = vmatpush1.msra.mxu0 0.0
  %5458 = vmatprep.subr.mxu0 0.0
  %5459 = vmatpush1.msra.mxu0 0.0
  %5460 = vmatprep.subr.mxu0 0.0
  %5461 = vmatpush1.msra.mxu0 0.0
  %5462 = vmatprep.subr.mxu0 0.0
  %5463 = vmatpush1.msra.mxu0 0.0
  %5464 = vmatprep.subr.mxu0 0.0
  %5465 = vmatpush1.msra.mxu0 0.0
  %5466 = vmatprep.subr.mxu0 0.0
  %5467 = vmatpush1.msra.mxu0 0.0
  %5468 = vmatprep.subr.mxu0 0.0
  %5469 = vmatpush1.msra.mxu0 0.0
  %5470 = vmatprep.subr.mxu0 0.0
  %5471 = vmatpush1.msra.mxu0 0.0
  %5472 = vmatprep.subr.mxu0 0.0
  %5473 = vmatpush1.msra.mxu0 0.0
  %5474 = vmatprep.subr.mxu0 0.0
  %5475 = vmatpush1.msra.mxu0 0.0
  %5476 = vmatprep.subr.mxu0 0.0
  %5477 = vmatpush1.msra.mxu0 0.0
  %5478 = vmatprep.subr.mxu0 0.0
  %5479 = vmatpush1.msra.mxu0 0.0
  %5480 = vmatprep.subr.mxu0 0.0
  %5481 = vmatpush1.msra.mxu0 0.0
  %5482 = vmatprep.subr.mxu0 0.0
  %5483 = vmatpush1.msra.mxu0 0.0
  %5484 = vmatprep.subr.mxu0 0.0
  %5485 = vmatpush1.msra.mxu0 0.0
  %5486 = vmatprep.subr.mxu0 0.0
  %5487 = vmatpush1.msra.mxu0 0.0
  %5488 = vmatprep.subr.mxu0 0.0
  %5489 = vmatpush1.msra.mxu0 0.0
  %5490 = vmatprep.subr.mxu0 0.0
  %5491 = vmatpush1.msra.mxu0 0.0
  %5492 = vmatprep.subr.mxu0 0.0
  %5493 = vmatpush1.msra.mxu0 0.0
  %5494 = vmatprep.subr.mxu0 0.0
  %5495 = vmatpush1.msra.mxu0 0.0
  %5496 = vmatprep.subr.mxu0 0.0
  %5497 = vmatpush1.msra.mxu0 0.0
  %5498 = vmatprep.subr.mxu0 0.0
  %5499 = vmatpush1.msra.mxu0 0.0
  %5500 = vmatprep.subr.mxu0 0.0
  %5501 = vmatpush1.msra.mxu0 0.0
  %5502 = vmatprep.subr.mxu0 0.0
  %5503 = vmatpush1.msra.mxu0 0.0
  %5504 = vmatprep.subr.mxu0 0.0
  %5505 = vmatpush1.msra.mxu0 0.0
  %5506 = vmatprep.subr.mxu0 0.0
  %5507 = vmatpush1.msra.mxu0 0.0
  %5508 = vmatprep.subr.mxu0 0.0
  %5509 = vmatpush1.msra.mxu0 0.0
  %5510 = vmatprep.subr.mxu0 0.0
  %5511 = vmatpush1.msra.mxu0 0.0
  %5512 = vmatprep.mubr.f32.mxu0 0.0
  %v5513 = vand.u32 %v4631, 4294901760
  %5514 = vmatmul.mubr.f32.gmra.mrb[0].mxu0 %v5513
  %v5515 = vpop.f32.mrb[0].mxu0
  %v5516 = vadd.f32 %v5378, %v5515
  %v5517 = vpop.f32.mrb[0].mxu0
  %5518 = vmatprep.mubr.f32.mxu0 0.0
  %v5519 = vand.u32 %v4634, 4294901760
  %5520 = vmatmul.mubr.f32.gmra.mrb[0].mxu0 %v5519
  %v5521 = vpop.f32.mrb[0].mxu0
  %v5522 = vadd.f32 %v5384, %v5521
  %v5523 = vpop.f32.mrb[0].mxu0
  %5524 = vmatprep.mubr.f32.mxu0 0.0
  %v5525 = vand.u32 %v4637, 4294901760
  %5526 = vmatmul.mubr.f32.gmra.mrb[0].mxu0 %v5525
  %v5527 = vpop.f32.mrb[0].mxu0
  %v5528 = vadd.f32 %v5390, %v5527
  %v5529 = vpop.f32.mrb[0].mxu0
  %5530 = vmatprep.mubr.f32.mxu0 0.0
  %v5531 = vand.u32 %v4640, 4294901760
  %5532 = vmatmul.mubr.f32.gmra.mrb[0].mxu0 %v5531
  %v5533 = vpop.f32.mrb[0].mxu0
  %v5534 = vadd.f32 %v5396, %v5533
  %v5535 = vpop.f32.mrb[0].mxu0
  %5536 = vmatprep.mubr.f32.mxu0 0.0
  %v5537 = vand.u32 %v4643, 4294901760
  %5538 = vmatmul.mubr.f32.gmra.mrb[0].mxu0 %v5537
  %v5539 = vpop.f32.mrb[0].mxu0
  %v5540 = vadd.f32 %v5402, %v5539
  %v5541 = vpop.f32.mrb[0].mxu0
  %5542 = vmatprep.mubr.f32.mxu0 0.0
  %v5543 = vand.u32 %v4646, 4294901760
  %5544 = vmatmul.mubr.f32.gmra.mrb[0].mxu0 %v5543
  %v5545 = vpop.f32.mrb[0].mxu0
  %v5546 = vadd.f32 %v5408, %v5545
  %v5547 = vpop.f32.mrb[0].mxu0
  %5548 = vmatprep.mubr.f32.mxu0 0.0
  %v5549 = vand.u32 %v4649, 4294901760
  %5550 = vmatmul.mubr.f32.gmra.mrb[0].mxu0 %v5549
  %v5551 = vpop.f32.mrb[0].mxu0
  %v5552 = vadd.f32 %v5414, %v5551
  %v5553 = vpop.f32.mrb[0].mxu0
  %5554 = vmatprep.mubr.f32.mxu0 0.0
  %v5555 = vand.u32 %v4652, 4294901760
  %5556 = vmatmul.mubr.f32.gmra.mrb[0].mxu0 %v5555
  %v5557 = vpop.f32.mrb[0].mxu0
  %v5558 = vadd.f32 %v5420, %v5557
  %v5559 = vpop.f32.mrb[0].mxu0
  %5560 = vmatprep.mubr.f32.mxu0 0.0
  %v5561 = vand.u32 %v4655, 4294901760
  %5562 = vmatmul.mubr.f32.gmra.mrb[0].mxu0 %v5561
  %v5563 = vpop.f32.mrb[0].mxu0
  %v5564 = vadd.f32 %v5426, %v5563
  %v5565 = vpop.f32.mrb[0].mxu0
  %5566 = vmatprep.mubr.f32.mxu0 0.0
  %v5567 = vand.u32 %v4658, 4294901760
  %5568 = vmatmul.mubr.f32.gmra.mrb[0].mxu0 %v5567
  %v5569 = vpop.f32.mrb[0].mxu0
  %v5570 = vadd.f32 %v5432, %v5569
  %v5571 = vpop.f32.mrb[0].mxu0
  %5572 = vmatprep.mubr.f32.mxu0 0.0
  %v5573 = vand.u32 %v4661, 4294901760
  %5574 = vmatmul.mubr.f32.gmra.mrb[0].mxu0 %v5573
  %v5575 = vpop.f32.mrb[0].mxu0
  %v5576 = vadd.f32 %v5438, %v5575
  %v5577 = vpop.f32.mrb[0].mxu0
  %5578 = vmatprep.mubr.f32.mxu0 0.0
  %v5579 = vand.u32 %v4664, 4294901760
  %5580 = vmatmul.mubr.f32.gmra.mrb[0].mxu0 %v5579
  %v5581 = vpop.f32.mrb[0].mxu0
  %v5582 = vadd.f32 %v5444, %v5581
  %v5583 = vpop.f32.mrb[0].mxu0
  %5584 = vdwg.mxu0
  %v5585 = vmul.f32 %v1804, %v25
  %v5586 = vmul.f32 %v1810, %v26
  %v5587 = vmul.f32 %v1816, %v27
  %v5588 = vmul.f32 %v1822, %v28
  %v5589 = vmul.f32 %v1828, %v29
  %v5590 = vmul.f32 %v1834, %v30
  %v5591 = vmul.f32 %v1840, %v31
  %v5592 = vmul.f32 %v1846, %v32
  %v5593 = vmul.f32 %v1852, %v33
  %v5594 = vmul.f32 %v1858, %v34
  %v5595 = vmul.f32 %v1864, %v35
  %v5596 = vmul.f32 %v1870, %v36
  %v5598 = vsel %vm1883, %v25, 0
  %v5601 = vsel %vm1883, %v26, 0
  %v5604 = vsel %vm1883, %v27, 0
  %v5607 = vsel %vm1883, %v28, 0
  %v5610 = vsel %vm1883, %v29, 0
  %v5613 = vsel %vm1883, %v30, 0
  %v5616 = vsel %vm1883, %v31, 0
  %v5619 = vsel %vm1883, %v32, 0
  %v5622 = vsel %vm1883, %v33, 0
  %v5625 = vsel %vm1883, %v34, 0
  %v5628 = vsel %vm1883, %v35, 0
  %v5631 = vsel %vm1883, %v36, 0
  %5633 = vmatprep.subr.mxu0 0.0
  %v5634 = vand.u32 %v49, 4294901760
  %5635 = vmatpush1.msra.mxu0 %v5634
  %5636 = vmatprep.subr.mxu0 0.0
  %v5637 = vand.u32 %v50, 4294901760
  %5638 = vmatpush1.msra.mxu0 %v5637
  %5639 = vmatprep.subr.mxu0 0.0
  %v5640 = vand.u32 %v51, 4294901760
  %5641 = vmatpush1.msra.mxu0 %v5640
  %5642 = vmatprep.subr.mxu0 0.0
  %v5643 = vand.u32 %v52, 4294901760
  %5644 = vmatpush1.msra.mxu0 %v5643
  %5645 = vmatprep.subr.mxu0 0.0
  %v5646 = vand.u32 %v53, 4294901760
  %5647 = vmatpush1.msra.mxu0 %v5646
  %5648 = vmatprep.subr.mxu0 0.0
  %v5649 = vand.u32 %v54, 4294901760
  %5650 = vmatpush1.msra.mxu0 %v5649
  %5651 = vmatprep.subr.mxu0 0.0
  %5652 = vmatpush1.msra.mxu0 0.0
  %5653 = vmatprep.subr.mxu0 0.0
  %5654 = vmatpush1.msra.mxu0 0.0
  %5655 = vmatprep.subr.mxu0 0.0
  %5656 = vmatpush1.msra.mxu0 0.0
  %5657 = vmatprep.subr.mxu0 0.0
  %5658 = vmatpush1.msra.mxu0 0.0
  %5659 = vmatprep.subr.mxu0 0.0
  %5660 = vmatpush1.msra.mxu0 0.0
  %5661 = vmatprep.subr.mxu0 0.0
  %5662 = vmatpush1.msra.mxu0 0.0
  %5663 = vmatprep.subr.mxu0 0.0
  %5664 = vmatpush1.msra.mxu0 0.0
  %5665 = vmatprep.subr.mxu0 0.0
  %5666 = vmatpush1.msra.mxu0 0.0
  %5667 = vmatprep.subr.mxu0 0.0
  %5668 = vmatpush1.msra.mxu0 0.0
  %5669 = vmatprep.subr.mxu0 0.0
  %5670 = vmatpush1.msra.mxu0 0.0
  %5671 = vmatprep.subr.mxu0 0.0
  %5672 = vmatpush1.msra.mxu0 0.0
  %5673 = vmatprep.subr.mxu0 0.0
  %5674 = vmatpush1.msra.mxu0 0.0
  %5675 = vmatprep.subr.mxu0 0.0
  %5676 = vmatpush1.msra.mxu0 0.0
  %5677 = vmatprep.subr.mxu0 0.0
  %5678 = vmatpush1.msra.mxu0 0.0
  %5679 = vmatprep.subr.mxu0 0.0
  %5680 = vmatpush1.msra.mxu0 0.0
  %5681 = vmatprep.subr.mxu0 0.0
  %5682 = vmatpush1.msra.mxu0 0.0
  %5683 = vmatprep.subr.mxu0 0.0
  %5684 = vmatpush1.msra.mxu0 0.0
  %5685 = vmatprep.subr.mxu0 0.0
  %5686 = vmatpush1.msra.mxu0 0.0
  %5687 = vmatprep.subr.mxu0 0.0
  %5688 = vmatpush1.msra.mxu0 0.0
  %5689 = vmatprep.subr.mxu0 0.0
  %5690 = vmatpush1.msra.mxu0 0.0
  %5691 = vmatprep.subr.mxu0 0.0
  %5692 = vmatpush1.msra.mxu0 0.0
  %5693 = vmatprep.subr.mxu0 0.0
  %5694 = vmatpush1.msra.mxu0 0.0
  %5695 = vmatprep.subr.mxu0 0.0
  %5696 = vmatpush1.msra.mxu0 0.0
  %5697 = vmatprep.subr.mxu0 0.0
  %5698 = vmatpush1.msra.mxu0 0.0
  %5699 = vmatprep.subr.mxu0 0.0
  %5700 = vmatpush1.msra.mxu0 0.0
  %5701 = vmatprep.subr.mxu0 0.0
  %5702 = vmatpush1.msra.mxu0 0.0
  %5703 = vmatprep.mubr.f32.mxu0 0.0
  %v5704 = vand.u32 %v5598, 4294901760
  %v5705 = vsub.f32 %v5598, %v5704
  %v5706 = vand.u32 %v5705, 4294901760
  %v5707 = vsub.f32 %v5705, %v5706
  %v5708 = vand.u32 %v5707, 4294901760
  %5709 = vmatmul.mubr.f32.gmra.mrb[0].mxu0 %v5708
  %v5710 = vpop.f32.mrb[0].mxu0
  %v5711 = vadd.f32 0.0, %v5710
  %v5712 = vpop.f32.mrb[0].mxu0
  %5713 = vmatprep.mubr.f32.mxu0 0.0
  %v5714 = vand.u32 %v5601, 4294901760
  %v5715 = vsub.f32 %v5601, %v5714
  %v5716 = vand.u32 %v5715, 4294901760
  %v5717 = vsub.f32 %v5715, %v5716
  %v5718 = vand.u32 %v5717, 4294901760
  %5719 = vmatmul.mubr.f32.gmra.mrb[0].mxu0 %v5718
  %v5720 = vpop.f32.mrb[0].mxu0
  %v5721 = vadd.f32 0.0, %v5720
  %v5722 = vpop.f32.mrb[0].mxu0
  %5723 = vmatprep.mubr.f32.mxu0 0.0
  %v5724 = vand.u32 %v5604, 4294901760
  %v5725 = vsub.f32 %v5604, %v5724
  %v5726 = vand.u32 %v5725, 4294901760
  %v5727 = vsub.f32 %v5725, %v5726
  %v5728 = vand.u32 %v5727, 4294901760
  %5729 = vmatmul.mubr.f32.gmra.mrb[0].mxu0 %v5728
  %v5730 = vpop.f32.mrb[0].mxu0
  %v5731 = vadd.f32 0.0, %v5730
  %v5732 = vpop.f32.mrb[0].mxu0
  %5733 = vmatprep.mubr.f32.mxu0 0.0
  %v5734 = vand.u32 %v5607, 4294901760
  %v5735 = vsub.f32 %v5607, %v5734
  %v5736 = vand.u32 %v5735, 4294901760
  %v5737 = vsub.f32 %v5735, %v5736
  %v5738 = vand.u32 %v5737, 4294901760
  %5739 = vmatmul.mubr.f32.gmra.mrb[0].mxu0 %v5738
  %v5740 = vpop.f32.mrb[0].mxu0
  %v5741 = vadd.f32 0.0, %v5740
  %v5742 = vpop.f32.mrb[0].mxu0
  %5743 = vmatprep.mubr.f32.mxu0 0.0
  %v5744 = vand.u32 %v5610, 4294901760
  %v5745 = vsub.f32 %v5610, %v5744
  %v5746 = vand.u32 %v5745, 4294901760
  %v5747 = vsub.f32 %v5745, %v5746
  %v5748 = vand.u32 %v5747, 4294901760
  %5749 = vmatmul.mubr.f32.gmra.mrb[0].mxu0 %v5748
  %v5750 = vpop.f32.mrb[0].mxu0
  %v5751 = vadd.f32 0.0, %v5750
  %v5752 = vpop.f32.mrb[0].mxu0
  %5753 = vmatprep.mubr.f32.mxu0 0.0
  %v5754 = vand.u32 %v5613, 4294901760
  %v5755 = vsub.f32 %v5613, %v5754
  %v5756 = vand.u32 %v5755, 4294901760
  %v5757 = vsub.f32 %v5755, %v5756
  %v5758 = vand.u32 %v5757, 4294901760
  %5759 = vmatmul.mubr.f32.gmra.mrb[0].mxu0 %v5758
  %v5760 = vpop.f32.mrb[0].mxu0
  %v5761 = vadd.f32 0.0, %v5760
  %v5762 = vpop.f32.mrb[0].mxu0
  %5763 = vmatprep.mubr.f32.mxu0 0.0
  %v5764 = vand.u32 %v5616, 4294901760
  %v5765 = vsub.f32 %v5616, %v5764
  %v5766 = vand.u32 %v5765, 4294901760
  %v5767 = vsub.f32 %v5765, %v5766
  %v5768 = vand.u32 %v5767, 4294901760
  %5769 = vmatmul.mubr.f32.gmra.mrb[0].mxu0 %v5768
  %v5770 = vpop.f32.mrb[0].mxu0
  %v5771 = vadd.f32 0.0, %v5770
  %v5772 = vpop.f32.mrb[0].mxu0
  %5773 = vmatprep.mubr.f32.mxu0 0.0
  %v5774 = vand.u32 %v5619, 4294901760
  %v5775 = vsub.f32 %v5619, %v5774
  %v5776 = vand.u32 %v5775, 4294901760
  %v5777 = vsub.f32 %v5775, %v5776
  %v5778 = vand.u32 %v5777, 4294901760
  %5779 = vmatmul.mubr.f32.gmra.mrb[0].mxu0 %v5778
  %v5780 = vpop.f32.mrb[0].mxu0
  %v5781 = vadd.f32 0.0, %v5780
  %v5782 = vpop.f32.mrb[0].mxu0
  %5783 = vmatprep.mubr.f32.mxu0 0.0
  %v5784 = vand.u32 %v5622, 4294901760
  %v5785 = vsub.f32 %v5622, %v5784
  %v5786 = vand.u32 %v5785, 4294901760
  %v5787 = vsub.f32 %v5785, %v5786
  %v5788 = vand.u32 %v5787, 4294901760
  %5789 = vmatmul.mubr.f32.gmra.mrb[0].mxu0 %v5788
  %v5790 = vpop.f32.mrb[0].mxu0
  %v5791 = vadd.f32 0.0, %v5790
  %v5792 = vpop.f32.mrb[0].mxu0
  %5793 = vmatprep.mubr.f32.mxu0 0.0
  %v5794 = vand.u32 %v5625, 4294901760
  %v5795 = vsub.f32 %v5625, %v5794
  %v5796 = vand.u32 %v5795, 4294901760
  %v5797 = vsub.f32 %v5795, %v5796
  %v5798 = vand.u32 %v5797, 4294901760
  %5799 = vmatmul.mubr.f32.gmra.mrb[0].mxu0 %v5798
  %v5800 = vpop.f32.mrb[0].mxu0
  %v5801 = vadd.f32 0.0, %v5800
  %v5802 = vpop.f32.mrb[0].mxu0
  %5803 = vmatprep.mubr.f32.mxu0 0.0
  %v5804 = vand.u32 %v5628, 4294901760
  %v5805 = vsub.f32 %v5628, %v5804
  %v5806 = vand.u32 %v5805, 4294901760
  %v5807 = vsub.f32 %v5805, %v5806
  %v5808 = vand.u32 %v5807, 4294901760
  %5809 = vmatmul.mubr.f32.gmra.mrb[0].mxu0 %v5808
  %v5810 = vpop.f32.mrb[0].mxu0
  %v5811 = vadd.f32 0.0, %v5810
  %v5812 = vpop.f32.mrb[0].mxu0
  %5813 = vmatprep.mubr.f32.mxu0 0.0
  %v5814 = vand.u32 %v5631, 4294901760
  %v5815 = vsub.f32 %v5631, %v5814
  %v5816 = vand.u32 %v5815, 4294901760
  %v5817 = vsub.f32 %v5815, %v5816
  %v5818 = vand.u32 %v5817, 4294901760
  %5819 = vmatmul.mubr.f32.gmra.mrb[0].mxu0 %v5818
  %v5820 = vpop.f32.mrb[0].mxu0
  %v5821 = vadd.f32 0.0, %v5820
  %v5822 = vpop.f32.mrb[0].mxu0
  %5823 = vdwg.mxu0
  %5824 = vmatprep.subr.mxu0 0.0
  %v5825 = vand.u32 %v49, 4294901760
  %v5826 = vsub.f32 %v49, %v5825
  %v5827 = vand.u32 %v5826, 4294901760
  %v5828 = vsub.f32 %v5826, %v5827
  %v5829 = vand.u32 %v5828, 4294901760
  %5830 = vmatpush1.msra.mxu0 %v5829
  %5831 = vmatprep.subr.mxu0 0.0
  %v5832 = vand.u32 %v50, 4294901760
  %v5833 = vsub.f32 %v50, %v5832
  %v5834 = vand.u32 %v5833, 4294901760
  %v5835 = vsub.f32 %v5833, %v5834
  %v5836 = vand.u32 %v5835, 4294901760
  %5837 = vmatpush1.msra.mxu0 %v5836
  %5838 = vmatprep.subr.mxu0 0.0
  %v5839 = vand.u32 %v51, 4294901760
  %v5840 = vsub.f32 %v51, %v5839
  %v5841 = vand.u32 %v5840, 4294901760
  %v5842 = vsub.f32 %v5840, %v5841
  %v5843 = vand.u32 %v5842, 4294901760
  %5844 = vmatpush1.msra.mxu0 %v5843
  %5845 = vmatprep.subr.mxu0 0.0
  %v5846 = vand.u32 %v52, 4294901760
  %v5847 = vsub.f32 %v52, %v5846
  %v5848 = vand.u32 %v5847, 4294901760
  %v5849 = vsub.f32 %v5847, %v5848
  %v5850 = vand.u32 %v5849, 4294901760
  %5851 = vmatpush1.msra.mxu0 %v5850
  %5852 = vmatprep.subr.mxu0 0.0
  %v5853 = vand.u32 %v53, 4294901760
  %v5854 = vsub.f32 %v53, %v5853
  %v5855 = vand.u32 %v5854, 4294901760
  %v5856 = vsub.f32 %v5854, %v5855
  %v5857 = vand.u32 %v5856, 4294901760
  %5858 = vmatpush1.msra.mxu0 %v5857
  %5859 = vmatprep.subr.mxu0 0.0
  %v5860 = vand.u32 %v54, 4294901760
  %v5861 = vsub.f32 %v54, %v5860
  %v5862 = vand.u32 %v5861, 4294901760
  %v5863 = vsub.f32 %v5861, %v5862
  %v5864 = vand.u32 %v5863, 4294901760
  %5865 = vmatpush1.msra.mxu0 %v5864
  %5866 = vmatprep.subr.mxu0 0.0
  %5867 = vmatpush1.msra.mxu0 0.0
  %5868 = vmatprep.subr.mxu0 0.0
  %5869 = vmatpush1.msra.mxu0 0.0
  %5870 = vmatprep.subr.mxu0 0.0
  %5871 = vmatpush1.msra.mxu0 0.0
  %5872 = vmatprep.subr.mxu0 0.0
  %5873 = vmatpush1.msra.mxu0 0.0
  %5874 = vmatprep.subr.mxu0 0.0
  %5875 = vmatpush1.msra.mxu0 0.0
  %5876 = vmatprep.subr.mxu0 0.0
  %5877 = vmatpush1.msra.mxu0 0.0
  %5878 = vmatprep.subr.mxu0 0.0
  %5879 = vmatpush1.msra.mxu0 0.0
  %5880 = vmatprep.subr.mxu0 0.0
  %5881 = vmatpush1.msra.mxu0 0.0
  %5882 = vmatprep.subr.mxu0 0.0
  %5883 = vmatpush1.msra.mxu0 0.0
  %5884 = vmatprep.subr.mxu0 0.0
  %5885 = vmatpush1.msra.mxu0 0.0
  %5886 = vmatprep.subr.mxu0 0.0
  %5887 = vmatpush1.msra.mxu0 0.0
  %5888 = vmatprep.subr.mxu0 0.0
  %5889 = vmatpush1.msra.mxu0 0.0
  %5890 = vmatprep.subr.mxu0 0.0
  %5891 = vmatpush1.msra.mxu0 0.0
  %5892 = vmatprep.subr.mxu0 0.0
  %5893 = vmatpush1.msra.mxu0 0.0
  %5894 = vmatprep.subr.mxu0 0.0
  %5895 = vmatpush1.msra.mxu0 0.0
  %5896 = vmatprep.subr.mxu0 0.0
  %5897 = vmatpush1.msra.mxu0 0.0
  %5898 = vmatprep.subr.mxu0 0.0
  %5899 = vmatpush1.msra.mxu0 0.0
  %5900 = vmatprep.subr.mxu0 0.0
  %5901 = vmatpush1.msra.mxu0 0.0
  %5902 = vmatprep.subr.mxu0 0.0
  %5903 = vmatpush1.msra.mxu0 0.0
  %5904 = vmatprep.subr.mxu0 0.0
  %5905 = vmatpush1.msra.mxu0 0.0
  %5906 = vmatprep.subr.mxu0 0.0
  %5907 = vmatpush1.msra.mxu0 0.0
  %5908 = vmatprep.subr.mxu0 0.0
  %5909 = vmatpush1.msra.mxu0 0.0
  %5910 = vmatprep.subr.mxu0 0.0
  %5911 = vmatpush1.msra.mxu0 0.0
  %5912 = vmatprep.subr.mxu0 0.0
  %5913 = vmatpush1.msra.mxu0 0.0
  %5914 = vmatprep.subr.mxu0 0.0
  %5915 = vmatpush1.msra.mxu0 0.0
  %5916 = vmatprep.subr.mxu0 0.0
  %5917 = vmatpush1.msra.mxu0 0.0
  %5918 = vmatprep.mubr.f32.mxu0 0.0
  %v5919 = vand.u32 %v5598, 4294901760
  %5920 = vmatmul.mubr.f32.gmra.mrb[0].mxu0 %v5919
  %v5921 = vpop.f32.mrb[0].mxu0
  %v5922 = vadd.f32 %v5711, %v5921
  %v5923 = vpop.f32.mrb[0].mxu0
  %5924 = vmatprep.mubr.f32.mxu0 0.0
  %v5925 = vand.u32 %v5601, 4294901760
  %5926 = vmatmul.mubr.f32.gmra.mrb[0].mxu0 %v5925
  %v5927 = vpop.f32.mrb[0].mxu0
  %v5928 = vadd.f32 %v5721, %v5927
  %v5929 = vpop.f32.mrb[0].mxu0
  %5930 = vmatprep.mubr.f32.mxu0 0.0
  %v5931 = vand.u32 %v5604, 4294901760
  %5932 = vmatmul.mubr.f32.gmra.mrb[0].mxu0 %v5931
  %v5933 = vpop.f32.mrb[0].mxu0
  %v5934 = vadd.f32 %v5731, %v5933
  %v5935 = vpop.f32.mrb[0].mxu0
  %5936 = vmatprep.mubr.f32.mxu0 0.0
  %v5937 = vand.u32 %v5607, 4294901760
  %5938 = vmatmul.mubr.f32.gmra.mrb[0].mxu0 %v5937
  %v5939 = vpop.f32.mrb[0].mxu0
  %v5940 = vadd.f32 %v5741, %v5939
  %v5941 = vpop.f32.mrb[0].mxu0
  %5942 = vmatprep.mubr.f32.mxu0 0.0
  %v5943 = vand.u32 %v5610, 4294901760
  %5944 = vmatmul.mubr.f32.gmra.mrb[0].mxu0 %v5943
  %v5945 = vpop.f32.mrb[0].mxu0
  %v5946 = vadd.f32 %v5751, %v5945
  %v5947 = vpop.f32.mrb[0].mxu0
  %5948 = vmatprep.mubr.f32.mxu0 0.0
  %v5949 = vand.u32 %v5613, 4294901760
  %5950 = vmatmul.mubr.f32.gmra.mrb[0].mxu0 %v5949
  %v5951 = vpop.f32.mrb[0].mxu0
  %v5952 = vadd.f32 %v5761, %v5951
  %v5953 = vpop.f32.mrb[0].mxu0
  %5954 = vmatprep.mubr.f32.mxu0 0.0
  %v5955 = vand.u32 %v5616, 4294901760
  %5956 = vmatmul.mubr.f32.gmra.mrb[0].mxu0 %v5955
  %v5957 = vpop.f32.mrb[0].mxu0
  %v5958 = vadd.f32 %v5771, %v5957
  %v5959 = vpop.f32.mrb[0].mxu0
  %5960 = vmatprep.mubr.f32.mxu0 0.0
  %v5961 = vand.u32 %v5619, 4294901760
  %5962 = vmatmul.mubr.f32.gmra.mrb[0].mxu0 %v5961
  %v5963 = vpop.f32.mrb[0].mxu0
  %v5964 = vadd.f32 %v5781, %v5963
  %v5965 = vpop.f32.mrb[0].mxu0
  %5966 = vmatprep.mubr.f32.mxu0 0.0
  %v5967 = vand.u32 %v5622, 4294901760
  %5968 = vmatmul.mubr.f32.gmra.mrb[0].mxu0 %v5967
  %v5969 = vpop.f32.mrb[0].mxu0
  %v5970 = vadd.f32 %v5791, %v5969
  %v5971 = vpop.f32.mrb[0].mxu0
  %5972 = vmatprep.mubr.f32.mxu0 0.0
  %v5973 = vand.u32 %v5625, 4294901760
  %5974 = vmatmul.mubr.f32.gmra.mrb[0].mxu0 %v5973
  %v5975 = vpop.f32.mrb[0].mxu0
  %v5976 = vadd.f32 %v5801, %v5975
  %v5977 = vpop.f32.mrb[0].mxu0
  %5978 = vmatprep.mubr.f32.mxu0 0.0
  %v5979 = vand.u32 %v5628, 4294901760
  %5980 = vmatmul.mubr.f32.gmra.mrb[0].mxu0 %v5979
  %v5981 = vpop.f32.mrb[0].mxu0
  %v5982 = vadd.f32 %v5811, %v5981
  %v5983 = vpop.f32.mrb[0].mxu0
  %5984 = vmatprep.mubr.f32.mxu0 0.0
  %v5985 = vand.u32 %v5631, 4294901760
  %5986 = vmatmul.mubr.f32.gmra.mrb[0].mxu0 %v5985
  %v5987 = vpop.f32.mrb[0].mxu0
  %v5988 = vadd.f32 %v5821, %v5987
  %v5989 = vpop.f32.mrb[0].mxu0
  %5990 = vdwg.mxu0
  %5991 = vmatprep.subr.mxu0 0.0
  %v5992 = vand.u32 %v49, 4294901760
  %v5993 = vsub.f32 %v49, %v5992
  %5994 = vmatpush1.msra.mxu0 %v5993
  %5995 = vmatprep.subr.mxu0 0.0
  %v5996 = vand.u32 %v50, 4294901760
  %v5997 = vsub.f32 %v50, %v5996
  %5998 = vmatpush1.msra.mxu0 %v5997
  %5999 = vmatprep.subr.mxu0 0.0
  %v6000 = vand.u32 %v51, 4294901760
  %v6001 = vsub.f32 %v51, %v6000
  %6002 = vmatpush1.msra.mxu0 %v6001
  %6003 = vmatprep.subr.mxu0 0.0
  %v6004 = vand.u32 %v52, 4294901760
  %v6005 = vsub.f32 %v52, %v6004
  %6006 = vmatpush1.msra.mxu0 %v6005
  %6007 = vmatprep.subr.mxu0 0.0
  %v6008 = vand.u32 %v53, 4294901760
  %v6009 = vsub.f32 %v53, %v6008
  %6010 = vmatpush1.msra.mxu0 %v6009
  %6011 = vmatprep.subr.mxu0 0.0
  %v6012 = vand.u32 %v54, 4294901760
  %v6013 = vsub.f32 %v54, %v6012
  %6014 = vmatpush1.msra.mxu0 %v6013
  %6015 = vmatprep.subr.mxu0 0.0
  %6016 = vmatpush1.msra.mxu0 0.0
  %6017 = vmatprep.subr.mxu0 0.0
  %6018 = vmatpush1.msra.mxu0 0.0
  %6019 = vmatprep.subr.mxu0 0.0
  %6020 = vmatpush1.msra.mxu0 0.0
  %6021 = vmatprep.subr.mxu0 0.0
  %6022 = vmatpush1.msra.mxu0 0.0
  %6023 = vmatprep.subr.mxu0 0.0
  %6024 = vmatpush1.msra.mxu0 0.0
  %6025 = vmatprep.subr.mxu0 0.0
  %6026 = vmatpush1.msra.mxu0 0.0
  %6027 = vmatprep.subr.mxu0 0.0
  %6028 = vmatpush1.msra.mxu0 0.0
  %6029 = vmatprep.subr.mxu0 0.0
  %6030 = vmatpush1.msra.mxu0 0.0
  %6031 = vmatprep.subr.mxu0 0.0
  %6032 = vmatpush1.msra.mxu0 0.0
  %6033 = vmatprep.subr.mxu0 0.0
  %6034 = vmatpush1.msra.mxu0 0.0
  %6035 = vmatprep.subr.mxu0 0.0
  %6036 = vmatpush1.msra.mxu0 0.0
  %6037 = vmatprep.subr.mxu0 0.0
  %6038 = vmatpush1.msra.mxu0 0.0
  %6039 = vmatprep.subr.mxu0 0.0
  %6040 = vmatpush1.msra.mxu0 0.0
  %6041 = vmatprep.subr.mxu0 0.0
  %6042 = vmatpush1.msra.mxu0 0.0
  %6043 = vmatprep.subr.mxu0 0.0
  %6044 = vmatpush1.msra.mxu0 0.0
  %6045 = vmatprep.subr.mxu0 0.0
  %6046 = vmatpush1.msra.mxu0 0.0
  %6047 = vmatprep.subr.mxu0 0.0
  %6048 = vmatpush1.msra.mxu0 0.0
  %6049 = vmatprep.subr.mxu0 0.0
  %6050 = vmatpush1.msra.mxu0 0.0
  %6051 = vmatprep.subr.mxu0 0.0
  %6052 = vmatpush1.msra.mxu0 0.0
  %6053 = vmatprep.subr.mxu0 0.0
  %6054 = vmatpush1.msra.mxu0 0.0
  %6055 = vmatprep.subr.mxu0 0.0
  %6056 = vmatpush1.msra.mxu0 0.0
  %6057 = vmatprep.subr.mxu0 0.0
  %6058 = vmatpush1.msra.mxu0 0.0
  %6059 = vmatprep.subr.mxu0 0.0
  %6060 = vmatpush1.msra.mxu0 0.0
  %6061 = vmatprep.subr.mxu0 0.0
  %6062 = vmatpush1.msra.mxu0 0.0
  %6063 = vmatprep.subr.mxu0 0.0
  %6064 = vmatpush1.msra.mxu0 0.0
  %6065 = vmatprep.subr.mxu0 0.0
  %6066 = vmatpush1.msra.mxu0 0.0
  %6067 = vmatprep.mubr.f32.mxu0 0.0
  %v6068 = vand.u32 %v5598, 4294901760
  %v6069 = vsub.f32 %v5598, %v6068
  %6070 = vmatmul.mubr.f32.gmra.mrb[0].mxu0 %v6069
  %v6071 = vpop.f32.mrb[0].mxu0
  %v6072 = vadd.f32 %v5922, %v6071
  %v6073 = vpop.f32.mrb[0].mxu0
  %6074 = vmatprep.mubr.f32.mxu0 0.0
  %v6075 = vand.u32 %v5601, 4294901760
  %v6076 = vsub.f32 %v5601, %v6075
  %6077 = vmatmul.mubr.f32.gmra.mrb[0].mxu0 %v6076
  %v6078 = vpop.f32.mrb[0].mxu0
  %v6079 = vadd.f32 %v5928, %v6078
  %v6080 = vpop.f32.mrb[0].mxu0
  %6081 = vmatprep.mubr.f32.mxu0 0.0
  %v6082 = vand.u32 %v5604, 4294901760
  %v6083 = vsub.f32 %v5604, %v6082
  %6084 = vmatmul.mubr.f32.gmra.mrb[0].mxu0 %v6083
  %v6085 = vpop.f32.mrb[0].mxu0
  %v6086 = vadd.f32 %v5934, %v6085
  %v6087 = vpop.f32.mrb[0].mxu0
  %6088 = vmatprep.mubr.f32.mxu0 0.0
  %v6089 = vand.u32 %v5607, 4294901760
  %v6090 = vsub.f32 %v5607, %v6089
  %6091 = vmatmul.mubr.f32.gmra.mrb[0].mxu0 %v6090
  %v6092 = vpop.f32.mrb[0].mxu0
  %v6093 = vadd.f32 %v5940, %v6092
  %v6094 = vpop.f32.mrb[0].mxu0
  %6095 = vmatprep.mubr.f32.mxu0 0.0
  %v6096 = vand.u32 %v5610, 4294901760
  %v6097 = vsub.f32 %v5610, %v6096
  %6098 = vmatmul.mubr.f32.gmra.mrb[0].mxu0 %v6097
  %v6099 = vpop.f32.mrb[0].mxu0
  %v6100 = vadd.f32 %v5946, %v6099
  %v6101 = vpop.f32.mrb[0].mxu0
  %6102 = vmatprep.mubr.f32.mxu0 0.0
  %v6103 = vand.u32 %v5613, 4294901760
  %v6104 = vsub.f32 %v5613, %v6103
  %6105 = vmatmul.mubr.f32.gmra.mrb[0].mxu0 %v6104
  %v6106 = vpop.f32.mrb[0].mxu0
  %v6107 = vadd.f32 %v5952, %v6106
  %v6108 = vpop.f32.mrb[0].mxu0
  %6109 = vmatprep.mubr.f32.mxu0 0.0
  %v6110 = vand.u32 %v5616, 4294901760
  %v6111 = vsub.f32 %v5616, %v6110
  %6112 = vmatmul.mubr.f32.gmra.mrb[0].mxu0 %v6111
  %v6113 = vpop.f32.mrb[0].mxu0
  %v6114 = vadd.f32 %v5958, %v6113
  %v6115 = vpop.f32.mrb[0].mxu0
  %6116 = vmatprep.mubr.f32.mxu0 0.0
  %v6117 = vand.u32 %v5619, 4294901760
  %v6118 = vsub.f32 %v5619, %v6117
  %6119 = vmatmul.mubr.f32.gmra.mrb[0].mxu0 %v6118
  %v6120 = vpop.f32.mrb[0].mxu0
  %v6121 = vadd.f32 %v5964, %v6120
  %v6122 = vpop.f32.mrb[0].mxu0
  %6123 = vmatprep.mubr.f32.mxu0 0.0
  %v6124 = vand.u32 %v5622, 4294901760
  %v6125 = vsub.f32 %v5622, %v6124
  %6126 = vmatmul.mubr.f32.gmra.mrb[0].mxu0 %v6125
  %v6127 = vpop.f32.mrb[0].mxu0
  %v6128 = vadd.f32 %v5970, %v6127
  %v6129 = vpop.f32.mrb[0].mxu0
  %6130 = vmatprep.mubr.f32.mxu0 0.0
  %v6131 = vand.u32 %v5625, 4294901760
  %v6132 = vsub.f32 %v5625, %v6131
  %6133 = vmatmul.mubr.f32.gmra.mrb[0].mxu0 %v6132
  %v6134 = vpop.f32.mrb[0].mxu0
  %v6135 = vadd.f32 %v5976, %v6134
  %v6136 = vpop.f32.mrb[0].mxu0
  %6137 = vmatprep.mubr.f32.mxu0 0.0
  %v6138 = vand.u32 %v5628, 4294901760
  %v6139 = vsub.f32 %v5628, %v6138
  %6140 = vmatmul.mubr.f32.gmra.mrb[0].mxu0 %v6139
  %v6141 = vpop.f32.mrb[0].mxu0
  %v6142 = vadd.f32 %v5982, %v6141
  %v6143 = vpop.f32.mrb[0].mxu0
  %6144 = vmatprep.mubr.f32.mxu0 0.0
  %v6145 = vand.u32 %v5631, 4294901760
  %v6146 = vsub.f32 %v5631, %v6145
  %6147 = vmatmul.mubr.f32.gmra.mrb[0].mxu0 %v6146
  %v6148 = vpop.f32.mrb[0].mxu0
  %v6149 = vadd.f32 %v5988, %v6148
  %v6150 = vpop.f32.mrb[0].mxu0
  %6151 = vdwg.mxu0
  %6152 = vmatprep.subr.mxu0 0.0
  %v6153 = vand.u32 %v49, 4294901760
  %6154 = vmatpush1.msra.mxu0 %v6153
  %6155 = vmatprep.subr.mxu0 0.0
  %v6156 = vand.u32 %v50, 4294901760
  %6157 = vmatpush1.msra.mxu0 %v6156
  %6158 = vmatprep.subr.mxu0 0.0
  %v6159 = vand.u32 %v51, 4294901760
  %6160 = vmatpush1.msra.mxu0 %v6159
  %6161 = vmatprep.subr.mxu0 0.0
  %v6162 = vand.u32 %v52, 4294901760
  %6163 = vmatpush1.msra.mxu0 %v6162
  %6164 = vmatprep.subr.mxu0 0.0
  %v6165 = vand.u32 %v53, 4294901760
  %6166 = vmatpush1.msra.mxu0 %v6165
  %6167 = vmatprep.subr.mxu0 0.0
  %v6168 = vand.u32 %v54, 4294901760
  %6169 = vmatpush1.msra.mxu0 %v6168
  %6170 = vmatprep.subr.mxu0 0.0
  %6171 = vmatpush1.msra.mxu0 0.0
  %6172 = vmatprep.subr.mxu0 0.0
  %6173 = vmatpush1.msra.mxu0 0.0
  %6174 = vmatprep.subr.mxu0 0.0
  %6175 = vmatpush1.msra.mxu0 0.0
  %6176 = vmatprep.subr.mxu0 0.0
  %6177 = vmatpush1.msra.mxu0 0.0
  %6178 = vmatprep.subr.mxu0 0.0
  %6179 = vmatpush1.msra.mxu0 0.0
  %6180 = vmatprep.subr.mxu0 0.0
  %6181 = vmatpush1.msra.mxu0 0.0
  %6182 = vmatprep.subr.mxu0 0.0
  %6183 = vmatpush1.msra.mxu0 0.0
  %6184 = vmatprep.subr.mxu0 0.0
  %6185 = vmatpush1.msra.mxu0 0.0
  %6186 = vmatprep.subr.mxu0 0.0
  %6187 = vmatpush1.msra.mxu0 0.0
  %6188 = vmatprep.subr.mxu0 0.0
  %6189 = vmatpush1.msra.mxu0 0.0
  %6190 = vmatprep.subr.mxu0 0.0
  %6191 = vmatpush1.msra.mxu0 0.0
  %6192 = vmatprep.subr.mxu0 0.0
  %6193 = vmatpush1.msra.mxu0 0.0
  %6194 = vmatprep.subr.mxu0 0.0
  %6195 = vmatpush1.msra.mxu0 0.0
  %6196 = vmatprep.subr.mxu0 0.0
  %6197 = vmatpush1.msra.mxu0 0.0
  %6198 = vmatprep.subr.mxu0 0.0
  %6199 = vmatpush1.msra.mxu0 0.0
  %6200 = vmatprep.subr.mxu0 0.0
  %6201 = vmatpush1.msra.mxu0 0.0
  %6202 = vmatprep.subr.mxu0 0.0
  %6203 = vmatpush1.msra.mxu0 0.0
  %6204 = vmatprep.subr.mxu0 0.0
  %6205 = vmatpush1.msra.mxu0 0.0
  %6206 = vmatprep.subr.mxu0 0.0
  %6207 = vmatpush1.msra.mxu0 0.0
  %6208 = vmatprep.subr.mxu0 0.0
  %6209 = vmatpush1.msra.mxu0 0.0
  %6210 = vmatprep.subr.mxu0 0.0
  %6211 = vmatpush1.msra.mxu0 0.0
  %6212 = vmatprep.subr.mxu0 0.0
  %6213 = vmatpush1.msra.mxu0 0.0
  %6214 = vmatprep.subr.mxu0 0.0
  %6215 = vmatpush1.msra.mxu0 0.0
  %6216 = vmatprep.subr.mxu0 0.0
  %6217 = vmatpush1.msra.mxu0 0.0
  %6218 = vmatprep.subr.mxu0 0.0
  %6219 = vmatpush1.msra.mxu0 0.0
  %6220 = vmatprep.subr.mxu0 0.0
  %6221 = vmatpush1.msra.mxu0 0.0
  %6222 = vmatprep.mubr.f32.mxu0 0.0
  %v6223 = vand.u32 %v5598, 4294901760
  %v6224 = vsub.f32 %v5598, %v6223
  %v6225 = vand.u32 %v6224, 4294901760
  %6226 = vmatmul.mubr.f32.gmra.mrb[0].mxu0 %v6225
  %v6227 = vpop.f32.mrb[0].mxu0
  %v6228 = vadd.f32 %v6072, %v6227
  %v6229 = vpop.f32.mrb[0].mxu0
  %6230 = vmatprep.mubr.f32.mxu0 0.0
  %v6231 = vand.u32 %v5601, 4294901760
  %v6232 = vsub.f32 %v5601, %v6231
  %v6233 = vand.u32 %v6232, 4294901760
  %6234 = vmatmul.mubr.f32.gmra.mrb[0].mxu0 %v6233
  %v6235 = vpop.f32.mrb[0].mxu0
  %v6236 = vadd.f32 %v6079, %v6235
  %v6237 = vpop.f32.mrb[0].mxu0
  %6238 = vmatprep.mubr.f32.mxu0 0.0
  %v6239 = vand.u32 %v5604, 4294901760
  %v6240 = vsub.f32 %v5604, %v6239
  %v6241 = vand.u32 %v6240, 4294901760
  %6242 = vmatmul.mubr.f32.gmra.mrb[0].mxu0 %v6241
  %v6243 = vpop.f32.mrb[0].mxu0
  %v6244 = vadd.f32 %v6086, %v6243
  %v6245 = vpop.f32.mrb[0].mxu0
  %6246 = vmatprep.mubr.f32.mxu0 0.0
  %v6247 = vand.u32 %v5607, 4294901760
  %v6248 = vsub.f32 %v5607, %v6247
  %v6249 = vand.u32 %v6248, 4294901760
  %6250 = vmatmul.mubr.f32.gmra.mrb[0].mxu0 %v6249
  %v6251 = vpop.f32.mrb[0].mxu0
  %v6252 = vadd.f32 %v6093, %v6251
  %v6253 = vpop.f32.mrb[0].mxu0
  %6254 = vmatprep.mubr.f32.mxu0 0.0
  %v6255 = vand.u32 %v5610, 4294901760
  %v6256 = vsub.f32 %v5610, %v6255
  %v6257 = vand.u32 %v6256, 4294901760
  %6258 = vmatmul.mubr.f32.gmra.mrb[0].mxu0 %v6257
  %v6259 = vpop.f32.mrb[0].mxu0
  %v6260 = vadd.f32 %v6100, %v6259
  %v6261 = vpop.f32.mrb[0].mxu0
  %6262 = vmatprep.mubr.f32.mxu0 0.0
  %v6263 = vand.u32 %v5613, 4294901760
  %v6264 = vsub.f32 %v5613, %v6263
  %v6265 = vand.u32 %v6264, 4294901760
  %6266 = vmatmul.mubr.f32.gmra.mrb[0].mxu0 %v6265
  %v6267 = vpop.f32.mrb[0].mxu0
  %v6268 = vadd.f32 %v6107, %v6267
  %v6269 = vpop.f32.mrb[0].mxu0
  %6270 = vmatprep.mubr.f32.mxu0 0.0
  %v6271 = vand.u32 %v5616, 4294901760
  %v6272 = vsub.f32 %v5616, %v6271
  %v6273 = vand.u32 %v6272, 4294901760
  %6274 = vmatmul.mubr.f32.gmra.mrb[0].mxu0 %v6273
  %v6275 = vpop.f32.mrb[0].mxu0
  %v6276 = vadd.f32 %v6114, %v6275
  %v6277 = vpop.f32.mrb[0].mxu0
  %6278 = vmatprep.mubr.f32.mxu0 0.0
  %v6279 = vand.u32 %v5619, 4294901760
  %v6280 = vsub.f32 %v5619, %v6279
  %v6281 = vand.u32 %v6280, 4294901760
  %6282 = vmatmul.mubr.f32.gmra.mrb[0].mxu0 %v6281
  %v6283 = vpop.f32.mrb[0].mxu0
  %v6284 = vadd.f32 %v6121, %v6283
  %v6285 = vpop.f32.mrb[0].mxu0
  %6286 = vmatprep.mubr.f32.mxu0 0.0
  %v6287 = vand.u32 %v5622, 4294901760
  %v6288 = vsub.f32 %v5622, %v6287
  %v6289 = vand.u32 %v6288, 4294901760
  %6290 = vmatmul.mubr.f32.gmra.mrb[0].mxu0 %v6289
  %v6291 = vpop.f32.mrb[0].mxu0
  %v6292 = vadd.f32 %v6128, %v6291
  %v6293 = vpop.f32.mrb[0].mxu0
  %6294 = vmatprep.mubr.f32.mxu0 0.0
  %v6295 = vand.u32 %v5625, 4294901760
  %v6296 = vsub.f32 %v5625, %v6295
  %v6297 = vand.u32 %v6296, 4294901760
  %6298 = vmatmul.mubr.f32.gmra.mrb[0].mxu0 %v6297
  %v6299 = vpop.f32.mrb[0].mxu0
  %v6300 = vadd.f32 %v6135, %v6299
  %v6301 = vpop.f32.mrb[0].mxu0
  %6302 = vmatprep.mubr.f32.mxu0 0.0
  %v6303 = vand.u32 %v5628, 4294901760
  %v6304 = vsub.f32 %v5628, %v6303
  %v6305 = vand.u32 %v6304, 4294901760
  %6306 = vmatmul.mubr.f32.gmra.mrb[0].mxu0 %v6305
  %v6307 = vpop.f32.mrb[0].mxu0
  %v6308 = vadd.f32 %v6142, %v6307
  %v6309 = vpop.f32.mrb[0].mxu0
  %6310 = vmatprep.mubr.f32.mxu0 0.0
  %v6311 = vand.u32 %v5631, 4294901760
  %v6312 = vsub.f32 %v5631, %v6311
  %v6313 = vand.u32 %v6312, 4294901760
  %6314 = vmatmul.mubr.f32.gmra.mrb[0].mxu0 %v6313
  %v6315 = vpop.f32.mrb[0].mxu0
  %v6316 = vadd.f32 %v6149, %v6315
  %v6317 = vpop.f32.mrb[0].mxu0
  %6318 = vdwg.mxu0
  %6319 = vmatprep.subr.mxu0 0.0
  %v6320 = vand.u32 %v49, 4294901760
  %v6321 = vsub.f32 %v49, %v6320
  %v6322 = vand.u32 %v6321, 4294901760
  %6323 = vmatpush1.msra.mxu0 %v6322
  %6324 = vmatprep.subr.mxu0 0.0
  %v6325 = vand.u32 %v50, 4294901760
  %v6326 = vsub.f32 %v50, %v6325
  %v6327 = vand.u32 %v6326, 4294901760
  %6328 = vmatpush1.msra.mxu0 %v6327
  %6329 = vmatprep.subr.mxu0 0.0
  %v6330 = vand.u32 %v51, 4294901760
  %v6331 = vsub.f32 %v51, %v6330
  %v6332 = vand.u32 %v6331, 4294901760
  %6333 = vmatpush1.msra.mxu0 %v6332
  %6334 = vmatprep.subr.mxu0 0.0
  %v6335 = vand.u32 %v52, 4294901760
  %v6336 = vsub.f32 %v52, %v6335
  %v6337 = vand.u32 %v6336, 4294901760
  %6338 = vmatpush1.msra.mxu0 %v6337
  %6339 = vmatprep.subr.mxu0 0.0
  %v6340 = vand.u32 %v53, 4294901760
  %v6341 = vsub.f32 %v53, %v6340
  %v6342 = vand.u32 %v6341, 4294901760
  %6343 = vmatpush1.msra.mxu0 %v6342
  %6344 = vmatprep.subr.mxu0 0.0
  %v6345 = vand.u32 %v54, 4294901760
  %v6346 = vsub.f32 %v54, %v6345
  %v6347 = vand.u32 %v6346, 4294901760
  %6348 = vmatpush1.msra.mxu0 %v6347
  %6349 = vmatprep.subr.mxu0 0.0
  %6350 = vmatpush1.msra.mxu0 0.0
  %6351 = vmatprep.subr.mxu0 0.0
  %6352 = vmatpush1.msra.mxu0 0.0
  %6353 = vmatprep.subr.mxu0 0.0
  %6354 = vmatpush1.msra.mxu0 0.0
  %6355 = vmatprep.subr.mxu0 0.0
  %6356 = vmatpush1.msra.mxu0 0.0
  %6357 = vmatprep.subr.mxu0 0.0
  %6358 = vmatpush1.msra.mxu0 0.0
  %6359 = vmatprep.subr.mxu0 0.0
  %6360 = vmatpush1.msra.mxu0 0.0
  %6361 = vmatprep.subr.mxu0 0.0
  %6362 = vmatpush1.msra.mxu0 0.0
  %6363 = vmatprep.subr.mxu0 0.0
  %6364 = vmatpush1.msra.mxu0 0.0
  %6365 = vmatprep.subr.mxu0 0.0
  %6366 = vmatpush1.msra.mxu0 0.0
  %6367 = vmatprep.subr.mxu0 0.0
  %6368 = vmatpush1.msra.mxu0 0.0
  %6369 = vmatprep.subr.mxu0 0.0
  %6370 = vmatpush1.msra.mxu0 0.0
  %6371 = vmatprep.subr.mxu0 0.0
  %6372 = vmatpush1.msra.mxu0 0.0
  %6373 = vmatprep.subr.mxu0 0.0
  %6374 = vmatpush1.msra.mxu0 0.0
  %6375 = vmatprep.subr.mxu0 0.0
  %6376 = vmatpush1.msra.mxu0 0.0
  %6377 = vmatprep.subr.mxu0 0.0
  %6378 = vmatpush1.msra.mxu0 0.0
  %6379 = vmatprep.subr.mxu0 0.0
  %6380 = vmatpush1.msra.mxu0 0.0
  %6381 = vmatprep.subr.mxu0 0.0
  %6382 = vmatpush1.msra.mxu0 0.0
  %6383 = vmatprep.subr.mxu0 0.0
  %6384 = vmatpush1.msra.mxu0 0.0
  %6385 = vmatprep.subr.mxu0 0.0
  %6386 = vmatpush1.msra.mxu0 0.0
  %6387 = vmatprep.subr.mxu0 0.0
  %6388 = vmatpush1.msra.mxu0 0.0
  %6389 = vmatprep.subr.mxu0 0.0
  %6390 = vmatpush1.msra.mxu0 0.0
  %6391 = vmatprep.subr.mxu0 0.0
  %6392 = vmatpush1.msra.mxu0 0.0
  %6393 = vmatprep.subr.mxu0 0.0
  %6394 = vmatpush1.msra.mxu0 0.0
  %6395 = vmatprep.subr.mxu0 0.0
  %6396 = vmatpush1.msra.mxu0 0.0
  %6397 = vmatprep.subr.mxu0 0.0
  %6398 = vmatpush1.msra.mxu0 0.0
  %6399 = vmatprep.subr.mxu0 0.0
  %6400 = vmatpush1.msra.mxu0 0.0
  %6401 = vmatprep.mubr.f32.mxu0 0.0
  %v6402 = vand.u32 %v5598, 4294901760
  %6403 = vmatmul.mubr.f32.gmra.mrb[0].mxu0 %v6402
  %v6404 = vpop.f32.mrb[0].mxu0
  %v6405 = vadd.f32 %v6228, %v6404
  %v6406 = vpop.f32.mrb[0].mxu0
  %6407 = vmatprep.mubr.f32.mxu0 0.0
  %v6408 = vand.u32 %v5601, 4294901760
  %6409 = vmatmul.mubr.f32.gmra.mrb[0].mxu0 %v6408
  %v6410 = vpop.f32.mrb[0].mxu0
  %v6411 = vadd.f32 %v6236, %v6410
  %v6412 = vpop.f32.mrb[0].mxu0
  %6413 = vmatprep.mubr.f32.mxu0 0.0
  %v6414 = vand.u32 %v5604, 4294901760
  %6415 = vmatmul.mubr.f32.gmra.mrb[0].mxu0 %v6414
  %v6416 = vpop.f32.mrb[0].mxu0
  %v6417 = vadd.f32 %v6244, %v6416
  %v6418 = vpop.f32.mrb[0].mxu0
  %6419 = vmatprep.mubr.f32.mxu0 0.0
  %v6420 = vand.u32 %v5607, 4294901760
  %6421 = vmatmul.mubr.f32.gmra.mrb[0].mxu0 %v6420
  %v6422 = vpop.f32.mrb[0].mxu0
  %v6423 = vadd.f32 %v6252, %v6422
  %v6424 = vpop.f32.mrb[0].mxu0
  %6425 = vmatprep.mubr.f32.mxu0 0.0
  %v6426 = vand.u32 %v5610, 4294901760
  %6427 = vmatmul.mubr.f32.gmra.mrb[0].mxu0 %v6426
  %v6428 = vpop.f32.mrb[0].mxu0
  %v6429 = vadd.f32 %v6260, %v6428
  %v6430 = vpop.f32.mrb[0].mxu0
  %6431 = vmatprep.mubr.f32.mxu0 0.0
  %v6432 = vand.u32 %v5613, 4294901760
  %6433 = vmatmul.mubr.f32.gmra.mrb[0].mxu0 %v6432
  %v6434 = vpop.f32.mrb[0].mxu0
  %v6435 = vadd.f32 %v6268, %v6434
  %v6436 = vpop.f32.mrb[0].mxu0
  %6437 = vmatprep.mubr.f32.mxu0 0.0
  %v6438 = vand.u32 %v5616, 4294901760
  %6439 = vmatmul.mubr.f32.gmra.mrb[0].mxu0 %v6438
  %v6440 = vpop.f32.mrb[0].mxu0
  %v6441 = vadd.f32 %v6276, %v6440
  %v6442 = vpop.f32.mrb[0].mxu0
  %6443 = vmatprep.mubr.f32.mxu0 0.0
  %v6444 = vand.u32 %v5619, 4294901760
  %6445 = vmatmul.mubr.f32.gmra.mrb[0].mxu0 %v6444
  %v6446 = vpop.f32.mrb[0].mxu0
  %v6447 = vadd.f32 %v6284, %v6446
  %v6448 = vpop.f32.mrb[0].mxu0
  %6449 = vmatprep.mubr.f32.mxu0 0.0
  %v6450 = vand.u32 %v5622, 4294901760
  %6451 = vmatmul.mubr.f32.gmra.mrb[0].mxu0 %v6450
  %v6452 = vpop.f32.mrb[0].mxu0
  %v6453 = vadd.f32 %v6292, %v6452
  %v6454 = vpop.f32.mrb[0].mxu0
  %6455 = vmatprep.mubr.f32.mxu0 0.0
  %v6456 = vand.u32 %v5625, 4294901760
  %6457 = vmatmul.mubr.f32.gmra.mrb[0].mxu0 %v6456
  %v6458 = vpop.f32.mrb[0].mxu0
  %v6459 = vadd.f32 %v6300, %v6458
  %v6460 = vpop.f32.mrb[0].mxu0
  %6461 = vmatprep.mubr.f32.mxu0 0.0
  %v6462 = vand.u32 %v5628, 4294901760
  %6463 = vmatmul.mubr.f32.gmra.mrb[0].mxu0 %v6462
  %v6464 = vpop.f32.mrb[0].mxu0
  %v6465 = vadd.f32 %v6308, %v6464
  %v6466 = vpop.f32.mrb[0].mxu0
  %6467 = vmatprep.mubr.f32.mxu0 0.0
  %v6468 = vand.u32 %v5631, 4294901760
  %6469 = vmatmul.mubr.f32.gmra.mrb[0].mxu0 %v6468
  %v6470 = vpop.f32.mrb[0].mxu0
  %v6471 = vadd.f32 %v6316, %v6470
  %v6472 = vpop.f32.mrb[0].mxu0
  %6473 = vdwg.mxu0
  %6474 = vmatprep.subr.mxu0 0.0
  %v6475 = vand.u32 %v49, 4294901760
  %6476 = vmatpush1.msra.mxu0 %v6475
  %6477 = vmatprep.subr.mxu0 0.0
  %v6478 = vand.u32 %v50, 4294901760
  %6479 = vmatpush1.msra.mxu0 %v6478
  %6480 = vmatprep.subr.mxu0 0.0
  %v6481 = vand.u32 %v51, 4294901760
  %6482 = vmatpush1.msra.mxu0 %v6481
  %6483 = vmatprep.subr.mxu0 0.0
  %v6484 = vand.u32 %v52, 4294901760
  %6485 = vmatpush1.msra.mxu0 %v6484
  %6486 = vmatprep.subr.mxu0 0.0
  %v6487 = vand.u32 %v53, 4294901760
  %6488 = vmatpush1.msra.mxu0 %v6487
  %6489 = vmatprep.subr.mxu0 0.0
  %v6490 = vand.u32 %v54, 4294901760
  %6491 = vmatpush1.msra.mxu0 %v6490
  %6492 = vmatprep.subr.mxu0 0.0
  %6493 = vmatpush1.msra.mxu0 0.0
  %6494 = vmatprep.subr.mxu0 0.0
  %6495 = vmatpush1.msra.mxu0 0.0
  %6496 = vmatprep.subr.mxu0 0.0
  %6497 = vmatpush1.msra.mxu0 0.0
  %6498 = vmatprep.subr.mxu0 0.0
  %6499 = vmatpush1.msra.mxu0 0.0
  %6500 = vmatprep.subr.mxu0 0.0
  %6501 = vmatpush1.msra.mxu0 0.0
  %6502 = vmatprep.subr.mxu0 0.0
  %6503 = vmatpush1.msra.mxu0 0.0
  %6504 = vmatprep.subr.mxu0 0.0
  %6505 = vmatpush1.msra.mxu0 0.0
  %6506 = vmatprep.subr.mxu0 0.0
  %6507 = vmatpush1.msra.mxu0 0.0
  %6508 = vmatprep.subr.mxu0 0.0
  %6509 = vmatpush1.msra.mxu0 0.0
  %6510 = vmatprep.subr.mxu0 0.0
  %6511 = vmatpush1.msra.mxu0 0.0
  %6512 = vmatprep.subr.mxu0 0.0
  %6513 = vmatpush1.msra.mxu0 0.0
  %6514 = vmatprep.subr.mxu0 0.0
  %6515 = vmatpush1.msra.mxu0 0.0
  %6516 = vmatprep.subr.mxu0 0.0
  %6517 = vmatpush1.msra.mxu0 0.0
  %6518 = vmatprep.subr.mxu0 0.0
  %6519 = vmatpush1.msra.mxu0 0.0
  %6520 = vmatprep.subr.mxu0 0.0
  %6521 = vmatpush1.msra.mxu0 0.0
  %6522 = vmatprep.subr.mxu0 0.0
  %6523 = vmatpush1.msra.mxu0 0.0
  %6524 = vmatprep.subr.mxu0 0.0
  %6525 = vmatpush1.msra.mxu0 0.0
  %6526 = vmatprep.subr.mxu0 0.0
  %6527 = vmatpush1.msra.mxu0 0.0
  %6528 = vmatprep.subr.mxu0 0.0
  %6529 = vmatpush1.msra.mxu0 0.0
  %6530 = vmatprep.subr.mxu0 0.0
  %6531 = vmatpush1.msra.mxu0 0.0
  %6532 = vmatprep.subr.mxu0 0.0
  %6533 = vmatpush1.msra.mxu0 0.0
  %6534 = vmatprep.subr.mxu0 0.0
  %6535 = vmatpush1.msra.mxu0 0.0
  %6536 = vmatprep.subr.mxu0 0.0
  %6537 = vmatpush1.msra.mxu0 0.0
  %6538 = vmatprep.subr.mxu0 0.0
  %6539 = vmatpush1.msra.mxu0 0.0
  %6540 = vmatprep.subr.mxu0 0.0
  %6541 = vmatpush1.msra.mxu0 0.0
  %6542 = vmatprep.subr.mxu0 0.0
  %6543 = vmatpush1.msra.mxu0 0.0
  %6544 = vmatprep.mubr.f32.mxu0 0.0
  %v6545 = vand.u32 %v5598, 4294901760
  %6546 = vmatmul.mubr.f32.gmra.mrb[0].mxu0 %v6545
  %v6547 = vpop.f32.mrb[0].mxu0
  %v6548 = vadd.f32 %v6405, %v6547
  %v6549 = vpop.f32.mrb[0].mxu0
  %6550 = vmatprep.mubr.f32.mxu0 0.0
  %v6551 = vand.u32 %v5601, 4294901760
  %6552 = vmatmul.mubr.f32.gmra.mrb[0].mxu0 %v6551
  %v6553 = vpop.f32.mrb[0].mxu0
  %v6554 = vadd.f32 %v6411, %v6553
  %v6555 = vpop.f32.mrb[0].mxu0
  %6556 = vmatprep.mubr.f32.mxu0 0.0
  %v6557 = vand.u32 %v5604, 4294901760
  %6558 = vmatmul.mubr.f32.gmra.mrb[0].mxu0 %v6557
  %v6559 = vpop.f32.mrb[0].mxu0
  %v6560 = vadd.f32 %v6417, %v6559
  %v6561 = vpop.f32.mrb[0].mxu0
  %6562 = vmatprep.mubr.f32.mxu0 0.0
  %v6563 = vand.u32 %v5607, 4294901760
  %6564 = vmatmul.mubr.f32.gmra.mrb[0].mxu0 %v6563
  %v6565 = vpop.f32.mrb[0].mxu0
  %v6566 = vadd.f32 %v6423, %v6565
  %v6567 = vpop.f32.mrb[0].mxu0
  %6568 = vmatprep.mubr.f32.mxu0 0.0
  %v6569 = vand.u32 %v5610, 4294901760
  %6570 = vmatmul.mubr.f32.gmra.mrb[0].mxu0 %v6569
  %v6571 = vpop.f32.mrb[0].mxu0
  %v6572 = vadd.f32 %v6429, %v6571
  %v6573 = vpop.f32.mrb[0].mxu0
  %6574 = vmatprep.mubr.f32.mxu0 0.0
  %v6575 = vand.u32 %v5613, 4294901760
  %6576 = vmatmul.mubr.f32.gmra.mrb[0].mxu0 %v6575
  %v6577 = vpop.f32.mrb[0].mxu0
  %v6578 = vadd.f32 %v6435, %v6577
  %v6579 = vpop.f32.mrb[0].mxu0
  %6580 = vmatprep.mubr.f32.mxu0 0.0
  %v6581 = vand.u32 %v5616, 4294901760
  %6582 = vmatmul.mubr.f32.gmra.mrb[0].mxu0 %v6581
  %v6583 = vpop.f32.mrb[0].mxu0
  %v6584 = vadd.f32 %v6441, %v6583
  %v6585 = vpop.f32.mrb[0].mxu0
  %6586 = vmatprep.mubr.f32.mxu0 0.0
  %v6587 = vand.u32 %v5619, 4294901760
  %6588 = vmatmul.mubr.f32.gmra.mrb[0].mxu0 %v6587
  %v6589 = vpop.f32.mrb[0].mxu0
  %v6590 = vadd.f32 %v6447, %v6589
  %v6591 = vpop.f32.mrb[0].mxu0
  %6592 = vmatprep.mubr.f32.mxu0 0.0
  %v6593 = vand.u32 %v5622, 4294901760
  %6594 = vmatmul.mubr.f32.gmra.mrb[0].mxu0 %v6593
  %v6595 = vpop.f32.mrb[0].mxu0
  %v6596 = vadd.f32 %v6453, %v6595
  %v6597 = vpop.f32.mrb[0].mxu0
  %6598 = vmatprep.mubr.f32.mxu0 0.0
  %v6599 = vand.u32 %v5625, 4294901760
  %6600 = vmatmul.mubr.f32.gmra.mrb[0].mxu0 %v6599
  %v6601 = vpop.f32.mrb[0].mxu0
  %v6602 = vadd.f32 %v6459, %v6601
  %v6603 = vpop.f32.mrb[0].mxu0
  %6604 = vmatprep.mubr.f32.mxu0 0.0
  %v6605 = vand.u32 %v5628, 4294901760
  %6606 = vmatmul.mubr.f32.gmra.mrb[0].mxu0 %v6605
  %v6607 = vpop.f32.mrb[0].mxu0
  %v6608 = vadd.f32 %v6465, %v6607
  %v6609 = vpop.f32.mrb[0].mxu0
  %6610 = vmatprep.mubr.f32.mxu0 0.0
  %v6611 = vand.u32 %v5631, 4294901760
  %6612 = vmatmul.mubr.f32.gmra.mrb[0].mxu0 %v6611
  %v6613 = vpop.f32.mrb[0].mxu0
  %v6614 = vadd.f32 %v6471, %v6613
  %v6615 = vpop.f32.mrb[0].mxu0
  %6616 = vdwg.mxu0
  %v6618 = vsel %vm1883, %v5585, 0
  %v6621 = vsel %vm1883, %v5586, 0
  %v6624 = vsel %vm1883, %v5587, 0
  %v6627 = vsel %vm1883, %v5588, 0
  %v6630 = vsel %vm1883, %v5589, 0
  %v6633 = vsel %vm1883, %v5590, 0
  %v6636 = vsel %vm1883, %v5591, 0
  %v6639 = vsel %vm1883, %v5592, 0
  %v6642 = vsel %vm1883, %v5593, 0
  %v6645 = vsel %vm1883, %v5594, 0
  %v6648 = vsel %vm1883, %v5595, 0
  %v6651 = vsel %vm1883, %v5596, 0
  %6653 = vmatprep.subr.mxu0 0.0
  %v6654 = vand.u32 %v43, 4294901760
  %6655 = vmatpush1.msra.mxu0 %v6654
  %6656 = vmatprep.subr.mxu0 0.0
  %v6657 = vand.u32 %v44, 4294901760
  %6658 = vmatpush1.msra.mxu0 %v6657
  %6659 = vmatprep.subr.mxu0 0.0
  %v6660 = vand.u32 %v45, 4294901760
  %6661 = vmatpush1.msra.mxu0 %v6660
  %6662 = vmatprep.subr.mxu0 0.0
  %v6663 = vand.u32 %v46, 4294901760
  %6664 = vmatpush1.msra.mxu0 %v6663
  %6665 = vmatprep.subr.mxu0 0.0
  %v6666 = vand.u32 %v47, 4294901760
  %6667 = vmatpush1.msra.mxu0 %v6666
  %6668 = vmatprep.subr.mxu0 0.0
  %v6669 = vand.u32 %v48, 4294901760
  %6670 = vmatpush1.msra.mxu0 %v6669
  %6671 = vmatprep.subr.mxu0 0.0
  %6672 = vmatpush1.msra.mxu0 0.0
  %6673 = vmatprep.subr.mxu0 0.0
  %6674 = vmatpush1.msra.mxu0 0.0
  %6675 = vmatprep.subr.mxu0 0.0
  %6676 = vmatpush1.msra.mxu0 0.0
  %6677 = vmatprep.subr.mxu0 0.0
  %6678 = vmatpush1.msra.mxu0 0.0
  %6679 = vmatprep.subr.mxu0 0.0
  %6680 = vmatpush1.msra.mxu0 0.0
  %6681 = vmatprep.subr.mxu0 0.0
  %6682 = vmatpush1.msra.mxu0 0.0
  %6683 = vmatprep.subr.mxu0 0.0
  %6684 = vmatpush1.msra.mxu0 0.0
  %6685 = vmatprep.subr.mxu0 0.0
  %6686 = vmatpush1.msra.mxu0 0.0
  %6687 = vmatprep.subr.mxu0 0.0
  %6688 = vmatpush1.msra.mxu0 0.0
  %6689 = vmatprep.subr.mxu0 0.0
  %6690 = vmatpush1.msra.mxu0 0.0
  %6691 = vmatprep.subr.mxu0 0.0
  %6692 = vmatpush1.msra.mxu0 0.0
  %6693 = vmatprep.subr.mxu0 0.0
  %6694 = vmatpush1.msra.mxu0 0.0
  %6695 = vmatprep.subr.mxu0 0.0
  %6696 = vmatpush1.msra.mxu0 0.0
  %6697 = vmatprep.subr.mxu0 0.0
  %6698 = vmatpush1.msra.mxu0 0.0
  %6699 = vmatprep.subr.mxu0 0.0
  %6700 = vmatpush1.msra.mxu0 0.0
  %6701 = vmatprep.subr.mxu0 0.0
  %6702 = vmatpush1.msra.mxu0 0.0
  %6703 = vmatprep.subr.mxu0 0.0
  %6704 = vmatpush1.msra.mxu0 0.0
  %6705 = vmatprep.subr.mxu0 0.0
  %6706 = vmatpush1.msra.mxu0 0.0
  %6707 = vmatprep.subr.mxu0 0.0
  %6708 = vmatpush1.msra.mxu0 0.0
  %6709 = vmatprep.subr.mxu0 0.0
  %6710 = vmatpush1.msra.mxu0 0.0
  %6711 = vmatprep.subr.mxu0 0.0
  %6712 = vmatpush1.msra.mxu0 0.0
  %6713 = vmatprep.subr.mxu0 0.0
  %6714 = vmatpush1.msra.mxu0 0.0
  %6715 = vmatprep.subr.mxu0 0.0
  %6716 = vmatpush1.msra.mxu0 0.0
  %6717 = vmatprep.subr.mxu0 0.0
  %6718 = vmatpush1.msra.mxu0 0.0
  %6719 = vmatprep.subr.mxu0 0.0
  %6720 = vmatpush1.msra.mxu0 0.0
  %6721 = vmatprep.subr.mxu0 0.0
  %6722 = vmatpush1.msra.mxu0 0.0
  %6723 = vmatprep.mubr.f32.mxu0 0.0
  %v6724 = vand.u32 %v6618, 4294901760
  %v6725 = vsub.f32 %v6618, %v6724
  %v6726 = vand.u32 %v6725, 4294901760
  %v6727 = vsub.f32 %v6725, %v6726
  %v6728 = vand.u32 %v6727, 4294901760
  %6729 = vmatmul.mubr.f32.gmra.mrb[0].mxu0 %v6728
  %v6730 = vpop.f32.mrb[0].mxu0
  %v6731 = vadd.f32 %v6548, %v6730
  %v6732 = vpop.f32.mrb[0].mxu0
  %6733 = vmatprep.mubr.f32.mxu0 0.0
  %v6734 = vand.u32 %v6621, 4294901760
  %v6735 = vsub.f32 %v6621, %v6734
  %v6736 = vand.u32 %v6735, 4294901760
  %v6737 = vsub.f32 %v6735, %v6736
  %v6738 = vand.u32 %v6737, 4294901760
  %6739 = vmatmul.mubr.f32.gmra.mrb[0].mxu0 %v6738
  %v6740 = vpop.f32.mrb[0].mxu0
  %v6741 = vadd.f32 %v6554, %v6740
  %v6742 = vpop.f32.mrb[0].mxu0
  %6743 = vmatprep.mubr.f32.mxu0 0.0
  %v6744 = vand.u32 %v6624, 4294901760
  %v6745 = vsub.f32 %v6624, %v6744
  %v6746 = vand.u32 %v6745, 4294901760
  %v6747 = vsub.f32 %v6745, %v6746
  %v6748 = vand.u32 %v6747, 4294901760
  %6749 = vmatmul.mubr.f32.gmra.mrb[0].mxu0 %v6748
  %v6750 = vpop.f32.mrb[0].mxu0
  %v6751 = vadd.f32 %v6560, %v6750
  %v6752 = vpop.f32.mrb[0].mxu0
  %6753 = vmatprep.mubr.f32.mxu0 0.0
  %v6754 = vand.u32 %v6627, 4294901760
  %v6755 = vsub.f32 %v6627, %v6754
  %v6756 = vand.u32 %v6755, 4294901760
  %v6757 = vsub.f32 %v6755, %v6756
  %v6758 = vand.u32 %v6757, 4294901760
  %6759 = vmatmul.mubr.f32.gmra.mrb[0].mxu0 %v6758
  %v6760 = vpop.f32.mrb[0].mxu0
  %v6761 = vadd.f32 %v6566, %v6760
  %v6762 = vpop.f32.mrb[0].mxu0
  %6763 = vmatprep.mubr.f32.mxu0 0.0
  %v6764 = vand.u32 %v6630, 4294901760
  %v6765 = vsub.f32 %v6630, %v6764
  %v6766 = vand.u32 %v6765, 4294901760
  %v6767 = vsub.f32 %v6765, %v6766
  %v6768 = vand.u32 %v6767, 4294901760
  %6769 = vmatmul.mubr.f32.gmra.mrb[0].mxu0 %v6768
  %v6770 = vpop.f32.mrb[0].mxu0
  %v6771 = vadd.f32 %v6572, %v6770
  %v6772 = vpop.f32.mrb[0].mxu0
  %6773 = vmatprep.mubr.f32.mxu0 0.0
  %v6774 = vand.u32 %v6633, 4294901760
  %v6775 = vsub.f32 %v6633, %v6774
  %v6776 = vand.u32 %v6775, 4294901760
  %v6777 = vsub.f32 %v6775, %v6776
  %v6778 = vand.u32 %v6777, 4294901760
  %6779 = vmatmul.mubr.f32.gmra.mrb[0].mxu0 %v6778
  %v6780 = vpop.f32.mrb[0].mxu0
  %v6781 = vadd.f32 %v6578, %v6780
  %v6782 = vpop.f32.mrb[0].mxu0
  %6783 = vmatprep.mubr.f32.mxu0 0.0
  %v6784 = vand.u32 %v6636, 4294901760
  %v6785 = vsub.f32 %v6636, %v6784
  %v6786 = vand.u32 %v6785, 4294901760
  %v6787 = vsub.f32 %v6785, %v6786
  %v6788 = vand.u32 %v6787, 4294901760
  %6789 = vmatmul.mubr.f32.gmra.mrb[0].mxu0 %v6788
  %v6790 = vpop.f32.mrb[0].mxu0
  %v6791 = vadd.f32 %v6584, %v6790
  %v6792 = vpop.f32.mrb[0].mxu0
  %6793 = vmatprep.mubr.f32.mxu0 0.0
  %v6794 = vand.u32 %v6639, 4294901760
  %v6795 = vsub.f32 %v6639, %v6794
  %v6796 = vand.u32 %v6795, 4294901760
  %v6797 = vsub.f32 %v6795, %v6796
  %v6798 = vand.u32 %v6797, 4294901760
  %6799 = vmatmul.mubr.f32.gmra.mrb[0].mxu0 %v6798
  %v6800 = vpop.f32.mrb[0].mxu0
  %v6801 = vadd.f32 %v6590, %v6800
  %v6802 = vpop.f32.mrb[0].mxu0
  %6803 = vmatprep.mubr.f32.mxu0 0.0
  %v6804 = vand.u32 %v6642, 4294901760
  %v6805 = vsub.f32 %v6642, %v6804
  %v6806 = vand.u32 %v6805, 4294901760
  %v6807 = vsub.f32 %v6805, %v6806
  %v6808 = vand.u32 %v6807, 4294901760
  %6809 = vmatmul.mubr.f32.gmra.mrb[0].mxu0 %v6808
  %v6810 = vpop.f32.mrb[0].mxu0
  %v6811 = vadd.f32 %v6596, %v6810
  %v6812 = vpop.f32.mrb[0].mxu0
  %6813 = vmatprep.mubr.f32.mxu0 0.0
  %v6814 = vand.u32 %v6645, 4294901760
  %v6815 = vsub.f32 %v6645, %v6814
  %v6816 = vand.u32 %v6815, 4294901760
  %v6817 = vsub.f32 %v6815, %v6816
  %v6818 = vand.u32 %v6817, 4294901760
  %6819 = vmatmul.mubr.f32.gmra.mrb[0].mxu0 %v6818
  %v6820 = vpop.f32.mrb[0].mxu0
  %v6821 = vadd.f32 %v6602, %v6820
  %v6822 = vpop.f32.mrb[0].mxu0
  %6823 = vmatprep.mubr.f32.mxu0 0.0
  %v6824 = vand.u32 %v6648, 4294901760
  %v6825 = vsub.f32 %v6648, %v6824
  %v6826 = vand.u32 %v6825, 4294901760
  %v6827 = vsub.f32 %v6825, %v6826
  %v6828 = vand.u32 %v6827, 4294901760
  %6829 = vmatmul.mubr.f32.gmra.mrb[0].mxu0 %v6828
  %v6830 = vpop.f32.mrb[0].mxu0
  %v6831 = vadd.f32 %v6608, %v6830
  %v6832 = vpop.f32.mrb[0].mxu0
  %6833 = vmatprep.mubr.f32.mxu0 0.0
  %v6834 = vand.u32 %v6651, 4294901760
  %v6835 = vsub.f32 %v6651, %v6834
  %v6836 = vand.u32 %v6835, 4294901760
  %v6837 = vsub.f32 %v6835, %v6836
  %v6838 = vand.u32 %v6837, 4294901760
  %6839 = vmatmul.mubr.f32.gmra.mrb[0].mxu0 %v6838
  %v6840 = vpop.f32.mrb[0].mxu0
  %v6841 = vadd.f32 %v6614, %v6840
  %v6842 = vpop.f32.mrb[0].mxu0
  %6843 = vdwg.mxu0
  %6844 = vmatprep.subr.mxu0 0.0
  %v6845 = vand.u32 %v43, 4294901760
  %v6846 = vsub.f32 %v43, %v6845
  %v6847 = vand.u32 %v6846, 4294901760
  %v6848 = vsub.f32 %v6846, %v6847
  %v6849 = vand.u32 %v6848, 4294901760
  %6850 = vmatpush1.msra.mxu0 %v6849
  %6851 = vmatprep.subr.mxu0 0.0
  %v6852 = vand.u32 %v44, 4294901760
  %v6853 = vsub.f32 %v44, %v6852
  %v6854 = vand.u32 %v6853, 4294901760
  %v6855 = vsub.f32 %v6853, %v6854
  %v6856 = vand.u32 %v6855, 4294901760
  %6857 = vmatpush1.msra.mxu0 %v6856
  %6858 = vmatprep.subr.mxu0 0.0
  %v6859 = vand.u32 %v45, 4294901760
  %v6860 = vsub.f32 %v45, %v6859
  %v6861 = vand.u32 %v6860, 4294901760
  %v6862 = vsub.f32 %v6860, %v6861
  %v6863 = vand.u32 %v6862, 4294901760
  %6864 = vmatpush1.msra.mxu0 %v6863
  %6865 = vmatprep.subr.mxu0 0.0
  %v6866 = vand.u32 %v46, 4294901760
  %v6867 = vsub.f32 %v46, %v6866
  %v6868 = vand.u32 %v6867, 4294901760
  %v6869 = vsub.f32 %v6867, %v6868
  %v6870 = vand.u32 %v6869, 4294901760
  %6871 = vmatpush1.msra.mxu0 %v6870
  %6872 = vmatprep.subr.mxu0 0.0
  %v6873 = vand.u32 %v47, 4294901760
  %v6874 = vsub.f32 %v47, %v6873
  %v6875 = vand.u32 %v6874, 4294901760
  %v6876 = vsub.f32 %v6874, %v6875
  %v6877 = vand.u32 %v6876, 4294901760
  %6878 = vmatpush1.msra.mxu0 %v6877
  %6879 = vmatprep.subr.mxu0 0.0
  %v6880 = vand.u32 %v48, 4294901760
  %v6881 = vsub.f32 %v48, %v6880
  %v6882 = vand.u32 %v6881, 4294901760
  %v6883 = vsub.f32 %v6881, %v6882
  %v6884 = vand.u32 %v6883, 4294901760
  %6885 = vmatpush1.msra.mxu0 %v6884
  %6886 = vmatprep.subr.mxu0 0.0
  %6887 = vmatpush1.msra.mxu0 0.0
  %6888 = vmatprep.subr.mxu0 0.0
  %6889 = vmatpush1.msra.mxu0 0.0
  %6890 = vmatprep.subr.mxu0 0.0
  %6891 = vmatpush1.msra.mxu0 0.0
  %6892 = vmatprep.subr.mxu0 0.0
  %6893 = vmatpush1.msra.mxu0 0.0
  %6894 = vmatprep.subr.mxu0 0.0
  %6895 = vmatpush1.msra.mxu0 0.0
  %6896 = vmatprep.subr.mxu0 0.0
  %6897 = vmatpush1.msra.mxu0 0.0
  %6898 = vmatprep.subr.mxu0 0.0
  %6899 = vmatpush1.msra.mxu0 0.0
  %6900 = vmatprep.subr.mxu0 0.0
  %6901 = vmatpush1.msra.mxu0 0.0
  %6902 = vmatprep.subr.mxu0 0.0
  %6903 = vmatpush1.msra.mxu0 0.0
  %6904 = vmatprep.subr.mxu0 0.0
  %6905 = vmatpush1.msra.mxu0 0.0
  %6906 = vmatprep.subr.mxu0 0.0
  %6907 = vmatpush1.msra.mxu0 0.0
  %6908 = vmatprep.subr.mxu0 0.0
  %6909 = vmatpush1.msra.mxu0 0.0
  %6910 = vmatprep.subr.mxu0 0.0
  %6911 = vmatpush1.msra.mxu0 0.0
  %6912 = vmatprep.subr.mxu0 0.0
  %6913 = vmatpush1.msra.mxu0 0.0
  %6914 = vmatprep.subr.mxu0 0.0
  %6915 = vmatpush1.msra.mxu0 0.0
  %6916 = vmatprep.subr.mxu0 0.0
  %6917 = vmatpush1.msra.mxu0 0.0
  %6918 = vmatprep.subr.mxu0 0.0
  %6919 = vmatpush1.msra.mxu0 0.0
  %6920 = vmatprep.subr.mxu0 0.0
  %6921 = vmatpush1.msra.mxu0 0.0
  %6922 = vmatprep.subr.mxu0 0.0
  %6923 = vmatpush1.msra.mxu0 0.0
  %6924 = vmatprep.subr.mxu0 0.0
  %6925 = vmatpush1.msra.mxu0 0.0
  %6926 = vmatprep.subr.mxu0 0.0
  %6927 = vmatpush1.msra.mxu0 0.0
  %6928 = vmatprep.subr.mxu0 0.0
  %6929 = vmatpush1.msra.mxu0 0.0
  %6930 = vmatprep.subr.mxu0 0.0
  %6931 = vmatpush1.msra.mxu0 0.0
  %6932 = vmatprep.subr.mxu0 0.0
  %6933 = vmatpush1.msra.mxu0 0.0
  %6934 = vmatprep.subr.mxu0 0.0
  %6935 = vmatpush1.msra.mxu0 0.0
  %6936 = vmatprep.subr.mxu0 0.0
  %6937 = vmatpush1.msra.mxu0 0.0
  %6938 = vmatprep.mubr.f32.mxu0 0.0
  %v6939 = vand.u32 %v6618, 4294901760
  %6940 = vmatmul.mubr.f32.gmra.mrb[0].mxu0 %v6939
  %v6941 = vpop.f32.mrb[0].mxu0
  %v6942 = vadd.f32 %v6731, %v6941
  %v6943 = vpop.f32.mrb[0].mxu0
  %6944 = vmatprep.mubr.f32.mxu0 0.0
  %v6945 = vand.u32 %v6621, 4294901760
  %6946 = vmatmul.mubr.f32.gmra.mrb[0].mxu0 %v6945
  %v6947 = vpop.f32.mrb[0].mxu0
  %v6948 = vadd.f32 %v6741, %v6947
  %v6949 = vpop.f32.mrb[0].mxu0
  %6950 = vmatprep.mubr.f32.mxu0 0.0
  %v6951 = vand.u32 %v6624, 4294901760
  %6952 = vmatmul.mubr.f32.gmra.mrb[0].mxu0 %v6951
  %v6953 = vpop.f32.mrb[0].mxu0
  %v6954 = vadd.f32 %v6751, %v6953
  %v6955 = vpop.f32.mrb[0].mxu0
  %6956 = vmatprep.mubr.f32.mxu0 0.0
  %v6957 = vand.u32 %v6627, 4294901760
  %6958 = vmatmul.mubr.f32.gmra.mrb[0].mxu0 %v6957
  %v6959 = vpop.f32.mrb[0].mxu0
  %v6960 = vadd.f32 %v6761, %v6959
  %v6961 = vpop.f32.mrb[0].mxu0
  %6962 = vmatprep.mubr.f32.mxu0 0.0
  %v6963 = vand.u32 %v6630, 4294901760
  %6964 = vmatmul.mubr.f32.gmra.mrb[0].mxu0 %v6963
  %v6965 = vpop.f32.mrb[0].mxu0
  %v6966 = vadd.f32 %v6771, %v6965
  %v6967 = vpop.f32.mrb[0].mxu0
  %6968 = vmatprep.mubr.f32.mxu0 0.0
  %v6969 = vand.u32 %v6633, 4294901760
  %6970 = vmatmul.mubr.f32.gmra.mrb[0].mxu0 %v6969
  %v6971 = vpop.f32.mrb[0].mxu0
  %v6972 = vadd.f32 %v6781, %v6971
  %v6973 = vpop.f32.mrb[0].mxu0
  %6974 = vmatprep.mubr.f32.mxu0 0.0
  %v6975 = vand.u32 %v6636, 4294901760
  %6976 = vmatmul.mubr.f32.gmra.mrb[0].mxu0 %v6975
  %v6977 = vpop.f32.mrb[0].mxu0
  %v6978 = vadd.f32 %v6791, %v6977
  %v6979 = vpop.f32.mrb[0].mxu0
  %6980 = vmatprep.mubr.f32.mxu0 0.0
  %v6981 = vand.u32 %v6639, 4294901760
  %6982 = vmatmul.mubr.f32.gmra.mrb[0].mxu0 %v6981
  %v6983 = vpop.f32.mrb[0].mxu0
  %v6984 = vadd.f32 %v6801, %v6983
  %v6985 = vpop.f32.mrb[0].mxu0
  %6986 = vmatprep.mubr.f32.mxu0 0.0
  %v6987 = vand.u32 %v6642, 4294901760
  %6988 = vmatmul.mubr.f32.gmra.mrb[0].mxu0 %v6987
  %v6989 = vpop.f32.mrb[0].mxu0
  %v6990 = vadd.f32 %v6811, %v6989
  %v6991 = vpop.f32.mrb[0].mxu0
  %6992 = vmatprep.mubr.f32.mxu0 0.0
  %v6993 = vand.u32 %v6645, 4294901760
  %6994 = vmatmul.mubr.f32.gmra.mrb[0].mxu0 %v6993
  %v6995 = vpop.f32.mrb[0].mxu0
  %v6996 = vadd.f32 %v6821, %v6995
  %v6997 = vpop.f32.mrb[0].mxu0
  %6998 = vmatprep.mubr.f32.mxu0 0.0
  %v6999 = vand.u32 %v6648, 4294901760
  %7000 = vmatmul.mubr.f32.gmra.mrb[0].mxu0 %v6999
  %v7001 = vpop.f32.mrb[0].mxu0
  %v7002 = vadd.f32 %v6831, %v7001
  %v7003 = vpop.f32.mrb[0].mxu0
  %7004 = vmatprep.mubr.f32.mxu0 0.0
  %v7005 = vand.u32 %v6651, 4294901760
  %7006 = vmatmul.mubr.f32.gmra.mrb[0].mxu0 %v7005
  %v7007 = vpop.f32.mrb[0].mxu0
  %v7008 = vadd.f32 %v6841, %v7007
  %v7009 = vpop.f32.mrb[0].mxu0
  %7010 = vdwg.mxu0
  %7011 = vmatprep.subr.mxu0 0.0
  %v7012 = vand.u32 %v43, 4294901760
  %v7013 = vsub.f32 %v43, %v7012
  %7014 = vmatpush1.msra.mxu0 %v7013
  %7015 = vmatprep.subr.mxu0 0.0
  %v7016 = vand.u32 %v44, 4294901760
  %v7017 = vsub.f32 %v44, %v7016
  %7018 = vmatpush1.msra.mxu0 %v7017
  %7019 = vmatprep.subr.mxu0 0.0
  %v7020 = vand.u32 %v45, 4294901760
  %v7021 = vsub.f32 %v45, %v7020
  %7022 = vmatpush1.msra.mxu0 %v7021
  %7023 = vmatprep.subr.mxu0 0.0
  %v7024 = vand.u32 %v46, 4294901760
  %v7025 = vsub.f32 %v46, %v7024
  %7026 = vmatpush1.msra.mxu0 %v7025
  %7027 = vmatprep.subr.mxu0 0.0
  %v7028 = vand.u32 %v47, 4294901760
  %v7029 = vsub.f32 %v47, %v7028
  %7030 = vmatpush1.msra.mxu0 %v7029
  %7031 = vmatprep.subr.mxu0 0.0
  %v7032 = vand.u32 %v48, 4294901760
  %v7033 = vsub.f32 %v48, %v7032
  %7034 = vmatpush1.msra.mxu0 %v7033
  %7035 = vmatprep.subr.mxu0 0.0
  %7036 = vmatpush1.msra.mxu0 0.0
  %7037 = vmatprep.subr.mxu0 0.0
  %7038 = vmatpush1.msra.mxu0 0.0
  %7039 = vmatprep.subr.mxu0 0.0
  %7040 = vmatpush1.msra.mxu0 0.0
  %7041 = vmatprep.subr.mxu0 0.0
  %7042 = vmatpush1.msra.mxu0 0.0
  %7043 = vmatprep.subr.mxu0 0.0
  %7044 = vmatpush1.msra.mxu0 0.0
  %7045 = vmatprep.subr.mxu0 0.0
  %7046 = vmatpush1.msra.mxu0 0.0
  %7047 = vmatprep.subr.mxu0 0.0
  %7048 = vmatpush1.msra.mxu0 0.0
  %7049 = vmatprep.subr.mxu0 0.0
  %7050 = vmatpush1.msra.mxu0 0.0
  %7051 = vmatprep.subr.mxu0 0.0
  %7052 = vmatpush1.msra.mxu0 0.0
  %7053 = vmatprep.subr.mxu0 0.0
  %7054 = vmatpush1.msra.mxu0 0.0
  %7055 = vmatprep.subr.mxu0 0.0
  %7056 = vmatpush1.msra.mxu0 0.0
  %7057 = vmatprep.subr.mxu0 0.0
  %7058 = vmatpush1.msra.mxu0 0.0
  %7059 = vmatprep.subr.mxu0 0.0
  %7060 = vmatpush1.msra.mxu0 0.0
  %7061 = vmatprep.subr.mxu0 0.0
  %7062 = vmatpush1.msra.mxu0 0.0
  %7063 = vmatprep.subr.mxu0 0.0
  %7064 = vmatpush1.msra.mxu0 0.0
  %7065 = vmatprep.subr.mxu0 0.0
  %7066 = vmatpush1.msra.mxu0 0.0
  %7067 = vmatprep.subr.mxu0 0.0
  %7068 = vmatpush1.msra.mxu0 0.0
  %7069 = vmatprep.subr.mxu0 0.0
  %7070 = vmatpush1.msra.mxu0 0.0
  %7071 = vmatprep.subr.mxu0 0.0
  %7072 = vmatpush1.msra.mxu0 0.0
  %7073 = vmatprep.subr.mxu0 0.0
  %7074 = vmatpush1.msra.mxu0 0.0
  %7075 = vmatprep.subr.mxu0 0.0
  %7076 = vmatpush1.msra.mxu0 0.0
  %7077 = vmatprep.subr.mxu0 0.0
  %7078 = vmatpush1.msra.mxu0 0.0
  %7079 = vmatprep.subr.mxu0 0.0
  %7080 = vmatpush1.msra.mxu0 0.0
  %7081 = vmatprep.subr.mxu0 0.0
  %7082 = vmatpush1.msra.mxu0 0.0
  %7083 = vmatprep.subr.mxu0 0.0
  %7084 = vmatpush1.msra.mxu0 0.0
  %7085 = vmatprep.subr.mxu0 0.0
  %7086 = vmatpush1.msra.mxu0 0.0
  %7087 = vmatprep.mubr.f32.mxu0 0.0
  %v7088 = vand.u32 %v6618, 4294901760
  %v7089 = vsub.f32 %v6618, %v7088
  %7090 = vmatmul.mubr.f32.gmra.mrb[0].mxu0 %v7089
  %v7091 = vpop.f32.mrb[0].mxu0
  %v7092 = vadd.f32 %v6942, %v7091
  %v7093 = vpop.f32.mrb[0].mxu0
  %7094 = vmatprep.mubr.f32.mxu0 0.0
  %v7095 = vand.u32 %v6621, 4294901760
  %v7096 = vsub.f32 %v6621, %v7095
  %7097 = vmatmul.mubr.f32.gmra.mrb[0].mxu0 %v7096
  %v7098 = vpop.f32.mrb[0].mxu0
  %v7099 = vadd.f32 %v6948, %v7098
  %v7100 = vpop.f32.mrb[0].mxu0
  %7101 = vmatprep.mubr.f32.mxu0 0.0
  %v7102 = vand.u32 %v6624, 4294901760
  %v7103 = vsub.f32 %v6624, %v7102
  %7104 = vmatmul.mubr.f32.gmra.mrb[0].mxu0 %v7103
  %v7105 = vpop.f32.mrb[0].mxu0
  %v7106 = vadd.f32 %v6954, %v7105
  %v7107 = vpop.f32.mrb[0].mxu0
  %7108 = vmatprep.mubr.f32.mxu0 0.0
  %v7109 = vand.u32 %v6627, 4294901760
  %v7110 = vsub.f32 %v6627, %v7109
  %7111 = vmatmul.mubr.f32.gmra.mrb[0].mxu0 %v7110
  %v7112 = vpop.f32.mrb[0].mxu0
  %v7113 = vadd.f32 %v6960, %v7112
  %v7114 = vpop.f32.mrb[0].mxu0
  %7115 = vmatprep.mubr.f32.mxu0 0.0
  %v7116 = vand.u32 %v6630, 4294901760
  %v7117 = vsub.f32 %v6630, %v7116
  %7118 = vmatmul.mubr.f32.gmra.mrb[0].mxu0 %v7117
  %v7119 = vpop.f32.mrb[0].mxu0
  %v7120 = vadd.f32 %v6966, %v7119
  %v7121 = vpop.f32.mrb[0].mxu0
  %7122 = vmatprep.mubr.f32.mxu0 0.0
  %v7123 = vand.u32 %v6633, 4294901760
  %v7124 = vsub.f32 %v6633, %v7123
  %7125 = vmatmul.mubr.f32.gmra.mrb[0].mxu0 %v7124
  %v7126 = vpop.f32.mrb[0].mxu0
  %v7127 = vadd.f32 %v6972, %v7126
  %v7128 = vpop.f32.mrb[0].mxu0
  %7129 = vmatprep.mubr.f32.mxu0 0.0
  %v7130 = vand.u32 %v6636, 4294901760
  %v7131 = vsub.f32 %v6636, %v7130
  %7132 = vmatmul.mubr.f32.gmra.mrb[0].mxu0 %v7131
  %v7133 = vpop.f32.mrb[0].mxu0
  %v7134 = vadd.f32 %v6978, %v7133
  %v7135 = vpop.f32.mrb[0].mxu0
  %7136 = vmatprep.mubr.f32.mxu0 0.0
  %v7137 = vand.u32 %v6639, 4294901760
  %v7138 = vsub.f32 %v6639, %v7137
  %7139 = vmatmul.mubr.f32.gmra.mrb[0].mxu0 %v7138
  %v7140 = vpop.f32.mrb[0].mxu0
  %v7141 = vadd.f32 %v6984, %v7140
  %v7142 = vpop.f32.mrb[0].mxu0
  %7143 = vmatprep.mubr.f32.mxu0 0.0
  %v7144 = vand.u32 %v6642, 4294901760
  %v7145 = vsub.f32 %v6642, %v7144
  %7146 = vmatmul.mubr.f32.gmra.mrb[0].mxu0 %v7145
  %v7147 = vpop.f32.mrb[0].mxu0
  %v7148 = vadd.f32 %v6990, %v7147
  %v7149 = vpop.f32.mrb[0].mxu0
  %7150 = vmatprep.mubr.f32.mxu0 0.0
  %v7151 = vand.u32 %v6645, 4294901760
  %v7152 = vsub.f32 %v6645, %v7151
  %7153 = vmatmul.mubr.f32.gmra.mrb[0].mxu0 %v7152
  %v7154 = vpop.f32.mrb[0].mxu0
  %v7155 = vadd.f32 %v6996, %v7154
  %v7156 = vpop.f32.mrb[0].mxu0
  %7157 = vmatprep.mubr.f32.mxu0 0.0
  %v7158 = vand.u32 %v6648, 4294901760
  %v7159 = vsub.f32 %v6648, %v7158
  %7160 = vmatmul.mubr.f32.gmra.mrb[0].mxu0 %v7159
  %v7161 = vpop.f32.mrb[0].mxu0
  %v7162 = vadd.f32 %v7002, %v7161
  %v7163 = vpop.f32.mrb[0].mxu0
  %7164 = vmatprep.mubr.f32.mxu0 0.0
  %v7165 = vand.u32 %v6651, 4294901760
  %v7166 = vsub.f32 %v6651, %v7165
  %7167 = vmatmul.mubr.f32.gmra.mrb[0].mxu0 %v7166
  %v7168 = vpop.f32.mrb[0].mxu0
  %v7169 = vadd.f32 %v7008, %v7168
  %v7170 = vpop.f32.mrb[0].mxu0
  %7171 = vdwg.mxu0
  %7172 = vmatprep.subr.mxu0 0.0
  %v7173 = vand.u32 %v43, 4294901760
  %7174 = vmatpush1.msra.mxu0 %v7173
  %7175 = vmatprep.subr.mxu0 0.0
  %v7176 = vand.u32 %v44, 4294901760
  %7177 = vmatpush1.msra.mxu0 %v7176
  %7178 = vmatprep.subr.mxu0 0.0
  %v7179 = vand.u32 %v45, 4294901760
  %7180 = vmatpush1.msra.mxu0 %v7179
  %7181 = vmatprep.subr.mxu0 0.0
  %v7182 = vand.u32 %v46, 4294901760
  %7183 = vmatpush1.msra.mxu0 %v7182
  %7184 = vmatprep.subr.mxu0 0.0
  %v7185 = vand.u32 %v47, 4294901760
  %7186 = vmatpush1.msra.mxu0 %v7185
  %7187 = vmatprep.subr.mxu0 0.0
  %v7188 = vand.u32 %v48, 4294901760
  %7189 = vmatpush1.msra.mxu0 %v7188
  %7190 = vmatprep.subr.mxu0 0.0
  %7191 = vmatpush1.msra.mxu0 0.0
  %7192 = vmatprep.subr.mxu0 0.0
  %7193 = vmatpush1.msra.mxu0 0.0
  %7194 = vmatprep.subr.mxu0 0.0
  %7195 = vmatpush1.msra.mxu0 0.0
  %7196 = vmatprep.subr.mxu0 0.0
  %7197 = vmatpush1.msra.mxu0 0.0
  %7198 = vmatprep.subr.mxu0 0.0
  %7199 = vmatpush1.msra.mxu0 0.0
  %7200 = vmatprep.subr.mxu0 0.0
  %7201 = vmatpush1.msra.mxu0 0.0
  %7202 = vmatprep.subr.mxu0 0.0
  %7203 = vmatpush1.msra.mxu0 0.0
  %7204 = vmatprep.subr.mxu0 0.0
  %7205 = vmatpush1.msra.mxu0 0.0
  %7206 = vmatprep.subr.mxu0 0.0
  %7207 = vmatpush1.msra.mxu0 0.0
  %7208 = vmatprep.subr.mxu0 0.0
  %7209 = vmatpush1.msra.mxu0 0.0
  %7210 = vmatprep.subr.mxu0 0.0
  %7211 = vmatpush1.msra.mxu0 0.0
  %7212 = vmatprep.subr.mxu0 0.0
  %7213 = vmatpush1.msra.mxu0 0.0
  %7214 = vmatprep.subr.mxu0 0.0
  %7215 = vmatpush1.msra.mxu0 0.0
  %7216 = vmatprep.subr.mxu0 0.0
  %7217 = vmatpush1.msra.mxu0 0.0
  %7218 = vmatprep.subr.mxu0 0.0
  %7219 = vmatpush1.msra.mxu0 0.0
  %7220 = vmatprep.subr.mxu0 0.0
  %7221 = vmatpush1.msra.mxu0 0.0
  %7222 = vmatprep.subr.mxu0 0.0
  %7223 = vmatpush1.msra.mxu0 0.0
  %7224 = vmatprep.subr.mxu0 0.0
  %7225 = vmatpush1.msra.mxu0 0.0
  %7226 = vmatprep.subr.mxu0 0.0
  %7227 = vmatpush1.msra.mxu0 0.0
  %7228 = vmatprep.subr.mxu0 0.0
  %7229 = vmatpush1.msra.mxu0 0.0
  %7230 = vmatprep.subr.mxu0 0.0
  %7231 = vmatpush1.msra.mxu0 0.0
  %7232 = vmatprep.subr.mxu0 0.0
  %7233 = vmatpush1.msra.mxu0 0.0
  %7234 = vmatprep.subr.mxu0 0.0
  %7235 = vmatpush1.msra.mxu0 0.0
  %7236 = vmatprep.subr.mxu0 0.0
  %7237 = vmatpush1.msra.mxu0 0.0
  %7238 = vmatprep.subr.mxu0 0.0
  %7239 = vmatpush1.msra.mxu0 0.0
  %7240 = vmatprep.subr.mxu0 0.0
  %7241 = vmatpush1.msra.mxu0 0.0
  %7242 = vmatprep.mubr.f32.mxu0 0.0
  %v7243 = vand.u32 %v6618, 4294901760
  %v7244 = vsub.f32 %v6618, %v7243
  %v7245 = vand.u32 %v7244, 4294901760
  %7246 = vmatmul.mubr.f32.gmra.mrb[0].mxu0 %v7245
  %v7247 = vpop.f32.mrb[0].mxu0
  %v7248 = vadd.f32 %v7092, %v7247
  %v7249 = vpop.f32.mrb[0].mxu0
  %7250 = vmatprep.mubr.f32.mxu0 0.0
  %v7251 = vand.u32 %v6621, 4294901760
  %v7252 = vsub.f32 %v6621, %v7251
  %v7253 = vand.u32 %v7252, 4294901760
  %7254 = vmatmul.mubr.f32.gmra.mrb[0].mxu0 %v7253
  %v7255 = vpop.f32.mrb[0].mxu0
  %v7256 = vadd.f32 %v7099, %v7255
  %v7257 = vpop.f32.mrb[0].mxu0
  %7258 = vmatprep.mubr.f32.mxu0 0.0
  %v7259 = vand.u32 %v6624, 4294901760
  %v7260 = vsub.f32 %v6624, %v7259
  %v7261 = vand.u32 %v7260, 4294901760
  %7262 = vmatmul.mubr.f32.gmra.mrb[0].mxu0 %v7261
  %v7263 = vpop.f32.mrb[0].mxu0
  %v7264 = vadd.f32 %v7106, %v7263
  %v7265 = vpop.f32.mrb[0].mxu0
  %7266 = vmatprep.mubr.f32.mxu0 0.0
  %v7267 = vand.u32 %v6627, 4294901760
  %v7268 = vsub.f32 %v6627, %v7267
  %v7269 = vand.u32 %v7268, 4294901760
  %7270 = vmatmul.mubr.f32.gmra.mrb[0].mxu0 %v7269
  %v7271 = vpop.f32.mrb[0].mxu0
  %v7272 = vadd.f32 %v7113, %v7271
  %v7273 = vpop.f32.mrb[0].mxu0
  %7274 = vmatprep.mubr.f32.mxu0 0.0
  %v7275 = vand.u32 %v6630, 4294901760
  %v7276 = vsub.f32 %v6630, %v7275
  %v7277 = vand.u32 %v7276, 4294901760
  %7278 = vmatmul.mubr.f32.gmra.mrb[0].mxu0 %v7277
  %v7279 = vpop.f32.mrb[0].mxu0
  %v7280 = vadd.f32 %v7120, %v7279
  %v7281 = vpop.f32.mrb[0].mxu0
  %7282 = vmatprep.mubr.f32.mxu0 0.0
  %v7283 = vand.u32 %v6633, 4294901760
  %v7284 = vsub.f32 %v6633, %v7283
  %v7285 = vand.u32 %v7284, 4294901760
  %7286 = vmatmul.mubr.f32.gmra.mrb[0].mxu0 %v7285
  %v7287 = vpop.f32.mrb[0].mxu0
  %v7288 = vadd.f32 %v7127, %v7287
  %v7289 = vpop.f32.mrb[0].mxu0
  %7290 = vmatprep.mubr.f32.mxu0 0.0
  %v7291 = vand.u32 %v6636, 4294901760
  %v7292 = vsub.f32 %v6636, %v7291
  %v7293 = vand.u32 %v7292, 4294901760
  %7294 = vmatmul.mubr.f32.gmra.mrb[0].mxu0 %v7293
  %v7295 = vpop.f32.mrb[0].mxu0
  %v7296 = vadd.f32 %v7134, %v7295
  %v7297 = vpop.f32.mrb[0].mxu0
  %7298 = vmatprep.mubr.f32.mxu0 0.0
  %v7299 = vand.u32 %v6639, 4294901760
  %v7300 = vsub.f32 %v6639, %v7299
  %v7301 = vand.u32 %v7300, 4294901760
  %7302 = vmatmul.mubr.f32.gmra.mrb[0].mxu0 %v7301
  %v7303 = vpop.f32.mrb[0].mxu0
  %v7304 = vadd.f32 %v7141, %v7303
  %v7305 = vpop.f32.mrb[0].mxu0
  %7306 = vmatprep.mubr.f32.mxu0 0.0
  %v7307 = vand.u32 %v6642, 4294901760
  %v7308 = vsub.f32 %v6642, %v7307
  %v7309 = vand.u32 %v7308, 4294901760
  %7310 = vmatmul.mubr.f32.gmra.mrb[0].mxu0 %v7309
  %v7311 = vpop.f32.mrb[0].mxu0
  %v7312 = vadd.f32 %v7148, %v7311
  %v7313 = vpop.f32.mrb[0].mxu0
  %7314 = vmatprep.mubr.f32.mxu0 0.0
  %v7315 = vand.u32 %v6645, 4294901760
  %v7316 = vsub.f32 %v6645, %v7315
  %v7317 = vand.u32 %v7316, 4294901760
  %7318 = vmatmul.mubr.f32.gmra.mrb[0].mxu0 %v7317
  %v7319 = vpop.f32.mrb[0].mxu0
  %v7320 = vadd.f32 %v7155, %v7319
  %v7321 = vpop.f32.mrb[0].mxu0
  %7322 = vmatprep.mubr.f32.mxu0 0.0
  %v7323 = vand.u32 %v6648, 4294901760
  %v7324 = vsub.f32 %v6648, %v7323
  %v7325 = vand.u32 %v7324, 4294901760
  %7326 = vmatmul.mubr.f32.gmra.mrb[0].mxu0 %v7325
  %v7327 = vpop.f32.mrb[0].mxu0
  %v7328 = vadd.f32 %v7162, %v7327
  %v7329 = vpop.f32.mrb[0].mxu0
  %7330 = vmatprep.mubr.f32.mxu0 0.0
  %v7331 = vand.u32 %v6651, 4294901760
  %v7332 = vsub.f32 %v6651, %v7331
  %v7333 = vand.u32 %v7332, 4294901760
  %7334 = vmatmul.mubr.f32.gmra.mrb[0].mxu0 %v7333
  %v7335 = vpop.f32.mrb[0].mxu0
  %v7336 = vadd.f32 %v7169, %v7335
  %v7337 = vpop.f32.mrb[0].mxu0
  %7338 = vdwg.mxu0
  %7339 = vmatprep.subr.mxu0 0.0
  %v7340 = vand.u32 %v43, 4294901760
  %v7341 = vsub.f32 %v43, %v7340
  %v7342 = vand.u32 %v7341, 4294901760
  %7343 = vmatpush1.msra.mxu0 %v7342
  %7344 = vmatprep.subr.mxu0 0.0
  %v7345 = vand.u32 %v44, 4294901760
  %v7346 = vsub.f32 %v44, %v7345
  %v7347 = vand.u32 %v7346, 4294901760
  %7348 = vmatpush1.msra.mxu0 %v7347
  %7349 = vmatprep.subr.mxu0 0.0
  %v7350 = vand.u32 %v45, 4294901760
  %v7351 = vsub.f32 %v45, %v7350
  %v7352 = vand.u32 %v7351, 4294901760
  %7353 = vmatpush1.msra.mxu0 %v7352
  %7354 = vmatprep.subr.mxu0 0.0
  %v7355 = vand.u32 %v46, 4294901760
  %v7356 = vsub.f32 %v46, %v7355
  %v7357 = vand.u32 %v7356, 4294901760
  %7358 = vmatpush1.msra.mxu0 %v7357
  %7359 = vmatprep.subr.mxu0 0.0
  %v7360 = vand.u32 %v47, 4294901760
  %v7361 = vsub.f32 %v47, %v7360
  %v7362 = vand.u32 %v7361, 4294901760
  %7363 = vmatpush1.msra.mxu0 %v7362
  %7364 = vmatprep.subr.mxu0 0.0
  %v7365 = vand.u32 %v48, 4294901760
  %v7366 = vsub.f32 %v48, %v7365
  %v7367 = vand.u32 %v7366, 4294901760
  %7368 = vmatpush1.msra.mxu0 %v7367
  %7369 = vmatprep.subr.mxu0 0.0
  %7370 = vmatpush1.msra.mxu0 0.0
  %7371 = vmatprep.subr.mxu0 0.0
  %7372 = vmatpush1.msra.mxu0 0.0
  %7373 = vmatprep.subr.mxu0 0.0
  %7374 = vmatpush1.msra.mxu0 0.0
  %7375 = vmatprep.subr.mxu0 0.0
  %7376 = vmatpush1.msra.mxu0 0.0
  %7377 = vmatprep.subr.mxu0 0.0
  %7378 = vmatpush1.msra.mxu0 0.0
  %7379 = vmatprep.subr.mxu0 0.0
  %7380 = vmatpush1.msra.mxu0 0.0
  %7381 = vmatprep.subr.mxu0 0.0
  %7382 = vmatpush1.msra.mxu0 0.0
  %7383 = vmatprep.subr.mxu0 0.0
  %7384 = vmatpush1.msra.mxu0 0.0
  %7385 = vmatprep.subr.mxu0 0.0
  %7386 = vmatpush1.msra.mxu0 0.0
  %7387 = vmatprep.subr.mxu0 0.0
  %7388 = vmatpush1.msra.mxu0 0.0
  %7389 = vmatprep.subr.mxu0 0.0
  %7390 = vmatpush1.msra.mxu0 0.0
  %7391 = vmatprep.subr.mxu0 0.0
  %7392 = vmatpush1.msra.mxu0 0.0
  %7393 = vmatprep.subr.mxu0 0.0
  %7394 = vmatpush1.msra.mxu0 0.0
  %7395 = vmatprep.subr.mxu0 0.0
  %7396 = vmatpush1.msra.mxu0 0.0
  %7397 = vmatprep.subr.mxu0 0.0
  %7398 = vmatpush1.msra.mxu0 0.0
  %7399 = vmatprep.subr.mxu0 0.0
  %7400 = vmatpush1.msra.mxu0 0.0
  %7401 = vmatprep.subr.mxu0 0.0
  %7402 = vmatpush1.msra.mxu0 0.0
  %7403 = vmatprep.subr.mxu0 0.0
  %7404 = vmatpush1.msra.mxu0 0.0
  %7405 = vmatprep.subr.mxu0 0.0
  %7406 = vmatpush1.msra.mxu0 0.0
  %7407 = vmatprep.subr.mxu0 0.0
  %7408 = vmatpush1.msra.mxu0 0.0
  %7409 = vmatprep.subr.mxu0 0.0
  %7410 = vmatpush1.msra.mxu0 0.0
  %7411 = vmatprep.subr.mxu0 0.0
  %7412 = vmatpush1.msra.mxu0 0.0
  %7413 = vmatprep.subr.mxu0 0.0
  %7414 = vmatpush1.msra.mxu0 0.0
  %7415 = vmatprep.subr.mxu0 0.0
  %7416 = vmatpush1.msra.mxu0 0.0
  %7417 = vmatprep.subr.mxu0 0.0
  %7418 = vmatpush1.msra.mxu0 0.0
  %7419 = vmatprep.subr.mxu0 0.0
  %7420 = vmatpush1.msra.mxu0 0.0
  %7421 = vmatprep.mubr.f32.mxu0 0.0
  %v7422 = vand.u32 %v6618, 4294901760
  %7423 = vmatmul.mubr.f32.gmra.mrb[0].mxu0 %v7422
  %v7424 = vpop.f32.mrb[0].mxu0
  %v7425 = vadd.f32 %v7248, %v7424
  %v7426 = vpop.f32.mrb[0].mxu0
  %7427 = vmatprep.mubr.f32.mxu0 0.0
  %v7428 = vand.u32 %v6621, 4294901760
  %7429 = vmatmul.mubr.f32.gmra.mrb[0].mxu0 %v7428
  %v7430 = vpop.f32.mrb[0].mxu0
  %v7431 = vadd.f32 %v7256, %v7430
  %v7432 = vpop.f32.mrb[0].mxu0
  %7433 = vmatprep.mubr.f32.mxu0 0.0
  %v7434 = vand.u32 %v6624, 4294901760
  %7435 = vmatmul.mubr.f32.gmra.mrb[0].mxu0 %v7434
  %v7436 = vpop.f32.mrb[0].mxu0
  %v7437 = vadd.f32 %v7264, %v7436
  %v7438 = vpop.f32.mrb[0].mxu0
  %7439 = vmatprep.mubr.f32.mxu0 0.0
  %v7440 = vand.u32 %v6627, 4294901760
  %7441 = vmatmul.mubr.f32.gmra.mrb[0].mxu0 %v7440
  %v7442 = vpop.f32.mrb[0].mxu0
  %v7443 = vadd.f32 %v7272, %v7442
  %v7444 = vpop.f32.mrb[0].mxu0
  %7445 = vmatprep.mubr.f32.mxu0 0.0
  %v7446 = vand.u32 %v6630, 4294901760
  %7447 = vmatmul.mubr.f32.gmra.mrb[0].mxu0 %v7446
  %v7448 = vpop.f32.mrb[0].mxu0
  %v7449 = vadd.f32 %v7280, %v7448
  %v7450 = vpop.f32.mrb[0].mxu0
  %7451 = vmatprep.mubr.f32.mxu0 0.0
  %v7452 = vand.u32 %v6633, 4294901760
  %7453 = vmatmul.mubr.f32.gmra.mrb[0].mxu0 %v7452
  %v7454 = vpop.f32.mrb[0].mxu0
  %v7455 = vadd.f32 %v7288, %v7454
  %v7456 = vpop.f32.mrb[0].mxu0
  %7457 = vmatprep.mubr.f32.mxu0 0.0
  %v7458 = vand.u32 %v6636, 4294901760
  %7459 = vmatmul.mubr.f32.gmra.mrb[0].mxu0 %v7458
  %v7460 = vpop.f32.mrb[0].mxu0
  %v7461 = vadd.f32 %v7296, %v7460
  %v7462 = vpop.f32.mrb[0].mxu0
  %7463 = vmatprep.mubr.f32.mxu0 0.0
  %v7464 = vand.u32 %v6639, 4294901760
  %7465 = vmatmul.mubr.f32.gmra.mrb[0].mxu0 %v7464
  %v7466 = vpop.f32.mrb[0].mxu0
  %v7467 = vadd.f32 %v7304, %v7466
  %v7468 = vpop.f32.mrb[0].mxu0
  %7469 = vmatprep.mubr.f32.mxu0 0.0
  %v7470 = vand.u32 %v6642, 4294901760
  %7471 = vmatmul.mubr.f32.gmra.mrb[0].mxu0 %v7470
  %v7472 = vpop.f32.mrb[0].mxu0
  %v7473 = vadd.f32 %v7312, %v7472
  %v7474 = vpop.f32.mrb[0].mxu0
  %7475 = vmatprep.mubr.f32.mxu0 0.0
  %v7476 = vand.u32 %v6645, 4294901760
  %7477 = vmatmul.mubr.f32.gmra.mrb[0].mxu0 %v7476
  %v7478 = vpop.f32.mrb[0].mxu0
  %v7479 = vadd.f32 %v7320, %v7478
  %v7480 = vpop.f32.mrb[0].mxu0
  %7481 = vmatprep.mubr.f32.mxu0 0.0
  %v7482 = vand.u32 %v6648, 4294901760
  %7483 = vmatmul.mubr.f32.gmra.mrb[0].mxu0 %v7482
  %v7484 = vpop.f32.mrb[0].mxu0
  %v7485 = vadd.f32 %v7328, %v7484
  %v7486 = vpop.f32.mrb[0].mxu0
  %7487 = vmatprep.mubr.f32.mxu0 0.0
  %v7488 = vand.u32 %v6651, 4294901760
  %7489 = vmatmul.mubr.f32.gmra.mrb[0].mxu0 %v7488
  %v7490 = vpop.f32.mrb[0].mxu0
  %v7491 = vadd.f32 %v7336, %v7490
  %v7492 = vpop.f32.mrb[0].mxu0
  %7493 = vdwg.mxu0
  %7494 = vmatprep.subr.mxu0 0.0
  %v7495 = vand.u32 %v43, 4294901760
  %7496 = vmatpush1.msra.mxu0 %v7495
  %7497 = vmatprep.subr.mxu0 0.0
  %v7498 = vand.u32 %v44, 4294901760
  %7499 = vmatpush1.msra.mxu0 %v7498
  %7500 = vmatprep.subr.mxu0 0.0
  %v7501 = vand.u32 %v45, 4294901760
  %7502 = vmatpush1.msra.mxu0 %v7501
  %7503 = vmatprep.subr.mxu0 0.0
  %v7504 = vand.u32 %v46, 4294901760
  %7505 = vmatpush1.msra.mxu0 %v7504
  %7506 = vmatprep.subr.mxu0 0.0
  %v7507 = vand.u32 %v47, 4294901760
  %7508 = vmatpush1.msra.mxu0 %v7507
  %7509 = vmatprep.subr.mxu0 0.0
  %v7510 = vand.u32 %v48, 4294901760
  %7511 = vmatpush1.msra.mxu0 %v7510
  %7512 = vmatprep.subr.mxu0 0.0
  %7513 = vmatpush1.msra.mxu0 0.0
  %7514 = vmatprep.subr.mxu0 0.0
  %7515 = vmatpush1.msra.mxu0 0.0
  %7516 = vmatprep.subr.mxu0 0.0
  %7517 = vmatpush1.msra.mxu0 0.0
  %7518 = vmatprep.subr.mxu0 0.0
  %7519 = vmatpush1.msra.mxu0 0.0
  %7520 = vmatprep.subr.mxu0 0.0
  %7521 = vmatpush1.msra.mxu0 0.0
  %7522 = vmatprep.subr.mxu0 0.0
  %7523 = vmatpush1.msra.mxu0 0.0
  %7524 = vmatprep.subr.mxu0 0.0
  %7525 = vmatpush1.msra.mxu0 0.0
  %7526 = vmatprep.subr.mxu0 0.0
  %7527 = vmatpush1.msra.mxu0 0.0
  %7528 = vmatprep.subr.mxu0 0.0
  %7529 = vmatpush1.msra.mxu0 0.0
  %7530 = vmatprep.subr.mxu0 0.0
  %7531 = vmatpush1.msra.mxu0 0.0
  %7532 = vmatprep.subr.mxu0 0.0
  %7533 = vmatpush1.msra.mxu0 0.0
  %7534 = vmatprep.subr.mxu0 0.0
  %7535 = vmatpush1.msra.mxu0 0.0
  %7536 = vmatprep.subr.mxu0 0.0
  %7537 = vmatpush1.msra.mxu0 0.0
  %7538 = vmatprep.subr.mxu0 0.0
  %7539 = vmatpush1.msra.mxu0 0.0
  %7540 = vmatprep.subr.mxu0 0.0
  %7541 = vmatpush1.msra.mxu0 0.0
  %7542 = vmatprep.subr.mxu0 0.0
  %7543 = vmatpush1.msra.mxu0 0.0
  %7544 = vmatprep.subr.mxu0 0.0
  %7545 = vmatpush1.msra.mxu0 0.0
  %7546 = vmatprep.subr.mxu0 0.0
  %7547 = vmatpush1.msra.mxu0 0.0
  %7548 = vmatprep.subr.mxu0 0.0
  %7549 = vmatpush1.msra.mxu0 0.0
  %7550 = vmatprep.subr.mxu0 0.0
  %7551 = vmatpush1.msra.mxu0 0.0
  %7552 = vmatprep.subr.mxu0 0.0
  %7553 = vmatpush1.msra.mxu0 0.0
  %7554 = vmatprep.subr.mxu0 0.0
  %7555 = vmatpush1.msra.mxu0 0.0
  %7556 = vmatprep.subr.mxu0 0.0
  %7557 = vmatpush1.msra.mxu0 0.0
  %7558 = vmatprep.subr.mxu0 0.0
  %7559 = vmatpush1.msra.mxu0 0.0
  %7560 = vmatprep.subr.mxu0 0.0
  %7561 = vmatpush1.msra.mxu0 0.0
  %7562 = vmatprep.subr.mxu0 0.0
  %7563 = vmatpush1.msra.mxu0 0.0
  %7564 = vmatprep.mubr.f32.mxu0 0.0
  %v7565 = vand.u32 %v6618, 4294901760
  %7566 = vmatmul.mubr.f32.gmra.mrb[0].mxu0 %v7565
  %v7567 = vpop.f32.mrb[0].mxu0
  %v7568 = vadd.f32 %v7425, %v7567
  %v7569 = vpop.f32.mrb[0].mxu0
  %7570 = vmatprep.mubr.f32.mxu0 0.0
  %v7571 = vand.u32 %v6621, 4294901760
  %7572 = vmatmul.mubr.f32.gmra.mrb[0].mxu0 %v7571
  %v7573 = vpop.f32.mrb[0].mxu0
  %v7574 = vadd.f32 %v7431, %v7573
  %v7575 = vpop.f32.mrb[0].mxu0
  %7576 = vmatprep.mubr.f32.mxu0 0.0
  %v7577 = vand.u32 %v6624, 4294901760
  %7578 = vmatmul.mubr.f32.gmra.mrb[0].mxu0 %v7577
  %v7579 = vpop.f32.mrb[0].mxu0
  %v7580 = vadd.f32 %v7437, %v7579
  %v7581 = vpop.f32.mrb[0].mxu0
  %7582 = vmatprep.mubr.f32.mxu0 0.0
  %v7583 = vand.u32 %v6627, 4294901760
  %7584 = vmatmul.mubr.f32.gmra.mrb[0].mxu0 %v7583
  %v7585 = vpop.f32.mrb[0].mxu0
  %v7586 = vadd.f32 %v7443, %v7585
  %v7587 = vpop.f32.mrb[0].mxu0
  %7588 = vmatprep.mubr.f32.mxu0 0.0
  %v7589 = vand.u32 %v6630, 4294901760
  %7590 = vmatmul.mubr.f32.gmra.mrb[0].mxu0 %v7589
  %v7591 = vpop.f32.mrb[0].mxu0
  %v7592 = vadd.f32 %v7449, %v7591
  %v7593 = vpop.f32.mrb[0].mxu0
  %7594 = vmatprep.mubr.f32.mxu0 0.0
  %v7595 = vand.u32 %v6633, 4294901760
  %7596 = vmatmul.mubr.f32.gmra.mrb[0].mxu0 %v7595
  %v7597 = vpop.f32.mrb[0].mxu0
  %v7598 = vadd.f32 %v7455, %v7597
  %v7599 = vpop.f32.mrb[0].mxu0
  %7600 = vmatprep.mubr.f32.mxu0 0.0
  %v7601 = vand.u32 %v6636, 4294901760
  %7602 = vmatmul.mubr.f32.gmra.mrb[0].mxu0 %v7601
  %v7603 = vpop.f32.mrb[0].mxu0
  %v7604 = vadd.f32 %v7461, %v7603
  %v7605 = vpop.f32.mrb[0].mxu0
  %7606 = vmatprep.mubr.f32.mxu0 0.0
  %v7607 = vand.u32 %v6639, 4294901760
  %7608 = vmatmul.mubr.f32.gmra.mrb[0].mxu0 %v7607
  %v7609 = vpop.f32.mrb[0].mxu0
  %v7610 = vadd.f32 %v7467, %v7609
  %v7611 = vpop.f32.mrb[0].mxu0
  %7612 = vmatprep.mubr.f32.mxu0 0.0
  %v7613 = vand.u32 %v6642, 4294901760
  %7614 = vmatmul.mubr.f32.gmra.mrb[0].mxu0 %v7613
  %v7615 = vpop.f32.mrb[0].mxu0
  %v7616 = vadd.f32 %v7473, %v7615
  %v7617 = vpop.f32.mrb[0].mxu0
  %7618 = vmatprep.mubr.f32.mxu0 0.0
  %v7619 = vand.u32 %v6645, 4294901760
  %7620 = vmatmul.mubr.f32.gmra.mrb[0].mxu0 %v7619
  %v7621 = vpop.f32.mrb[0].mxu0
  %v7622 = vadd.f32 %v7479, %v7621
  %v7623 = vpop.f32.mrb[0].mxu0
  %7624 = vmatprep.mubr.f32.mxu0 0.0
  %v7625 = vand.u32 %v6648, 4294901760
  %7626 = vmatmul.mubr.f32.gmra.mrb[0].mxu0 %v7625
  %v7627 = vpop.f32.mrb[0].mxu0
  %v7628 = vadd.f32 %v7485, %v7627
  %v7629 = vpop.f32.mrb[0].mxu0
  %7630 = vmatprep.mubr.f32.mxu0 0.0
  %v7631 = vand.u32 %v6651, 4294901760
  %7632 = vmatmul.mubr.f32.gmra.mrb[0].mxu0 %v7631
  %v7633 = vpop.f32.mrb[0].mxu0
  %v7634 = vadd.f32 %v7491, %v7633
  %v7635 = vpop.f32.mrb[0].mxu0
  %7636 = vdwg.mxu0
  %v7637 = vadd.f32 %v7568, %v5516
  %v7638 = vadd.f32 %v7574, %v5522
  %v7639 = vadd.f32 %v7580, %v5528
  %v7640 = vadd.f32 %v7586, %v5534
  %v7641 = vadd.f32 %v7592, %v5540
  %v7642 = vadd.f32 %v7598, %v5546
  %v7643 = vadd.f32 %v7604, %v5552
  %v7644 = vadd.f32 %v7610, %v5558
  %v7645 = vadd.f32 %v7616, %v5564
  %v7646 = vadd.f32 %v7622, %v5570
  %v7647 = vadd.f32 %v7628, %v5576
  %v7648 = vadd.f32 %v7634, %v5582
  %v7649 = vtanh.pop %v7637
  %v7650 = vtanh.pop %v7638
  %v7651 = vtanh.pop %v7639
  %v7652 = vtanh.pop %v7640
  %v7653 = vtanh.pop %v7641
  %v7654 = vtanh.pop %v7642
  %v7655 = vtanh.pop %v7643
  %v7656 = vtanh.pop %v7644
  %v7657 = vtanh.pop %v7645
  %v7658 = vtanh.pop %v7646
  %v7659 = vtanh.pop %v7647
  %v7660 = vtanh.pop %v7648
  %v7661 = vlaneseq
  %v7662 = vshrl.u32 %v7661, 7
  %v7663 = vsub.s32 0, %v7662
  %v7664 = vrot.slane %v56, %v7663
  %v7665 = vmul.f32 %v7649, %v7664
  %v7666 = vmul.f32 %v7650, %v7664
  %v7667 = vmul.f32 %v7651, %v7664
  %v7668 = vmul.f32 %v7652, %v7664
  %v7669 = vmul.f32 %v7653, %v7664
  %v7670 = vmul.f32 %v7654, %v7664
  %v7671 = vmul.f32 %v7655, %v7664
  %v7672 = vmul.f32 %v7656, %v7664
  %v7673 = vmul.f32 %v7657, %v7664
  %v7674 = vmul.f32 %v7658, %v7664
  %v7675 = vmul.f32 %v7659, %v7664
  %v7676 = vmul.f32 %v7660, %v7664
  %v7677 = vsel %vm2856, %v7665, 0.0
  %7678 = vadd.xlane.f32.xlu0 %v7677
  %v7679 = vpop.xlane.xlu0 %7678
  %v7680 = vsel %vm2856, %v7666, 0.0
  %7681 = vadd.xlane.f32.xlu0 %v7680
  %v7682 = vpop.xlane.xlu0 %7681
  %v7683 = vsel %vm2856, %v7667, 0.0
  %7684 = vadd.xlane.f32.xlu0 %v7683
  %v7685 = vpop.xlane.xlu0 %7684
  %v7686 = vsel %vm2856, %v7668, 0.0
  %7687 = vadd.xlane.f32.xlu0 %v7686
  %v7688 = vpop.xlane.xlu0 %7687
  %v7689 = vsel %vm2856, %v7669, 0.0
  %7690 = vadd.xlane.f32.xlu0 %v7689
  %v7691 = vpop.xlane.xlu0 %7690
  %v7692 = vsel %vm2856, %v7670, 0.0
  %7693 = vadd.xlane.f32.xlu0 %v7692
  %v7694 = vpop.xlane.xlu0 %7693
  %v7695 = vsel %vm2856, %v7671, 0.0
  %7696 = vadd.xlane.f32.xlu0 %v7695
  %v7697 = vpop.xlane.xlu0 %7696
  %v7698 = vsel %vm2856, %v7672, 0.0
  %7699 = vadd.xlane.f32.xlu0 %v7698
  %v7700 = vpop.xlane.xlu0 %7699
  %v7701 = vsel %vm2856, %v7673, 0.0
  %7702 = vadd.xlane.f32.xlu0 %v7701
  %v7703 = vpop.xlane.xlu0 %7702
  %v7704 = vsel %vm2856, %v7674, 0.0
  %7705 = vadd.xlane.f32.xlu0 %v7704
  %v7706 = vpop.xlane.xlu0 %7705
  %v7707 = vsel %vm2856, %v7675, 0.0
  %7708 = vadd.xlane.f32.xlu0 %v7707
  %v7709 = vpop.xlane.xlu0 %7708
  %v7710 = vsel %vm2856, %v7676, 0.0
  %7711 = vadd.xlane.f32.xlu0 %v7710
  %v7712 = vpop.xlane.xlu0 %7711
  %v7713 = vmul.f32 %v7679, 1.442695
  %v7714 = vpow.pop %v7713
  %v7715 = vmul.f32 %v7682, 1.442695
  %v7716 = vpow.pop %v7715
  %v7717 = vmul.f32 %v7685, 1.442695
  %v7718 = vpow.pop %v7717
  %v7719 = vmul.f32 %v7688, 1.442695
  %v7720 = vpow.pop %v7719
  %v7721 = vmul.f32 %v7691, 1.442695
  %v7722 = vpow.pop %v7721
  %v7723 = vmul.f32 %v7694, 1.442695
  %v7724 = vpow.pop %v7723
  %v7725 = vmul.f32 %v7697, 1.442695
  %v7726 = vpow.pop %v7725
  %v7727 = vmul.f32 %v7700, 1.442695
  %v7728 = vpow.pop %v7727
  %v7729 = vmul.f32 %v7703, 1.442695
  %v7730 = vpow.pop %v7729
  %v7731 = vmul.f32 %v7706, 1.442695
  %v7732 = vpow.pop %v7731
  %v7733 = vmul.f32 %v7709, 1.442695
  %v7734 = vpow.pop %v7733
  %v7735 = vmul.f32 %v7712, 1.442695
  %v7736 = vpow.pop %v7735
  %v7737 = vmul.u32 %v58, 6
  %v7738 = vmul.u32 %v59, 6
  %vm7739 = vcmp.ge.s32.totalorder %v81, %v7737
  %vm7740 = vcmp.ge.s32.totalorder %v81, %v7738
  %v7741 = vadd.s32 %v7737, 6
  %v7742 = vadd.s32 %v7738, 6
  %vm7743 = vcmp.lt.s32.totalorder %v81, %v7741
  %vm7744 = vcmp.lt.s32.totalorder %v81, %v7742
  %vm7745 = vmand %vm7739, %vm7743
  %vm7746 = vmand %vm7740, %vm7744
  %v7747 = vsel %vm7745, 1.0, 0.0
  %v7748 = vsel %vm7746, 1.0, 0.0
  %v7749 = vmul.f32 %v7714, %v25
  %v7750 = vmul.f32 %v7716, %v26
  %v7751 = vmul.f32 %v7718, %v27
  %v7752 = vmul.f32 %v7720, %v28
  %v7753 = vmul.f32 %v7722, %v29
  %v7754 = vmul.f32 %v7724, %v30
  %v7755 = vmul.f32 %v7726, %v31
  %v7756 = vmul.f32 %v7728, %v32
  %v7757 = vmul.f32 %v7730, %v33
  %v7758 = vmul.f32 %v7732, %v34
  %v7759 = vmul.f32 %v7734, %v35
  %v7760 = vmul.f32 %v7736, %v36
  %vm7761 = vcmask 785408
  %v7763 = vsel %vm7761, %v7747, 0
  %v7766 = vsel %vm7761, %v7748, 0
  %7768 = vmatprep.subr.mxu0 0.0
  %v7769 = vand.u32 %v7749, 4294901760
  %7770 = vmatpush1.msra.mxu0 %v7769
  %7771 = vmatprep.subr.mxu0 0.0
  %v7772 = vand.u32 %v7750, 4294901760
  %7773 = vmatpush1.msra.mxu0 %v7772
  %7774 = vmatprep.subr.mxu0 0.0
  %v7775 = vand.u32 %v7751, 4294901760
  %7776 = vmatpush1.msra.mxu0 %v7775
  %7777 = vmatprep.subr.mxu0 0.0
  %v7778 = vand.u32 %v7752, 4294901760
  %7779 = vmatpush1.msra.mxu0 %v7778
  %7780 = vmatprep.subr.mxu0 0.0
  %v7781 = vand.u32 %v7753, 4294901760
  %7782 = vmatpush1.msra.mxu0 %v7781
  %7783 = vmatprep.subr.mxu0 0.0
  %v7784 = vand.u32 %v7754, 4294901760
  %7785 = vmatpush1.msra.mxu0 %v7784
  %7786 = vmatprep.subr.mxu0 0.0
  %v7787 = vand.u32 %v7755, 4294901760
  %7788 = vmatpush1.msra.mxu0 %v7787
  %7789 = vmatprep.subr.mxu0 0.0
  %v7790 = vand.u32 %v7756, 4294901760
  %7791 = vmatpush1.msra.mxu0 %v7790
  %7792 = vmatprep.subr.mxu0 0.0
  %v7793 = vand.u32 %v7757, 4294901760
  %7794 = vmatpush1.msra.mxu0 %v7793
  %7795 = vmatprep.subr.mxu0 0.0
  %v7796 = vand.u32 %v7758, 4294901760
  %7797 = vmatpush1.msra.mxu0 %v7796
  %7798 = vmatprep.subr.mxu0 0.0
  %v7799 = vand.u32 %v7759, 4294901760
  %7800 = vmatpush1.msra.mxu0 %v7799
  %7801 = vmatprep.subr.mxu0 0.0
  %v7802 = vand.u32 %v7760, 4294901760
  %7803 = vmatpush1.msra.mxu0 %v7802
  %7804 = vmatprep.subr.mxu0 0.0
  %7805 = vmatpush1.msra.mxu0 0.0
  %7806 = vmatprep.subr.mxu0 0.0
  %7807 = vmatpush1.msra.mxu0 0.0
  %7808 = vmatprep.subr.mxu0 0.0
  %7809 = vmatpush1.msra.mxu0 0.0
  %7810 = vmatprep.subr.mxu0 0.0
  %7811 = vmatpush1.msra.mxu0 0.0
  %7812 = vmatprep.subr.mxu0 0.0
  %7813 = vmatpush1.msra.mxu0 0.0
  %7814 = vmatprep.subr.mxu0 0.0
  %7815 = vmatpush1.msra.mxu0 0.0
  %7816 = vmatprep.subr.mxu0 0.0
  %7817 = vmatpush1.msra.mxu0 0.0
  %7818 = vmatprep.subr.mxu0 0.0
  %7819 = vmatpush1.msra.mxu0 0.0
  %7820 = vmatprep.subr.mxu0 0.0
  %7821 = vmatpush1.msra.mxu0 0.0
  %7822 = vmatprep.subr.mxu0 0.0
  %7823 = vmatpush1.msra.mxu0 0.0
  %7824 = vmatprep.subr.mxu0 0.0
  %7825 = vmatpush1.msra.mxu0 0.0
  %7826 = vmatprep.subr.mxu0 0.0
  %7827 = vmatpush1.msra.mxu0 0.0
  %7828 = vmatprep.subr.mxu0 0.0
  %7829 = vmatpush1.msra.mxu0 0.0
  %7830 = vmatprep.subr.mxu0 0.0
  %7831 = vmatpush1.msra.mxu0 0.0
  %7832 = vmatprep.subr.mxu0 0.0
  %7833 = vmatpush1.msra.mxu0 0.0
  %7834 = vmatprep.subr.mxu0 0.0
  %7835 = vmatpush1.msra.mxu0 0.0
  %7836 = vmatprep.subr.mxu0 0.0
  %7837 = vmatpush1.msra.mxu0 0.0
  %7838 = vmatprep.subr.mxu0 0.0
  %7839 = vmatpush1.msra.mxu0 0.0
  %7840 = vmatprep.subr.mxu0 0.0
  %7841 = vmatpush1.msra.mxu0 0.0
  %7842 = vmatprep.subr.mxu0 0.0
  %7843 = vmatpush1.msra.mxu0 0.0
  %7844 = vmatprep.mubr.f32.mxu0 0.0
  %v7845 = vand.u32 %v7763, 4294901760
  %v7846 = vsub.f32 %v7763, %v7845
  %v7847 = vand.u32 %v7846, 4294901760
  %v7848 = vsub.f32 %v7846, %v7847
  %v7849 = vand.u32 %v7848, 4294901760
  %7850 = vmatmul.mubr.f32.gmra.mrb[0].mxu0 %v7849
  %v7851 = vpop.f32.mrb[0].mxu0
  %v7852 = vadd.f32 0.0, %v7851
  %v7853 = vpop.f32.mrb[0].mxu0
  %7854 = vmatprep.mubr.f32.mxu0 0.0
  %v7855 = vand.u32 %v7766, 4294901760
  %v7856 = vsub.f32 %v7766, %v7855
  %v7857 = vand.u32 %v7856, 4294901760
  %v7858 = vsub.f32 %v7856, %v7857
  %v7859 = vand.u32 %v7858, 4294901760
  %7860 = vmatmul.mubr.f32.gmra.mrb[0].mxu0 %v7859
  %v7861 = vpop.f32.mrb[0].mxu0
  %v7862 = vadd.f32 0.0, %v7861
  %v7863 = vpop.f32.mrb[0].mxu0
  %7864 = vdwg.mxu0
  %7865 = vmatprep.subr.mxu0 0.0
  %v7866 = vand.u32 %v7749, 4294901760
  %v7867 = vsub.f32 %v7749, %v7866
  %v7868 = vand.u32 %v7867, 4294901760
  %v7869 = vsub.f32 %v7867, %v7868
  %v7870 = vand.u32 %v7869, 4294901760
  %7871 = vmatpush1.msra.mxu0 %v7870
  %7872 = vmatprep.subr.mxu0 0.0
  %v7873 = vand.u32 %v7750, 4294901760
  %v7874 = vsub.f32 %v7750, %v7873
  %v7875 = vand.u32 %v7874, 4294901760
  %v7876 = vsub.f32 %v7874, %v7875
  %v7877 = vand.u32 %v7876, 4294901760
  %7878 = vmatpush1.msra.mxu0 %v7877
  %7879 = vmatprep.subr.mxu0 0.0
  %v7880 = vand.u32 %v7751, 4294901760
  %v7881 = vsub.f32 %v7751, %v7880
  %v7882 = vand.u32 %v7881, 4294901760
  %v7883 = vsub.f32 %v7881, %v7882
  %v7884 = vand.u32 %v7883, 4294901760
  %7885 = vmatpush1.msra.mxu0 %v7884
  %7886 = vmatprep.subr.mxu0 0.0
  %v7887 = vand.u32 %v7752, 4294901760
  %v7888 = vsub.f32 %v7752, %v7887
  %v7889 = vand.u32 %v7888, 4294901760
  %v7890 = vsub.f32 %v7888, %v7889
  %v7891 = vand.u32 %v7890, 4294901760
  %7892 = vmatpush1.msra.mxu0 %v7891
  %7893 = vmatprep.subr.mxu0 0.0
  %v7894 = vand.u32 %v7753, 4294901760
  %v7895 = vsub.f32 %v7753, %v7894
  %v7896 = vand.u32 %v7895, 4294901760
  %v7897 = vsub.f32 %v7895, %v7896
  %v7898 = vand.u32 %v7897, 4294901760
  %7899 = vmatpush1.msra.mxu0 %v7898
  %7900 = vmatprep.subr.mxu0 0.0
  %v7901 = vand.u32 %v7754, 4294901760
  %v7902 = vsub.f32 %v7754, %v7901
  %v7903 = vand.u32 %v7902, 4294901760
  %v7904 = vsub.f32 %v7902, %v7903
  %v7905 = vand.u32 %v7904, 4294901760
  %7906 = vmatpush1.msra.mxu0 %v7905
  %7907 = vmatprep.subr.mxu0 0.0
  %v7908 = vand.u32 %v7755, 4294901760
  %v7909 = vsub.f32 %v7755, %v7908
  %v7910 = vand.u32 %v7909, 4294901760
  %v7911 = vsub.f32 %v7909, %v7910
  %v7912 = vand.u32 %v7911, 4294901760
  %7913 = vmatpush1.msra.mxu0 %v7912
  %7914 = vmatprep.subr.mxu0 0.0
  %v7915 = vand.u32 %v7756, 4294901760
  %v7916 = vsub.f32 %v7756, %v7915
  %v7917 = vand.u32 %v7916, 4294901760
  %v7918 = vsub.f32 %v7916, %v7917
  %v7919 = vand.u32 %v7918, 4294901760
  %7920 = vmatpush1.msra.mxu0 %v7919
  %7921 = vmatprep.subr.mxu0 0.0
  %v7922 = vand.u32 %v7757, 4294901760
  %v7923 = vsub.f32 %v7757, %v7922
  %v7924 = vand.u32 %v7923, 4294901760
  %v7925 = vsub.f32 %v7923, %v7924
  %v7926 = vand.u32 %v7925, 4294901760
  %7927 = vmatpush1.msra.mxu0 %v7926
  %7928 = vmatprep.subr.mxu0 0.0
  %v7929 = vand.u32 %v7758, 4294901760
  %v7930 = vsub.f32 %v7758, %v7929
  %v7931 = vand.u32 %v7930, 4294901760
  %v7932 = vsub.f32 %v7930, %v7931
  %v7933 = vand.u32 %v7932, 4294901760
  %7934 = vmatpush1.msra.mxu0 %v7933
  %7935 = vmatprep.subr.mxu0 0.0
  %v7936 = vand.u32 %v7759, 4294901760
  %v7937 = vsub.f32 %v7759, %v7936
  %v7938 = vand.u32 %v7937, 4294901760
  %v7939 = vsub.f32 %v7937, %v7938
  %v7940 = vand.u32 %v7939, 4294901760
  %7941 = vmatpush1.msra.mxu0 %v7940
  %7942 = vmatprep.subr.mxu0 0.0
  %v7943 = vand.u32 %v7760, 4294901760
  %v7944 = vsub.f32 %v7760, %v7943
  %v7945 = vand.u32 %v7944, 4294901760
  %v7946 = vsub.f32 %v7944, %v7945
  %v7947 = vand.u32 %v7946, 4294901760
  %7948 = vmatpush1.msra.mxu0 %v7947
  %7949 = vmatprep.subr.mxu0 0.0
  %7950 = vmatpush1.msra.mxu0 0.0
  %7951 = vmatprep.subr.mxu0 0.0
  %7952 = vmatpush1.msra.mxu0 0.0
  %7953 = vmatprep.subr.mxu0 0.0
  %7954 = vmatpush1.msra.mxu0 0.0
  %7955 = vmatprep.subr.mxu0 0.0
  %7956 = vmatpush1.msra.mxu0 0.0
  %7957 = vmatprep.subr.mxu0 0.0
  %7958 = vmatpush1.msra.mxu0 0.0
  %7959 = vmatprep.subr.mxu0 0.0
  %7960 = vmatpush1.msra.mxu0 0.0
  %7961 = vmatprep.subr.mxu0 0.0
  %7962 = vmatpush1.msra.mxu0 0.0
  %7963 = vmatprep.subr.mxu0 0.0
  %7964 = vmatpush1.msra.mxu0 0.0
  %7965 = vmatprep.subr.mxu0 0.0
  %7966 = vmatpush1.msra.mxu0 0.0
  %7967 = vmatprep.subr.mxu0 0.0
  %7968 = vmatpush1.msra.mxu0 0.0
  %7969 = vmatprep.subr.mxu0 0.0
  %7970 = vmatpush1.msra.mxu0 0.0
  %7971 = vmatprep.subr.mxu0 0.0
  %7972 = vmatpush1.msra.mxu0 0.0
  %7973 = vmatprep.subr.mxu0 0.0
  %7974 = vmatpush1.msra.mxu0 0.0
  %7975 = vmatprep.subr.mxu0 0.0
  %7976 = vmatpush1.msra.mxu0 0.0
  %7977 = vmatprep.subr.mxu0 0.0
  %7978 = vmatpush1.msra.mxu0 0.0
  %7979 = vmatprep.subr.mxu0 0.0
  %7980 = vmatpush1.msra.mxu0 0.0
  %7981 = vmatprep.subr.mxu0 0.0
  %7982 = vmatpush1.msra.mxu0 0.0
  %7983 = vmatprep.subr.mxu0 0.0
  %7984 = vmatpush1.msra.mxu0 0.0
  %7985 = vmatprep.subr.mxu0 0.0
  %7986 = vmatpush1.msra.mxu0 0.0
  %7987 = vmatprep.subr.mxu0 0.0
  %7988 = vmatpush1.msra.mxu0 0.0
  %7989 = vmatprep.mubr.f32.mxu0 0.0
  %v7990 = vand.u32 %v7763, 4294901760
  %7991 = vmatmul.mubr.f32.gmra.mrb[0].mxu0 %v7990
  %v7992 = vpop.f32.mrb[0].mxu0
  %v7993 = vadd.f32 %v7852, %v7992
  %v7994 = vpop.f32.mrb[0].mxu0
  %7995 = vmatprep.mubr.f32.mxu0 0.0
  %v7996 = vand.u32 %v7766, 4294901760
  %7997 = vmatmul.mubr.f32.gmra.mrb[0].mxu0 %v7996
  %v7998 = vpop.f32.mrb[0].mxu0
  %v7999 = vadd.f32 %v7862, %v7998
  %v8000 = vpop.f32.mrb[0].mxu0
  %8001 = vdwg.mxu0
  %8002 = vmatprep.subr.mxu0 0.0
  %v8003 = vand.u32 %v7749, 4294901760
  %v8004 = vsub.f32 %v7749, %v8003
  %8005 = vmatpush1.msra.mxu0 %v8004
  %8006 = vmatprep.subr.mxu0 0.0
  %v8007 = vand.u32 %v7750, 4294901760
  %v8008 = vsub.f32 %v7750, %v8007
  %8009 = vmatpush1.msra.mxu0 %v8008
  %8010 = vmatprep.subr.mxu0 0.0
  %v8011 = vand.u32 %v7751, 4294901760
  %v8012 = vsub.f32 %v7751, %v8011
  %8013 = vmatpush1.msra.mxu0 %v8012
  %8014 = vmatprep.subr.mxu0 0.0
  %v8015 = vand.u32 %v7752, 4294901760
  %v8016 = vsub.f32 %v7752, %v8015
  %8017 = vmatpush1.msra.mxu0 %v8016
  %8018 = vmatprep.subr.mxu0 0.0
  %v8019 = vand.u32 %v7753, 4294901760
  %v8020 = vsub.f32 %v7753, %v8019
  %8021 = vmatpush1.msra.mxu0 %v8020
  %8022 = vmatprep.subr.mxu0 0.0
  %v8023 = vand.u32 %v7754, 4294901760
  %v8024 = vsub.f32 %v7754, %v8023
  %8025 = vmatpush1.msra.mxu0 %v8024
  %8026 = vmatprep.subr.mxu0 0.0
  %v8027 = vand.u32 %v7755, 4294901760
  %v8028 = vsub.f32 %v7755, %v8027
  %8029 = vmatpush1.msra.mxu0 %v8028
  %8030 = vmatprep.subr.mxu0 0.0
  %v8031 = vand.u32 %v7756, 4294901760
  %v8032 = vsub.f32 %v7756, %v8031
  %8033 = vmatpush1.msra.mxu0 %v8032
  %8034 = vmatprep.subr.mxu0 0.0
  %v8035 = vand.u32 %v7757, 4294901760
  %v8036 = vsub.f32 %v7757, %v8035
  %8037 = vmatpush1.msra.mxu0 %v8036
  %8038 = vmatprep.subr.mxu0 0.0
  %v8039 = vand.u32 %v7758, 4294901760
  %v8040 = vsub.f32 %v7758, %v8039
  %8041 = vmatpush1.msra.mxu0 %v8040
  %8042 = vmatprep.subr.mxu0 0.0
  %v8043 = vand.u32 %v7759, 4294901760
  %v8044 = vsub.f32 %v7759, %v8043
  %8045 = vmatpush1.msra.mxu0 %v8044
  %8046 = vmatprep.subr.mxu0 0.0
  %v8047 = vand.u32 %v7760, 4294901760
  %v8048 = vsub.f32 %v7760, %v8047
  %8049 = vmatpush1.msra.mxu0 %v8048
  %8050 = vmatprep.subr.mxu0 0.0
  %8051 = vmatpush1.msra.mxu0 0.0
  %8052 = vmatprep.subr.mxu0 0.0
  %8053 = vmatpush1.msra.mxu0 0.0
  %8054 = vmatprep.subr.mxu0 0.0
  %8055 = vmatpush1.msra.mxu0 0.0
  %8056 = vmatprep.subr.mxu0 0.0
  %8057 = vmatpush1.msra.mxu0 0.0
  %8058 = vmatprep.subr.mxu0 0.0
  %8059 = vmatpush1.msra.mxu0 0.0
  %8060 = vmatprep.subr.mxu0 0.0
  %8061 = vmatpush1.msra.mxu0 0.0
  %8062 = vmatprep.subr.mxu0 0.0
  %8063 = vmatpush1.msra.mxu0 0.0
  %8064 = vmatprep.subr.mxu0 0.0
  %8065 = vmatpush1.msra.mxu0 0.0
  %8066 = vmatprep.subr.mxu0 0.0
  %8067 = vmatpush1.msra.mxu0 0.0
  %8068 = vmatprep.subr.mxu0 0.0
  %8069 = vmatpush1.msra.mxu0 0.0
  %8070 = vmatprep.subr.mxu0 0.0
  %8071 = vmatpush1.msra.mxu0 0.0
  %8072 = vmatprep.subr.mxu0 0.0
  %8073 = vmatpush1.msra.mxu0 0.0
  %8074 = vmatprep.subr.mxu0 0.0
  %8075 = vmatpush1.msra.mxu0 0.0
  %8076 = vmatprep.subr.mxu0 0.0
  %8077 = vmatpush1.msra.mxu0 0.0
  %8078 = vmatprep.subr.mxu0 0.0
  %8079 = vmatpush1.msra.mxu0 0.0
  %8080 = vmatprep.subr.mxu0 0.0
  %8081 = vmatpush1.msra.mxu0 0.0
  %8082 = vmatprep.subr.mxu0 0.0
  %8083 = vmatpush1.msra.mxu0 0.0
  %8084 = vmatprep.subr.mxu0 0.0
  %8085 = vmatpush1.msra.mxu0 0.0
  %8086 = vmatprep.subr.mxu0 0.0
  %8087 = vmatpush1.msra.mxu0 0.0
  %8088 = vmatprep.subr.mxu0 0.0
  %8089 = vmatpush1.msra.mxu0 0.0
  %8090 = vmatprep.mubr.f32.mxu0 0.0
  %v8091 = vand.u32 %v7763, 4294901760
  %v8092 = vsub.f32 %v7763, %v8091
  %8093 = vmatmul.mubr.f32.gmra.mrb[0].mxu0 %v8092
  %v8094 = vpop.f32.mrb[0].mxu0
  %v8095 = vadd.f32 %v7993, %v8094
  %v8096 = vpop.f32.mrb[0].mxu0
  %8097 = vmatprep.mubr.f32.mxu0 0.0
  %v8098 = vand.u32 %v7766, 4294901760
  %v8099 = vsub.f32 %v7766, %v8098
  %8100 = vmatmul.mubr.f32.gmra.mrb[0].mxu0 %v8099
  %v8101 = vpop.f32.mrb[0].mxu0
  %v8102 = vadd.f32 %v7999, %v8101
  %v8103 = vpop.f32.mrb[0].mxu0
  %8104 = vdwg.mxu0
  %8105 = vmatprep.subr.mxu0 0.0
  %v8106 = vand.u32 %v7749, 4294901760
  %8107 = vmatpush1.msra.mxu0 %v8106
  %8108 = vmatprep.subr.mxu0 0.0
  %v8109 = vand.u32 %v7750, 4294901760
  %8110 = vmatpush1.msra.mxu0 %v8109
  %8111 = vmatprep.subr.mxu0 0.0
  %v8112 = vand.u32 %v7751, 4294901760
  %8113 = vmatpush1.msra.mxu0 %v8112
  %8114 = vmatprep.subr.mxu0 0.0
  %v8115 = vand.u32 %v7752, 4294901760
  %8116 = vmatpush1.msra.mxu0 %v8115
  %8117 = vmatprep.subr.mxu0 0.0
  %v8118 = vand.u32 %v7753, 4294901760
  %8119 = vmatpush1.msra.mxu0 %v8118
  %8120 = vmatprep.subr.mxu0 0.0
  %v8121 = vand.u32 %v7754, 4294901760
  %8122 = vmatpush1.msra.mxu0 %v8121
  %8123 = vmatprep.subr.mxu0 0.0
  %v8124 = vand.u32 %v7755, 4294901760
  %8125 = vmatpush1.msra.mxu0 %v8124
  %8126 = vmatprep.subr.mxu0 0.0
  %v8127 = vand.u32 %v7756, 4294901760
  %8128 = vmatpush1.msra.mxu0 %v8127
  %8129 = vmatprep.subr.mxu0 0.0
  %v8130 = vand.u32 %v7757, 4294901760
  %8131 = vmatpush1.msra.mxu0 %v8130
  %8132 = vmatprep.subr.mxu0 0.0
  %v8133 = vand.u32 %v7758, 4294901760
  %8134 = vmatpush1.msra.mxu0 %v8133
  %8135 = vmatprep.subr.mxu0 0.0
  %v8136 = vand.u32 %v7759, 4294901760
  %8137 = vmatpush1.msra.mxu0 %v8136
  %8138 = vmatprep.subr.mxu0 0.0
  %v8139 = vand.u32 %v7760, 4294901760
  %8140 = vmatpush1.msra.mxu0 %v8139
  %8141 = vmatprep.subr.mxu0 0.0
  %8142 = vmatpush1.msra.mxu0 0.0
  %8143 = vmatprep.subr.mxu0 0.0
  %8144 = vmatpush1.msra.mxu0 0.0
  %8145 = vmatprep.subr.mxu0 0.0
  %8146 = vmatpush1.msra.mxu0 0.0
  %8147 = vmatprep.subr.mxu0 0.0
  %8148 = vmatpush1.msra.mxu0 0.0
  %8149 = vmatprep.subr.mxu0 0.0
  %8150 = vmatpush1.msra.mxu0 0.0
  %8151 = vmatprep.subr.mxu0 0.0
  %8152 = vmatpush1.msra.mxu0 0.0
  %8153 = vmatprep.subr.mxu0 0.0
  %8154 = vmatpush1.msra.mxu0 0.0
  %8155 = vmatprep.subr.mxu0 0.0
  %8156 = vmatpush1.msra.mxu0 0.0
  %8157 = vmatprep.subr.mxu0 0.0
  %8158 = vmatpush1.msra.mxu0 0.0
  %8159 = vmatprep.subr.mxu0 0.0
  %8160 = vmatpush1.msra.mxu0 0.0
  %8161 = vmatprep.subr.mxu0 0.0
  %8162 = vmatpush1.msra.mxu0 0.0
  %8163 = vmatprep.subr.mxu0 0.0
  %8164 = vmatpush1.msra.mxu0 0.0
  %8165 = vmatprep.subr.mxu0 0.0
  %8166 = vmatpush1.msra.mxu0 0.0
  %8167 = vmatprep.subr.mxu0 0.0
  %8168 = vmatpush1.msra.mxu0 0.0
  %8169 = vmatprep.subr.mxu0 0.0
  %8170 = vmatpush1.msra.mxu0 0.0
  %8171 = vmatprep.subr.mxu0 0.0
  %8172 = vmatpush1.msra.mxu0 0.0
  %8173 = vmatprep.subr.mxu0 0.0
  %8174 = vmatpush1.msra.mxu0 0.0
  %8175 = vmatprep.subr.mxu0 0.0
  %8176 = vmatpush1.msra.mxu0 0.0
  %8177 = vmatprep.subr.mxu0 0.0
  %8178 = vmatpush1.msra.mxu0 0.0
  %8179 = vmatprep.subr.mxu0 0.0
  %8180 = vmatpush1.msra.mxu0 0.0
  %8181 = vmatprep.mubr.f32.mxu0 0.0
  %v8182 = vand.u32 %v7763, 4294901760
  %v8183 = vsub.f32 %v7763, %v8182
  %v8184 = vand.u32 %v8183, 4294901760
  %8185 = vmatmul.mubr.f32.gmra.mrb[0].mxu0 %v8184
  %v8186 = vpop.f32.mrb[0].mxu0
  %v8187 = vadd.f32 %v8095, %v8186
  %v8188 = vpop.f32.mrb[0].mxu0
  %8189 = vmatprep.mubr.f32.mxu0 0.0
  %v8190 = vand.u32 %v7766, 4294901760
  %v8191 = vsub.f32 %v7766, %v8190
  %v8192 = vand.u32 %v8191, 4294901760
  %8193 = vmatmul.mubr.f32.gmra.mrb[0].mxu0 %v8192
  %v8194 = vpop.f32.mrb[0].mxu0
  %v8195 = vadd.f32 %v8102, %v8194
  %v8196 = vpop.f32.mrb[0].mxu0
  %8197 = vdwg.mxu0
  %8198 = vmatprep.subr.mxu0 0.0
  %v8199 = vand.u32 %v7749, 4294901760
  %v8200 = vsub.f32 %v7749, %v8199
  %v8201 = vand.u32 %v8200, 4294901760
  %8202 = vmatpush1.msra.mxu0 %v8201
  %8203 = vmatprep.subr.mxu0 0.0
  %v8204 = vand.u32 %v7750, 4294901760
  %v8205 = vsub.f32 %v7750, %v8204
  %v8206 = vand.u32 %v8205, 4294901760
  %8207 = vmatpush1.msra.mxu0 %v8206
  %8208 = vmatprep.subr.mxu0 0.0
  %v8209 = vand.u32 %v7751, 4294901760
  %v8210 = vsub.f32 %v7751, %v8209
  %v8211 = vand.u32 %v8210, 4294901760
  %8212 = vmatpush1.msra.mxu0 %v8211
  %8213 = vmatprep.subr.mxu0 0.0
  %v8214 = vand.u32 %v7752, 4294901760
  %v8215 = vsub.f32 %v7752, %v8214
  %v8216 = vand.u32 %v8215, 4294901760
  %8217 = vmatpush1.msra.mxu0 %v8216
  %8218 = vmatprep.subr.mxu0 0.0
  %v8219 = vand.u32 %v7753, 4294901760
  %v8220 = vsub.f32 %v7753, %v8219
  %v8221 = vand.u32 %v8220, 4294901760
  %8222 = vmatpush1.msra.mxu0 %v8221
  %8223 = vmatprep.subr.mxu0 0.0
  %v8224 = vand.u32 %v7754, 4294901760
  %v8225 = vsub.f32 %v7754, %v8224
  %v8226 = vand.u32 %v8225, 4294901760
  %8227 = vmatpush1.msra.mxu0 %v8226
  %8228 = vmatprep.subr.mxu0 0.0
  %v8229 = vand.u32 %v7755, 4294901760
  %v8230 = vsub.f32 %v7755, %v8229
  %v8231 = vand.u32 %v8230, 4294901760
  %8232 = vmatpush1.msra.mxu0 %v8231
  %8233 = vmatprep.subr.mxu0 0.0
  %v8234 = vand.u32 %v7756, 4294901760
  %v8235 = vsub.f32 %v7756, %v8234
  %v8236 = vand.u32 %v8235, 4294901760
  %8237 = vmatpush1.msra.mxu0 %v8236
  %8238 = vmatprep.subr.mxu0 0.0
  %v8239 = vand.u32 %v7757, 4294901760
  %v8240 = vsub.f32 %v7757, %v8239
  %v8241 = vand.u32 %v8240, 4294901760
  %8242 = vmatpush1.msra.mxu0 %v8241
  %8243 = vmatprep.subr.mxu0 0.0
  %v8244 = vand.u32 %v7758, 4294901760
  %v8245 = vsub.f32 %v7758, %v8244
  %v8246 = vand.u32 %v8245, 4294901760
  %8247 = vmatpush1.msra.mxu0 %v8246
  %8248 = vmatprep.subr.mxu0 0.0
  %v8249 = vand.u32 %v7759, 4294901760
  %v8250 = vsub.f32 %v7759, %v8249
  %v8251 = vand.u32 %v8250, 4294901760
  %8252 = vmatpush1.msra.mxu0 %v8251
  %8253 = vmatprep.subr.mxu0 0.0
  %v8254 = vand.u32 %v7760, 4294901760
  %v8255 = vsub.f32 %v7760, %v8254
  %v8256 = vand.u32 %v8255, 4294901760
  %8257 = vmatpush1.msra.mxu0 %v8256
  %8258 = vmatprep.subr.mxu0 0.0
  %8259 = vmatpush1.msra.mxu0 0.0
  %8260 = vmatprep.subr.mxu0 0.0
  %8261 = vmatpush1.msra.mxu0 0.0
  %8262 = vmatprep.subr.mxu0 0.0
  %8263 = vmatpush1.msra.mxu0 0.0
  %8264 = vmatprep.subr.mxu0 0.0
  %8265 = vmatpush1.msra.mxu0 0.0
  %8266 = vmatprep.subr.mxu0 0.0
  %8267 = vmatpush1.msra.mxu0 0.0
  %8268 = vmatprep.subr.mxu0 0.0
  %8269 = vmatpush1.msra.mxu0 0.0
  %8270 = vmatprep.subr.mxu0 0.0
  %8271 = vmatpush1.msra.mxu0 0.0
  %8272 = vmatprep.subr.mxu0 0.0
  %8273 = vmatpush1.msra.mxu0 0.0
  %8274 = vmatprep.subr.mxu0 0.0
  %8275 = vmatpush1.msra.mxu0 0.0
  %8276 = vmatprep.subr.mxu0 0.0
  %8277 = vmatpush1.msra.mxu0 0.0
  %8278 = vmatprep.subr.mxu0 0.0
  %8279 = vmatpush1.msra.mxu0 0.0
  %8280 = vmatprep.subr.mxu0 0.0
  %8281 = vmatpush1.msra.mxu0 0.0
  %8282 = vmatprep.subr.mxu0 0.0
  %8283 = vmatpush1.msra.mxu0 0.0
  %8284 = vmatprep.subr.mxu0 0.0
  %8285 = vmatpush1.msra.mxu0 0.0
  %8286 = vmatprep.subr.mxu0 0.0
  %8287 = vmatpush1.msra.mxu0 0.0
  %8288 = vmatprep.subr.mxu0 0.0
  %8289 = vmatpush1.msra.mxu0 0.0
  %8290 = vmatprep.subr.mxu0 0.0
  %8291 = vmatpush1.msra.mxu0 0.0
  %8292 = vmatprep.subr.mxu0 0.0
  %8293 = vmatpush1.msra.mxu0 0.0
  %8294 = vmatprep.subr.mxu0 0.0
  %8295 = vmatpush1.msra.mxu0 0.0
  %8296 = vmatprep.subr.mxu0 0.0
  %8297 = vmatpush1.msra.mxu0 0.0
  %8298 = vmatprep.mubr.f32.mxu0 0.0
  %v8299 = vand.u32 %v7763, 4294901760
  %8300 = vmatmul.mubr.f32.gmra.mrb[0].mxu0 %v8299
  %v8301 = vpop.f32.mrb[0].mxu0
  %v8302 = vadd.f32 %v8187, %v8301
  %v8303 = vpop.f32.mrb[0].mxu0
  %8304 = vmatprep.mubr.f32.mxu0 0.0
  %v8305 = vand.u32 %v7766, 4294901760
  %8306 = vmatmul.mubr.f32.gmra.mrb[0].mxu0 %v8305
  %v8307 = vpop.f32.mrb[0].mxu0
  %v8308 = vadd.f32 %v8195, %v8307
  %v8309 = vpop.f32.mrb[0].mxu0
  %8310 = vdwg.mxu0
  %8311 = vmatprep.subr.mxu0 0.0
  %v8312 = vand.u32 %v7749, 4294901760
  %8313 = vmatpush1.msra.mxu0 %v8312
  %8314 = vmatprep.subr.mxu0 0.0
  %v8315 = vand.u32 %v7750, 4294901760
  %8316 = vmatpush1.msra.mxu0 %v8315
  %8317 = vmatprep.subr.mxu0 0.0
  %v8318 = vand.u32 %v7751, 4294901760
  %8319 = vmatpush1.msra.mxu0 %v8318
  %8320 = vmatprep.subr.mxu0 0.0
  %v8321 = vand.u32 %v7752, 4294901760
  %8322 = vmatpush1.msra.mxu0 %v8321
  %8323 = vmatprep.subr.mxu0 0.0
  %v8324 = vand.u32 %v7753, 4294901760
  %8325 = vmatpush1.msra.mxu0 %v8324
  %8326 = vmatprep.subr.mxu0 0.0
  %v8327 = vand.u32 %v7754, 4294901760
  %8328 = vmatpush1.msra.mxu0 %v8327
  %8329 = vmatprep.subr.mxu0 0.0
  %v8330 = vand.u32 %v7755, 4294901760
  %8331 = vmatpush1.msra.mxu0 %v8330
  %8332 = vmatprep.subr.mxu0 0.0
  %v8333 = vand.u32 %v7756, 4294901760
  %8334 = vmatpush1.msra.mxu0 %v8333
  %8335 = vmatprep.subr.mxu0 0.0
  %v8336 = vand.u32 %v7757, 4294901760
  %8337 = vmatpush1.msra.mxu0 %v8336
  %8338 = vmatprep.subr.mxu0 0.0
  %v8339 = vand.u32 %v7758, 4294901760
  %8340 = vmatpush1.msra.mxu0 %v8339
  %8341 = vmatprep.subr.mxu0 0.0
  %v8342 = vand.u32 %v7759, 4294901760
  %8343 = vmatpush1.msra.mxu0 %v8342
  %8344 = vmatprep.subr.mxu0 0.0
  %v8345 = vand.u32 %v7760, 4294901760
  %8346 = vmatpush1.msra.mxu0 %v8345
  %8347 = vmatprep.subr.mxu0 0.0
  %8348 = vmatpush1.msra.mxu0 0.0
  %8349 = vmatprep.subr.mxu0 0.0
  %8350 = vmatpush1.msra.mxu0 0.0
  %8351 = vmatprep.subr.mxu0 0.0
  %8352 = vmatpush1.msra.mxu0 0.0
  %8353 = vmatprep.subr.mxu0 0.0
  %8354 = vmatpush1.msra.mxu0 0.0
  %8355 = vmatprep.subr.mxu0 0.0
  %8356 = vmatpush1.msra.mxu0 0.0
  %8357 = vmatprep.subr.mxu0 0.0
  %8358 = vmatpush1.msra.mxu0 0.0
  %8359 = vmatprep.subr.mxu0 0.0
  %8360 = vmatpush1.msra.mxu0 0.0
  %8361 = vmatprep.subr.mxu0 0.0
  %8362 = vmatpush1.msra.mxu0 0.0
  %8363 = vmatprep.subr.mxu0 0.0
  %8364 = vmatpush1.msra.mxu0 0.0
  %8365 = vmatprep.subr.mxu0 0.0
  %8366 = vmatpush1.msra.mxu0 0.0
  %8367 = vmatprep.subr.mxu0 0.0
  %8368 = vmatpush1.msra.mxu0 0.0
  %8369 = vmatprep.subr.mxu0 0.0
  %8370 = vmatpush1.msra.mxu0 0.0
  %8371 = vmatprep.subr.mxu0 0.0
  %8372 = vmatpush1.msra.mxu0 0.0
  %8373 = vmatprep.subr.mxu0 0.0
  %8374 = vmatpush1.msra.mxu0 0.0
  %8375 = vmatprep.subr.mxu0 0.0
  %8376 = vmatpush1.msra.mxu0 0.0
  %8377 = vmatprep.subr.mxu0 0.0
  %8378 = vmatpush1.msra.mxu0 0.0
  %8379 = vmatprep.subr.mxu0 0.0
  %8380 = vmatpush1.msra.mxu0 0.0
  %8381 = vmatprep.subr.mxu0 0.0
  %8382 = vmatpush1.msra.mxu0 0.0
  %8383 = vmatprep.subr.mxu0 0.0
  %8384 = vmatpush1.msra.mxu0 0.0
  %8385 = vmatprep.subr.mxu0 0.0
  %8386 = vmatpush1.msra.mxu0 0.0
  %8387 = vmatprep.mubr.f32.mxu0 0.0
  %v8388 = vand.u32 %v7763, 4294901760
  %8389 = vmatmul.mubr.f32.gmra.mrb[0].mxu0 %v8388
  %v8390 = vpop.f32.mrb[0].mxu0
  %v8391 = vadd.f32 %v8302, %v8390
  %v8392 = vpop.f32.mrb[0].mxu0
  %8393 = vmatprep.mubr.f32.mxu0 0.0
  %v8394 = vand.u32 %v7766, 4294901760
  %8395 = vmatmul.mubr.f32.gmra.mrb[0].mxu0 %v8394
  %v8396 = vpop.f32.mrb[0].mxu0
  %v8397 = vadd.f32 %v8308, %v8396
  %v8398 = vpop.f32.mrb[0].mxu0
  %8399 = vdwg.mxu0
  %v8400 = vrcp.pop %v8391
  %v8401 = vrcp.pop %v8397
  %8403 = vset.pattern.permute.xlu0 40
  %8404 = vperm.xlu0 %8403, %v8400
  %v8405 = vpop.permute.xlu0 %8404
  %8408 = vset.pattern.permute.xlu0 40
  %8409 = vperm.xlu0 %8408, %v8401
  %v8410 = vpop.permute.xlu0 %8409
  %v8412 = vmul.f32 %v8391, %v8405
  %v8413 = vmul.f32 %v8397, %v8410
  %v8414 = vadd.f32 %v8412, %v13
  %v8415 = vadd.f32 %v8413, %v14
  %v8416 = vmul.f32 %v8414, 0.5
  %v8417 = vmul.f32 %v8415, 0.5
  %v8418 = vmul.f32 %v8416, %v8416
  %v8419 = vmul.f32 %v8417, %v8417
  %v8420 = vsel %vm2856, %v8418, 0.0
  %8421 = vadd.xlane.f32.xlu0 %v8420
  %v8422 = vpop.xlane.xlu0 %8421
  %v8423 = vsel %vm2856, %v8419, 0.0
  %8424 = vadd.xlane.f32.xlu0 %v8423
  %v8425 = vpop.xlane.xlu0 %8424
  %v8426 = vmax.f32 %v8422, 1e-24
  %v8427 = vmax.f32 %v8425, 1e-24
  %v8428 = vrsqrt.pop %v8426
  %v8429 = vrsqrt.pop %v8427
  %v8430 = vmul.f32 %v8416, %v8428
  %v8431 = vmul.f32 %v8417, %v8429
  %8432 = vst.msk [vmem:[%s2 + $0x10] sm:$0xff] %vm2856, %v8430
  %8433 = vst.msk [vmem:[%s2 + $0x18] sm:$0xff] %vm2856, %v8431
  // Predicated region
  $region10: #{interaction_gnn_aggregator.1} parent=0 // pred_check
    _
  $region11: #{interaction_gnn_aggregator.1} parent=0 // pred_check_branch
    %8435 = sbr.rel (0) target = $region13
  $region12: #{interaction_gnn_aggregator.1} parent=0 // pred_region
    _
  $region13: #{interaction_gnn_aggregator.1} parent=0 // pred_fallthru
    _
  // Predicated region
  $region14: #{interaction_gnn_aggregator.1} parent=0 // pred_check
    _
  $region15: #{interaction_gnn_aggregator.1} parent=0 // pred_check_branch
    %8437 = sbr.rel (0) target = $region17
  $region16: #{interaction_gnn_aggregator.1} parent=0 // pred_region
    _
  $region17: #{interaction_gnn_aggregator.1} parent=0 // pred_fallthru
    _

</llo_original>
